<compile_context>
chip_gen: v6e
topology: v6e:2x2x1
jax: 0.10.0
libtpu: 0.0.40
codegen_flags: <defaults>
</compile_context>

<pallas_src>
import numpy as np
import jax
import jax.numpy as jnp
from jax.experimental import pallas as pl
from jax.experimental.pallas import tpu as pltpu

LANES = 128   # every post-stem channel dim is padded to the 128-lane vreg width


# ----------------------------- host-side prep -----------------------------

def _fold_bn(w_oihw, bn):
    """Fold eval-mode BatchNorm scale into the conv weight; return (w, bias) as numpy."""
    scale, bias = bn
    w = np.asarray(w_oihw, np.float32) * np.asarray(scale, np.float32)[:, None, None, None]
    return w, np.asarray(bias, np.float32)


def _bias_row(b, cout):
    out = np.zeros((1, LANES), np.float32)
    out[0, :cout] = b
    return out


def _stack_conv3x3(w_oihw, bn):
    """[Cout,Cin,3,3] + BN -> K-stacked [9*128, 128] weight (tap-major) + [1,128] bias."""
    w, b = _fold_bn(w_oihw, bn)
    co, ci, kh, kw = w.shape
    ws = np.zeros((kh * kw * LANES, LANES), np.float32)
    for dy in range(kh):
        for dx in range(kw):
            t = dy * kw + dx
            ws[t * LANES:t * LANES + ci, :co] = w[:, :, dy, dx].T
    return ws, _bias_row(b, co)


def _stack_conv1x1(w_oihw, bn):
    w, b = _fold_bn(w_oihw, bn)
    co, ci = w.shape[0], w.shape[1]
    ws = np.zeros((LANES, LANES), np.float32)
    ws[:ci, :co] = w[:, :, 0, 0].T
    return ws, _bias_row(b, co)


def _stem_matrix(w_oihw, bn, kpad):
    """Stem 7x7 weight as an im2col matrix [49*Cin (pad kpad), 128] (tap-major, ch-minor)."""
    w, b = _fold_bn(w_oihw, bn)
    co, ci, kh, kw = w.shape
    ws = np.zeros((kpad, LANES), np.float32)
    for dy in range(kh):
        for dx in range(kw):
            t = dy * kw + dx
            ws[t * ci:(t + 1) * ci, :co] = w[:, :, dy, dx].T
    return ws, _bias_row(b, co)


def get_2d_sincos_pos_embed(embed_dim, grid_size):
    """Standard MAE-style 2D sin-cos positional embedding -> [gh*gw, embed_dim]."""
    gh, gw = grid_size

    def _1d(dim, pos):
        omega = np.arange(dim // 2, dtype=np.float64) / (dim / 2.0)
        omega = 1.0 / 10000 ** omega
        out = np.einsum("m,d->md", pos.reshape(-1), omega)
        return np.concatenate([np.sin(out), np.cos(out)], axis=1)

    grid_h = np.arange(gh, dtype=np.float32)
    grid_w = np.arange(gw, dtype=np.float32)
    grid = np.stack(np.meshgrid(grid_w, grid_h), axis=0).reshape(2, 1, gh, gw)
    emb_h = _1d(embed_dim // 2, grid[0])
    emb_w = _1d(embed_dim // 2, grid[1])
    return np.concatenate([emb_h, emb_w], axis=1)


def prepare_encoder(params, in_h, in_w):
    """Fold BN, stack conv taps along K, build the static op plan + head constants."""
    cin = int(params["stem_w"].shape[1])
    kpad = -(-49 * cin // LANES) * LANES                        # 49*Cin rounded up to 128
    stem_w, stem_b = _stem_matrix(params["stem_w"], params["stem_bn"], kpad)

    h = (in_h + 2 * 3 - 7) // 2 + 1                             # post stem (7x7/s2/p3)
    w = (in_w + 2 * 3 - 7) // 2 + 1
    assert h % 2 == 0 and w % 2 == 0, "stride-2 subsampling assumes even stem output dims"
    stem_hw = (h, w)
    h, w = h // 2, w // 2                                       # post maxpool (3x3/s2/p1)

    conv_w, conv_b, plan = [], [], []

    def add(stacker, wt, bn):
        ws, bs = stacker(wt, bn)
        conv_w.append(ws)
        conv_b.append(bs)
        return len(conv_w) - 1

    for stage in params["stages"]:
        for blk in stage:
            s = int(blk["stride"])
            if s == 2:
                assert h % 2 == 0 and w % 2 == 0
            c1 = add(_stack_conv3x3, blk["conv1_w"], blk["bn1"])
            c2 = add(_stack_conv3x3, blk["conv2_w"], blk["bn2"])
            down = add(_stack_conv1x1, blk["down_w"], blk["down_bn"]) if "down_w" in blk else None
            plan.append((h, w, s, c1, c2, down))
            h = (h + 2 - 3) // s + 1
            w = (w + 2 - 3) // s + 1

    c_last = int(params["stages"][-1][-1]["conv2_w"].shape[0])
    out_dim = int(params["linear_w"].shape[0])
    pos = np.zeros((h * w, LANES), np.float32)
    pos[:, :c_last] = get_2d_sincos_pos_embed(c_last, (h, w))
    wlin = np.zeros((LANES, LANES), np.float32)
    wlin[:c_last, :out_dim] = np.asarray(params["linear_w"], np.float32).T
    blin = np.zeros((1, LANES), np.float32)
    blin[0, :out_dim] = np.asarray(params["linear_b"], np.float32)

    max_rows = stem_hw[0] * stem_hw[1]                          # largest in-kernel image
    stage_rows = (max_rows + 2 * (stem_hw[1] + 1) + 7) // 8 * 8  # shift buffer rows

    return {
        "plan": tuple(plan),
        "stem_hw": stem_hw,
        "stem_kpad": kpad,
        "in_ch": cin,
        "stem_w": jnp.asarray(stem_w, jnp.bfloat16),
        "stem_b": jnp.asarray(stem_b),
        "conv_w": [jnp.asarray(ws, jnp.bfloat16) for ws in conv_w],
        "conv_b": [jnp.asarray(bs) for bs in conv_b],
        "pos": jnp.asarray(pos),
        "lin_w": jnp.asarray(wlin, jnp.bfloat16),
        "lin_b": jnp.asarray(blin),
        "n_tokens": h * w,
        "c_last": c_last,
        "out_dim": out_dim,
        "stage_rows": stage_rows,
        "pack_rows": max(max_rows // 4, 8),
    }


def _stem_im2col(x_nchw, cin, kpad):
    """Host-side im2col for the 7x7/s2/p3 stem: [B,Cin,H,W] -> [B, Ho*Wo, kpad] f32."""
    x = jnp.transpose(x_nchw, (0, 2, 3, 1)).astype(jnp.float32)
    B, H, W, _ = x.shape
    ho = (H + 6 - 7) // 2 + 1
    wo = (W + 6 - 7) // 2 + 1
    xp = jnp.pad(x, ((0, 0), (3, 3), (3, 3), (0, 0)))
    taps = [xp[:, dy:dy + 2 * ho:2, dx:dx + 2 * wo:2, :]
            for dy in range(7) for dx in range(7)]
    p = jnp.concatenate(taps, axis=-1).reshape(B, ho * wo, 49 * cin)
    return jnp.pad(p, ((0, 0), (0, 0), (0, kpad - 49 * cin)))


# ----------------------------- fused Pallas kernel -----------------------------

def _build_kernel(plan, n_conv, pooled, stem_hw):
    H0, W0 = stem_hw

    def kernel(*refs):
        x_ref, sw_ref, sb_ref = refs[0], refs[1], refs[2]
        cw = refs[3:3 + n_conv]
        cb = refs[3 + n_conv:3 + 2 * n_conv]
        i = 3 + 2 * n_conv
        if pooled:
            o_ref, shift_ref, pack_ref = refs[i], refs[i + 1], refs[i + 2]
            pos_ref = lin_w_ref = lin_b_ref = None
        else:
            pos_ref, lin_w_ref, lin_b_ref = refs[i], refs[i + 1], refs[i + 2]
            o_ref, shift_ref, pack_ref = refs[i + 3], refs[i + 4], refs[i + 5]

        def make_taps(x, H, W):
            """Stage x in a zero-padded VMEM buffer; taps are static row slices
            (load/store slots) plus a VPU iota mask on the horizontal border. No MXU."""
            rows, pad = H * W, W + 1
            shift_ref[0:rows + 2 * pad, :] = jnp.zeros((rows + 2 * pad, LANES), jnp.float32)
            shift_ref[pad:pad + rows, :] = x
            jj = jax.lax.broadcasted_iota(jnp.int32, (rows, LANES), 0) % W
            not_left = jj >= 1            # column j-1 exists (dx == 0 taps)
            not_right = jj <= W - 2       # column j+1 exists (dx == 2 taps)

            def tap(dy, dx):
                off = (dy - 1) * W + (dx - 1)
                t = shift_ref[pad + off:pad + off + rows, :]
                if dx == 0:
                    t = jnp.where(not_left, t, 0.0)
                elif dx == 2:
                    t = jnp.where(not_right, t, 0.0)
                return t                  # vertical borders land in the zeroed pad rows

            return tap

        def subsample2(y, H, W):
            """Keep rows with even (i, j): strided row slices through a VMEM buffer."""
            rows, ho, wo = H * W, H // 2, W // 2
            shift_ref[0:rows, :] = y
            for r in range(ho):
                pack_ref[r * wo:(r + 1) * wo, :] = shift_ref[pl.ds(2 * r * W, wo, 2), :]
            return pack_ref[0:ho * wo, :]

        def conv3x3(x, H, W, stride, wi, relu):
            # One bf16 MXU matmul per conv: the 9 shifted taps concatenated along K.
            tap = make_taps(x, H, W)
            patches = jnp.concatenate(
                [tap(dy, dx).astype(jnp.bfloat16) for dy in range(3) for dx in range(3)],
                axis=1)                                                 # [rows, 9*128] bf16
            y = jnp.dot(patches, cw[wi][...],
                        preferred_element_type=jnp.float32) + cb[wi][...]
            if relu:
                y = jnp.maximum(y, 0.0)
            if stride == 2:
                # stride-2 conv == stride-1 conv sampled at even (i, j)
                y = subsample2(y, H, W)
            return y

        def maxpool3x3s2(x, H, W):
            # x is the post-ReLU stem output (>= 0), so the zeroed pad rows / masked
            # columns are exact for max.  Pure f32 slices + VPU max — never on the MXU.
            tap = make_taps(x, H, W)
            m = x                                                       # centre tap (1,1)
            for dy in range(3):
                for dx in range(3):
                    if (dy, dx) != (1, 1):
                        m = jnp.maximum(m, tap(dy, dx))
            return subsample2(m, H, W)

        # stem 7x7/s2 + BN + ReLU: a single bf16 matmul on host-side im2col patches
        h = jnp.dot(x_ref[0].astype(jnp.bfloat16), sw_ref[...],
                    preferred_element_type=jnp.float32) + sb_ref[...]
        h = jnp.maximum(h, 0.0)                                         # [H0*W0, 128]
        h = maxpool3x3s2(h, H0, W0)

        for (bh, bw, s, c1, c2, dwn) in plan:                           # static, unrolled
            y = conv3x3(h, bh, bw, s, c1, True)
            y = conv3x3(y, bh // s, bw // s, 1, c2, False)
            if dwn is None:
                sc = h
            else:
                hs = subsample2(h, bh, bw)                              # 1x1/s2 shortcut:
                sc = jnp.dot(hs.astype(jnp.bfloat16), cw[dwn][...],     # slice, then matmul
                             preferred_element_type=jnp.float32) + cb[dwn][...]
            h = jnp.maximum(y + sc, 0.0)

        if pooled:
            o_ref[0] = jnp.mean(h, axis=0, keepdims=True)               # AdaptiveAvgPool2d(1)
        else:
            tok = h + pos_ref[...]                                      # '(H W) C' + pos emb
            o_ref[0] = jnp.dot(tok.astype(jnp.bfloat16), lin_w_ref[...],
                               preferred_element_type=jnp.float32) + lin_b_ref[...]

    return kernel


def _const_spec(shape):
    nd = len(shape)
    return pl.BlockSpec(shape, lambda b, _nd=nd: (0,) * _nd)


def resnet_encoder_wrapper(x_nchw, enc, pooled=True):
    B = x_nchw.shape[0]
    patches = _stem_im2col(x_nchw, enc["in_ch"], enc["stem_kpad"])      # [B, S0, KPAD]
    s0, kpad = patches.shape[1], patches.shape[2]
    rows_out = 1 if pooled else enc["n_tokens"]

    args = [patches, enc["stem_w"], enc["stem_b"]] + enc["conv_w"] + enc["conv_b"]
    if not pooled:
        args += [enc["pos"], enc["lin_w"], enc["lin_b"]]                # token head only

    in_specs = [pl.BlockSpec((1, s0, kpad), lambda b: (b, 0, 0))]
    in_specs += [_const_spec(a.shape) for a in args[1:]]

    kernel = _build_kernel(enc["plan"], len(enc["conv_w"]), pooled, enc["stem_hw"])
    out = pl.pallas_call(
        kernel,
        out_shape=jax.ShapeDtypeStruct((B, rows_out, LANES), jnp.float32),
        grid=(B,),
        in_specs=in_specs,
        out_specs=pl.BlockSpec((1, rows_out, LANES), lambda b: (b, 0, 0)),  # lane-dense
        scratch_shapes=[pltpu.VMEM((enc["stage_rows"], LANES), jnp.float32),
                        pltpu.VMEM((enc["pack_rows"], LANES), jnp.float32)],
        compiler_params=pltpu.CompilerParams(
            dimension_semantics=("parallel",)),       # split batch across v7x's 2 TCs
    )(*args)
    n_out = enc["c_last"] if pooled else enc["out_dim"]
    return out[:, :, :n_out]


# ----------------------------- pure-JAX reference (self-check) -----------------------------

def _round_bf16(w):
    return w.astype(jnp.bfloat16).astype(jnp.float32)


def _conv2d_ref(x, w, bn, stride, pad, relu):
    scale, bias = bn
    w = _round_bf16(jnp.asarray(w, jnp.float32) * scale[:, None, None, None])
    B, H, W, cin = x.shape
    cout, _, kh, kw = w.shape
    xp = jnp.pad(x, ((0, 0), (pad, pad), (pad, pad), (0, 0)))
    ho = (H + 2 * pad - kh) // stride + 1
    wo = (W + 2 * pad - kw) // stride + 1
    taps = [xp[:, dy:dy + stride * ho:stride, dx:dx + stride * wo:stride, :]
            for dy in range(kh) for dx in range(kw)]
    patches = jnp.concatenate(taps, axis=-1).reshape(B * ho * wo, kh * kw * cin)
    wmat = jnp.transpose(w, (2, 3, 1, 0)).reshape(kh * kw * cin, cout)
    y = patches @ wmat + bias
    if relu:
        y = jnp.maximum(y, 0.0)
    return y.reshape(B, ho, wo, cout)


def _maxpool_ref(x, k=3, stride=2, pad=1):
    B, H, W, C = x.shape
    xp = jnp.pad(x, ((0, 0), (pad, pad), (pad, pad), (0, 0)), constant_values=-jnp.inf)
    ho = (H + 2 * pad - k) // stride + 1
    wo = (W + 2 * pad - k) // stride + 1
    taps = jnp.stack([xp[:, dy:dy + stride * ho:stride, dx:dx + stride * wo:stride, :]
                      for dy in range(k) for dx in range(k)], axis=0)
    return jnp.max(taps, axis=0)


def _block_ref(x, blk):
    s = blk["stride"]
    h = _conv2d_ref(x, blk["conv1_w"], blk["bn1"], s, 1, True)
    h = _conv2d_ref(h, blk["conv2_w"], blk["bn2"], 1, 1, False)
    sc = _conv2d_ref(x, blk["down_w"], blk["down_bn"], s, 0, False) if "down_w" in blk else x
    return jnp.maximum(h + sc, 0.0)


def reference_forward(x_nchw, params, pooled):
    x = jnp.transpose(x_nchw, (0, 2, 3, 1)).astype(jnp.float32)
    x = _conv2d_ref(x, params["stem_w"], params["stem_bn"], 2, 3, True)
    x = _maxpool_ref(x)
    for stage in params["stages"]:
        for blk in stage:
            x = _block_ref(x, blk)
    if pooled:
        return jnp.mean(x, axis=(1, 2))[:, None, :]
    B, H, W, C = x.shape
    pos = jnp.asarray(get_2d_sincos_pos_embed(C, (H, W)), jnp.float32)
    tok = x.reshape(B, H * W, C) + pos[None]
    wlin = _round_bf16(jnp.asarray(params["linear_w"], jnp.float32))
    return tok @ wlin.T + params["linear_b"]


# ----------------------------- deterministic params -----------------------------

def _bn_params(key, c):
    k1, k2, k3, k4 = jax.random.split(key, 4)
    gamma = 1.0 + 0.1 * jax.random.normal(k1, (c,))
    beta = 0.1 * jax.random.normal(k2, (c,))
    mean = 0.1 * jax.random.normal(k3, (c,))
    var = 1.0 + 0.1 * jax.random.uniform(k4, (c,))
    scale = gamma / jnp.sqrt(var + 1e-5)      # eval-mode BN folded to scale/bias
    bias = beta - mean * scale
    return scale.astype(jnp.float32), bias.astype(jnp.float32)


def _conv_w(key, cout, cin, k):
    fan_in = cin * k * k
    return (jax.random.normal(key, (cout, cin, k, k)) * (2.0 / fan_in) ** 0.5).astype(jnp.float32)


def _block_params(key, cin, cout, stride):
    ks = jax.random.split(key, 6)
    p = {
        "conv1_w": _conv_w(ks[0], cout, cin, 3),
        "bn1": _bn_params(ks[1], cout),
        "conv2_w": _conv_w(ks[2], cout, cout, 3),
        "bn2": _bn_params(ks[3], cout),
        "stride": stride,
    }
    if stride != 1 or cin != cout:
        p["down_w"] = _conv_w(ks[4], cout, cin, 1)
        p["down_bn"] = _bn_params(ks[5], cout)
    return p


def init_params(key, in_ch=4, embedding_size=16, hidden_sizes=(16, 32), out_dim=32, depths=(2, 2)):
    keys = jax.random.split(key, 8)
    params = {
        "stem_w": _conv_w(keys[0], embedding_size, in_ch, 7),
        "stem_bn": _bn_params(keys[1], embedding_size),
        "stages": [],
    }
    cin = embedding_size
    kidx = 2
    for si, (c, d) in enumerate(zip(hidden_sizes, depths)):
        stage = []
        for bi in range(d):
            stride = 2 if (si > 0 and bi == 0) else 1
            stage.append(_block_params(keys[kidx], cin, c, stride))
            kidx += 1
            cin = c
        params["stages"].append(stage)
    kw, kb = jax.random.split(keys[kidx])
    limit = 1.0 / np.sqrt(hidden_sizes[-1])
    params["linear_w"] = jax.random.uniform(kw, (out_dim, hidden_sizes[-1]),
                                            minval=-limit, maxval=limit).astype(jnp.float32)
    params["linear_b"] = jax.random.uniform(kb, (out_dim,),
                                            minval=-limit, maxval=limit).astype(jnp.float32)
    return params


# ----------------------------- main -----------------------------

if __name__ == "__main__":
    key = jax.random.PRNGKey(0)
    kx, kp = jax.random.split(key)
    # PyTorch-convention NCHW input: batch=2, channels=4, 16x16 spatial.
    x = jax.random.normal(kx, (2, 4, 16, 16), dtype=jnp.float32)
    params = init_params(kp, in_ch=4, embedding_size=16, hidden_sizes=(16, 32),
                         out_dim=32, depths=(2, 2))
    enc = prepare_encoder(params, in_h=16, in_w=16)

    fwd_pooled = jax.jit(lambda a: resnet_encoder_wrapper(a, enc, pooled=True))
    fwd_tokens = jax.jit(lambda a: resnet_encoder_wrapper(a, enc, pooled=False))

    out_pooled = jax.block_until_ready(fwd_pooled(x))    # [B, 1, 32]
    out_tokens = jax.block_until_ready(fwd_tokens(x))    # [B, H*W=4, 32]

    assert out_pooled.shape == (2, 1, 32), out_pooled.shape
    assert out_tokens.shape == (2, 4, 32), out_tokens.shape

    # correctness self-check (loose tol: kernel rounds activations to bf16 at matmuls)
    ref_pooled = reference_forward(x, params, pooled=True)
    ref_tokens = reference_forward(x, params, pooled=False)
    np.testing.assert_allclose(np.asarray(out_pooled), np.asarray(ref_pooled),
                               rtol=5e-2, atol=5e-2)
    np.testing.assert_allclose(np.asarray(out_tokens), np.asarray(ref_tokens),
                               rtol=5e-2, atol=5e-2)
    print("KERNEL_OK")
</pallas_src>

<mosaic_0001>
module attributes {stable_mosaic.version = 11 : i64} {
  func.func @kernel(%arg0: i32, %arg1: memref<1x64x256xf32, #tpu.memory_space<vmem>>, %arg2: memref<256x128xbf16, #tpu.memory_space<vmem>>, %arg3: memref<1x128xf32, #tpu.memory_space<vmem>>, %arg4: memref<1152x128xbf16, #tpu.memory_space<vmem>>, %arg5: memref<1152x128xbf16, #tpu.memory_space<vmem>>, %arg6: memref<1152x128xbf16, #tpu.memory_space<vmem>>, %arg7: memref<1152x128xbf16, #tpu.memory_space<vmem>>, %arg8: memref<1152x128xbf16, #tpu.memory_space<vmem>>, %arg9: memref<1152x128xbf16, #tpu.memory_space<vmem>>, %arg10: memref<128x128xbf16, #tpu.memory_space<vmem>>, %arg11: memref<1152x128xbf16, #tpu.memory_space<vmem>>, %arg12: memref<1152x128xbf16, #tpu.memory_space<vmem>>, %arg13: memref<1x128xf32, #tpu.memory_space<vmem>>, %arg14: memref<1x128xf32, #tpu.memory_space<vmem>>, %arg15: memref<1x128xf32, #tpu.memory_space<vmem>>, %arg16: memref<1x128xf32, #tpu.memory_space<vmem>>, %arg17: memref<1x128xf32, #tpu.memory_space<vmem>>, %arg18: memref<1x128xf32, #tpu.memory_space<vmem>>, %arg19: memref<1x128xf32, #tpu.memory_space<vmem>>, %arg20: memref<1x128xf32, #tpu.memory_space<vmem>>, %arg21: memref<1x128xf32, #tpu.memory_space<vmem>>, %arg22: memref<1x1x128xf32, #tpu.memory_space<vmem>>, %arg23: memref<88x128xf32, #tpu.memory_space<vmem>>, %arg24: memref<16x128xf32, #tpu.memory_space<vmem>>) attributes {dimension_semantics = [#tpu.dimension_semantics<parallel>], iteration_bounds = array<i64: 2>, scalar_prefetch = 0 : i64, scratch_operands = 2 : i64, tpu.core_type = #tpu.core_type<tc>, window_params = [{transform_indices = @transform_0, window_bounds = array<i64: 1, 64, 256>}, {pipeline_mode = #tpu.pipeline_mode<synchronous>, transform_indices = @transform_1, window_bounds = array<i64: 256, 128>}, {pipeline_mode = #tpu.pipeline_mode<synchronous>, transform_indices = @transform_2, window_bounds = array<i64: 1, 128>}, {pipeline_mode = #tpu.pipeline_mode<synchronous>, transform_indices = @transform_3, window_bounds = array<i64: 1152, 128>}, {pipeline_mode = #tpu.pipeline_mode<synchronous>, transform_indices = @transform_4, window_bounds = array<i64: 1152, 128>}, {pipeline_mode = #tpu.pipeline_mode<synchronous>, transform_indices = @transform_5, window_bounds = array<i64: 1152, 128>}, {pipeline_mode = #tpu.pipeline_mode<synchronous>, transform_indices = @transform_6, window_bounds = array<i64: 1152, 128>}, {pipeline_mode = #tpu.pipeline_mode<synchronous>, transform_indices = @transform_7, window_bounds = array<i64: 1152, 128>}, {pipeline_mode = #tpu.pipeline_mode<synchronous>, transform_indices = @transform_8, window_bounds = array<i64: 1152, 128>}, {pipeline_mode = #tpu.pipeline_mode<synchronous>, transform_indices = @transform_9, window_bounds = array<i64: 128, 128>}, {pipeline_mode = #tpu.pipeline_mode<synchronous>, transform_indices = @transform_10, window_bounds = array<i64: 1152, 128>}, {pipeline_mode = #tpu.pipeline_mode<synchronous>, transform_indices = @transform_11, window_bounds = array<i64: 1152, 128>}, {pipeline_mode = #tpu.pipeline_mode<synchronous>, transform_indices = @transform_12, window_bounds = array<i64: 1, 128>}, {pipeline_mode = #tpu.pipeline_mode<synchronous>, transform_indices = @transform_13, window_bounds = array<i64: 1, 128>}, {pipeline_mode = #tpu.pipeline_mode<synchronous>, transform_indices = @transform_14, window_bounds = array<i64: 1, 128>}, {pipeline_mode = #tpu.pipeline_mode<synchronous>, transform_indices = @transform_15, window_bounds = array<i64: 1, 128>}, {pipeline_mode = #tpu.pipeline_mode<synchronous>, transform_indices = @transform_16, window_bounds = array<i64: 1, 128>}, {pipeline_mode = #tpu.pipeline_mode<synchronous>, transform_indices = @transform_17, window_bounds = array<i64: 1, 128>}, {pipeline_mode = #tpu.pipeline_mode<synchronous>, transform_indices = @transform_18, window_bounds = array<i64: 1, 128>}, {pipeline_mode = #tpu.pipeline_mode<synchronous>, transform_indices = @transform_19, window_bounds = array<i64: 1, 128>}, {pipeline_mode = #tpu.pipeline_mode<synchronous>, transform_indices = @transform_20, window_bounds = array<i64: 1, 128>}, {transform_indices = @transform_21, window_bounds = array<i64: 1, 1, 128>}]} {
    %c0 = arith.constant 0 : index
    %c0_0 = arith.constant 0 : index
    %c0_1 = arith.constant 0 : index
    %0 = vector.load %arg1[%c0, %c0_0, %c0_1] : memref<1x64x256xf32, #tpu.memory_space<vmem>>, vector<1x64x256xf32>
    %1 = vector.shape_cast %0 : vector<1x64x256xf32> to vector<64x256xf32>
    %2 = arith.truncf %1 : vector<64x256xf32> to vector<64x256xbf16>
    %c0_2 = arith.constant 0 : index
    %c0_3 = arith.constant 0 : index
    %3 = vector.load %arg2[%c0_2, %c0_3] : memref<256x128xbf16, #tpu.memory_space<vmem>>, vector<256x128xbf16>
    %cst = arith.constant dense<0.000000e+00> : vector<64x128xf32>
    %4 = tpu.matmul %2, %3, %cst {dimension_numbers = #tpu.dot_dimension_numbers<[1], [0], [0], [1], [0, 0, 1, 1], [], []>} : vector<64x256xbf16>, vector<256x128xbf16>, vector<64x128xf32> -> vector<64x128xf32>
    %c0_4 = arith.constant 0 : index
    %c0_5 = arith.constant 0 : index
    %5 = vector.load %arg3[%c0_4, %c0_5] : memref<1x128xf32, #tpu.memory_space<vmem>>, vector<1x128xf32>
    %6 = vector.broadcast %5 : vector<1x128xf32> to vector<64x128xf32>
    %7 = arith.addf %4, %6 : vector<64x128xf32>
    %cst_6 = arith.constant 0.000000e+00 : f32
    %8 = vector.broadcast %cst_6 : f32 to vector<64x128xf32>
    %9 = arith.maximumf %7, %8 : vector<64x128xf32>
    %cst_7 = arith.constant 0.000000e+00 : f32
    %10 = vector.broadcast %cst_7 : f32 to vector<82x128xf32>
    %c0_8 = arith.constant 0 : index
    %c0_9 = arith.constant 0 : index
    %11 = vector.load %arg23[%c0_8, %c0_9] : memref<88x128xf32, #tpu.memory_space<vmem>>, vector<82x128xf32>
    tpu.vector_store %arg23[%c0_8, %c0_9], %10 {strides = array<i32>} : memref<88x128xf32, #tpu.memory_space<vmem>>, vector<82x128xf32>,
    %c9 = arith.constant 9 : index
    %c0_10 = arith.constant 0 : index
    %12 = vector.load %arg23[%c9, %c0_10] : memref<88x128xf32, #tpu.memory_space<vmem>>, vector<64x128xf32>
    tpu.vector_store %arg23[%c9, %c0_10], %9 {strides = array<i32>} : memref<88x128xf32, #tpu.memory_space<vmem>>, vector<64x128xf32>,
    %13 = tpu.iota {dimensions = array<i32: 0>} : vector<64x128xi32>
    %c8_i32 = arith.constant 8 : i32
    %c0_i32 = arith.constant 0 : i32
    %14 = arith.cmpi eq, %c8_i32, %c0_i32 : i32
    %c1_i32 = arith.constant 1 : i32
    %15 = arith.select %14, %c1_i32, %c8_i32 : i32
    %16 = vector.broadcast %15 : i32 to vector<64x128xi32>
    %17 = arith.remsi %13, %16 : vector<64x128xi32>
    %c0_i32_11 = arith.constant 0 : i32
    %18 = vector.broadcast %c0_i32_11 : i32 to vector<64x128xi32>
    %19 = arith.cmpi ne, %17, %18 : vector<64x128xi32>
    %c0_i32_12 = arith.constant 0 : i32
    %20 = vector.broadcast %c0_i32_12 : i32 to vector<64x128xi32>
    %21 = arith.cmpi slt, %17, %20 : vector<64x128xi32>
    %c0_i32_13 = arith.constant 0 : i32
    %22 = arith.cmpi slt, %15, %c0_i32_13 : i32
    %23 = vector.broadcast %22 : i1 to vector<64x128xi1>
    %24 = vector.broadcast %23 : vector<64x128xi1> to vector<64x128xi1>
    %25 = arith.xori %21, %24 : vector<64x128xi1>
    %26 = arith.andi %25, %19 : vector<64x128xi1>
    %27 = vector.broadcast %15 : i32 to vector<64x128xi32>
    %28 = arith.addi %17, %27 : vector<64x128xi32>
    %29 = arith.select %26, %28, %17 : vector<64x128xi1>, vector<64x128xi32>
    %c1_i32_14 = arith.constant 1 : i32
    %30 = vector.broadcast %c1_i32_14 : i32 to vector<64x128xi32>
    %31 = arith.cmpi sge, %29, %30 : vector<64x128xi32>
    %c6_i32 = arith.constant 6 : i32
    %32 = vector.broadcast %c6_i32 : i32 to vector<64x128xi32>
    %33 = arith.cmpi sle, %29, %32 : vector<64x128xi32>
    %c0_15 = arith.constant 0 : index
    %c0_16 = arith.constant 0 : index
    %34 = vector.load %arg23[%c0_15, %c0_16] : memref<88x128xf32, #tpu.memory_space<vmem>>, vector<64x128xf32>
    %cst_17 = arith.constant 0.000000e+00 : f32
    %35 = vector.broadcast %cst_17 : f32 to vector<64x128xf32>
    %36 = arith.select %31, %34, %35 : vector<64x128xi1>, vector<64x128xf32>
    %37 = arith.maximumf %9, %36 : vector<64x128xf32>
    %c1 = arith.constant 1 : index
    %c0_18 = arith.constant 0 : index
    %38 = vector.load %arg23[%c1, %c0_18] : memref<88x128xf32, #tpu.memory_space<vmem>>, vector<64x128xf32>
    %39 = arith.maximumf %37, %38 : vector<64x128xf32>
    %c2 = arith.constant 2 : index
    %c0_19 = arith.constant 0 : index
    %40 = vector.load %arg23[%c2, %c0_19] : memref<88x128xf32, #tpu.memory_space<vmem>>, vector<64x128xf32>
    %cst_20 = arith.constant 0.000000e+00 : f32
    %41 = vector.broadcast %cst_20 : f32 to vector<64x128xf32>
    %42 = arith.select %33, %40, %41 : vector<64x128xi1>, vector<64x128xf32>
    %43 = arith.maximumf %39, %42 : vector<64x128xf32>
    %c8 = arith.constant 8 : index
    %c0_21 = arith.constant 0 : index
    %44 = vector.load %arg23[%c8, %c0_21] : memref<88x128xf32, #tpu.memory_space<vmem>>, vector<64x128xf32>
    %cst_22 = arith.constant 0.000000e+00 : f32
    %45 = vector.broadcast %cst_22 : f32 to vector<64x128xf32>
    %46 = arith.select %31, %44, %45 : vector<64x128xi1>, vector<64x128xf32>
    %47 = arith.maximumf %43, %46 : vector<64x128xf32>
    %c10 = arith.constant 10 : index
    %c0_23 = arith.constant 0 : index
    %48 = vector.load %arg23[%c10, %c0_23] : memref<88x128xf32, #tpu.memory_space<vmem>>, vector<64x128xf32>
    %cst_24 = arith.constant 0.000000e+00 : f32
    %49 = vector.broadcast %cst_24 : f32 to vector<64x128xf32>
    %50 = arith.select %33, %48, %49 : vector<64x128xi1>, vector<64x128xf32>
    %51 = arith.maximumf %47, %50 : vector<64x128xf32>
    %c16 = arith.constant 16 : index
    %c0_25 = arith.constant 0 : index
    %52 = vector.load %arg23[%c16, %c0_25] : memref<88x128xf32, #tpu.memory_space<vmem>>, vector<64x128xf32>
    %cst_26 = arith.constant 0.000000e+00 : f32
    %53 = vector.broadcast %cst_26 : f32 to vector<64x128xf32>
    %54 = arith.select %31, %52, %53 : vector<64x128xi1>, vector<64x128xf32>
    %55 = arith.maximumf %51, %54 : vector<64x128xf32>
    %c17 = arith.constant 17 : index
    %c0_27 = arith.constant 0 : index
    %56 = vector.load %arg23[%c17, %c0_27] : memref<88x128xf32, #tpu.memory_space<vmem>>, vector<64x128xf32>
    %57 = arith.maximumf %55, %56 : vector<64x128xf32>
    %c18 = arith.constant 18 : index
    %c0_28 = arith.constant 0 : index
    %58 = vector.load %arg23[%c18, %c0_28] : memref<88x128xf32, #tpu.memory_space<vmem>>, vector<64x128xf32>
    %cst_29 = arith.constant 0.000000e+00 : f32
    %59 = vector.broadcast %cst_29 : f32 to vector<64x128xf32>
    %60 = arith.select %33, %58, %59 : vector<64x128xi1>, vector<64x128xf32>
    %61 = arith.maximumf %57, %60 : vector<64x128xf32>
    %c0_30 = arith.constant 0 : index
    %c0_31 = arith.constant 0 : index
    %62 = vector.load %arg23[%c0_30, %c0_31] : memref<88x128xf32, #tpu.memory_space<vmem>>, vector<64x128xf32>
    tpu.vector_store %arg23[%c0_30, %c0_31], %61 {strides = array<i32>} : memref<88x128xf32, #tpu.memory_space<vmem>>, vector<64x128xf32>,
    %c0_32 = arith.constant 0 : index
    %c0_33 = arith.constant 0 : index
    %63 = tpu.strided_load %arg23[%c0_32, %c0_33] {strides = array<i32: 2, 1>} : memref<88x128xf32, #tpu.memory_space<vmem>>, vector<4x128xf32>
    %c0_34 = arith.constant 0 : index
    %c0_35 = arith.constant 0 : index
    %64 = vector.load %arg24[%c0_34, %c0_35] : memref<16x128xf32, #tpu.memory_space<vmem>>, vector<4x128xf32>
    tpu.vector_store %arg24[%c0_34, %c0_35], %63 {strides = array<i32>} : memref<16x128xf32, #tpu.memory_space<vmem>>, vector<4x128xf32>,
    %c16_36 = arith.constant 16 : index
    %c0_37 = arith.constant 0 : index
    %65 = tpu.strided_load %arg23[%c16_36, %c0_37] {strides = array<i32: 2, 1>} : memref<88x128xf32, #tpu.memory_space<vmem>>, vector<4x128xf32>
    %c4 = arith.constant 4 : index
    %c0_38 = arith.constant 0 : index
    %66 = vector.load %arg24[%c4, %c0_38] : memref<16x128xf32, #tpu.memory_space<vmem>>, vector<4x128xf32>
    tpu.vector_store %arg24[%c4, %c0_38], %65 {strides = array<i32>} : memref<16x128xf32, #tpu.memory_space<vmem>>, vector<4x128xf32>,
    %c32 = arith.constant 32 : index
    %c0_39 = arith.constant 0 : index
    %67 = tpu.strided_load %arg23[%c32, %c0_39] {strides = array<i32: 2, 1>} : memref<88x128xf32, #tpu.memory_space<vmem>>, vector<4x128xf32>
    %c8_40 = arith.constant 8 : index
    %c0_41 = arith.constant 0 : index
    %68 = vector.load %arg24[%c8_40, %c0_41] : memref<16x128xf32, #tpu.memory_space<vmem>>, vector<4x128xf32>
    tpu.vector_store %arg24[%c8_40, %c0_41], %67 {strides = array<i32>} : memref<16x128xf32, #tpu.memory_space<vmem>>, vector<4x128xf32>,
    %c48 = arith.constant 48 : index
    %c0_42 = arith.constant 0 : index
    %69 = tpu.strided_load %arg23[%c48, %c0_42] {strides = array<i32: 2, 1>} : memref<88x128xf32, #tpu.memory_space<vmem>>, vector<4x128xf32>
    %c12 = arith.constant 12 : index
    %c0_43 = arith.constant 0 : index
    %70 = vector.load %arg24[%c12, %c0_43] : memref<16x128xf32, #tpu.memory_space<vmem>>, vector<4x128xf32>
    tpu.vector_store %arg24[%c12, %c0_43], %69 {strides = array<i32>} : memref<16x128xf32, #tpu.memory_space<vmem>>, vector<4x128xf32>,
    %c0_44 = arith.constant 0 : index
    %c0_45 = arith.constant 0 : index
    %71 = vector.load %arg24[%c0_44, %c0_45] : memref<16x128xf32, #tpu.memory_space<vmem>>, vector<16x128xf32>
    %cst_46 = arith.constant 0.000000e+00 : f32
    %72 = vector.broadcast %cst_46 : f32 to vector<26x128xf32>
    %c0_47 = arith.constant 0 : index
    %c0_48 = arith.constant 0 : index
    %73 = vector.load %arg23[%c0_47, %c0_48] : memref<88x128xf32, #tpu.memory_space<vmem>>, vector<26x128xf32>
    tpu.vector_store %arg23[%c0_47, %c0_48], %72 {strides = array<i32>} : memref<88x128xf32, #tpu.memory_space<vmem>>, vector<26x128xf32>,
    %c5 = arith.constant 5 : index
    %c0_49 = arith.constant 0 : index
    %74 = vector.load %arg23[%c5, %c0_49] : memref<88x128xf32, #tpu.memory_space<vmem>>, vector<16x128xf32>
    tpu.vector_store %arg23[%c5, %c0_49], %71 {strides = array<i32>} : memref<88x128xf32, #tpu.memory_space<vmem>>, vector<16x128xf32>,
    %75 = tpu.iota {dimensions = array<i32: 0>} : vector<16x128xi32>
    %c4_i32 = arith.constant 4 : i32
    %c0_i32_50 = arith.constant 0 : i32
    %76 = arith.cmpi eq, %c4_i32, %c0_i32_50 : i32
    %c1_i32_51 = arith.constant 1 : i32
    %77 = arith.select %76, %c1_i32_51, %c4_i32 : i32
    %78 = vector.broadcast %77 : i32 to vector<16x128xi32>
    %79 = arith.remsi %75, %78 : vector<16x128xi32>
    %c0_i32_52 = arith.constant 0 : i32
    %80 = vector.broadcast %c0_i32_52 : i32 to vector<16x128xi32>
    %81 = arith.cmpi ne, %79, %80 : vector<16x128xi32>
    %c0_i32_53 = arith.constant 0 : i32
    %82 = vector.broadcast %c0_i32_53 : i32 to vector<16x128xi32>
    %83 = arith.cmpi slt, %79, %82 : vector<16x128xi32>
    %c0_i32_54 = arith.constant 0 : i32
    %84 = arith.cmpi slt, %77, %c0_i32_54 : i32
    %85 = vector.broadcast %84 : i1 to vector<16x128xi1>
    %86 = vector.broadcast %85 : vector<16x128xi1> to vector<16x128xi1>
    %87 = arith.xori %83, %86 : vector<16x128xi1>
    %88 = arith.andi %87, %81 : vector<16x128xi1>
    %89 = vector.broadcast %77 : i32 to vector<16x128xi32>
    %90 = arith.addi %79, %89 : vector<16x128xi32>
    %91 = arith.select %88, %90, %79 : vector<16x128xi1>, vector<16x128xi32>
    %c1_i32_55 = arith.constant 1 : i32
    %92 = vector.broadcast %c1_i32_55 : i32 to vector<16x128xi32>
    %93 = arith.cmpi sge, %91, %92 : vector<16x128xi32>
    %c2_i32 = arith.constant 2 : i32
    %94 = vector.broadcast %c2_i32 : i32 to vector<16x128xi32>
    %95 = arith.cmpi sle, %91, %94 : vector<16x128xi32>
    %c0_56 = arith.constant 0 : index
    %c0_57 = arith.constant 0 : index
    %96 = vector.load %arg23[%c0_56, %c0_57] : memref<88x128xf32, #tpu.memory_space<vmem>>, vector<16x128xf32>
    %cst_58 = arith.constant 0.000000e+00 : f32
    %97 = vector.broadcast %cst_58 : f32 to vector<16x128xf32>
    %98 = arith.select %93, %96, %97 : vector<16x128xi1>, vector<16x128xf32>
    %99 = arith.truncf %98 : vector<16x128xf32> to vector<16x128xbf16>
    %c1_59 = arith.constant 1 : index
    %c0_60 = arith.constant 0 : index
    %100 = vector.load %arg23[%c1_59, %c0_60] : memref<88x128xf32, #tpu.memory_space<vmem>>, vector<16x128xf32>
    %101 = arith.truncf %100 : vector<16x128xf32> to vector<16x128xbf16>
    %c2_61 = arith.constant 2 : index
    %c0_62 = arith.constant 0 : index
    %102 = vector.load %arg23[%c2_61, %c0_62] : memref<88x128xf32, #tpu.memory_space<vmem>>, vector<16x128xf32>
    %cst_63 = arith.constant 0.000000e+00 : f32
    %103 = vector.broadcast %cst_63 : f32 to vector<16x128xf32>
    %104 = arith.select %95, %102, %103 : vector<16x128xi1>, vector<16x128xf32>
    %105 = arith.truncf %104 : vector<16x128xf32> to vector<16x128xbf16>
    %c4_64 = arith.constant 4 : index
    %c0_65 = arith.constant 0 : index
    %106 = vector.load %arg23[%c4_64, %c0_65] : memref<88x128xf32, #tpu.memory_space<vmem>>, vector<16x128xf32>
    %cst_66 = arith.constant 0.000000e+00 : f32
    %107 = vector.broadcast %cst_66 : f32 to vector<16x128xf32>
    %108 = arith.select %93, %106, %107 : vector<16x128xi1>, vector<16x128xf32>
    %109 = arith.truncf %108 : vector<16x128xf32> to vector<16x128xbf16>
    %c5_67 = arith.constant 5 : index
    %c0_68 = arith.constant 0 : index
    %110 = vector.load %arg23[%c5_67, %c0_68] : memref<88x128xf32, #tpu.memory_space<vmem>>, vector<16x128xf32>
    %111 = arith.truncf %110 : vector<16x128xf32> to vector<16x128xbf16>
    %c6 = arith.constant 6 : index
    %c0_69 = arith.constant 0 : index
    %112 = vector.load %arg23[%c6, %c0_69] : memref<88x128xf32, #tpu.memory_space<vmem>>, vector<16x128xf32>
    %cst_70 = arith.constant 0.000000e+00 : f32
    %113 = vector.broadcast %cst_70 : f32 to vector<16x128xf32>
    %114 = arith.select %95, %112, %113 : vector<16x128xi1>, vector<16x128xf32>
    %115 = arith.truncf %114 : vector<16x128xf32> to vector<16x128xbf16>
    %c8_71 = arith.constant 8 : index
    %c0_72 = arith.constant 0 : index
    %116 = vector.load %arg23[%c8_71, %c0_72] : memref<88x128xf32, #tpu.memory_space<vmem>>, vector<16x128xf32>
    %cst_73 = arith.constant 0.000000e+00 : f32
    %117 = vector.broadcast %cst_73 : f32 to vector<16x128xf32>
    %118 = arith.select %93, %116, %117 : vector<16x128xi1>, vector<16x128xf32>
    %119 = arith.truncf %118 : vector<16x128xf32> to vector<16x128xbf16>
    %c9_74 = arith.constant 9 : index
    %c0_75 = arith.constant 0 : index
    %120 = vector.load %arg23[%c9_74, %c0_75] : memref<88x128xf32, #tpu.memory_space<vmem>>, vector<16x128xf32>
    %121 = arith.truncf %120 : vector<16x128xf32> to vector<16x128xbf16>
    %c10_76 = arith.constant 10 : index
    %c0_77 = arith.constant 0 : index
    %122 = vector.load %arg23[%c10_76, %c0_77] : memref<88x128xf32, #tpu.memory_space<vmem>>, vector<16x128xf32>
    %cst_78 = arith.constant 0.000000e+00 : f32
    %123 = vector.broadcast %cst_78 : f32 to vector<16x128xf32>
    %124 = arith.select %95, %122, %123 : vector<16x128xi1>, vector<16x128xf32>
    %125 = arith.truncf %124 : vector<16x128xf32> to vector<16x128xbf16>
    %126 = tpu.concatenate %99, %101, %105, %109, %111, %115, %119, %121, %125 in 1 : vector<16x128xbf16>, vector<16x128xbf16>, vector<16x128xbf16>, vector<16x128xbf16>, vector<16x128xbf16>, vector<16x128xbf16>, vector<16x128xbf16>, vector<16x128xbf16>, vector<16x128xbf16> -> vector<16x1152xbf16>
    %c0_79 = arith.constant 0 : index
    %c0_80 = arith.constant 0 : index
    %127 = vector.load %arg4[%c0_79, %c0_80] : memref<1152x128xbf16, #tpu.memory_space<vmem>>, vector<1152x128xbf16>
    %cst_81 = arith.constant dense<0.000000e+00> : vector<16x128xf32>
    %128 = tpu.matmul %126, %127, %cst_81 {dimension_numbers = #tpu.dot_dimension_numbers<[1], [0], [0], [1], [0, 0, 1, 1], [], []>} : vector<16x1152xbf16>, vector<1152x128xbf16>, vector<16x128xf32> -> vector<16x128xf32>
    %c0_82 = arith.constant 0 : index
    %c0_83 = arith.constant 0 : index
    %129 = vector.load %arg13[%c0_82, %c0_83] : memref<1x128xf32, #tpu.memory_space<vmem>>, vector<1x128xf32>
    %130 = vector.broadcast %129 : vector<1x128xf32> to vector<16x128xf32>
    %131 = arith.addf %128, %130 : vector<16x128xf32>
    %cst_84 = arith.constant 0.000000e+00 : f32
    %132 = vector.broadcast %cst_84 : f32 to vector<16x128xf32>
    %133 = arith.maximumf %131, %132 : vector<16x128xf32>
    %cst_85 = arith.constant 0.000000e+00 : f32
    %134 = vector.broadcast %cst_85 : f32 to vector<26x128xf32>
    %c0_86 = arith.constant 0 : index
    %c0_87 = arith.constant 0 : index
    %135 = vector.load %arg23[%c0_86, %c0_87] : memref<88x128xf32, #tpu.memory_space<vmem>>, vector<26x128xf32>
    tpu.vector_store %arg23[%c0_86, %c0_87], %134 {strides = array<i32>} : memref<88x128xf32, #tpu.memory_space<vmem>>, vector<26x128xf32>,
    %c5_88 = arith.constant 5 : index
    %c0_89 = arith.constant 0 : index
    %136 = vector.load %arg23[%c5_88, %c0_89] : memref<88x128xf32, #tpu.memory_space<vmem>>, vector<16x128xf32>
    tpu.vector_store %arg23[%c5_88, %c0_89], %133 {strides = array<i32>} : memref<88x128xf32, #tpu.memory_space<vmem>>, vector<16x128xf32>,
    %137 = tpu.iota {dimensions = array<i32: 0>} : vector<16x128xi32>
    %c4_i32_90 = arith.constant 4 : i32
    %c0_i32_91 = arith.constant 0 : i32
    %138 = arith.cmpi eq, %c4_i32_90, %c0_i32_91 : i32
    %c1_i32_92 = arith.constant 1 : i32
    %139 = arith.select %138, %c1_i32_92, %c4_i32_90 : i32
    %140 = vector.broadcast %139 : i32 to vector<16x128xi32>
    %141 = arith.remsi %137, %140 : vector<16x128xi32>
    %c0_i32_93 = arith.constant 0 : i32
    %142 = vector.broadcast %c0_i32_93 : i32 to vector<16x128xi32>
    %143 = arith.cmpi ne, %141, %142 : vector<16x128xi32>
    %c0_i32_94 = arith.constant 0 : i32
    %144 = vector.broadcast %c0_i32_94 : i32 to vector<16x128xi32>
    %145 = arith.cmpi slt, %141, %144 : vector<16x128xi32>
    %c0_i32_95 = arith.constant 0 : i32
    %146 = arith.cmpi slt, %139, %c0_i32_95 : i32
    %147 = vector.broadcast %146 : i1 to vector<16x128xi1>
    %148 = vector.broadcast %147 : vector<16x128xi1> to vector<16x128xi1>
    %149 = arith.xori %145, %148 : vector<16x128xi1>
    %150 = arith.andi %149, %143 : vector<16x128xi1>
    %151 = vector.broadcast %139 : i32 to vector<16x128xi32>
    %152 = arith.addi %141, %151 : vector<16x128xi32>
    %153 = arith.select %150, %152, %141 : vector<16x128xi1>, vector<16x128xi32>
    %c1_i32_96 = arith.constant 1 : i32
    %154 = vector.broadcast %c1_i32_96 : i32 to vector<16x128xi32>
    %155 = arith.cmpi sge, %153, %154 : vector<16x128xi32>
    %c2_i32_97 = arith.constant 2 : i32
    %156 = vector.broadcast %c2_i32_97 : i32 to vector<16x128xi32>
    %157 = arith.cmpi sle, %153, %156 : vector<16x128xi32>
    %c0_98 = arith.constant 0 : index
    %c0_99 = arith.constant 0 : index
    %158 = vector.load %arg23[%c0_98, %c0_99] : memref<88x128xf32, #tpu.memory_space<vmem>>, vector<16x128xf32>
    %cst_100 = arith.constant 0.000000e+00 : f32
    %159 = vector.broadcast %cst_100 : f32 to vector<16x128xf32>
    %160 = arith.select %155, %158, %159 : vector<16x128xi1>, vector<16x128xf32>
    %161 = arith.truncf %160 : vector<16x128xf32> to vector<16x128xbf16>
    %c1_101 = arith.constant 1 : index
    %c0_102 = arith.constant 0 : index
    %162 = vector.load %arg23[%c1_101, %c0_102] : memref<88x128xf32, #tpu.memory_space<vmem>>, vector<16x128xf32>
    %163 = arith.truncf %162 : vector<16x128xf32> to vector<16x128xbf16>
    %c2_103 = arith.constant 2 : index
    %c0_104 = arith.constant 0 : index
    %164 = vector.load %arg23[%c2_103, %c0_104] : memref<88x128xf32, #tpu.memory_space<vmem>>, vector<16x128xf32>
    %cst_105 = arith.constant 0.000000e+00 : f32
    %165 = vector.broadcast %cst_105 : f32 to vector<16x128xf32>
    %166 = arith.select %157, %164, %165 : vector<16x128xi1>, vector<16x128xf32>
    %167 = arith.truncf %166 : vector<16x128xf32> to vector<16x128xbf16>
    %c4_106 = arith.constant 4 : index
    %c0_107 = arith.constant 0 : index
    %168 = vector.load %arg23[%c4_106, %c0_107] : memref<88x128xf32, #tpu.memory_space<vmem>>, vector<16x128xf32>
    %cst_108 = arith.constant 0.000000e+00 : f32
    %169 = vector.broadcast %cst_108 : f32 to vector<16x128xf32>
    %170 = arith.select %155, %168, %169 : vector<16x128xi1>, vector<16x128xf32>
    %171 = arith.truncf %170 : vector<16x128xf32> to vector<16x128xbf16>
    %c5_109 = arith.constant 5 : index
    %c0_110 = arith.constant 0 : index
    %172 = vector.load %arg23[%c5_109, %c0_110] : memref<88x128xf32, #tpu.memory_space<vmem>>, vector<16x128xf32>
    %173 = arith.truncf %172 : vector<16x128xf32> to vector<16x128xbf16>
    %c6_111 = arith.constant 6 : index
    %c0_112 = arith.constant 0 : index
    %174 = vector.load %arg23[%c6_111, %c0_112] : memref<88x128xf32, #tpu.memory_space<vmem>>, vector<16x128xf32>
    %cst_113 = arith.constant 0.000000e+00 : f32
    %175 = vector.broadcast %cst_113 : f32 to vector<16x128xf32>
    %176 = arith.select %157, %174, %175 : vector<16x128xi1>, vector<16x128xf32>
    %177 = arith.truncf %176 : vector<16x128xf32> to vector<16x128xbf16>
    %c8_114 = arith.constant 8 : index
    %c0_115 = arith.constant 0 : index
    %178 = vector.load %arg23[%c8_114, %c0_115] : memref<88x128xf32, #tpu.memory_space<vmem>>, vector<16x128xf32>
    %cst_116 = arith.constant 0.000000e+00 : f32
    %179 = vector.broadcast %cst_116 : f32 to vector<16x128xf32>
    %180 = arith.select %155, %178, %179 : vector<16x128xi1>, vector<16x128xf32>
    %181 = arith.truncf %180 : vector<16x128xf32> to vector<16x128xbf16>
    %c9_117 = arith.constant 9 : index
    %c0_118 = arith.constant 0 : index
    %182 = vector.load %arg23[%c9_117, %c0_118] : memref<88x128xf32, #tpu.memory_space<vmem>>, vector<16x128xf32>
    %183 = arith.truncf %182 : vector<16x128xf32> to vector<16x128xbf16>
    %c10_119 = arith.constant 10 : index
    %c0_120 = arith.constant 0 : index
    %184 = vector.load %arg23[%c10_119, %c0_120] : memref<88x128xf32, #tpu.memory_space<vmem>>, vector<16x128xf32>
    %cst_121 = arith.constant 0.000000e+00 : f32
    %185 = vector.broadcast %cst_121 : f32 to vector<16x128xf32>
    %186 = arith.select %157, %184, %185 : vector<16x128xi1>, vector<16x128xf32>
    %187 = arith.truncf %186 : vector<16x128xf32> to vector<16x128xbf16>
    %188 = tpu.concatenate %161, %163, %167, %171, %173, %177, %181, %183, %187 in 1 : vector<16x128xbf16>, vector<16x128xbf16>, vector<16x128xbf16>, vector<16x128xbf16>, vector<16x128xbf16>, vector<16x128xbf16>, vector<16x128xbf16>, vector<16x128xbf16>, vector<16x128xbf16> -> vector<16x1152xbf16>
    %c0_122 = arith.constant 0 : index
    %c0_123 = arith.constant 0 : index
    %189 = vector.load %arg5[%c0_122, %c0_123] : memref<1152x128xbf16, #tpu.memory_space<vmem>>, vector<1152x128xbf16>
    %cst_124 = arith.constant dense<0.000000e+00> : vector<16x128xf32>
    %190 = tpu.matmul %188, %189, %cst_124 {dimension_numbers = #tpu.dot_dimension_numbers<[1], [0], [0], [1], [0, 0, 1, 1], [], []>} : vector<16x1152xbf16>, vector<1152x128xbf16>, vector<16x128xf32> -> vector<16x128xf32>
    %c0_125 = arith.constant 0 : index
    %c0_126 = arith.constant 0 : index
    %191 = vector.load %arg14[%c0_125, %c0_126] : memref<1x128xf32, #tpu.memory_space<vmem>>, vector<1x128xf32>
    %192 = vector.broadcast %191 : vector<1x128xf32> to vector<16x128xf32>
    %193 = arith.addf %190, %192 : vector<16x128xf32>
    %194 = arith.addf %193, %71 : vector<16x128xf32>
    %cst_127 = arith.constant 0.000000e+00 : f32
    %195 = vector.broadcast %cst_127 : f32 to vector<16x128xf32>
    %196 = arith.maximumf %194, %195 : vector<16x128xf32>
    %cst_128 = arith.constant 0.000000e+00 : f32
    %197 = vector.broadcast %cst_128 : f32 to vector<26x128xf32>
    %c0_129 = arith.constant 0 : index
    %c0_130 = arith.constant 0 : index
    %198 = vector.load %arg23[%c0_129, %c0_130] : memref<88x128xf32, #tpu.memory_space<vmem>>, vector<26x128xf32>
    tpu.vector_store %arg23[%c0_129, %c0_130], %197 {strides = array<i32>} : memref<88x128xf32, #tpu.memory_space<vmem>>, vector<26x128xf32>,
    %c5_131 = arith.constant 5 : index
    %c0_132 = arith.constant 0 : index
    %199 = vector.load %arg23[%c5_131, %c0_132] : memref<88x128xf32, #tpu.memory_space<vmem>>, vector<16x128xf32>
    tpu.vector_store %arg23[%c5_131, %c0_132], %196 {strides = array<i32>} : memref<88x128xf32, #tpu.memory_space<vmem>>, vector<16x128xf32>,
    %200 = tpu.iota {dimensions = array<i32: 0>} : vector<16x128xi32>
    %c4_i32_133 = arith.constant 4 : i32
    %c0_i32_134 = arith.constant 0 : i32
    %201 = arith.cmpi eq, %c4_i32_133, %c0_i32_134 : i32
    %c1_i32_135 = arith.constant 1 : i32
    %202 = arith.select %201, %c1_i32_135, %c4_i32_133 : i32
    %203 = vector.broadcast %202 : i32 to vector<16x128xi32>
    %204 = arith.remsi %200, %203 : vector<16x128xi32>
    %c0_i32_136 = arith.constant 0 : i32
    %205 = vector.broadcast %c0_i32_136 : i32 to vector<16x128xi32>
    %206 = arith.cmpi ne, %204, %205 : vector<16x128xi32>
    %c0_i32_137 = arith.constant 0 : i32
    %207 = vector.broadcast %c0_i32_137 : i32 to vector<16x128xi32>
    %208 = arith.cmpi slt, %204, %207 : vector<16x128xi32>
    %c0_i32_138 = arith.constant 0 : i32
    %209 = arith.cmpi slt, %202, %c0_i32_138 : i32
    %210 = vector.broadcast %209 : i1 to vector<16x128xi1>
    %211 = vector.broadcast %210 : vector<16x128xi1> to vector<16x128xi1>
    %212 = arith.xori %208, %211 : vector<16x128xi1>
    %213 = arith.andi %212, %206 : vector<16x128xi1>
    %214 = vector.broadcast %202 : i32 to vector<16x128xi32>
    %215 = arith.addi %204, %214 : vector<16x128xi32>
    %216 = arith.select %213, %215, %204 : vector<16x128xi1>, vector<16x128xi32>
    %c1_i32_139 = arith.constant 1 : i32
    %217 = vector.broadcast %c1_i32_139 : i32 to vector<16x128xi32>
    %218 = arith.cmpi sge, %216, %217 : vector<16x128xi32>
    %c2_i32_140 = arith.constant 2 : i32
    %219 = vector.broadcast %c2_i32_140 : i32 to vector<16x128xi32>
    %220 = arith.cmpi sle, %216, %219 : vector<16x128xi32>
    %c0_141 = arith.constant 0 : index
    %c0_142 = arith.constant 0 : index
    %221 = vector.load %arg23[%c0_141, %c0_142] : memref<88x128xf32, #tpu.memory_space<vmem>>, vector<16x128xf32>
    %cst_143 = arith.constant 0.000000e+00 : f32
    %222 = vector.broadcast %cst_143 : f32 to vector<16x128xf32>
    %223 = arith.select %218, %221, %222 : vector<16x128xi1>, vector<16x128xf32>
    %224 = arith.truncf %223 : vector<16x128xf32> to vector<16x128xbf16>
    %c1_144 = arith.constant 1 : index
    %c0_145 = arith.constant 0 : index
    %225 = vector.load %arg23[%c1_144, %c0_145] : memref<88x128xf32, #tpu.memory_space<vmem>>, vector<16x128xf32>
    %226 = arith.truncf %225 : vector<16x128xf32> to vector<16x128xbf16>
    %c2_146 = arith.constant 2 : index
    %c0_147 = arith.constant 0 : index
    %227 = vector.load %arg23[%c2_146, %c0_147] : memref<88x128xf32, #tpu.memory_space<vmem>>, vector<16x128xf32>
    %cst_148 = arith.constant 0.000000e+00 : f32
    %228 = vector.broadcast %cst_148 : f32 to vector<16x128xf32>
    %229 = arith.select %220, %227, %228 : vector<16x128xi1>, vector<16x128xf32>
    %230 = arith.truncf %229 : vector<16x128xf32> to vector<16x128xbf16>
    %c4_149 = arith.constant 4 : index
    %c0_150 = arith.constant 0 : index
    %231 = vector.load %arg23[%c4_149, %c0_150] : memref<88x128xf32, #tpu.memory_space<vmem>>, vector<16x128xf32>
    %cst_151 = arith.constant 0.000000e+00 : f32
    %232 = vector.broadcast %cst_151 : f32 to vector<16x128xf32>
    %233 = arith.select %218, %231, %232 : vector<16x128xi1>, vector<16x128xf32>
    %234 = arith.truncf %233 : vector<16x128xf32> to vector<16x128xbf16>
    %c5_152 = arith.constant 5 : index
    %c0_153 = arith.constant 0 : index
    %235 = vector.load %arg23[%c5_152, %c0_153] : memref<88x128xf32, #tpu.memory_space<vmem>>, vector<16x128xf32>
    %236 = arith.truncf %235 : vector<16x128xf32> to vector<16x128xbf16>
    %c6_154 = arith.constant 6 : index
    %c0_155 = arith.constant 0 : index
    %237 = vector.load %arg23[%c6_154, %c0_155] : memref<88x128xf32, #tpu.memory_space<vmem>>, vector<16x128xf32>
    %cst_156 = arith.constant 0.000000e+00 : f32
    %238 = vector.broadcast %cst_156 : f32 to vector<16x128xf32>
    %239 = arith.select %220, %237, %238 : vector<16x128xi1>, vector<16x128xf32>
    %240 = arith.truncf %239 : vector<16x128xf32> to vector<16x128xbf16>
    %c8_157 = arith.constant 8 : index
    %c0_158 = arith.constant 0 : index
    %241 = vector.load %arg23[%c8_157, %c0_158] : memref<88x128xf32, #tpu.memory_space<vmem>>, vector<16x128xf32>
    %cst_159 = arith.constant 0.000000e+00 : f32
    %242 = vector.broadcast %cst_159 : f32 to vector<16x128xf32>
    %243 = arith.select %218, %241, %242 : vector<16x128xi1>, vector<16x128xf32>
    %244 = arith.truncf %243 : vector<16x128xf32> to vector<16x128xbf16>
    %c9_160 = arith.constant 9 : index
    %c0_161 = arith.constant 0 : index
    %245 = vector.load %arg23[%c9_160, %c0_161] : memref<88x128xf32, #tpu.memory_space<vmem>>, vector<16x128xf32>
    %246 = arith.truncf %245 : vector<16x128xf32> to vector<16x128xbf16>
    %c10_162 = arith.constant 10 : index
    %c0_163 = arith.constant 0 : index
    %247 = vector.load %arg23[%c10_162, %c0_163] : memref<88x128xf32, #tpu.memory_space<vmem>>, vector<16x128xf32>
    %cst_164 = arith.constant 0.000000e+00 : f32
    %248 = vector.broadcast %cst_164 : f32 to vector<16x128xf32>
    %249 = arith.select %220, %247, %248 : vector<16x128xi1>, vector<16x128xf32>
    %250 = arith.truncf %249 : vector<16x128xf32> to vector<16x128xbf16>
    %251 = tpu.concatenate %224, %226, %230, %234, %236, %240, %244, %246, %250 in 1 : vector<16x128xbf16>, vector<16x128xbf16>, vector<16x128xbf16>, vector<16x128xbf16>, vector<16x128xbf16>, vector<16x128xbf16>, vector<16x128xbf16>, vector<16x128xbf16>, vector<16x128xbf16> -> vector<16x1152xbf16>
    %c0_165 = arith.constant 0 : index
    %c0_166 = arith.constant 0 : index
    %252 = vector.load %arg6[%c0_165, %c0_166] : memref<1152x128xbf16, #tpu.memory_space<vmem>>, vector<1152x128xbf16>
    %cst_167 = arith.constant dense<0.000000e+00> : vector<16x128xf32>
    %253 = tpu.matmul %251, %252, %cst_167 {dimension_numbers = #tpu.dot_dimension_numbers<[1], [0], [0], [1], [0, 0, 1, 1], [], []>} : vector<16x1152xbf16>, vector<1152x128xbf16>, vector<16x128xf32> -> vector<16x128xf32>
    %c0_168 = arith.constant 0 : index
    %c0_169 = arith.constant 0 : index
    %254 = vector.load %arg15[%c0_168, %c0_169] : memref<1x128xf32, #tpu.memory_space<vmem>>, vector<1x128xf32>
    %255 = vector.broadcast %254 : vector<1x128xf32> to vector<16x128xf32>
    %256 = arith.addf %253, %255 : vector<16x128xf32>
    %cst_170 = arith.constant 0.000000e+00 : f32
    %257 = vector.broadcast %cst_170 : f32 to vector<16x128xf32>
    %258 = arith.maximumf %256, %257 : vector<16x128xf32>
    %cst_171 = arith.constant 0.000000e+00 : f32
    %259 = vector.broadcast %cst_171 : f32 to vector<26x128xf32>
    %c0_172 = arith.constant 0 : index
    %c0_173 = arith.constant 0 : index
    %260 = vector.load %arg23[%c0_172, %c0_173] : memref<88x128xf32, #tpu.memory_space<vmem>>, vector<26x128xf32>
    tpu.vector_store %arg23[%c0_172, %c0_173], %259 {strides = array<i32>} : memref<88x128xf32, #tpu.memory_space<vmem>>, vector<26x128xf32>,
    %c5_174 = arith.constant 5 : index
    %c0_175 = arith.constant 0 : index
    %261 = vector.load %arg23[%c5_174, %c0_175] : memref<88x128xf32, #tpu.memory_space<vmem>>, vector<16x128xf32>
    tpu.vector_store %arg23[%c5_174, %c0_175], %258 {strides = array<i32>} : memref<88x128xf32, #tpu.memory_space<vmem>>, vector<16x128xf32>,
    %262 = tpu.iota {dimensions = array<i32: 0>} : vector<16x128xi32>
    %c4_i32_176 = arith.constant 4 : i32
    %c0_i32_177 = arith.constant 0 : i32
    %263 = arith.cmpi eq, %c4_i32_176, %c0_i32_177 : i32
    %c1_i32_178 = arith.constant 1 : i32
    %264 = arith.select %263, %c1_i32_178, %c4_i32_176 : i32
    %265 = vector.broadcast %264 : i32 to vector<16x128xi32>
    %266 = arith.remsi %262, %265 : vector<16x128xi32>
    %c0_i32_179 = arith.constant 0 : i32
    %267 = vector.broadcast %c0_i32_179 : i32 to vector<16x128xi32>
    %268 = arith.cmpi ne, %266, %267 : vector<16x128xi32>
    %c0_i32_180 = arith.constant 0 : i32
    %269 = vector.broadcast %c0_i32_180 : i32 to vector<16x128xi32>
    %270 = arith.cmpi slt, %266, %269 : vector<16x128xi32>
    %c0_i32_181 = arith.constant 0 : i32
    %271 = arith.cmpi slt, %264, %c0_i32_181 : i32
    %272 = vector.broadcast %271 : i1 to vector<16x128xi1>
    %273 = vector.broadcast %272 : vector<16x128xi1> to vector<16x128xi1>
    %274 = arith.xori %270, %273 : vector<16x128xi1>
    %275 = arith.andi %274, %268 : vector<16x128xi1>
    %276 = vector.broadcast %264 : i32 to vector<16x128xi32>
    %277 = arith.addi %266, %276 : vector<16x128xi32>
    %278 = arith.select %275, %277, %266 : vector<16x128xi1>, vector<16x128xi32>
    %c1_i32_182 = arith.constant 1 : i32
    %279 = vector.broadcast %c1_i32_182 : i32 to vector<16x128xi32>
    %280 = arith.cmpi sge, %278, %279 : vector<16x128xi32>
    %c2_i32_183 = arith.constant 2 : i32
    %281 = vector.broadcast %c2_i32_183 : i32 to vector<16x128xi32>
    %282 = arith.cmpi sle, %278, %281 : vector<16x128xi32>
    %c0_184 = arith.constant 0 : index
    %c0_185 = arith.constant 0 : index
    %283 = vector.load %arg23[%c0_184, %c0_185] : memref<88x128xf32, #tpu.memory_space<vmem>>, vector<16x128xf32>
    %cst_186 = arith.constant 0.000000e+00 : f32
    %284 = vector.broadcast %cst_186 : f32 to vector<16x128xf32>
    %285 = arith.select %280, %283, %284 : vector<16x128xi1>, vector<16x128xf32>
    %286 = arith.truncf %285 : vector<16x128xf32> to vector<16x128xbf16>
    %c1_187 = arith.constant 1 : index
    %c0_188 = arith.constant 0 : index
    %287 = vector.load %arg23[%c1_187, %c0_188] : memref<88x128xf32, #tpu.memory_space<vmem>>, vector<16x128xf32>
    %288 = arith.truncf %287 : vector<16x128xf32> to vector<16x128xbf16>
    %c2_189 = arith.constant 2 : index
    %c0_190 = arith.constant 0 : index
    %289 = vector.load %arg23[%c2_189, %c0_190] : memref<88x128xf32, #tpu.memory_space<vmem>>, vector<16x128xf32>
    %cst_191 = arith.constant 0.000000e+00 : f32
    %290 = vector.broadcast %cst_191 : f32 to vector<16x128xf32>
    %291 = arith.select %282, %289, %290 : vector<16x128xi1>, vector<16x128xf32>
    %292 = arith.truncf %291 : vector<16x128xf32> to vector<16x128xbf16>
    %c4_192 = arith.constant 4 : index
    %c0_193 = arith.constant 0 : index
    %293 = vector.load %arg23[%c4_192, %c0_193] : memref<88x128xf32, #tpu.memory_space<vmem>>, vector<16x128xf32>
    %cst_194 = arith.constant 0.000000e+00 : f32
    %294 = vector.broadcast %cst_194 : f32 to vector<16x128xf32>
    %295 = arith.select %280, %293, %294 : vector<16x128xi1>, vector<16x128xf32>
    %296 = arith.truncf %295 : vector<16x128xf32> to vector<16x128xbf16>
    %c5_195 = arith.constant 5 : index
    %c0_196 = arith.constant 0 : index
    %297 = vector.load %arg23[%c5_195, %c0_196] : memref<88x128xf32, #tpu.memory_space<vmem>>, vector<16x128xf32>
    %298 = arith.truncf %297 : vector<16x128xf32> to vector<16x128xbf16>
    %c6_197 = arith.constant 6 : index
    %c0_198 = arith.constant 0 : index
    %299 = vector.load %arg23[%c6_197, %c0_198] : memref<88x128xf32, #tpu.memory_space<vmem>>, vector<16x128xf32>
    %cst_199 = arith.constant 0.000000e+00 : f32
    %300 = vector.broadcast %cst_199 : f32 to vector<16x128xf32>
    %301 = arith.select %282, %299, %300 : vector<16x128xi1>, vector<16x128xf32>
    %302 = arith.truncf %301 : vector<16x128xf32> to vector<16x128xbf16>
    %c8_200 = arith.constant 8 : index
    %c0_201 = arith.constant 0 : index
    %303 = vector.load %arg23[%c8_200, %c0_201] : memref<88x128xf32, #tpu.memory_space<vmem>>, vector<16x128xf32>
    %cst_202 = arith.constant 0.000000e+00 : f32
    %304 = vector.broadcast %cst_202 : f32 to vector<16x128xf32>
    %305 = arith.select %280, %303, %304 : vector<16x128xi1>, vector<16x128xf32>
    %306 = arith.truncf %305 : vector<16x128xf32> to vector<16x128xbf16>
    %c9_203 = arith.constant 9 : index
    %c0_204 = arith.constant 0 : index
    %307 = vector.load %arg23[%c9_203, %c0_204] : memref<88x128xf32, #tpu.memory_space<vmem>>, vector<16x128xf32>
    %308 = arith.truncf %307 : vector<16x128xf32> to vector<16x128xbf16>
    %c10_205 = arith.constant 10 : index
    %c0_206 = arith.constant 0 : index
    %309 = vector.load %arg23[%c10_205, %c0_206] : memref<88x128xf32, #tpu.memory_space<vmem>>, vector<16x128xf32>
    %cst_207 = arith.constant 0.000000e+00 : f32
    %310 = vector.broadcast %cst_207 : f32 to vector<16x128xf32>
    %311 = arith.select %282, %309, %310 : vector<16x128xi1>, vector<16x128xf32>
    %312 = arith.truncf %311 : vector<16x128xf32> to vector<16x128xbf16>
    %313 = tpu.concatenate %286, %288, %292, %296, %298, %302, %306, %308, %312 in 1 : vector<16x128xbf16>, vector<16x128xbf16>, vector<16x128xbf16>, vector<16x128xbf16>, vector<16x128xbf16>, vector<16x128xbf16>, vector<16x128xbf16>, vector<16x128xbf16>, vector<16x128xbf16> -> vector<16x1152xbf16>
    %c0_208 = arith.constant 0 : index
    %c0_209 = arith.constant 0 : index
    %314 = vector.load %arg7[%c0_208, %c0_209] : memref<1152x128xbf16, #tpu.memory_space<vmem>>, vector<1152x128xbf16>
    %cst_210 = arith.constant dense<0.000000e+00> : vector<16x128xf32>
    %315 = tpu.matmul %313, %314, %cst_210 {dimension_numbers = #tpu.dot_dimension_numbers<[1], [0], [0], [1], [0, 0, 1, 1], [], []>} : vector<16x1152xbf16>, vector<1152x128xbf16>, vector<16x128xf32> -> vector<16x128xf32>
    %c0_211 = arith.constant 0 : index
    %c0_212 = arith.constant 0 : index
    %316 = vector.load %arg16[%c0_211, %c0_212] : memref<1x128xf32, #tpu.memory_space<vmem>>, vector<1x128xf32>
    %317 = vector.broadcast %316 : vector<1x128xf32> to vector<16x128xf32>
    %318 = arith.addf %315, %317 : vector<16x128xf32>
    %319 = arith.addf %318, %196 : vector<16x128xf32>
    %cst_213 = arith.constant 0.000000e+00 : f32
    %320 = vector.broadcast %cst_213 : f32 to vector<16x128xf32>
    %321 = arith.maximumf %319, %320 : vector<16x128xf32>
    %cst_214 = arith.constant 0.000000e+00 : f32
    %322 = vector.broadcast %cst_214 : f32 to vector<26x128xf32>
    %c0_215 = arith.constant 0 : index
    %c0_216 = arith.constant 0 : index
    %323 = vector.load %arg23[%c0_215, %c0_216] : memref<88x128xf32, #tpu.memory_space<vmem>>, vector<26x128xf32>
    tpu.vector_store %arg23[%c0_215, %c0_216], %322 {strides = array<i32>} : memref<88x128xf32, #tpu.memory_space<vmem>>, vector<26x128xf32>,
    %c5_217 = arith.constant 5 : index
    %c0_218 = arith.constant 0 : index
    %324 = vector.load %arg23[%c5_217, %c0_218] : memref<88x128xf32, #tpu.memory_space<vmem>>, vector<16x128xf32>
    tpu.vector_store %arg23[%c5_217, %c0_218], %321 {strides = array<i32>} : memref<88x128xf32, #tpu.memory_space<vmem>>, vector<16x128xf32>,
    %325 = tpu.iota {dimensions = array<i32: 0>} : vector<16x128xi32>
    %c4_i32_219 = arith.constant 4 : i32
    %c0_i32_220 = arith.constant 0 : i32
    %326 = arith.cmpi eq, %c4_i32_219, %c0_i32_220 : i32
    %c1_i32_221 = arith.constant 1 : i32
    %327 = arith.select %326, %c1_i32_221, %c4_i32_219 : i32
    %328 = vector.broadcast %327 : i32 to vector<16x128xi32>
    %329 = arith.remsi %325, %328 : vector<16x128xi32>
    %c0_i32_222 = arith.constant 0 : i32
    %330 = vector.broadcast %c0_i32_222 : i32 to vector<16x128xi32>
    %331 = arith.cmpi ne, %329, %330 : vector<16x128xi32>
    %c0_i32_223 = arith.constant 0 : i32
    %332 = vector.broadcast %c0_i32_223 : i32 to vector<16x128xi32>
    %333 = arith.cmpi slt, %329, %332 : vector<16x128xi32>
    %c0_i32_224 = arith.constant 0 : i32
    %334 = arith.cmpi slt, %327, %c0_i32_224 : i32
    %335 = vector.broadcast %334 : i1 to vector<16x128xi1>
    %336 = vector.broadcast %335 : vector<16x128xi1> to vector<16x128xi1>
    %337 = arith.xori %333, %336 : vector<16x128xi1>
    %338 = arith.andi %337, %331 : vector<16x128xi1>
    %339 = vector.broadcast %327 : i32 to vector<16x128xi32>
    %340 = arith.addi %329, %339 : vector<16x128xi32>
    %341 = arith.select %338, %340, %329 : vector<16x128xi1>, vector<16x128xi32>
    %c1_i32_225 = arith.constant 1 : i32
    %342 = vector.broadcast %c1_i32_225 : i32 to vector<16x128xi32>
    %343 = arith.cmpi sge, %341, %342 : vector<16x128xi32>
    %c2_i32_226 = arith.constant 2 : i32
    %344 = vector.broadcast %c2_i32_226 : i32 to vector<16x128xi32>
    %345 = arith.cmpi sle, %341, %344 : vector<16x128xi32>
    %c0_227 = arith.constant 0 : index
    %c0_228 = arith.constant 0 : index
    %346 = vector.load %arg23[%c0_227, %c0_228] : memref<88x128xf32, #tpu.memory_space<vmem>>, vector<16x128xf32>
    %cst_229 = arith.constant 0.000000e+00 : f32
    %347 = vector.broadcast %cst_229 : f32 to vector<16x128xf32>
    %348 = arith.select %343, %346, %347 : vector<16x128xi1>, vector<16x128xf32>
    %349 = arith.truncf %348 : vector<16x128xf32> to vector<16x128xbf16>
    %c1_230 = arith.constant 1 : index
    %c0_231 = arith.constant 0 : index
    %350 = vector.load %arg23[%c1_230, %c0_231] : memref<88x128xf32, #tpu.memory_space<vmem>>, vector<16x128xf32>
    %351 = arith.truncf %350 : vector<16x128xf32> to vector<16x128xbf16>
    %c2_232 = arith.constant 2 : index
    %c0_233 = arith.constant 0 : index
    %352 = vector.load %arg23[%c2_232, %c0_233] : memref<88x128xf32, #tpu.memory_space<vmem>>, vector<16x128xf32>
    %cst_234 = arith.constant 0.000000e+00 : f32
    %353 = vector.broadcast %cst_234 : f32 to vector<16x128xf32>
    %354 = arith.select %345, %352, %353 : vector<16x128xi1>, vector<16x128xf32>
    %355 = arith.truncf %354 : vector<16x128xf32> to vector<16x128xbf16>
    %c4_235 = arith.constant 4 : index
    %c0_236 = arith.constant 0 : index
    %356 = vector.load %arg23[%c4_235, %c0_236] : memref<88x128xf32, #tpu.memory_space<vmem>>, vector<16x128xf32>
    %cst_237 = arith.constant 0.000000e+00 : f32
    %357 = vector.broadcast %cst_237 : f32 to vector<16x128xf32>
    %358 = arith.select %343, %356, %357 : vector<16x128xi1>, vector<16x128xf32>
    %359 = arith.truncf %358 : vector<16x128xf32> to vector<16x128xbf16>
    %c5_238 = arith.constant 5 : index
    %c0_239 = arith.constant 0 : index
    %360 = vector.load %arg23[%c5_238, %c0_239] : memref<88x128xf32, #tpu.memory_space<vmem>>, vector<16x128xf32>
    %361 = arith.truncf %360 : vector<16x128xf32> to vector<16x128xbf16>
    %c6_240 = arith.constant 6 : index
    %c0_241 = arith.constant 0 : index
    %362 = vector.load %arg23[%c6_240, %c0_241] : memref<88x128xf32, #tpu.memory_space<vmem>>, vector<16x128xf32>
    %cst_242 = arith.constant 0.000000e+00 : f32
    %363 = vector.broadcast %cst_242 : f32 to vector<16x128xf32>
    %364 = arith.select %345, %362, %363 : vector<16x128xi1>, vector<16x128xf32>
    %365 = arith.truncf %364 : vector<16x128xf32> to vector<16x128xbf16>
    %c8_243 = arith.constant 8 : index
    %c0_244 = arith.constant 0 : index
    %366 = vector.load %arg23[%c8_243, %c0_244] : memref<88x128xf32, #tpu.memory_space<vmem>>, vector<16x128xf32>
    %cst_245 = arith.constant 0.000000e+00 : f32
    %367 = vector.broadcast %cst_245 : f32 to vector<16x128xf32>
    %368 = arith.select %343, %366, %367 : vector<16x128xi1>, vector<16x128xf32>
    %369 = arith.truncf %368 : vector<16x128xf32> to vector<16x128xbf16>
    %c9_246 = arith.constant 9 : index
    %c0_247 = arith.constant 0 : index
    %370 = vector.load %arg23[%c9_246, %c0_247] : memref<88x128xf32, #tpu.memory_space<vmem>>, vector<16x128xf32>
    %371 = arith.truncf %370 : vector<16x128xf32> to vector<16x128xbf16>
    %c10_248 = arith.constant 10 : index
    %c0_249 = arith.constant 0 : index
    %372 = vector.load %arg23[%c10_248, %c0_249] : memref<88x128xf32, #tpu.memory_space<vmem>>, vector<16x128xf32>
    %cst_250 = arith.constant 0.000000e+00 : f32
    %373 = vector.broadcast %cst_250 : f32 to vector<16x128xf32>
    %374 = arith.select %345, %372, %373 : vector<16x128xi1>, vector<16x128xf32>
    %375 = arith.truncf %374 : vector<16x128xf32> to vector<16x128xbf16>
    %376 = tpu.concatenate %349, %351, %355, %359, %361, %365, %369, %371, %375 in 1 : vector<16x128xbf16>, vector<16x128xbf16>, vector<16x128xbf16>, vector<16x128xbf16>, vector<16x128xbf16>, vector<16x128xbf16>, vector<16x128xbf16>, vector<16x128xbf16>, vector<16x128xbf16> -> vector<16x1152xbf16>
    %c0_251 = arith.constant 0 : index
    %c0_252 = arith.constant 0 : index
    %377 = vector.load %arg8[%c0_251, %c0_252] : memref<1152x128xbf16, #tpu.memory_space<vmem>>, vector<1152x128xbf16>
    %cst_253 = arith.constant dense<0.000000e+00> : vector<16x128xf32>
    %378 = tpu.matmul %376, %377, %cst_253 {dimension_numbers = #tpu.dot_dimension_numbers<[1], [0], [0], [1], [0, 0, 1, 1], [], []>} : vector<16x1152xbf16>, vector<1152x128xbf16>, vector<16x128xf32> -> vector<16x128xf32>
    %c0_254 = arith.constant 0 : index
    %c0_255 = arith.constant 0 : index
    %379 = vector.load %arg17[%c0_254, %c0_255] : memref<1x128xf32, #tpu.memory_space<vmem>>, vector<1x128xf32>
    %380 = vector.broadcast %379 : vector<1x128xf32> to vector<16x128xf32>
    %381 = arith.addf %378, %380 : vector<16x128xf32>
    %cst_256 = arith.constant 0.000000e+00 : f32
    %382 = vector.broadcast %cst_256 : f32 to vector<16x128xf32>
    %383 = arith.maximumf %381, %382 : vector<16x128xf32>
    %c0_257 = arith.constant 0 : index
    %c0_258 = arith.constant 0 : index
    %384 = vector.load %arg23[%c0_257, %c0_258] : memref<88x128xf32, #tpu.memory_space<vmem>>, vector<16x128xf32>
    tpu.vector_store %arg23[%c0_257, %c0_258], %383 {strides = array<i32>} : memref<88x128xf32, #tpu.memory_space<vmem>>, vector<16x128xf32>,
    %c0_259 = arith.constant 0 : index
    %c0_260 = arith.constant 0 : index
    %385 = tpu.strided_load %arg23[%c0_259, %c0_260] {strides = array<i32: 2, 1>} : memref<88x128xf32, #tpu.memory_space<vmem>>, vector<2x128xf32>
    %c0_261 = arith.constant 0 : index
    %c0_262 = arith.constant 0 : index
    %386 = vector.load %arg24[%c0_261, %c0_262] : memref<16x128xf32, #tpu.memory_space<vmem>>, vector<2x128xf32>
    tpu.vector_store %arg24[%c0_261, %c0_262], %385 {strides = array<i32>} : memref<16x128xf32, #tpu.memory_space<vmem>>, vector<2x128xf32>,
    %c8_263 = arith.constant 8 : index
    %c0_264 = arith.constant 0 : index
    %387 = tpu.strided_load %arg23[%c8_263, %c0_264] {strides = array<i32: 2, 1>} : memref<88x128xf32, #tpu.memory_space<vmem>>, vector<2x128xf32>
    %c2_265 = arith.constant 2 : index
    %c0_266 = arith.constant 0 : index
    %388 = vector.load %arg24[%c2_265, %c0_266] : memref<16x128xf32, #tpu.memory_space<vmem>>, vector<2x128xf32>
    tpu.vector_store %arg24[%c2_265, %c0_266], %387 {strides = array<i32>} : memref<16x128xf32, #tpu.memory_space<vmem>>, vector<2x128xf32>,
    %c0_267 = arith.constant 0 : index
    %c0_268 = arith.constant 0 : index
    %389 = vector.load %arg24[%c0_267, %c0_268] : memref<16x128xf32, #tpu.memory_space<vmem>>, vector<4x128xf32>
    %cst_269 = arith.constant 0.000000e+00 : f32
    %390 = vector.broadcast %cst_269 : f32 to vector<10x128xf32>
    %c0_270 = arith.constant 0 : index
    %c0_271 = arith.constant 0 : index
    %391 = vector.load %arg23[%c0_270, %c0_271] : memref<88x128xf32, #tpu.memory_space<vmem>>, vector<10x128xf32>
    tpu.vector_store %arg23[%c0_270, %c0_271], %390 {strides = array<i32>} : memref<88x128xf32, #tpu.memory_space<vmem>>, vector<10x128xf32>,
    %c3 = arith.constant 3 : index
    %c0_272 = arith.constant 0 : index
    %392 = vector.load %arg23[%c3, %c0_272] : memref<88x128xf32, #tpu.memory_space<vmem>>, vector<4x128xf32>
    tpu.vector_store %arg23[%c3, %c0_272], %389 {strides = array<i32>} : memref<88x128xf32, #tpu.memory_space<vmem>>, vector<4x128xf32>,
    %393 = tpu.iota {dimensions = array<i32: 0>} : vector<4x128xi32>
    %c2_i32_273 = arith.constant 2 : i32
    %c0_i32_274 = arith.constant 0 : i32
    %394 = arith.cmpi eq, %c2_i32_273, %c0_i32_274 : i32
    %c1_i32_275 = arith.constant 1 : i32
    %395 = arith.select %394, %c1_i32_275, %c2_i32_273 : i32
    %396 = vector.broadcast %395 : i32 to vector<4x128xi32>
    %397 = arith.remsi %393, %396 : vector<4x128xi32>
    %c0_i32_276 = arith.constant 0 : i32
    %398 = vector.broadcast %c0_i32_276 : i32 to vector<4x128xi32>
    %399 = arith.cmpi ne, %397, %398 : vector<4x128xi32>
    %c0_i32_277 = arith.constant 0 : i32
    %400 = vector.broadcast %c0_i32_277 : i32 to vector<4x128xi32>
    %401 = arith.cmpi slt, %397, %400 : vector<4x128xi32>
    %c0_i32_278 = arith.constant 0 : i32
    %402 = arith.cmpi slt, %395, %c0_i32_278 : i32
    %403 = vector.broadcast %402 : i1 to vector<4x128xi1>
    %404 = vector.broadcast %403 : vector<4x128xi1> to vector<4x128xi1>
    %405 = arith.xori %401, %404 : vector<4x128xi1>
    %406 = arith.andi %405, %399 : vector<4x128xi1>
    %407 = vector.broadcast %395 : i32 to vector<4x128xi32>
    %408 = arith.addi %397, %407 : vector<4x128xi32>
    %409 = arith.select %406, %408, %397 : vector<4x128xi1>, vector<4x128xi32>
    %c1_i32_279 = arith.constant 1 : i32
    %410 = vector.broadcast %c1_i32_279 : i32 to vector<4x128xi32>
    %411 = arith.cmpi sge, %409, %410 : vector<4x128xi32>
    %c0_i32_280 = arith.constant 0 : i32
    %412 = vector.broadcast %c0_i32_280 : i32 to vector<4x128xi32>
    %413 = arith.cmpi sle, %409, %412 : vector<4x128xi32>
    %c0_281 = arith.constant 0 : index
    %c0_282 = arith.constant 0 : index
    %414 = vector.load %arg23[%c0_281, %c0_282] : memref<88x128xf32, #tpu.memory_space<vmem>>, vector<4x128xf32>
    %cst_283 = arith.constant 0.000000e+00 : f32
    %415 = vector.broadcast %cst_283 : f32 to vector<4x128xf32>
    %416 = arith.select %411, %414, %415 : vector<4x128xi1>, vector<4x128xf32>
    %417 = arith.truncf %416 : vector<4x128xf32> to vector<4x128xbf16>
    %c1_284 = arith.constant 1 : index
    %c0_285 = arith.constant 0 : index
    %418 = vector.load %arg23[%c1_284, %c0_285] : memref<88x128xf32, #tpu.memory_space<vmem>>, vector<4x128xf32>
    %419 = arith.truncf %418 : vector<4x128xf32> to vector<4x128xbf16>
    %c2_286 = arith.constant 2 : index
    %c0_287 = arith.constant 0 : index
    %420 = vector.load %arg23[%c2_286, %c0_287] : memref<88x128xf32, #tpu.memory_space<vmem>>, vector<4x128xf32>
    %cst_288 = arith.constant 0.000000e+00 : f32
    %421 = vector.broadcast %cst_288 : f32 to vector<4x128xf32>
    %422 = arith.select %413, %420, %421 : vector<4x128xi1>, vector<4x128xf32>
    %423 = arith.truncf %422 : vector<4x128xf32> to vector<4x128xbf16>
    %c2_289 = arith.constant 2 : index
    %c0_290 = arith.constant 0 : index
    %424 = vector.load %arg23[%c2_289, %c0_290] : memref<88x128xf32, #tpu.memory_space<vmem>>, vector<4x128xf32>
    %cst_291 = arith.constant 0.000000e+00 : f32
    %425 = vector.broadcast %cst_291 : f32 to vector<4x128xf32>
    %426 = arith.select %411, %424, %425 : vector<4x128xi1>, vector<4x128xf32>
    %427 = arith.truncf %426 : vector<4x128xf32> to vector<4x128xbf16>
    %c3_292 = arith.constant 3 : index
    %c0_293 = arith.constant 0 : index
    %428 = vector.load %arg23[%c3_292, %c0_293] : memref<88x128xf32, #tpu.memory_space<vmem>>, vector<4x128xf32>
    %429 = arith.truncf %428 : vector<4x128xf32> to vector<4x128xbf16>
    %c4_294 = arith.constant 4 : index
    %c0_295 = arith.constant 0 : index
    %430 = vector.load %arg23[%c4_294, %c0_295] : memref<88x128xf32, #tpu.memory_space<vmem>>, vector<4x128xf32>
    %cst_296 = arith.constant 0.000000e+00 : f32
    %431 = vector.broadcast %cst_296 : f32 to vector<4x128xf32>
    %432 = arith.select %413, %430, %431 : vector<4x128xi1>, vector<4x128xf32>
    %433 = arith.truncf %432 : vector<4x128xf32> to vector<4x128xbf16>
    %c4_297 = arith.constant 4 : index
    %c0_298 = arith.constant 0 : index
    %434 = vector.load %arg23[%c4_297, %c0_298] : memref<88x128xf32, #tpu.memory_space<vmem>>, vector<4x128xf32>
    %cst_299 = arith.constant 0.000000e+00 : f32
    %435 = vector.broadcast %cst_299 : f32 to vector<4x128xf32>
    %436 = arith.select %411, %434, %435 : vector<4x128xi1>, vector<4x128xf32>
    %437 = arith.truncf %436 : vector<4x128xf32> to vector<4x128xbf16>
    %c5_300 = arith.constant 5 : index
    %c0_301 = arith.constant 0 : index
    %438 = vector.load %arg23[%c5_300, %c0_301] : memref<88x128xf32, #tpu.memory_space<vmem>>, vector<4x128xf32>
    %439 = arith.truncf %438 : vector<4x128xf32> to vector<4x128xbf16>
    %c6_302 = arith.constant 6 : index
    %c0_303 = arith.constant 0 : index
    %440 = vector.load %arg23[%c6_302, %c0_303] : memref<88x128xf32, #tpu.memory_space<vmem>>, vector<4x128xf32>
    %cst_304 = arith.constant 0.000000e+00 : f32
    %441 = vector.broadcast %cst_304 : f32 to vector<4x128xf32>
    %442 = arith.select %413, %440, %441 : vector<4x128xi1>, vector<4x128xf32>
    %443 = arith.truncf %442 : vector<4x128xf32> to vector<4x128xbf16>
    %444 = tpu.concatenate %417, %419, %423, %427, %429, %433, %437, %439, %443 in 1 : vector<4x128xbf16>, vector<4x128xbf16>, vector<4x128xbf16>, vector<4x128xbf16>, vector<4x128xbf16>, vector<4x128xbf16>, vector<4x128xbf16>, vector<4x128xbf16>, vector<4x128xbf16> -> vector<4x1152xbf16>
    %c0_305 = arith.constant 0 : index
    %c0_306 = arith.constant 0 : index
    %445 = vector.load %arg9[%c0_305, %c0_306] : memref<1152x128xbf16, #tpu.memory_space<vmem>>, vector<1152x128xbf16>
    %cst_307 = arith.constant dense<0.000000e+00> : vector<4x128xf32>
    %446 = tpu.matmul %444, %445, %cst_307 {dimension_numbers = #tpu.dot_dimension_numbers<[1], [0], [0], [1], [0, 0, 1, 1], [], []>} : vector<4x1152xbf16>, vector<1152x128xbf16>, vector<4x128xf32> -> vector<4x128xf32>
    %c0_308 = arith.constant 0 : index
    %c0_309 = arith.constant 0 : index
    %447 = vector.load %arg18[%c0_308, %c0_309] : memref<1x128xf32, #tpu.memory_space<vmem>>, vector<1x128xf32>
    %448 = vector.broadcast %447 : vector<1x128xf32> to vector<4x128xf32>
    %449 = arith.addf %446, %448 : vector<4x128xf32>
    %c0_310 = arith.constant 0 : index
    %c0_311 = arith.constant 0 : index
    %450 = vector.load %arg23[%c0_310, %c0_311] : memref<88x128xf32, #tpu.memory_space<vmem>>, vector<16x128xf32>
    tpu.vector_store %arg23[%c0_310, %c0_311], %321 {strides = array<i32>} : memref<88x128xf32, #tpu.memory_space<vmem>>, vector<16x128xf32>,
    %c0_312 = arith.constant 0 : index
    %c0_313 = arith.constant 0 : index
    %451 = tpu.strided_load %arg23[%c0_312, %c0_313] {strides = array<i32: 2, 1>} : memref<88x128xf32, #tpu.memory_space<vmem>>, vector<2x128xf32>
    %c0_314 = arith.constant 0 : index
    %c0_315 = arith.constant 0 : index
    %452 = vector.load %arg24[%c0_314, %c0_315] : memref<16x128xf32, #tpu.memory_space<vmem>>, vector<2x128xf32>
    tpu.vector_store %arg24[%c0_314, %c0_315], %451 {strides = array<i32>} : memref<16x128xf32, #tpu.memory_space<vmem>>, vector<2x128xf32>,
    %c8_316 = arith.constant 8 : index
    %c0_317 = arith.constant 0 : index
    %453 = tpu.strided_load %arg23[%c8_316, %c0_317] {strides = array<i32: 2, 1>} : memref<88x128xf32, #tpu.memory_space<vmem>>, vector<2x128xf32>
    %c2_318 = arith.constant 2 : index
    %c0_319 = arith.constant 0 : index
    %454 = vector.load %arg24[%c2_318, %c0_319] : memref<16x128xf32, #tpu.memory_space<vmem>>, vector<2x128xf32>
    tpu.vector_store %arg24[%c2_318, %c0_319], %453 {strides = array<i32>} : memref<16x128xf32, #tpu.memory_space<vmem>>, vector<2x128xf32>,
    %c0_320 = arith.constant 0 : index
    %c0_321 = arith.constant 0 : index
    %455 = vector.load %arg24[%c0_320, %c0_321] : memref<16x128xf32, #tpu.memory_space<vmem>>, vector<4x128xf32>
    %456 = arith.truncf %455 : vector<4x128xf32> to vector<4x128xbf16>
    %c0_322 = arith.constant 0 : index
    %c0_323 = arith.constant 0 : index
    %457 = vector.load %arg10[%c0_322, %c0_323] : memref<128x128xbf16, #tpu.memory_space<vmem>>, vector<128x128xbf16>
    %cst_324 = arith.constant dense<0.000000e+00> : vector<4x128xf32>
    %458 = tpu.matmul %456, %457, %cst_324 {dimension_numbers = #tpu.dot_dimension_numbers<[1], [0], [0], [1], [0, 0, 1, 1], [], []>} : vector<4x128xbf16>, vector<128x128xbf16>, vector<4x128xf32> -> vector<4x128xf32>
    %c0_325 = arith.constant 0 : index
    %c0_326 = arith.constant 0 : index
    %459 = vector.load %arg19[%c0_325, %c0_326] : memref<1x128xf32, #tpu.memory_space<vmem>>, vector<1x128xf32>
    %460 = vector.broadcast %459 : vector<1x128xf32> to vector<4x128xf32>
    %461 = arith.addf %458, %460 : vector<4x128xf32>
    %462 = arith.addf %449, %461 : vector<4x128xf32>
    %cst_327 = arith.constant 0.000000e+00 : f32
    %463 = vector.broadcast %cst_327 : f32 to vector<4x128xf32>
    %464 = arith.maximumf %462, %463 : vector<4x128xf32>
    %cst_328 = arith.constant 0.000000e+00 : f32
    %465 = vector.broadcast %cst_328 : f32 to vector<10x128xf32>
    %c0_329 = arith.constant 0 : index
    %c0_330 = arith.constant 0 : index
    %466 = vector.load %arg23[%c0_329, %c0_330] : memref<88x128xf32, #tpu.memory_space<vmem>>, vector<10x128xf32>
    tpu.vector_store %arg23[%c0_329, %c0_330], %465 {strides = array<i32>} : memref<88x128xf32, #tpu.memory_space<vmem>>, vector<10x128xf32>,
    %c3_331 = arith.constant 3 : index
    %c0_332 = arith.constant 0 : index
    %467 = vector.load %arg23[%c3_331, %c0_332] : memref<88x128xf32, #tpu.memory_space<vmem>>, vector<4x128xf32>
    tpu.vector_store %arg23[%c3_331, %c0_332], %464 {strides = array<i32>} : memref<88x128xf32, #tpu.memory_space<vmem>>, vector<4x128xf32>,
    %468 = tpu.iota {dimensions = array<i32: 0>} : vector<4x128xi32>
    %c2_i32_333 = arith.constant 2 : i32
    %c0_i32_334 = arith.constant 0 : i32
    %469 = arith.cmpi eq, %c2_i32_333, %c0_i32_334 : i32
    %c1_i32_335 = arith.constant 1 : i32
    %470 = arith.select %469, %c1_i32_335, %c2_i32_333 : i32
    %471 = vector.broadcast %470 : i32 to vector<4x128xi32>
    %472 = arith.remsi %468, %471 : vector<4x128xi32>
    %c0_i32_336 = arith.constant 0 : i32
    %473 = vector.broadcast %c0_i32_336 : i32 to vector<4x128xi32>
    %474 = arith.cmpi ne, %472, %473 : vector<4x128xi32>
    %c0_i32_337 = arith.constant 0 : i32
    %475 = vector.broadcast %c0_i32_337 : i32 to vector<4x128xi32>
    %476 = arith.cmpi slt, %472, %475 : vector<4x128xi32>
    %c0_i32_338 = arith.constant 0 : i32
    %477 = arith.cmpi slt, %470, %c0_i32_338 : i32
    %478 = vector.broadcast %477 : i1 to vector<4x128xi1>
    %479 = vector.broadcast %478 : vector<4x128xi1> to vector<4x128xi1>
    %480 = arith.xori %476, %479 : vector<4x128xi1>
    %481 = arith.andi %480, %474 : vector<4x128xi1>
    %482 = vector.broadcast %470 : i32 to vector<4x128xi32>
    %483 = arith.addi %472, %482 : vector<4x128xi32>
    %484 = arith.select %481, %483, %472 : vector<4x128xi1>, vector<4x128xi32>
    %c1_i32_339 = arith.constant 1 : i32
    %485 = vector.broadcast %c1_i32_339 : i32 to vector<4x128xi32>
    %486 = arith.cmpi sge, %484, %485 : vector<4x128xi32>
    %c0_i32_340 = arith.constant 0 : i32
    %487 = vector.broadcast %c0_i32_340 : i32 to vector<4x128xi32>
    %488 = arith.cmpi sle, %484, %487 : vector<4x128xi32>
    %c0_341 = arith.constant 0 : index
    %c0_342 = arith.constant 0 : index
    %489 = vector.load %arg23[%c0_341, %c0_342] : memref<88x128xf32, #tpu.memory_space<vmem>>, vector<4x128xf32>
    %cst_343 = arith.constant 0.000000e+00 : f32
    %490 = vector.broadcast %cst_343 : f32 to vector<4x128xf32>
    %491 = arith.select %486, %489, %490 : vector<4x128xi1>, vector<4x128xf32>
    %492 = arith.truncf %491 : vector<4x128xf32> to vector<4x128xbf16>
    %c1_344 = arith.constant 1 : index
    %c0_345 = arith.constant 0 : index
    %493 = vector.load %arg23[%c1_344, %c0_345] : memref<88x128xf32, #tpu.memory_space<vmem>>, vector<4x128xf32>
    %494 = arith.truncf %493 : vector<4x128xf32> to vector<4x128xbf16>
    %c2_346 = arith.constant 2 : index
    %c0_347 = arith.constant 0 : index
    %495 = vector.load %arg23[%c2_346, %c0_347] : memref<88x128xf32, #tpu.memory_space<vmem>>, vector<4x128xf32>
    %cst_348 = arith.constant 0.000000e+00 : f32
    %496 = vector.broadcast %cst_348 : f32 to vector<4x128xf32>
    %497 = arith.select %488, %495, %496 : vector<4x128xi1>, vector<4x128xf32>
    %498 = arith.truncf %497 : vector<4x128xf32> to vector<4x128xbf16>
    %c2_349 = arith.constant 2 : index
    %c0_350 = arith.constant 0 : index
    %499 = vector.load %arg23[%c2_349, %c0_350] : memref<88x128xf32, #tpu.memory_space<vmem>>, vector<4x128xf32>
    %cst_351 = arith.constant 0.000000e+00 : f32
    %500 = vector.broadcast %cst_351 : f32 to vector<4x128xf32>
    %501 = arith.select %486, %499, %500 : vector<4x128xi1>, vector<4x128xf32>
    %502 = arith.truncf %501 : vector<4x128xf32> to vector<4x128xbf16>
    %c3_352 = arith.constant 3 : index
    %c0_353 = arith.constant 0 : index
    %503 = vector.load %arg23[%c3_352, %c0_353] : memref<88x128xf32, #tpu.memory_space<vmem>>, vector<4x128xf32>
    %504 = arith.truncf %503 : vector<4x128xf32> to vector<4x128xbf16>
    %c4_354 = arith.constant 4 : index
    %c0_355 = arith.constant 0 : index
    %505 = vector.load %arg23[%c4_354, %c0_355] : memref<88x128xf32, #tpu.memory_space<vmem>>, vector<4x128xf32>
    %cst_356 = arith.constant 0.000000e+00 : f32
    %506 = vector.broadcast %cst_356 : f32 to vector<4x128xf32>
    %507 = arith.select %488, %505, %506 : vector<4x128xi1>, vector<4x128xf32>
    %508 = arith.truncf %507 : vector<4x128xf32> to vector<4x128xbf16>
    %c4_357 = arith.constant 4 : index
    %c0_358 = arith.constant 0 : index
    %509 = vector.load %arg23[%c4_357, %c0_358] : memref<88x128xf32, #tpu.memory_space<vmem>>, vector<4x128xf32>
    %cst_359 = arith.constant 0.000000e+00 : f32
    %510 = vector.broadcast %cst_359 : f32 to vector<4x128xf32>
    %511 = arith.select %486, %509, %510 : vector<4x128xi1>, vector<4x128xf32>
    %512 = arith.truncf %511 : vector<4x128xf32> to vector<4x128xbf16>
    %c5_360 = arith.constant 5 : index
    %c0_361 = arith.constant 0 : index
    %513 = vector.load %arg23[%c5_360, %c0_361] : memref<88x128xf32, #tpu.memory_space<vmem>>, vector<4x128xf32>
    %514 = arith.truncf %513 : vector<4x128xf32> to vector<4x128xbf16>
    %c6_362 = arith.constant 6 : index
    %c0_363 = arith.constant 0 : index
    %515 = vector.load %arg23[%c6_362, %c0_363] : memref<88x128xf32, #tpu.memory_space<vmem>>, vector<4x128xf32>
    %cst_364 = arith.constant 0.000000e+00 : f32
    %516 = vector.broadcast %cst_364 : f32 to vector<4x128xf32>
    %517 = arith.select %488, %515, %516 : vector<4x128xi1>, vector<4x128xf32>
    %518 = arith.truncf %517 : vector<4x128xf32> to vector<4x128xbf16>
    %519 = tpu.concatenate %492, %494, %498, %502, %504, %508, %512, %514, %518 in 1 : vector<4x128xbf16>, vector<4x128xbf16>, vector<4x128xbf16>, vector<4x128xbf16>, vector<4x128xbf16>, vector<4x128xbf16>, vector<4x128xbf16>, vector<4x128xbf16>, vector<4x128xbf16> -> vector<4x1152xbf16>
    %c0_365 = arith.constant 0 : index
    %c0_366 = arith.constant 0 : index
    %520 = vector.load %arg11[%c0_365, %c0_366] : memref<1152x128xbf16, #tpu.memory_space<vmem>>, vector<1152x128xbf16>
    %cst_367 = arith.constant dense<0.000000e+00> : vector<4x128xf32>
    %521 = tpu.matmul %519, %520, %cst_367 {dimension_numbers = #tpu.dot_dimension_numbers<[1], [0], [0], [1], [0, 0, 1, 1], [], []>} : vector<4x1152xbf16>, vector<1152x128xbf16>, vector<4x128xf32> -> vector<4x128xf32>
    %c0_368 = arith.constant 0 : index
    %c0_369 = arith.constant 0 : index
    %522 = vector.load %arg20[%c0_368, %c0_369] : memref<1x128xf32, #tpu.memory_space<vmem>>, vector<1x128xf32>
    %523 = vector.broadcast %522 : vector<1x128xf32> to vector<4x128xf32>
    %524 = arith.addf %521, %523 : vector<4x128xf32>
    %cst_370 = arith.constant 0.000000e+00 : f32
    %525 = vector.broadcast %cst_370 : f32 to vector<4x128xf32>
    %526 = arith.maximumf %524, %525 : vector<4x128xf32>
    %cst_371 = arith.constant 0.000000e+00 : f32
    %527 = vector.broadcast %cst_371 : f32 to vector<10x128xf32>
    %c0_372 = arith.constant 0 : index
    %c0_373 = arith.constant 0 : index
    %528 = vector.load %arg23[%c0_372, %c0_373] : memref<88x128xf32, #tpu.memory_space<vmem>>, vector<10x128xf32>
    tpu.vector_store %arg23[%c0_372, %c0_373], %527 {strides = array<i32>} : memref<88x128xf32, #tpu.memory_space<vmem>>, vector<10x128xf32>,
    %c3_374 = arith.constant 3 : index
    %c0_375 = arith.constant 0 : index
    %529 = vector.load %arg23[%c3_374, %c0_375] : memref<88x128xf32, #tpu.memory_space<vmem>>, vector<4x128xf32>
    tpu.vector_store %arg23[%c3_374, %c0_375], %526 {strides = array<i32>} : memref<88x128xf32, #tpu.memory_space<vmem>>, vector<4x128xf32>,
    %530 = tpu.iota {dimensions = array<i32: 0>} : vector<4x128xi32>
    %c2_i32_376 = arith.constant 2 : i32
    %c0_i32_377 = arith.constant 0 : i32
    %531 = arith.cmpi eq, %c2_i32_376, %c0_i32_377 : i32
    %c1_i32_378 = arith.constant 1 : i32
    %532 = arith.select %531, %c1_i32_378, %c2_i32_376 : i32
    %533 = vector.broadcast %532 : i32 to vector<4x128xi32>
    %534 = arith.remsi %530, %533 : vector<4x128xi32>
    %c0_i32_379 = arith.constant 0 : i32
    %535 = vector.broadcast %c0_i32_379 : i32 to vector<4x128xi32>
    %536 = arith.cmpi ne, %534, %535 : vector<4x128xi32>
    %c0_i32_380 = arith.constant 0 : i32
    %537 = vector.broadcast %c0_i32_380 : i32 to vector<4x128xi32>
    %538 = arith.cmpi slt, %534, %537 : vector<4x128xi32>
    %c0_i32_381 = arith.constant 0 : i32
    %539 = arith.cmpi slt, %532, %c0_i32_381 : i32
    %540 = vector.broadcast %539 : i1 to vector<4x128xi1>
    %541 = vector.broadcast %540 : vector<4x128xi1> to vector<4x128xi1>
    %542 = arith.xori %538, %541 : vector<4x128xi1>
    %543 = arith.andi %542, %536 : vector<4x128xi1>
    %544 = vector.broadcast %532 : i32 to vector<4x128xi32>
    %545 = arith.addi %534, %544 : vector<4x128xi32>
    %546 = arith.select %543, %545, %534 : vector<4x128xi1>, vector<4x128xi32>
    %c1_i32_382 = arith.constant 1 : i32
    %547 = vector.broadcast %c1_i32_382 : i32 to vector<4x128xi32>
    %548 = arith.cmpi sge, %546, %547 : vector<4x128xi32>
    %c0_i32_383 = arith.constant 0 : i32
    %549 = vector.broadcast %c0_i32_383 : i32 to vector<4x128xi32>
    %550 = arith.cmpi sle, %546, %549 : vector<4x128xi32>
    %c0_384 = arith.constant 0 : index
    %c0_385 = arith.constant 0 : index
    %551 = vector.load %arg23[%c0_384, %c0_385] : memref<88x128xf32, #tpu.memory_space<vmem>>, vector<4x128xf32>
    %cst_386 = arith.constant 0.000000e+00 : f32
    %552 = vector.broadcast %cst_386 : f32 to vector<4x128xf32>
    %553 = arith.select %548, %551, %552 : vector<4x128xi1>, vector<4x128xf32>
    %554 = arith.truncf %553 : vector<4x128xf32> to vector<4x128xbf16>
    %c1_387 = arith.constant 1 : index
    %c0_388 = arith.constant 0 : index
    %555 = vector.load %arg23[%c1_387, %c0_388] : memref<88x128xf32, #tpu.memory_space<vmem>>, vector<4x128xf32>
    %556 = arith.truncf %555 : vector<4x128xf32> to vector<4x128xbf16>
    %c2_389 = arith.constant 2 : index
    %c0_390 = arith.constant 0 : index
    %557 = vector.load %arg23[%c2_389, %c0_390] : memref<88x128xf32, #tpu.memory_space<vmem>>, vector<4x128xf32>
    %cst_391 = arith.constant 0.000000e+00 : f32
    %558 = vector.broadcast %cst_391 : f32 to vector<4x128xf32>
    %559 = arith.select %550, %557, %558 : vector<4x128xi1>, vector<4x128xf32>
    %560 = arith.truncf %559 : vector<4x128xf32> to vector<4x128xbf16>
    %c2_392 = arith.constant 2 : index
    %c0_393 = arith.constant 0 : index
    %561 = vector.load %arg23[%c2_392, %c0_393] : memref<88x128xf32, #tpu.memory_space<vmem>>, vector<4x128xf32>
    %cst_394 = arith.constant 0.000000e+00 : f32
    %562 = vector.broadcast %cst_394 : f32 to vector<4x128xf32>
    %563 = arith.select %548, %561, %562 : vector<4x128xi1>, vector<4x128xf32>
    %564 = arith.truncf %563 : vector<4x128xf32> to vector<4x128xbf16>
    %c3_395 = arith.constant 3 : index
    %c0_396 = arith.constant 0 : index
    %565 = vector.load %arg23[%c3_395, %c0_396] : memref<88x128xf32, #tpu.memory_space<vmem>>, vector<4x128xf32>
    %566 = arith.truncf %565 : vector<4x128xf32> to vector<4x128xbf16>
    %c4_397 = arith.constant 4 : index
    %c0_398 = arith.constant 0 : index
    %567 = vector.load %arg23[%c4_397, %c0_398] : memref<88x128xf32, #tpu.memory_space<vmem>>, vector<4x128xf32>
    %cst_399 = arith.constant 0.000000e+00 : f32
    %568 = vector.broadcast %cst_399 : f32 to vector<4x128xf32>
    %569 = arith.select %550, %567, %568 : vector<4x128xi1>, vector<4x128xf32>
    %570 = arith.truncf %569 : vector<4x128xf32> to vector<4x128xbf16>
    %c4_400 = arith.constant 4 : index
    %c0_401 = arith.constant 0 : index
    %571 = vector.load %arg23[%c4_400, %c0_401] : memref<88x128xf32, #tpu.memory_space<vmem>>, vector<4x128xf32>
    %cst_402 = arith.constant 0.000000e+00 : f32
    %572 = vector.broadcast %cst_402 : f32 to vector<4x128xf32>
    %573 = arith.select %548, %571, %572 : vector<4x128xi1>, vector<4x128xf32>
    %574 = arith.truncf %573 : vector<4x128xf32> to vector<4x128xbf16>
    %c5_403 = arith.constant 5 : index
    %c0_404 = arith.constant 0 : index
    %575 = vector.load %arg23[%c5_403, %c0_404] : memref<88x128xf32, #tpu.memory_space<vmem>>, vector<4x128xf32>
    %576 = arith.truncf %575 : vector<4x128xf32> to vector<4x128xbf16>
    %c6_405 = arith.constant 6 : index
    %c0_406 = arith.constant 0 : index
    %577 = vector.load %arg23[%c6_405, %c0_406] : memref<88x128xf32, #tpu.memory_space<vmem>>, vector<4x128xf32>
    %cst_407 = arith.constant 0.000000e+00 : f32
    %578 = vector.broadcast %cst_407 : f32 to vector<4x128xf32>
    %579 = arith.select %550, %577, %578 : vector<4x128xi1>, vector<4x128xf32>
    %580 = arith.truncf %579 : vector<4x128xf32> to vector<4x128xbf16>
    %581 = tpu.concatenate %554, %556, %560, %564, %566, %570, %574, %576, %580 in 1 : vector<4x128xbf16>, vector<4x128xbf16>, vector<4x128xbf16>, vector<4x128xbf16>, vector<4x128xbf16>, vector<4x128xbf16>, vector<4x128xbf16>, vector<4x128xbf16>, vector<4x128xbf16> -> vector<4x1152xbf16>
    %c0_408 = arith.constant 0 : index
    %c0_409 = arith.constant 0 : index
    %582 = vector.load %arg12[%c0_408, %c0_409] : memref<1152x128xbf16, #tpu.memory_space<vmem>>, vector<1152x128xbf16>
    %cst_410 = arith.constant dense<0.000000e+00> : vector<4x128xf32>
    %583 = tpu.matmul %581, %582, %cst_410 {dimension_numbers = #tpu.dot_dimension_numbers<[1], [0], [0], [1], [0, 0, 1, 1], [], []>} : vector<4x1152xbf16>, vector<1152x128xbf16>, vector<4x128xf32> -> vector<4x128xf32>
    %c0_411 = arith.constant 0 : index
    %c0_412 = arith.constant 0 : index
    %584 = vector.load %arg21[%c0_411, %c0_412] : memref<1x128xf32, #tpu.memory_space<vmem>>, vector<1x128xf32>
    %585 = vector.broadcast %584 : vector<1x128xf32> to vector<4x128xf32>
    %586 = arith.addf %583, %585 : vector<4x128xf32>
    %587 = arith.addf %586, %464 : vector<4x128xf32>
    %cst_413 = arith.constant 0.000000e+00 : f32
    %588 = vector.broadcast %cst_413 : f32 to vector<4x128xf32>
    %589 = arith.maximumf %587, %588 : vector<4x128xf32>
    %cst_414 = arith.constant dense<0.000000e+00> : vector<128xf32>
    %590 = vector.multi_reduction <add>, %589, %cst_414 [0] : vector<4x128xf32> to vector<128xf32>
    %591 = vector.shape_cast %590 : vector<128xf32> to vector<1x128xf32>
    %cst_415 = arith.constant 4.000000e+00 : f32
    %592 = vector.broadcast %cst_415 : f32 to vector<1x128xf32>
    %593 = arith.divf %591, %592 : vector<1x128xf32>
    %c0_416 = arith.constant 0 : index
    %c0_417 = arith.constant 0 : index
    %c0_418 = arith.constant 0 : index
    %594 = vector.load %arg22[%c0_416, %c0_417, %c0_418] : memref<1x1x128xf32, #tpu.memory_space<vmem>>, vector<1x1x128xf32>
    %595 = vector.shape_cast %594 : vector<1x1x128xf32> to vector<1x128xf32>
    %596 = vector.shape_cast %593 : vector<1x128xf32> to vector<1x1x128xf32>
    tpu.vector_store %arg22[%c0_416, %c0_417, %c0_418], %596 {strides = array<i32>} : memref<1x1x128xf32, #tpu.memory_space<vmem>>, vector<1x1x128xf32>,
    return
  }
  func.func @transform_0(%arg0: i32) -> (i32, i32, i32) {
    %c0_i32 = arith.constant 0 : i32
    %c0_i32_0 = arith.constant 0 : i32
    %c0_i32_1 = arith.constant 0 : i32
    return %arg0, %c0_i32, %c0_i32_0 : i32, i32, i32
  }
  func.func @transform_1(%arg0: i32) -> (i32, i32) {
    %c0_i32 = arith.constant 0 : i32
    %c0_i32_0 = arith.constant 0 : i32
    %c0_i32_1 = arith.constant 0 : i32
    return %c0_i32, %c0_i32_0 : i32, i32
  }
  func.func @transform_2(%arg0: i32) -> (i32, i32) {
    %c0_i32 = arith.constant 0 : i32
    %c0_i32_0 = arith.constant 0 : i32
    %c0_i32_1 = arith.constant 0 : i32
    return %c0_i32, %c0_i32_0 : i32, i32
  }
  func.func @transform_3(%arg0: i32) -> (i32, i32) {
    %c0_i32 = arith.constant 0 : i32
    %c0_i32_0 = arith.constant 0 : i32
    %c0_i32_1 = arith.constant 0 : i32
    return %c0_i32, %c0_i32_0 : i32, i32
  }
  func.func @transform_4(%arg0: i32) -> (i32, i32) {
    %c0_i32 = arith.constant 0 : i32
    %c0_i32_0 = arith.constant 0 : i32
    %c0_i32_1 = arith.constant 0 : i32
    return %c0_i32, %c0_i32_0 : i32, i32
  }
  func.func @transform_5(%arg0: i32) -> (i32, i32) {
    %c0_i32 = arith.constant 0 : i32
    %c0_i32_0 = arith.constant 0 : i32
    %c0_i32_1 = arith.constant 0 : i32
    return %c0_i32, %c0_i32_0 : i32, i32
  }
  func.func @transform_6(%arg0: i32) -> (i32, i32) {
    %c0_i32 = arith.constant 0 : i32
    %c0_i32_0 = arith.constant 0 : i32
    %c0_i32_1 = arith.constant 0 : i32
    return %c0_i32, %c0_i32_0 : i32, i32
  }
  func.func @transform_7(%arg0: i32) -> (i32, i32) {
    %c0_i32 = arith.constant 0 : i32
    %c0_i32_0 = arith.constant 0 : i32
    %c0_i32_1 = arith.constant 0 : i32
    return %c0_i32, %c0_i32_0 : i32, i32
  }
  func.func @transform_8(%arg0: i32) -> (i32, i32) {
    %c0_i32 = arith.constant 0 : i32
    %c0_i32_0 = arith.constant 0 : i32
    %c0_i32_1 = arith.constant 0 : i32
    return %c0_i32, %c0_i32_0 : i32, i32
  }
  func.func @transform_9(%arg0: i32) -> (i32, i32) {
    %c0_i32 = arith.constant 0 : i32
    %c0_i32_0 = arith.constant 0 : i32
    %c0_i32_1 = arith.constant 0 : i32
    return %c0_i32, %c0_i32_0 : i32, i32
  }
  func.func @transform_10(%arg0: i32) -> (i32, i32) {
    %c0_i32 = arith.constant 0 : i32
    %c0_i32_0 = arith.constant 0 : i32
    %c0_i32_1 = arith.constant 0 : i32
    return %c0_i32, %c0_i32_0 : i32, i32
  }
  func.func @transform_11(%arg0: i32) -> (i32, i32) {
    %c0_i32 = arith.constant 0 : i32
    %c0_i32_0 = arith.constant 0 : i32
    %c0_i32_1 = arith.constant 0 : i32
    return %c0_i32, %c0_i32_0 : i32, i32
  }
  func.func @transform_12(%arg0: i32) -> (i32, i32) {
    %c0_i32 = arith.constant 0 : i32
    %c0_i32_0 = arith.constant 0 : i32
    %c0_i32_1 = arith.constant 0 : i32
    return %c0_i32, %c0_i32_0 : i32, i32
  }
  func.func @transform_13(%arg0: i32) -> (i32, i32) {
    %c0_i32 = arith.constant 0 : i32
    %c0_i32_0 = arith.constant 0 : i32
    %c0_i32_1 = arith.constant 0 : i32
    return %c0_i32, %c0_i32_0 : i32, i32
  }
  func.func @transform_14(%arg0: i32) -> (i32, i32) {
    %c0_i32 = arith.constant 0 : i32
    %c0_i32_0 = arith.constant 0 : i32
    %c0_i32_1 = arith.constant 0 : i32
    return %c0_i32, %c0_i32_0 : i32, i32
  }
  func.func @transform_15(%arg0: i32) -> (i32, i32) {
    %c0_i32 = arith.constant 0 : i32
    %c0_i32_0 = arith.constant 0 : i32
    %c0_i32_1 = arith.constant 0 : i32
    return %c0_i32, %c0_i32_0 : i32, i32
  }
  func.func @transform_16(%arg0: i32) -> (i32, i32) {
    %c0_i32 = arith.constant 0 : i32
    %c0_i32_0 = arith.constant 0 : i32
    %c0_i32_1 = arith.constant 0 : i32
    return %c0_i32, %c0_i32_0 : i32, i32
  }
  func.func @transform_17(%arg0: i32) -> (i32, i32) {
    %c0_i32 = arith.constant 0 : i32
    %c0_i32_0 = arith.constant 0 : i32
    %c0_i32_1 = arith.constant 0 : i32
    return %c0_i32, %c0_i32_0 : i32, i32
  }
  func.func @transform_18(%arg0: i32) -> (i32, i32) {
    %c0_i32 = arith.constant 0 : i32
    %c0_i32_0 = arith.constant 0 : i32
    %c0_i32_1 = arith.constant 0 : i32
    return %c0_i32, %c0_i32_0 : i32, i32
  }
  func.func @transform_19(%arg0: i32) -> (i32, i32) {
    %c0_i32 = arith.constant 0 : i32
    %c0_i32_0 = arith.constant 0 : i32
    %c0_i32_1 = arith.constant 0 : i32
    return %c0_i32, %c0_i32_0 : i32, i32
  }
  func.func @transform_20(%arg0: i32) -> (i32, i32) {
    %c0_i32 = arith.constant 0 : i32
    %c0_i32_0 = arith.constant 0 : i32
    %c0_i32_1 = arith.constant 0 : i32
    return %c0_i32, %c0_i32_0 : i32, i32
  }
  func.func @transform_21(%arg0: i32) -> (i32, i32, i32) {
    %c0_i32 = arith.constant 0 : i32
    %c0_i32_0 = arith.constant 0 : i32
    %c0_i32_1 = arith.constant 0 : i32
    return %arg0, %c0_i32, %c0_i32_0 : i32, i32, i32
  }
}

</mosaic_0001>

<llo_original>
// kernel: _lambda_.1
$region0: #{_lambda_.1}
  #allocation0 [shape = 'u32[]', space=smem, size = 0x4, offset = 0x4, fixed_abs, tag = 'smem constant byte address 0x4 - core index']
  #allocation1 [shape = 'u32[144,128]{1,0:T(1,128)}', space=vmem, size = 0x12000, scoped, tag = 'internal scratch']
  #allocation2 [shape = 'f32[88,128]{1,0:T(8,128)}', space=vmem, size = 0xb000, scoped, tag = 'scratch operand']
  #allocation3 [shape = 'f32[16,128]{1,0:T(8,128)}', space=vmem, size = 0x2000, scoped, tag = 'scratch operand']
  %s0 = inlined_call_operand.vmem [shape: f32[2,64,256], index: 0, kind: input, shape index: {}]
  %s1 = inlined_call_operand.vmem [shape: bf16[256,128], index: 1, kind: input, shape index: {}]
  %s2 = inlined_call_operand.vmem [shape: f32[1,128], index: 2, kind: input, shape index: {}]
  %s3 = inlined_call_operand.vmem [shape: bf16[1152,128], index: 3, kind: input, shape index: {}]
  %s4 = inlined_call_operand.vmem [shape: bf16[1152,128], index: 4, kind: input, shape index: {}]
  %s5 = inlined_call_operand.vmem [shape: bf16[1152,128], index: 5, kind: input, shape index: {}]
  %s6 = inlined_call_operand.vmem [shape: bf16[1152,128], index: 6, kind: input, shape index: {}]
  %s7 = inlined_call_operand.vmem [shape: bf16[1152,128], index: 7, kind: input, shape index: {}]
  %s8 = inlined_call_operand.vmem [shape: bf16[1152,128], index: 8, kind: input, shape index: {}]
  %s9 = inlined_call_operand.vmem [shape: bf16[128,128], index: 9, kind: input, shape index: {}]
  %s10 = inlined_call_operand.vmem [shape: bf16[1152,128], index: 10, kind: input, shape index: {}]
  %s11 = inlined_call_operand.vmem [shape: bf16[1152,128], index: 11, kind: input, shape index: {}]
  %s12 = inlined_call_operand.vmem [shape: f32[1,128], index: 12, kind: input, shape index: {}]
  %s13 = inlined_call_operand.vmem [shape: f32[1,128], index: 13, kind: input, shape index: {}]
  %s14 = inlined_call_operand.vmem [shape: f32[1,128], index: 14, kind: input, shape index: {}]
  %s15 = inlined_call_operand.vmem [shape: f32[1,128], index: 15, kind: input, shape index: {}]
  %s16 = inlined_call_operand.vmem [shape: f32[1,128], index: 16, kind: input, shape index: {}]
  %s17 = inlined_call_operand.vmem [shape: f32[1,128], index: 17, kind: input, shape index: {}]
  %s18 = inlined_call_operand.vmem [shape: f32[1,128], index: 18, kind: input, shape index: {}]
  %s19 = inlined_call_operand.vmem [shape: f32[1,128], index: 19, kind: input, shape index: {}]
  %s20 = inlined_call_operand.vmem [shape: f32[1,128], index: 20, kind: input, shape index: {}]
  %s21 = inlined_call_operand.hbm [shape: f32[2,1,128], index: 21, kind: output, shape index: {}]
  %s22 = sld [smem:[#allocation0]]
  $region117: #{_lambda_.1} parent=0
    _
  %s24 = ssub.s32 1, %s22
  %s25 = scalar_select 0, %s24, %s22
  $region1: #{_lambda_.1} parent=0
    #allocation4 [shape = 'u8[1024]{0}', space=vmem, size = 0x400, scoped, tag = 'output window, operand 0']
    #allocation5 [shape = 's32[2]{0}', space=sflag, size = 0x8, scoped, tag = 'scoped memory for _lambda_.1']
    %26 = vsyncpa [#allocation5], 0
    %s27 = scalar_lea.sflag [#allocation5], 1
    %28 = vsyncpa %s27, 0
    loop: start=0, step=1, limit=4
    $region2: #{_lambda_.1} parent=1 // loop_pre_header
      _
    $region3: #{_lambda_.1} parent=1 // loop_header
      %s30 = sphi 0, %s34
      %p31 = scmp.ge.s32.totalorder %s30, 4
      %s40 = sphi 0, %s42
      %s43 = sphi 0, %s40
      %s44 = sphi 0, %s43
      %s60 = sphi 0, %s44
      %s64 = sphi 0, %s64
      %s66 = sphi 0, %s64
      %s67 = sphi 0, %s66
      %s81 = sphi 0, %s67
      %s85 = sphi 0, %s85
      %s87 = sphi 0, %s85
      %s88 = sphi 0, %s87
      %s102 = sphi 0, %s88
      %s106 = sphi 0, %s106
      %s108 = sphi 0, %s106
      %s109 = sphi 0, %s108
      %s123 = sphi 0, %s109
      %s127 = sphi 0, %s127
      %s129 = sphi 0, %s127
      %s130 = sphi 0, %s129
      %s144 = sphi 0, %s130
      %s148 = sphi 0, %s148
      %s150 = sphi 0, %s148
      %s151 = sphi 0, %s150
      %s165 = sphi 0, %s151
      %s169 = sphi 0, %s169
      %s171 = sphi 0, %s169
      %s172 = sphi 0, %s171
      %s186 = sphi 0, %s172
      %s190 = sphi 0, %s190
      %s192 = sphi 0, %s190
      %s193 = sphi 0, %s192
      %s207 = sphi 0, %s193
      %s211 = sphi 0, %s211
      %s213 = sphi 0, %s211
      %s214 = sphi 0, %s213
      %s228 = sphi 0, %s214
      %s232 = sphi 0, %s232
      %s234 = sphi 0, %s232
      %s235 = sphi 0, %s234
      %s249 = sphi 0, %s235
      %s253 = sphi 0, %s253
      %s255 = sphi 0, %s253
      %s256 = sphi 0, %s255
      %s270 = sphi 0, %s256
      %s274 = sphi 0, %s274
      %s276 = sphi 0, %s274
      %s277 = sphi 0, %s276
      %s291 = sphi 0, %s277
      %s295 = sphi 0, %s295
      %s297 = sphi 0, %s295
      %s298 = sphi 0, %s297
      %s312 = sphi 0, %s298
      %s316 = sphi 0, %s316
      %s318 = sphi 0, %s316
      %s319 = sphi 0, %s318
      %s333 = sphi 0, %s319
      %s337 = sphi 0, %s337
      %s339 = sphi 0, %s337
      %s340 = sphi 0, %s339
      %s354 = sphi 0, %s340
      %s358 = sphi 0, %s358
      %s360 = sphi 0, %s358
      %s361 = sphi 0, %s360
      %s375 = sphi 0, %s361
      %s379 = sphi 0, %s379
      %s381 = sphi 0, %s379
      %s382 = sphi 0, %s381
      %s396 = sphi 0, %s382
      %s400 = sphi 0, %s400
      %s402 = sphi 0, %s400
      %s403 = sphi 0, %s402
      %s417 = sphi 0, %s403
      %s421 = sphi 0, %s421
      %s423 = sphi 0, %s421
      %s424 = sphi 0, %s423
      %s438 = sphi 0, %s424
      %s442 = sphi 0, %s442
      %s444 = sphi 0, %s442
      %s445 = sphi 0, %s444
      %s459 = sphi 0, %s445
      %s463 = sphi 0, %s463
      %s465 = sphi 0, %s463
      %s466 = sphi 0, %s465
      %s480 = sphi 0, %s466
      %s486 = sphi 0, %s488
      %s489 = sphi 0, %s486
      %s490 = sphi 0, %s489
      %s506 = sphi 0, %s490
    $region4: #{_lambda_.1} parent=1 // loop_header_branch
      %33 = sbr.rel (%p31) target = $region8
    $region5: #{_lambda_.1} parent=1 // loop_body
      %s35 = ssub.s32 %s30, 1
      %s36 = ssub.s32 %s30, 2
      %s37 = sadd.s32 %s30, 1
      %s38 = ssub.s32 %s30, %s37
      %p39 = scmp.eq.s32.totalorder %s38, 0
      %s41 = sadd.s32 %s40, 1
      %s42 = scalar_select %p39, %s40, %s41
      %p45 = pneg %p39
      %p46 = scmp.eq.s32.totalorder %s30, 1
      %p47 = por %p45, %p46
      %p48 = scmp.ne.s32.totalorder %s40, %s43
      %p49 = scmp.eq.s32.totalorder %s30, 0
      %p50 = por %p48, %p49
      %p51 = scmp.ne.s32.totalorder %s40, %s43
      %p52 = scmp.eq.s32.totalorder %s35, 1
      %p53 = por %p51, %p52
      %p54 = scmp.ne.s32.totalorder %s43, %s44
      %p55 = scmp.eq.s32.totalorder %s35, 0
      %p56 = por %p54, %p55
      %p57 = scmp.ne.s32.totalorder %s43, %s44
      %p58 = scmp.eq.s32.totalorder %s36, 1
      %p59 = por %p57, %p58
      %p61 = scmp.ne.s32.totalorder %s44, %s60
      %p62 = scmp.eq.s32.totalorder %s36, 0
      %p63 = por %p61, %p62
      %s65 = sadd.s32 %s64, 1
      %p68 = scmp.eq.s32.totalorder %s30, 1
      %p69 = scmp.ne.s32.totalorder %s64, %s66
      %p70 = scmp.eq.s32.totalorder %s30, 0
      %p71 = por %p69, %p70
      %p72 = scmp.ne.s32.totalorder %s64, %s66
      %p73 = scmp.eq.s32.totalorder %s35, 1
      %p74 = por %p72, %p73
      %p75 = scmp.ne.s32.totalorder %s66, %s67
      %p76 = scmp.eq.s32.totalorder %s35, 0
      %p77 = por %p75, %p76
      %p78 = scmp.ne.s32.totalorder %s66, %s67
      %p79 = scmp.eq.s32.totalorder %s36, 1
      %p80 = por %p78, %p79
      %p82 = scmp.ne.s32.totalorder %s67, %s81
      %p83 = scmp.eq.s32.totalorder %s36, 0
      %p84 = por %p82, %p83
      %s86 = sadd.s32 %s85, 1
      %p89 = scmp.eq.s32.totalorder %s30, 1
      %p90 = scmp.ne.s32.totalorder %s85, %s87
      %p91 = scmp.eq.s32.totalorder %s30, 0
      %p92 = por %p90, %p91
      %p93 = scmp.ne.s32.totalorder %s85, %s87
      %p94 = scmp.eq.s32.totalorder %s35, 1
      %p95 = por %p93, %p94
      %p96 = scmp.ne.s32.totalorder %s87, %s88
      %p97 = scmp.eq.s32.totalorder %s35, 0
      %p98 = por %p96, %p97
      %p99 = scmp.ne.s32.totalorder %s87, %s88
      %p100 = scmp.eq.s32.totalorder %s36, 1
      %p101 = por %p99, %p100
      %p103 = scmp.ne.s32.totalorder %s88, %s102
      %p104 = scmp.eq.s32.totalorder %s36, 0
      %p105 = por %p103, %p104
      %s107 = sadd.s32 %s106, 1
      %p110 = scmp.eq.s32.totalorder %s30, 1
      %p111 = scmp.ne.s32.totalorder %s106, %s108
      %p112 = scmp.eq.s32.totalorder %s30, 0
      %p113 = por %p111, %p112
      %p114 = scmp.ne.s32.totalorder %s106, %s108
      %p115 = scmp.eq.s32.totalorder %s35, 1
      %p116 = por %p114, %p115
      %p117 = scmp.ne.s32.totalorder %s108, %s109
      %p118 = scmp.eq.s32.totalorder %s35, 0
      %p119 = por %p117, %p118
      %p120 = scmp.ne.s32.totalorder %s108, %s109
      %p121 = scmp.eq.s32.totalorder %s36, 1
      %p122 = por %p120, %p121
      %p124 = scmp.ne.s32.totalorder %s109, %s123
      %p125 = scmp.eq.s32.totalorder %s36, 0
      %p126 = por %p124, %p125
      %s128 = sadd.s32 %s127, 1
      %p131 = scmp.eq.s32.totalorder %s30, 1
      %p132 = scmp.ne.s32.totalorder %s127, %s129
      %p133 = scmp.eq.s32.totalorder %s30, 0
      %p134 = por %p132, %p133
      %p135 = scmp.ne.s32.totalorder %s127, %s129
      %p136 = scmp.eq.s32.totalorder %s35, 1
      %p137 = por %p135, %p136
      %p138 = scmp.ne.s32.totalorder %s129, %s130
      %p139 = scmp.eq.s32.totalorder %s35, 0
      %p140 = por %p138, %p139
      %p141 = scmp.ne.s32.totalorder %s129, %s130
      %p142 = scmp.eq.s32.totalorder %s36, 1
      %p143 = por %p141, %p142
      %p145 = scmp.ne.s32.totalorder %s130, %s144
      %p146 = scmp.eq.s32.totalorder %s36, 0
      %p147 = por %p145, %p146
      %s149 = sadd.s32 %s148, 1
      %p152 = scmp.eq.s32.totalorder %s30, 1
      %p153 = scmp.ne.s32.totalorder %s148, %s150
      %p154 = scmp.eq.s32.totalorder %s30, 0
      %p155 = por %p153, %p154
      %p156 = scmp.ne.s32.totalorder %s148, %s150
      %p157 = scmp.eq.s32.totalorder %s35, 1
      %p158 = por %p156, %p157
      %p159 = scmp.ne.s32.totalorder %s150, %s151
      %p160 = scmp.eq.s32.totalorder %s35, 0
      %p161 = por %p159, %p160
      %p162 = scmp.ne.s32.totalorder %s150, %s151
      %p163 = scmp.eq.s32.totalorder %s36, 1
      %p164 = por %p162, %p163
      %p166 = scmp.ne.s32.totalorder %s151, %s165
      %p167 = scmp.eq.s32.totalorder %s36, 0
      %p168 = por %p166, %p167
      %s170 = sadd.s32 %s169, 1
      %p173 = scmp.eq.s32.totalorder %s30, 1
      %p174 = scmp.ne.s32.totalorder %s169, %s171
      %p175 = scmp.eq.s32.totalorder %s30, 0
      %p176 = por %p174, %p175
      %p177 = scmp.ne.s32.totalorder %s169, %s171
      %p178 = scmp.eq.s32.totalorder %s35, 1
      %p179 = por %p177, %p178
      %p180 = scmp.ne.s32.totalorder %s171, %s172
      %p181 = scmp.eq.s32.totalorder %s35, 0
      %p182 = por %p180, %p181
      %p183 = scmp.ne.s32.totalorder %s171, %s172
      %p184 = scmp.eq.s32.totalorder %s36, 1
      %p185 = por %p183, %p184
      %p187 = scmp.ne.s32.totalorder %s172, %s186
      %p188 = scmp.eq.s32.totalorder %s36, 0
      %p189 = por %p187, %p188
      %s191 = sadd.s32 %s190, 1
      %p194 = scmp.eq.s32.totalorder %s30, 1
      %p195 = scmp.ne.s32.totalorder %s190, %s192
      %p196 = scmp.eq.s32.totalorder %s30, 0
      %p197 = por %p195, %p196
      %p198 = scmp.ne.s32.totalorder %s190, %s192
      %p199 = scmp.eq.s32.totalorder %s35, 1
      %p200 = por %p198, %p199
      %p201 = scmp.ne.s32.totalorder %s192, %s193
      %p202 = scmp.eq.s32.totalorder %s35, 0
      %p203 = por %p201, %p202
      %p204 = scmp.ne.s32.totalorder %s192, %s193
      %p205 = scmp.eq.s32.totalorder %s36, 1
      %p206 = por %p204, %p205
      %p208 = scmp.ne.s32.totalorder %s193, %s207
      %p209 = scmp.eq.s32.totalorder %s36, 0
      %p210 = por %p208, %p209
      %s212 = sadd.s32 %s211, 1
      %p215 = scmp.eq.s32.totalorder %s30, 1
      %p216 = scmp.ne.s32.totalorder %s211, %s213
      %p217 = scmp.eq.s32.totalorder %s30, 0
      %p218 = por %p216, %p217
      %p219 = scmp.ne.s32.totalorder %s211, %s213
      %p220 = scmp.eq.s32.totalorder %s35, 1
      %p221 = por %p219, %p220
      %p222 = scmp.ne.s32.totalorder %s213, %s214
      %p223 = scmp.eq.s32.totalorder %s35, 0
      %p224 = por %p222, %p223
      %p225 = scmp.ne.s32.totalorder %s213, %s214
      %p226 = scmp.eq.s32.totalorder %s36, 1
      %p227 = por %p225, %p226
      %p229 = scmp.ne.s32.totalorder %s214, %s228
      %p230 = scmp.eq.s32.totalorder %s36, 0
      %p231 = por %p229, %p230
      %s233 = sadd.s32 %s232, 1
      %p236 = scmp.eq.s32.totalorder %s30, 1
      %p237 = scmp.ne.s32.totalorder %s232, %s234
      %p238 = scmp.eq.s32.totalorder %s30, 0
      %p239 = por %p237, %p238
      %p240 = scmp.ne.s32.totalorder %s232, %s234
      %p241 = scmp.eq.s32.totalorder %s35, 1
      %p242 = por %p240, %p241
      %p243 = scmp.ne.s32.totalorder %s234, %s235
      %p244 = scmp.eq.s32.totalorder %s35, 0
      %p245 = por %p243, %p244
      %p246 = scmp.ne.s32.totalorder %s234, %s235
      %p247 = scmp.eq.s32.totalorder %s36, 1
      %p248 = por %p246, %p247
      %p250 = scmp.ne.s32.totalorder %s235, %s249
      %p251 = scmp.eq.s32.totalorder %s36, 0
      %p252 = por %p250, %p251
      %s254 = sadd.s32 %s253, 1
      %p257 = scmp.eq.s32.totalorder %s30, 1
      %p258 = scmp.ne.s32.totalorder %s253, %s255
      %p259 = scmp.eq.s32.totalorder %s30, 0
      %p260 = por %p258, %p259
      %p261 = scmp.ne.s32.totalorder %s253, %s255
      %p262 = scmp.eq.s32.totalorder %s35, 1
      %p263 = por %p261, %p262
      %p264 = scmp.ne.s32.totalorder %s255, %s256
      %p265 = scmp.eq.s32.totalorder %s35, 0
      %p266 = por %p264, %p265
      %p267 = scmp.ne.s32.totalorder %s255, %s256
      %p268 = scmp.eq.s32.totalorder %s36, 1
      %p269 = por %p267, %p268
      %p271 = scmp.ne.s32.totalorder %s256, %s270
      %p272 = scmp.eq.s32.totalorder %s36, 0
      %p273 = por %p271, %p272
      %s275 = sadd.s32 %s274, 1
      %p278 = scmp.eq.s32.totalorder %s30, 1
      %p279 = scmp.ne.s32.totalorder %s274, %s276
      %p280 = scmp.eq.s32.totalorder %s30, 0
      %p281 = por %p279, %p280
      %p282 = scmp.ne.s32.totalorder %s274, %s276
      %p283 = scmp.eq.s32.totalorder %s35, 1
      %p284 = por %p282, %p283
      %p285 = scmp.ne.s32.totalorder %s276, %s277
      %p286 = scmp.eq.s32.totalorder %s35, 0
      %p287 = por %p285, %p286
      %p288 = scmp.ne.s32.totalorder %s276, %s277
      %p289 = scmp.eq.s32.totalorder %s36, 1
      %p290 = por %p288, %p289
      %p292 = scmp.ne.s32.totalorder %s277, %s291
      %p293 = scmp.eq.s32.totalorder %s36, 0
      %p294 = por %p292, %p293
      %s296 = sadd.s32 %s295, 1
      %p299 = scmp.eq.s32.totalorder %s30, 1
      %p300 = scmp.ne.s32.totalorder %s295, %s297
      %p301 = scmp.eq.s32.totalorder %s30, 0
      %p302 = por %p300, %p301
      %p303 = scmp.ne.s32.totalorder %s295, %s297
      %p304 = scmp.eq.s32.totalorder %s35, 1
      %p305 = por %p303, %p304
      %p306 = scmp.ne.s32.totalorder %s297, %s298
      %p307 = scmp.eq.s32.totalorder %s35, 0
      %p308 = por %p306, %p307
      %p309 = scmp.ne.s32.totalorder %s297, %s298
      %p310 = scmp.eq.s32.totalorder %s36, 1
      %p311 = por %p309, %p310
      %p313 = scmp.ne.s32.totalorder %s298, %s312
      %p314 = scmp.eq.s32.totalorder %s36, 0
      %p315 = por %p313, %p314
      %s317 = sadd.s32 %s316, 1
      %p320 = scmp.eq.s32.totalorder %s30, 1
      %p321 = scmp.ne.s32.totalorder %s316, %s318
      %p322 = scmp.eq.s32.totalorder %s30, 0
      %p323 = por %p321, %p322
      %p324 = scmp.ne.s32.totalorder %s316, %s318
      %p325 = scmp.eq.s32.totalorder %s35, 1
      %p326 = por %p324, %p325
      %p327 = scmp.ne.s32.totalorder %s318, %s319
      %p328 = scmp.eq.s32.totalorder %s35, 0
      %p329 = por %p327, %p328
      %p330 = scmp.ne.s32.totalorder %s318, %s319
      %p331 = scmp.eq.s32.totalorder %s36, 1
      %p332 = por %p330, %p331
      %p334 = scmp.ne.s32.totalorder %s319, %s333
      %p335 = scmp.eq.s32.totalorder %s36, 0
      %p336 = por %p334, %p335
      %s338 = sadd.s32 %s337, 1
      %p341 = scmp.eq.s32.totalorder %s30, 1
      %p342 = scmp.ne.s32.totalorder %s337, %s339
      %p343 = scmp.eq.s32.totalorder %s30, 0
      %p344 = por %p342, %p343
      %p345 = scmp.ne.s32.totalorder %s337, %s339
      %p346 = scmp.eq.s32.totalorder %s35, 1
      %p347 = por %p345, %p346
      %p348 = scmp.ne.s32.totalorder %s339, %s340
      %p349 = scmp.eq.s32.totalorder %s35, 0
      %p350 = por %p348, %p349
      %p351 = scmp.ne.s32.totalorder %s339, %s340
      %p352 = scmp.eq.s32.totalorder %s36, 1
      %p353 = por %p351, %p352
      %p355 = scmp.ne.s32.totalorder %s340, %s354
      %p356 = scmp.eq.s32.totalorder %s36, 0
      %p357 = por %p355, %p356
      %s359 = sadd.s32 %s358, 1
      %p362 = scmp.eq.s32.totalorder %s30, 1
      %p363 = scmp.ne.s32.totalorder %s358, %s360
      %p364 = scmp.eq.s32.totalorder %s30, 0
      %p365 = por %p363, %p364
      %p366 = scmp.ne.s32.totalorder %s358, %s360
      %p367 = scmp.eq.s32.totalorder %s35, 1
      %p368 = por %p366, %p367
      %p369 = scmp.ne.s32.totalorder %s360, %s361
      %p370 = scmp.eq.s32.totalorder %s35, 0
      %p371 = por %p369, %p370
      %p372 = scmp.ne.s32.totalorder %s360, %s361
      %p373 = scmp.eq.s32.totalorder %s36, 1
      %p374 = por %p372, %p373
      %p376 = scmp.ne.s32.totalorder %s361, %s375
      %p377 = scmp.eq.s32.totalorder %s36, 0
      %p378 = por %p376, %p377
      %s380 = sadd.s32 %s379, 1
      %p383 = scmp.eq.s32.totalorder %s30, 1
      %p384 = scmp.ne.s32.totalorder %s379, %s381
      %p385 = scmp.eq.s32.totalorder %s30, 0
      %p386 = por %p384, %p385
      %p387 = scmp.ne.s32.totalorder %s379, %s381
      %p388 = scmp.eq.s32.totalorder %s35, 1
      %p389 = por %p387, %p388
      %p390 = scmp.ne.s32.totalorder %s381, %s382
      %p391 = scmp.eq.s32.totalorder %s35, 0
      %p392 = por %p390, %p391
      %p393 = scmp.ne.s32.totalorder %s381, %s382
      %p394 = scmp.eq.s32.totalorder %s36, 1
      %p395 = por %p393, %p394
      %p397 = scmp.ne.s32.totalorder %s382, %s396
      %p398 = scmp.eq.s32.totalorder %s36, 0
      %p399 = por %p397, %p398
      %s401 = sadd.s32 %s400, 1
      %p404 = scmp.eq.s32.totalorder %s30, 1
      %p405 = scmp.ne.s32.totalorder %s400, %s402
      %p406 = scmp.eq.s32.totalorder %s30, 0
      %p407 = por %p405, %p406
      %p408 = scmp.ne.s32.totalorder %s400, %s402
      %p409 = scmp.eq.s32.totalorder %s35, 1
      %p410 = por %p408, %p409
      %p411 = scmp.ne.s32.totalorder %s402, %s403
      %p412 = scmp.eq.s32.totalorder %s35, 0
      %p413 = por %p411, %p412
      %p414 = scmp.ne.s32.totalorder %s402, %s403
      %p415 = scmp.eq.s32.totalorder %s36, 1
      %p416 = por %p414, %p415
      %p418 = scmp.ne.s32.totalorder %s403, %s417
      %p419 = scmp.eq.s32.totalorder %s36, 0
      %p420 = por %p418, %p419
      %s422 = sadd.s32 %s421, 1
      %p425 = scmp.eq.s32.totalorder %s30, 1
      %p426 = scmp.ne.s32.totalorder %s421, %s423
      %p427 = scmp.eq.s32.totalorder %s30, 0
      %p428 = por %p426, %p427
      %p429 = scmp.ne.s32.totalorder %s421, %s423
      %p430 = scmp.eq.s32.totalorder %s35, 1
      %p431 = por %p429, %p430
      %p432 = scmp.ne.s32.totalorder %s423, %s424
      %p433 = scmp.eq.s32.totalorder %s35, 0
      %p434 = por %p432, %p433
      %p435 = scmp.ne.s32.totalorder %s423, %s424
      %p436 = scmp.eq.s32.totalorder %s36, 1
      %p437 = por %p435, %p436
      %p439 = scmp.ne.s32.totalorder %s424, %s438
      %p440 = scmp.eq.s32.totalorder %s36, 0
      %p441 = por %p439, %p440
      %s443 = sadd.s32 %s442, 1
      %p446 = scmp.eq.s32.totalorder %s30, 1
      %p447 = scmp.ne.s32.totalorder %s442, %s444
      %p448 = scmp.eq.s32.totalorder %s30, 0
      %p449 = por %p447, %p448
      %p450 = scmp.ne.s32.totalorder %s442, %s444
      %p451 = scmp.eq.s32.totalorder %s35, 1
      %p452 = por %p450, %p451
      %p453 = scmp.ne.s32.totalorder %s444, %s445
      %p454 = scmp.eq.s32.totalorder %s35, 0
      %p455 = por %p453, %p454
      %p456 = scmp.ne.s32.totalorder %s444, %s445
      %p457 = scmp.eq.s32.totalorder %s36, 1
      %p458 = por %p456, %p457
      %p460 = scmp.ne.s32.totalorder %s445, %s459
      %p461 = scmp.eq.s32.totalorder %s36, 0
      %p462 = por %p460, %p461
      %s464 = sadd.s32 %s463, 1
      %p467 = scmp.eq.s32.totalorder %s30, 1
      %p468 = scmp.ne.s32.totalorder %s463, %s465
      %p469 = scmp.eq.s32.totalorder %s30, 0
      %p470 = por %p468, %p469
      %p471 = scmp.ne.s32.totalorder %s463, %s465
      %p472 = scmp.eq.s32.totalorder %s35, 1
      %p473 = por %p471, %p472
      %p474 = scmp.ne.s32.totalorder %s465, %s466
      %p475 = scmp.eq.s32.totalorder %s35, 0
      %p476 = por %p474, %p475
      %p477 = scmp.ne.s32.totalorder %s465, %s466
      %p478 = scmp.eq.s32.totalorder %s36, 1
      %p479 = por %p477, %p478
      %p481 = scmp.ne.s32.totalorder %s466, %s480
      %p482 = scmp.eq.s32.totalorder %s36, 0
      %p483 = por %p481, %p482
      %s484 = ssub.s32 %s30, %s37
      %p485 = scmp.eq.s32.totalorder %s484, 0
      %s487 = sadd.s32 %s486, 1
      %s488 = scalar_select %p485, %s486, %s487
      %p491 = pneg %p485
      %p492 = scmp.eq.s32.totalorder %s30, 1
      %p493 = por %p491, %p492
      %p494 = scmp.ne.s32.totalorder %s486, %s489
      %p495 = scmp.eq.s32.totalorder %s30, 0
      %p496 = por %p494, %p495
      %p497 = scmp.ne.s32.totalorder %s486, %s489
      %p498 = scmp.eq.s32.totalorder %s35, 1
      %p499 = por %p497, %p498
      %p500 = scmp.ne.s32.totalorder %s489, %s490
      %p501 = scmp.eq.s32.totalorder %s35, 0
      %p502 = por %p500, %p501
      %p503 = scmp.ne.s32.totalorder %s489, %s490
      %p504 = scmp.eq.s32.totalorder %s36, 1
      %p505 = por %p503, %p504
      %p507 = scmp.ne.s32.totalorder %s490, %s506
      %p508 = scmp.eq.s32.totalorder %s36, 0
      %p509 = por %p507, %p508
      %p510 = scmp.le.s32.totalorder 1, %s30
      %p511 = scmp.lt.s32.totalorder %s30, 3
      %p512 = pnand %p510, %p511
      %p513 = pneg %p512
      // Predicated region
      $region9: #{_lambda_.1} parent=5 // pred_check
        _
      $region10: #{_lambda_.1} parent=5 // pred_check_branch
        %515 = sbr.rel (%p512) target = $region12
      $region11: #{_lambda_.1} parent=5 // pred_region
        %s516 = ssub.s32 %s30, 1
        // Predicated region
        $region13: #{_lambda_.1} parent=11 // pred_check
          %p517 = pneg %p77
        $region14: #{_lambda_.1} parent=11 // pred_check_branch
          %519 = sbr.rel (%p517) target = $region16
        $region15: #{_lambda_.1} parent=11 // pred_region
          _
        $region16: #{_lambda_.1} parent=11 // pred_fallthru
          _
        // Predicated region
        $region17: #{_lambda_.1} parent=11 // pred_check
          %p520 = pneg %p98
        $region18: #{_lambda_.1} parent=11 // pred_check_branch
          %522 = sbr.rel (%p520) target = $region20
        $region19: #{_lambda_.1} parent=11 // pred_region
          _
        $region20: #{_lambda_.1} parent=11 // pred_fallthru
          _
        // Predicated region
        $region21: #{_lambda_.1} parent=11 // pred_check
          %p523 = pneg %p119
        $region22: #{_lambda_.1} parent=11 // pred_check_branch
          %525 = sbr.rel (%p523) target = $region24
        $region23: #{_lambda_.1} parent=11 // pred_region
          _
        $region24: #{_lambda_.1} parent=11 // pred_fallthru
          _
        // Predicated region
        $region25: #{_lambda_.1} parent=11 // pred_check
          %p526 = pneg %p140
        $region26: #{_lambda_.1} parent=11 // pred_check_branch
          %528 = sbr.rel (%p526) target = $region28
        $region27: #{_lambda_.1} parent=11 // pred_region
          _
        $region28: #{_lambda_.1} parent=11 // pred_fallthru
          _
        // Predicated region
        $region29: #{_lambda_.1} parent=11 // pred_check
          %p529 = pneg %p161
        $region30: #{_lambda_.1} parent=11 // pred_check_branch
          %531 = sbr.rel (%p529) target = $region32
        $region31: #{_lambda_.1} parent=11 // pred_region
          _
        $region32: #{_lambda_.1} parent=11 // pred_fallthru
          _
        // Predicated region
        $region33: #{_lambda_.1} parent=11 // pred_check
          %p532 = pneg %p182
        $region34: #{_lambda_.1} parent=11 // pred_check_branch
          %534 = sbr.rel (%p532) target = $region36
        $region35: #{_lambda_.1} parent=11 // pred_region
          _
        $region36: #{_lambda_.1} parent=11 // pred_fallthru
          _
        // Predicated region
        $region37: #{_lambda_.1} parent=11 // pred_check
          %p535 = pneg %p203
        $region38: #{_lambda_.1} parent=11 // pred_check_branch
          %537 = sbr.rel (%p535) target = $region40
        $region39: #{_lambda_.1} parent=11 // pred_region
          _
        $region40: #{_lambda_.1} parent=11 // pred_fallthru
          _
        // Predicated region
        $region41: #{_lambda_.1} parent=11 // pred_check
          %p538 = pneg %p224
        $region42: #{_lambda_.1} parent=11 // pred_check_branch
          %540 = sbr.rel (%p538) target = $region44
        $region43: #{_lambda_.1} parent=11 // pred_region
          _
        $region44: #{_lambda_.1} parent=11 // pred_fallthru
          _
        // Predicated region
        $region45: #{_lambda_.1} parent=11 // pred_check
          %p541 = pneg %p245
        $region46: #{_lambda_.1} parent=11 // pred_check_branch
          %543 = sbr.rel (%p541) target = $region48
        $region47: #{_lambda_.1} parent=11 // pred_region
          _
        $region48: #{_lambda_.1} parent=11 // pred_fallthru
          _
        // Predicated region
        $region49: #{_lambda_.1} parent=11 // pred_check
          %p544 = pneg %p266
        $region50: #{_lambda_.1} parent=11 // pred_check_branch
          %546 = sbr.rel (%p544) target = $region52
        $region51: #{_lambda_.1} parent=11 // pred_region
          _
        $region52: #{_lambda_.1} parent=11 // pred_fallthru
          _
        // Predicated region
        $region53: #{_lambda_.1} parent=11 // pred_check
          %p547 = pneg %p287
        $region54: #{_lambda_.1} parent=11 // pred_check_branch
          %549 = sbr.rel (%p547) target = $region56
        $region55: #{_lambda_.1} parent=11 // pred_region
          _
        $region56: #{_lambda_.1} parent=11 // pred_fallthru
          _
        // Predicated region
        $region57: #{_lambda_.1} parent=11 // pred_check
          %p550 = pneg %p308
        $region58: #{_lambda_.1} parent=11 // pred_check_branch
          %552 = sbr.rel (%p550) target = $region60
        $region59: #{_lambda_.1} parent=11 // pred_region
          _
        $region60: #{_lambda_.1} parent=11 // pred_fallthru
          _
        // Predicated region
        $region61: #{_lambda_.1} parent=11 // pred_check
          %p553 = pneg %p329
        $region62: #{_lambda_.1} parent=11 // pred_check_branch
          %555 = sbr.rel (%p553) target = $region64
        $region63: #{_lambda_.1} parent=11 // pred_region
          _
        $region64: #{_lambda_.1} parent=11 // pred_fallthru
          _
        // Predicated region
        $region65: #{_lambda_.1} parent=11 // pred_check
          %p556 = pneg %p350
        $region66: #{_lambda_.1} parent=11 // pred_check_branch
          %558 = sbr.rel (%p556) target = $region68
        $region67: #{_lambda_.1} parent=11 // pred_region
          _
        $region68: #{_lambda_.1} parent=11 // pred_fallthru
          _
        // Predicated region
        $region69: #{_lambda_.1} parent=11 // pred_check
          %p559 = pneg %p371
        $region70: #{_lambda_.1} parent=11 // pred_check_branch
          %561 = sbr.rel (%p559) target = $region72
        $region71: #{_lambda_.1} parent=11 // pred_region
          _
        $region72: #{_lambda_.1} parent=11 // pred_fallthru
          _
        // Predicated region
        $region73: #{_lambda_.1} parent=11 // pred_check
          %p562 = pneg %p392
        $region74: #{_lambda_.1} parent=11 // pred_check_branch
          %564 = sbr.rel (%p562) target = $region76
        $region75: #{_lambda_.1} parent=11 // pred_region
          _
        $region76: #{_lambda_.1} parent=11 // pred_fallthru
          _
        // Predicated region
        $region77: #{_lambda_.1} parent=11 // pred_check
          %p565 = pneg %p413
        $region78: #{_lambda_.1} parent=11 // pred_check_branch
          %567 = sbr.rel (%p565) target = $region80
        $region79: #{_lambda_.1} parent=11 // pred_region
          _
        $region80: #{_lambda_.1} parent=11 // pred_fallthru
          _
        // Predicated region
        $region81: #{_lambda_.1} parent=11 // pred_check
          %p568 = pneg %p434
        $region82: #{_lambda_.1} parent=11 // pred_check_branch
          %570 = sbr.rel (%p568) target = $region84
        $region83: #{_lambda_.1} parent=11 // pred_region
          _
        $region84: #{_lambda_.1} parent=11 // pred_fallthru
          _
        // Predicated region
        $region85: #{_lambda_.1} parent=11 // pred_check
          %p571 = pneg %p455
        $region86: #{_lambda_.1} parent=11 // pred_check_branch
          %573 = sbr.rel (%p571) target = $region88
        $region87: #{_lambda_.1} parent=11 // pred_region
          _
        $region88: #{_lambda_.1} parent=11 // pred_fallthru
          _
        // Predicated region
        $region89: #{_lambda_.1} parent=11 // pred_check
          %p574 = pneg %p476
        $region90: #{_lambda_.1} parent=11 // pred_check_branch
          %576 = sbr.rel (%p574) target = $region92
        $region91: #{_lambda_.1} parent=11 // pred_region
          _
        $region92: #{_lambda_.1} parent=11 // pred_fallthru
          _
      $region12: #{_lambda_.1} parent=5 // pred_fallthru
        _
      %p577 = scmp.lt.s32.totalorder %s30, 2
      // Predicated region
      $region93: #{_lambda_.1} parent=5 // pred_check
        %p578 = pneg %p577
      $region94: #{_lambda_.1} parent=5 // pred_check_branch
        %580 = sbr.rel (%p578) target = $region96
      $region95: #{_lambda_.1} parent=5 // pred_region
        // Predicated region
        $region97: #{_lambda_.1} parent=95 // pred_check
          %p581 = pneg %p50
        $region98: #{_lambda_.1} parent=95 // pred_check_branch
          %583 = sbr.rel (%p581) target = $region100
        $region99: #{_lambda_.1} parent=95 // pred_region
          %p584 = scmp.lt.s32.totalorder %s30, 1
          %s585 = scalar_select %p584, %s30, 1
          %s586 = smul.addr %s585, 16
          %s587 = smul.addr %s586, 8
          %s588 = scalar_lea.vmem %s0, %s587
        $region100: #{_lambda_.1} parent=95 // pred_fallthru
          _
      $region96: #{_lambda_.1} parent=5 // pred_fallthru
        _
      %p589 = scmp.le.s32.totalorder 1, %s30
      %p590 = scmp.lt.s32.totalorder %s30, 3
      %p591 = pnand %p589, %p590
      %p592 = pneg %p591
      // Predicated region
      $region101: #{_lambda_.1} parent=5 // pred_check
        _
      $region102: #{_lambda_.1} parent=5 // pred_check_branch
        %594 = sbr.rel (%p591) target = $region104
      $region103: #{_lambda_.1} parent=5 // pred_region
        %s595 = ssub.s32 %s30, 1
        %p596 = scmp.lt.s32.totalorder %s35, 1
        %s597 = scalar_select %p596, %s35, 1
        %s598 = smul.addr %s597, 16
        %s599 = smul.addr %s598, 8
        %s600 = scalar_lea.vmem %s0, %s599
        %p601 = pneg %p56
        %p602 = pneg %p53
        %p603 = pneg %p77
        %p604 = pneg %p74
        %p605 = pneg %p98
        %p606 = pneg %p95
        %p607 = pneg %p119
        %p608 = pneg %p116
        %p609 = pneg %p140
        %p610 = pneg %p137
        %p611 = pneg %p161
        %p612 = pneg %p158
        %p613 = pneg %p182
        %p614 = pneg %p179
        %p615 = pneg %p203
        %p616 = pneg %p200
        %p617 = pneg %p224
        %p618 = pneg %p221
        %p619 = pneg %p245
        %p620 = pneg %p242
        %p621 = pneg %p266
        %p622 = pneg %p263
        %p623 = pneg %p287
        %p624 = pneg %p284
        %p625 = pneg %p308
        %p626 = pneg %p305
        %p627 = pneg %p329
        %p628 = pneg %p326
        %p629 = pneg %p350
        %p630 = pneg %p347
        %p631 = pneg %p371
        %p632 = pneg %p368
        %p633 = pneg %p392
        %p634 = pneg %p389
        %p635 = pneg %p413
        %p636 = pneg %p410
        %p637 = pneg %p434
        %p638 = pneg %p431
        %p639 = pneg %p455
        %p640 = pneg %p452
        %p641 = pneg %p476
        %p642 = pneg %p473
        %p643 = pneg %p502
        %p644 = pneg %p499
        %s645 = sand.u32 %s489, 1
        %s646 = scalar_lea.sflag [#allocation5], %s645
        %s647 = sand.u32 %s489, 1
        %s648 = scalar_lea.vmem [#allocation4], %s647
        %p649 = scmp.lt.s32.totalorder %s35, 1
        %s650 = scalar_select %p649, %s35, 1
        %s651 = smul.addr %s650, 16
        %s652 = smul.addr %s651, 8
        %s653 = scalar_lea.vmem %s0, %s652
        %v655 = vld [vmem:[%s653] sm:$0xff]
        %v656 = vld [vmem:[%s653 + $0x8] sm:$0xff]
        %v657 = vld [vmem:[%s653 + $0x10] sm:$0xff]
        %v658 = vld [vmem:[%s653 + $0x18] sm:$0xff]
        %v659 = vld [vmem:[%s653 + $0x20] sm:$0xff]
        %v660 = vld [vmem:[%s653 + $0x28] sm:$0xff]
        %v661 = vld [vmem:[%s653 + $0x30] sm:$0xff]
        %v662 = vld [vmem:[%s653 + $0x38] sm:$0xff]
        %v663 = vld [vmem:[%s653 + $0x40] sm:$0xff]
        %v664 = vld [vmem:[%s653 + $0x48] sm:$0xff]
        %v665 = vld [vmem:[%s653 + $0x50] sm:$0xff]
        %v666 = vld [vmem:[%s653 + $0x58] sm:$0xff]
        %v667 = vld [vmem:[%s653 + $0x60] sm:$0xff]
        %v668 = vld [vmem:[%s653 + $0x68] sm:$0xff]
        %v669 = vld [vmem:[%s653 + $0x70] sm:$0xff]
        %v670 = vld [vmem:[%s653 + $0x78] sm:$0xff]
        %v671 = vpack.c.bf16 %v657, %v655
        %v672 = vpack.c.bf16 %v658, %v656
        %v673 = vpack.c.bf16 %v661, %v659
        %v674 = vpack.c.bf16 %v662, %v660
        %v675 = vpack.c.bf16 %v665, %v663
        %v676 = vpack.c.bf16 %v666, %v664
        %v677 = vpack.c.bf16 %v669, %v667
        %v678 = vpack.c.bf16 %v670, %v668
        %v679 = vld [vmem:[%s1] sm:$0xf]
        %v680 = vld [vmem:[%s1 + $0x4] sm:$0xf]
        %v681 = vld [vmem:[%s1 + $0x8] sm:$0xf]
        %v682 = vld [vmem:[%s1 + $0xc] sm:$0xf]
        %v683 = vld [vmem:[%s1 + $0x10] sm:$0xf]
        %v684 = vld [vmem:[%s1 + $0x14] sm:$0xf]
        %v685 = vld [vmem:[%s1 + $0x18] sm:$0xf]
        %v686 = vld [vmem:[%s1 + $0x1c] sm:$0xf]
        %v687 = vld [vmem:[%s1 + $0x20] sm:$0xf]
        %v688 = vld [vmem:[%s1 + $0x24] sm:$0xf]
        %v689 = vld [vmem:[%s1 + $0x28] sm:$0xf]
        %v690 = vld [vmem:[%s1 + $0x2c] sm:$0xf]
        %v691 = vld [vmem:[%s1 + $0x30] sm:$0xf]
        %v692 = vld [vmem:[%s1 + $0x34] sm:$0xf]
        %v693 = vld [vmem:[%s1 + $0x38] sm:$0xf]
        %v694 = vld [vmem:[%s1 + $0x3c] sm:$0xf]
        %v695 = vld [vmem:[%s1 + $0x40] sm:$0xf]
        %v696 = vld [vmem:[%s1 + $0x44] sm:$0xf]
        %v697 = vld [vmem:[%s1 + $0x48] sm:$0xf]
        %v698 = vld [vmem:[%s1 + $0x4c] sm:$0xf]
        %v699 = vld [vmem:[%s1 + $0x50] sm:$0xf]
        %v700 = vld [vmem:[%s1 + $0x54] sm:$0xf]
        %v701 = vld [vmem:[%s1 + $0x58] sm:$0xf]
        %v702 = vld [vmem:[%s1 + $0x5c] sm:$0xf]
        %v703 = vld [vmem:[%s1 + $0x60] sm:$0xf]
        %v704 = vld [vmem:[%s1 + $0x64] sm:$0xf]
        %v705 = vld [vmem:[%s1 + $0x68] sm:$0xf]
        %v706 = vld [vmem:[%s1 + $0x6c] sm:$0xf]
        %v707 = vld [vmem:[%s1 + $0x70] sm:$0xf]
        %v708 = vld [vmem:[%s1 + $0x74] sm:$0xf]
        %v709 = vld [vmem:[%s1 + $0x78] sm:$0xf]
        %v710 = vld [vmem:[%s1 + $0x7c] sm:$0xf]
        %v711 = vld [vmem:[%s2] sm:$0x1]
        %v713 = vlaneseq
        %v714 = vshrl.u32 %v713, 7
        %v715 = vsub.s32 0, %v714
        %v716 = vrot.slane %v711, %v715
        %v750 = vunpack.c.l.b16 %v679
        %v751 = vunpack.c.l.b16 %v680
        %v752 = vunpack.c.l.b16 %v681
        %v753 = vunpack.c.l.b16 %v682
        %v754 = vunpack.c.l.b16 %v683
        %v755 = vunpack.c.l.b16 %v684
        %v756 = vunpack.c.l.b16 %v685
        %v757 = vunpack.c.l.b16 %v686
        %v758 = vunpack.c.l.b16 %v687
        %v759 = vunpack.c.l.b16 %v688
        %v760 = vunpack.c.l.b16 %v689
        %v761 = vunpack.c.l.b16 %v690
        %v762 = vunpack.c.l.b16 %v691
        %v763 = vunpack.c.l.b16 %v692
        %v764 = vunpack.c.l.b16 %v693
        %v765 = vunpack.c.l.b16 %v694
        %v766 = vunpack.c.l.b16 %v695
        %v767 = vunpack.c.l.b16 %v696
        %v768 = vunpack.c.l.b16 %v697
        %v769 = vunpack.c.l.b16 %v698
        %v770 = vunpack.c.l.b16 %v699
        %v771 = vunpack.c.l.b16 %v700
        %v772 = vunpack.c.l.b16 %v701
        %v773 = vunpack.c.l.b16 %v702
        %v774 = vunpack.c.l.b16 %v703
        %v775 = vunpack.c.l.b16 %v704
        %v776 = vunpack.c.l.b16 %v705
        %v777 = vunpack.c.l.b16 %v706
        %v778 = vunpack.c.l.b16 %v707
        %v779 = vunpack.c.l.b16 %v708
        %v780 = vunpack.c.l.b16 %v709
        %v781 = vunpack.c.l.b16 %v710
        %v782 = vpack.c.b16 %v751, %v750
        %v783 = vpack.c.b16 %v753, %v752
        %v784 = vpack.c.b16 %v755, %v754
        %v785 = vpack.c.b16 %v757, %v756
        %v786 = vpack.c.b16 %v759, %v758
        %v787 = vpack.c.b16 %v761, %v760
        %v788 = vpack.c.b16 %v763, %v762
        %v789 = vpack.c.b16 %v765, %v764
        %v790 = vpack.c.b16 %v767, %v766
        %v791 = vpack.c.b16 %v769, %v768
        %v792 = vpack.c.b16 %v771, %v770
        %v793 = vpack.c.b16 %v773, %v772
        %v794 = vpack.c.b16 %v775, %v774
        %v795 = vpack.c.b16 %v777, %v776
        %v796 = vpack.c.b16 %v779, %v778
        %v797 = vpack.c.b16 %v781, %v780
        %814 = vmatprep.subr.bf16.mxu0 0
        %815 = vmatpush1.bf16.msra.mxu0 %v789
        %816 = vmatprep.subr.bf16.mxu0 0
        %817 = vmatpush1.bf16.msra.mxu0 %v788
        %818 = vmatprep.subr.bf16.mxu0 0
        %819 = vmatpush1.bf16.msra.mxu0 %v787
        %820 = vmatprep.subr.bf16.mxu0 0
        %821 = vmatpush1.bf16.msra.mxu0 %v786
        %822 = vmatprep.subr.bf16.mxu0 0
        %823 = vmatpush1.bf16.msra.mxu0 %v785
        %824 = vmatprep.subr.bf16.mxu0 0
        %825 = vmatpush1.bf16.msra.mxu0 %v784
        %826 = vmatprep.subr.bf16.mxu0 0
        %827 = vmatpush1.bf16.msra.mxu0 %v783
        %828 = vmatprep.subr.bf16.mxu0 0
        %829 = vmatpush1.bf16.msra.mxu0 %v782
        %830 = vmatprep.subr.bf16.mxu0 0
        %831 = vmatpush2.bf16.msra.mxu0 %v797
        %832 = vmatprep.subr.bf16.mxu0 0
        %833 = vmatpush2.bf16.msra.mxu0 %v796
        %834 = vmatprep.subr.bf16.mxu0 0
        %835 = vmatpush2.bf16.msra.mxu0 %v795
        %836 = vmatprep.subr.bf16.mxu0 0
        %837 = vmatpush2.bf16.msra.mxu0 %v794
        %838 = vmatprep.subr.bf16.mxu0 0
        %839 = vmatpush2.bf16.msra.mxu0 %v793
        %840 = vmatprep.subr.bf16.mxu0 0
        %841 = vmatpush2.bf16.msra.mxu0 %v792
        %842 = vmatprep.subr.bf16.mxu0 0
        %843 = vmatpush2.bf16.msra.mxu0 %v791
        %844 = vmatprep.subr.bf16.mxu0 0
        %845 = vmatpush2.bf16.msra.mxu0 %v790
        %846 = vmatprep.mubr.bf16.mxu0 %v672
        %847 = vmatmul.mubr.bf16.gmra.mxu0 %v671
        %v848 = vpop.f32.mrf.mxu0
        %v849 = vadd.f32 %v716, %v848
        %v850 = vpop.f32.mrf.mxu0
        %v851 = vpop.f32.mrf.mxu0
        %v852 = vadd.f32 %v716, %v851
        %v853 = vpop.f32.mrf.mxu0
        %854 = vmatprep.mubr.bf16.mxu0 %v674
        %855 = vmatmul.mubr.bf16.gmra.mxu0 %v673
        %v856 = vpop.f32.mrf.mxu0
        %v857 = vadd.f32 %v716, %v856
        %v858 = vpop.f32.mrf.mxu0
        %v859 = vpop.f32.mrf.mxu0
        %v860 = vadd.f32 %v716, %v859
        %v861 = vpop.f32.mrf.mxu0
        %862 = vmatprep.mubr.bf16.mxu0 %v676
        %863 = vmatmul.mubr.bf16.gmra.mxu0 %v675
        %v864 = vpop.f32.mrf.mxu0
        %v865 = vadd.f32 %v716, %v864
        %v866 = vpop.f32.mrf.mxu0
        %v867 = vpop.f32.mrf.mxu0
        %v868 = vadd.f32 %v716, %v867
        %v869 = vpop.f32.mrf.mxu0
        %870 = vmatprep.mubr.bf16.mxu0 %v678
        %871 = vmatmul.mubr.bf16.gmra.mxu0 %v677
        %v872 = vpop.f32.mrf.mxu0
        %v873 = vadd.f32 %v716, %v872
        %v874 = vpop.f32.mrf.mxu0
        %v875 = vpop.f32.mrf.mxu0
        %v876 = vadd.f32 %v716, %v875
        %v877 = vpop.f32.mrf.mxu0
        %878 = vdwg.mxu0
        %v879 = vmax.f32 %v849, 0.0
        %v880 = vmax.f32 %v852, 0.0
        %v881 = vmax.f32 %v857, 0.0
        %v882 = vmax.f32 %v860, 0.0
        %v883 = vmax.f32 %v865, 0.0
        %v884 = vmax.f32 %v868, 0.0
        %v885 = vmax.f32 %v873, 0.0
        %v886 = vmax.f32 %v876, 0.0
        %887 = vst [vmem:[#allocation2] sm:$0xff] 0.0
        %888 = vst [vmem:[#allocation2 + $0x8] sm:$0xff] 0.0
        %889 = vst [vmem:[#allocation2 + $0x10] sm:$0xff] 0.0
        %890 = vst [vmem:[#allocation2 + $0x18] sm:$0xff] 0.0
        %891 = vst [vmem:[#allocation2 + $0x20] sm:$0xff] 0.0
        %892 = vst [vmem:[#allocation2 + $0x28] sm:$0xff] 0.0
        %893 = vst [vmem:[#allocation2 + $0x30] sm:$0xff] 0.0
        %894 = vst [vmem:[#allocation2 + $0x38] sm:$0xff] 0.0
        %895 = vst [vmem:[#allocation2 + $0x40] sm:$0xff] 0.0
        %896 = vst [vmem:[#allocation2 + $0x48] sm:$0xff] 0.0
        %897 = vst [vmem:[#allocation2 + $0x50] sm:$0x3] 0.0
        %898 = vst [vmem:[#allocation2 + $0x9] sm:$0xff] %v879
        %899 = vst [vmem:[#allocation2 + $0x11] sm:$0xff] %v880
        %900 = vst [vmem:[#allocation2 + $0x19] sm:$0xff] %v881
        %901 = vst [vmem:[#allocation2 + $0x21] sm:$0xff] %v882
        %902 = vst [vmem:[#allocation2 + $0x29] sm:$0xff] %v883
        %903 = vst [vmem:[#allocation2 + $0x31] sm:$0xff] %v884
        %904 = vst [vmem:[#allocation2 + $0x39] sm:$0xff] %v885
        %905 = vst [vmem:[#allocation2 + $0x41] sm:$0xff] %v886
        %v906 = vlaneseq
        %v907 = vshrl.u32 %v906, 7
        %v908 = vadd.s32 %v907, 8
        %v909 = vadd.s32 %v907, 16
        %v910 = vadd.s32 %v907, 24
        %v911 = vadd.s32 %v907, 32
        %v912 = vadd.s32 %v907, 40
        %v913 = vadd.s32 %v907, 48
        %v914 = vadd.s32 %v907, 56
        %vm915 = vcmp.lt.s32.totalorder %v907, 0
        %v916 = vsub.s32 0, %v907
        %v917 = vsel %vm915, %v916, %v907
        %v918 = vshrl.u32 %v917, 3
        %v919 = vand.u32 %v917, 7
        %v920 = vsub.s32 0, %v919
        %v921 = vsel %vm915, %v920, %v919
        %vm922 = vcmp.lt.s32.totalorder %v908, 0
        %v923 = vsub.s32 0, %v908
        %v924 = vsel %vm922, %v923, %v908
        %v925 = vshrl.u32 %v924, 3
        %v926 = vand.u32 %v924, 7
        %v927 = vsub.s32 0, %v926
        %v928 = vsel %vm922, %v927, %v926
        %vm929 = vcmp.lt.s32.totalorder %v909, 0
        %v930 = vsub.s32 0, %v909
        %v931 = vsel %vm929, %v930, %v909
        %v932 = vshrl.u32 %v931, 3
        %v933 = vand.u32 %v931, 7
        %v934 = vsub.s32 0, %v933
        %v935 = vsel %vm929, %v934, %v933
        %vm936 = vcmp.lt.s32.totalorder %v910, 0
        %v937 = vsub.s32 0, %v910
        %v938 = vsel %vm936, %v937, %v910
        %v939 = vshrl.u32 %v938, 3
        %v940 = vand.u32 %v938, 7
        %v941 = vsub.s32 0, %v940
        %v942 = vsel %vm936, %v941, %v940
        %vm943 = vcmp.lt.s32.totalorder %v911, 0
        %v944 = vsub.s32 0, %v911
        %v945 = vsel %vm943, %v944, %v911
        %v946 = vshrl.u32 %v945, 3
        %v947 = vand.u32 %v945, 7
        %v948 = vsub.s32 0, %v947
        %v949 = vsel %vm943, %v948, %v947
        %vm950 = vcmp.lt.s32.totalorder %v912, 0
        %v951 = vsub.s32 0, %v912
        %v952 = vsel %vm950, %v951, %v912
        %v953 = vshrl.u32 %v952, 3
        %v954 = vand.u32 %v952, 7
        %v955 = vsub.s32 0, %v954
        %v956 = vsel %vm950, %v955, %v954
        %vm957 = vcmp.lt.s32.totalorder %v913, 0
        %v958 = vsub.s32 0, %v913
        %v959 = vsel %vm957, %v958, %v913
        %v960 = vshrl.u32 %v959, 3
        %v961 = vand.u32 %v959, 7
        %v962 = vsub.s32 0, %v961
        %v963 = vsel %vm957, %v962, %v961
        %vm964 = vcmp.lt.s32.totalorder %v914, 0
        %v965 = vsub.s32 0, %v914
        %v966 = vsel %vm964, %v965, %v914
        %v967 = vshrl.u32 %v966, 3
        %v968 = vand.u32 %v966, 7
        %v969 = vsub.s32 0, %v968
        %v970 = vsel %vm964, %v969, %v968
        %vm971 = vcmp.ne.s32.totalorder %v921, 0
        %vm972 = vcmp.ne.s32.totalorder %v928, 0
        %vm973 = vcmp.ne.s32.totalorder %v935, 0
        %vm974 = vcmp.ne.s32.totalorder %v942, 0
        %vm975 = vcmp.ne.s32.totalorder %v949, 0
        %vm976 = vcmp.ne.s32.totalorder %v956, 0
        %vm977 = vcmp.ne.s32.totalorder %v963, 0
        %vm978 = vcmp.ne.s32.totalorder %v970, 0
        %vm979 = vcmp.lt.s32.totalorder %v921, 0
        %vm980 = vcmp.lt.s32.totalorder %v928, 0
        %vm981 = vcmp.lt.s32.totalorder %v935, 0
        %vm982 = vcmp.lt.s32.totalorder %v942, 0
        %vm983 = vcmp.lt.s32.totalorder %v949, 0
        %vm984 = vcmp.lt.s32.totalorder %v956, 0
        %vm985 = vcmp.lt.s32.totalorder %v963, 0
        %vm986 = vcmp.lt.s32.totalorder %v970, 0
        %vm987 = vmand %vm979, %vm971
        %vm988 = vmand %vm980, %vm972
        %vm989 = vmand %vm981, %vm973
        %vm990 = vmand %vm982, %vm974
        %vm991 = vmand %vm983, %vm975
        %vm992 = vmand %vm984, %vm976
        %vm993 = vmand %vm985, %vm977
        %vm994 = vmand %vm986, %vm978
        %v995 = vadd.s32 %v921, 8
        %v996 = vadd.s32 %v928, 8
        %v997 = vadd.s32 %v935, 8
        %v998 = vadd.s32 %v942, 8
        %v999 = vadd.s32 %v949, 8
        %v1000 = vadd.s32 %v956, 8
        %v1001 = vadd.s32 %v963, 8
        %v1002 = vadd.s32 %v970, 8
        %v1003 = vsel %vm987, %v995, %v921
        %v1004 = vsel %vm988, %v996, %v928
        %v1005 = vsel %vm989, %v997, %v935
        %v1006 = vsel %vm990, %v998, %v942
        %v1007 = vsel %vm991, %v999, %v949
        %v1008 = vsel %vm992, %v1000, %v956
        %v1009 = vsel %vm993, %v1001, %v963
        %v1010 = vsel %vm994, %v1002, %v970
        %vm1011 = vcmp.ge.s32.totalorder %v1003, 1
        %vm1012 = vcmp.ge.s32.totalorder %v1004, 1
        %vm1013 = vcmp.ge.s32.totalorder %v1005, 1
        %vm1014 = vcmp.ge.s32.totalorder %v1006, 1
        %vm1015 = vcmp.ge.s32.totalorder %v1007, 1
        %vm1016 = vcmp.ge.s32.totalorder %v1008, 1
        %vm1017 = vcmp.ge.s32.totalorder %v1009, 1
        %vm1018 = vcmp.ge.s32.totalorder %v1010, 1
        %vm1019 = vcmp.le.s32.totalorder %v1003, 6
        %vm1020 = vcmp.le.s32.totalorder %v1004, 6
        %vm1021 = vcmp.le.s32.totalorder %v1005, 6
        %vm1022 = vcmp.le.s32.totalorder %v1006, 6
        %vm1023 = vcmp.le.s32.totalorder %v1007, 6
        %vm1024 = vcmp.le.s32.totalorder %v1008, 6
        %vm1025 = vcmp.le.s32.totalorder %v1009, 6
        %vm1026 = vcmp.le.s32.totalorder %v1010, 6
        %v1027 = vld [vmem:[#allocation2] sm:$0xff]
        %v1028 = vld [vmem:[#allocation2 + $0x8] sm:$0xff]
        %v1029 = vld [vmem:[#allocation2 + $0x10] sm:$0xff]
        %v1030 = vld [vmem:[#allocation2 + $0x18] sm:$0xff]
        %v1031 = vld [vmem:[#allocation2 + $0x20] sm:$0xff]
        %v1032 = vld [vmem:[#allocation2 + $0x28] sm:$0xff]
        %v1033 = vld [vmem:[#allocation2 + $0x30] sm:$0xff]
        %v1034 = vld [vmem:[#allocation2 + $0x38] sm:$0xff]
        %v1035 = vsel %vm1011, %v1027, 0.0
        %v1036 = vsel %vm1012, %v1028, 0.0
        %v1037 = vsel %vm1013, %v1029, 0.0
        %v1038 = vsel %vm1014, %v1030, 0.0
        %v1039 = vsel %vm1015, %v1031, 0.0
        %v1040 = vsel %vm1016, %v1032, 0.0
        %v1041 = vsel %vm1017, %v1033, 0.0
        %v1042 = vsel %vm1018, %v1034, 0.0
        %v1043 = vmax.f32 %v879, %v1035
        %v1044 = vmax.f32 %v880, %v1036
        %v1045 = vmax.f32 %v881, %v1037
        %v1046 = vmax.f32 %v882, %v1038
        %v1047 = vmax.f32 %v883, %v1039
        %v1048 = vmax.f32 %v884, %v1040
        %v1049 = vmax.f32 %v885, %v1041
        %v1050 = vmax.f32 %v886, %v1042
        %v1051 = vld [vmem:[#allocation2 + $0x1] sm:$0xff]
        %v1052 = vld [vmem:[#allocation2 + $0x9] sm:$0xff]
        %v1053 = vld [vmem:[#allocation2 + $0x11] sm:$0xff]
        %v1054 = vld [vmem:[#allocation2 + $0x19] sm:$0xff]
        %v1055 = vld [vmem:[#allocation2 + $0x21] sm:$0xff]
        %v1056 = vld [vmem:[#allocation2 + $0x29] sm:$0xff]
        %v1057 = vld [vmem:[#allocation2 + $0x31] sm:$0xff]
        %v1058 = vld [vmem:[#allocation2 + $0x39] sm:$0xff]
        %v1059 = vmax.f32 %v1043, %v1051
        %v1060 = vmax.f32 %v1044, %v1052
        %v1061 = vmax.f32 %v1045, %v1053
        %v1062 = vmax.f32 %v1046, %v1054
        %v1063 = vmax.f32 %v1047, %v1055
        %v1064 = vmax.f32 %v1048, %v1056
        %v1065 = vmax.f32 %v1049, %v1057
        %v1066 = vmax.f32 %v1050, %v1058
        %v1067 = vld [vmem:[#allocation2 + $0x2] sm:$0xff]
        %v1068 = vld [vmem:[#allocation2 + $0xa] sm:$0xff]
        %v1069 = vld [vmem:[#allocation2 + $0x12] sm:$0xff]
        %v1070 = vld [vmem:[#allocation2 + $0x1a] sm:$0xff]
        %v1071 = vld [vmem:[#allocation2 + $0x22] sm:$0xff]
        %v1072 = vld [vmem:[#allocation2 + $0x2a] sm:$0xff]
        %v1073 = vld [vmem:[#allocation2 + $0x32] sm:$0xff]
        %v1074 = vld [vmem:[#allocation2 + $0x3a] sm:$0xff]
        %v1075 = vsel %vm1019, %v1067, 0.0
        %v1076 = vsel %vm1020, %v1068, 0.0
        %v1077 = vsel %vm1021, %v1069, 0.0
        %v1078 = vsel %vm1022, %v1070, 0.0
        %v1079 = vsel %vm1023, %v1071, 0.0
        %v1080 = vsel %vm1024, %v1072, 0.0
        %v1081 = vsel %vm1025, %v1073, 0.0
        %v1082 = vsel %vm1026, %v1074, 0.0
        %v1083 = vmax.f32 %v1059, %v1075
        %v1084 = vmax.f32 %v1060, %v1076
        %v1085 = vmax.f32 %v1061, %v1077
        %v1086 = vmax.f32 %v1062, %v1078
        %v1087 = vmax.f32 %v1063, %v1079
        %v1088 = vmax.f32 %v1064, %v1080
        %v1089 = vmax.f32 %v1065, %v1081
        %v1090 = vmax.f32 %v1066, %v1082
        %v1091 = vld [vmem:[#allocation2 + $0x40] sm:$0xff]
        %v1092 = vsel %vm1011, %v1028, 0.0
        %v1093 = vsel %vm1012, %v1029, 0.0
        %v1094 = vsel %vm1013, %v1030, 0.0
        %v1095 = vsel %vm1014, %v1031, 0.0
        %v1096 = vsel %vm1015, %v1032, 0.0
        %v1097 = vsel %vm1016, %v1033, 0.0
        %v1098 = vsel %vm1017, %v1034, 0.0
        %v1099 = vsel %vm1018, %v1091, 0.0
        %v1100 = vmax.f32 %v1083, %v1092
        %v1101 = vmax.f32 %v1084, %v1093
        %v1102 = vmax.f32 %v1085, %v1094
        %v1103 = vmax.f32 %v1086, %v1095
        %v1104 = vmax.f32 %v1087, %v1096
        %v1105 = vmax.f32 %v1088, %v1097
        %v1106 = vmax.f32 %v1089, %v1098
        %v1107 = vmax.f32 %v1090, %v1099
        %v1108 = vld [vmem:[#allocation2 + $0x42] sm:$0xff]
        %v1109 = vsel %vm1019, %v1068, 0.0
        %v1110 = vsel %vm1020, %v1069, 0.0
        %v1111 = vsel %vm1021, %v1070, 0.0
        %v1112 = vsel %vm1022, %v1071, 0.0
        %v1113 = vsel %vm1023, %v1072, 0.0
        %v1114 = vsel %vm1024, %v1073, 0.0
        %v1115 = vsel %vm1025, %v1074, 0.0
        %v1116 = vsel %vm1026, %v1108, 0.0
        %v1117 = vmax.f32 %v1100, %v1109
        %v1118 = vmax.f32 %v1101, %v1110
        %v1119 = vmax.f32 %v1102, %v1111
        %v1120 = vmax.f32 %v1103, %v1112
        %v1121 = vmax.f32 %v1104, %v1113
        %v1122 = vmax.f32 %v1105, %v1114
        %v1123 = vmax.f32 %v1106, %v1115
        %v1124 = vmax.f32 %v1107, %v1116
        %v1125 = vld [vmem:[#allocation2 + $0x48] sm:$0xff]
        %v1126 = vsel %vm1011, %v1029, 0.0
        %v1127 = vsel %vm1012, %v1030, 0.0
        %v1128 = vsel %vm1013, %v1031, 0.0
        %v1129 = vsel %vm1014, %v1032, 0.0
        %v1130 = vsel %vm1015, %v1033, 0.0
        %v1131 = vsel %vm1016, %v1034, 0.0
        %v1132 = vsel %vm1017, %v1091, 0.0
        %v1133 = vsel %vm1018, %v1125, 0.0
        %v1134 = vmax.f32 %v1117, %v1126
        %v1135 = vmax.f32 %v1118, %v1127
        %v1136 = vmax.f32 %v1119, %v1128
        %v1137 = vmax.f32 %v1120, %v1129
        %v1138 = vmax.f32 %v1121, %v1130
        %v1139 = vmax.f32 %v1122, %v1131
        %v1140 = vmax.f32 %v1123, %v1132
        %v1141 = vmax.f32 %v1124, %v1133
        %v1142 = vld [vmem:[#allocation2 + $0x41] sm:$0xff]
        %v1143 = vld [vmem:[#allocation2 + $0x49] sm:$0xff]
        %v1144 = vmax.f32 %v1134, %v1053
        %v1145 = vmax.f32 %v1135, %v1054
        %v1146 = vmax.f32 %v1136, %v1055
        %v1147 = vmax.f32 %v1137, %v1056
        %v1148 = vmax.f32 %v1138, %v1057
        %v1149 = vmax.f32 %v1139, %v1058
        %v1150 = vmax.f32 %v1140, %v1142
        %v1151 = vmax.f32 %v1141, %v1143
        %v1152 = vld [vmem:[#allocation2 + $0x4a] sm:$0xff]
        %v1153 = vsel %vm1019, %v1069, 0.0
        %v1154 = vsel %vm1020, %v1070, 0.0
        %v1155 = vsel %vm1021, %v1071, 0.0
        %v1156 = vsel %vm1022, %v1072, 0.0
        %v1157 = vsel %vm1023, %v1073, 0.0
        %v1158 = vsel %vm1024, %v1074, 0.0
        %v1159 = vsel %vm1025, %v1108, 0.0
        %v1160 = vsel %vm1026, %v1152, 0.0
        %v1161 = vmax.f32 %v1144, %v1153
        %v1162 = vmax.f32 %v1145, %v1154
        %v1163 = vmax.f32 %v1146, %v1155
        %v1164 = vmax.f32 %v1147, %v1156
        %v1165 = vmax.f32 %v1148, %v1157
        %v1166 = vmax.f32 %v1149, %v1158
        %v1167 = vmax.f32 %v1150, %v1159
        %v1168 = vmax.f32 %v1151, %v1160
        %1169 = vst [vmem:[#allocation2] sm:$0xff] %v1161
        %1170 = vst [vmem:[#allocation2 + $0x8] sm:$0xff] %v1162
        %1171 = vst [vmem:[#allocation2 + $0x10] sm:$0xff] %v1163
        %1172 = vst [vmem:[#allocation2 + $0x18] sm:$0xff] %v1164
        %1173 = vst [vmem:[#allocation2 + $0x20] sm:$0xff] %v1165
        %1174 = vst [vmem:[#allocation2 + $0x28] sm:$0xff] %v1166
        %1175 = vst [vmem:[#allocation2 + $0x30] sm:$0xff] %v1167
        %1176 = vst [vmem:[#allocation2 + $0x38] sm:$0xff] %v1168
        %v1177 = vld [vmem:[#allocation2] ss:$2 sm:$0xf]
        %1178 = vst [vmem:[#allocation3] sm:$0xf] %v1177
        %s1179 = scalar_lea.vmem [#allocation2], 16
        %v1180 = vld [vmem:[%s1179] ss:$2 sm:$0xf]
        %1181 = vst [vmem:[#allocation3 + $0x4] sm:$0xf] %v1180
        %s1182 = scalar_lea.vmem [#allocation2], 32
        %v1183 = vld [vmem:[%s1182] ss:$2 sm:$0xf]
        %1184 = vst [vmem:[#allocation3 + $0x8] sm:$0xf] %v1183
        %s1185 = scalar_lea.vmem [#allocation2], 48
        %v1186 = vld [vmem:[%s1185] ss:$2 sm:$0xf]
        %1187 = vst [vmem:[#allocation3 + $0xc] sm:$0xf] %v1186
        %v1188 = vld [vmem:[#allocation3] sm:$0xff]
        %v1189 = vld [vmem:[#allocation3 + $0x8] sm:$0xff]
        %1190 = vst [vmem:[#allocation2] sm:$0xff] 0.0
        %1191 = vst [vmem:[#allocation2 + $0x8] sm:$0xff] 0.0
        %1192 = vst [vmem:[#allocation2 + $0x10] sm:$0xff] 0.0
        %1193 = vst [vmem:[#allocation2 + $0x18] sm:$0x3] 0.0
        %1194 = vst [vmem:[#allocation2 + $0x5] sm:$0xff] %v1188
        %1195 = vst [vmem:[#allocation2 + $0xd] sm:$0xff] %v1189
        %vm1196 = vcmp.lt.s32.totalorder %v907, 0
        %v1197 = vsub.s32 0, %v907
        %v1198 = vsel %vm1196, %v1197, %v907
        %v1199 = vshrl.u32 %v1198, 2
        %v1200 = vand.u32 %v1198, 3
        %v1201 = vsub.s32 0, %v1200
        %v1202 = vsel %vm1196, %v1201, %v1200
        %vm1203 = vcmp.lt.s32.totalorder %v908, 0
        %v1204 = vsub.s32 0, %v908
        %v1205 = vsel %vm1203, %v1204, %v908
        %v1206 = vshrl.u32 %v1205, 2
        %v1207 = vand.u32 %v1205, 3
        %v1208 = vsub.s32 0, %v1207
        %v1209 = vsel %vm1203, %v1208, %v1207
        %vm1210 = vcmp.ne.s32.totalorder %v1202, 0
        %vm1211 = vcmp.ne.s32.totalorder %v1209, 0
        %vm1212 = vcmp.lt.s32.totalorder %v1202, 0
        %vm1213 = vcmp.lt.s32.totalorder %v1209, 0
        %vm1214 = vmand %vm1212, %vm1210
        %vm1215 = vmand %vm1213, %vm1211
        %v1216 = vadd.s32 %v1202, 4
        %v1217 = vadd.s32 %v1209, 4
        %v1218 = vsel %vm1214, %v1216, %v1202
        %v1219 = vsel %vm1215, %v1217, %v1209
        %vm1220 = vcmp.ge.s32.totalorder %v1218, 1
        %vm1221 = vcmp.ge.s32.totalorder %v1219, 1
        %vm1222 = vcmp.le.s32.totalorder %v1218, 2
        %vm1223 = vcmp.le.s32.totalorder %v1219, 2
        %v1224 = vld [vmem:[#allocation2] sm:$0xff]
        %v1225 = vld [vmem:[#allocation2 + $0x8] sm:$0xff]
        %v1226 = vsel %vm1220, %v1224, 0.0
        %v1227 = vsel %vm1221, %v1225, 0.0
        %v1228 = vpack.c.bf16 %v1227, %v1226
        %v1229 = vld [vmem:[#allocation2 + $0x1] sm:$0xff]
        %v1230 = vld [vmem:[#allocation2 + $0x9] sm:$0xff]
        %v1231 = vpack.c.bf16 %v1230, %v1229
        %v1232 = vld [vmem:[#allocation2 + $0x2] sm:$0xff]
        %v1233 = vld [vmem:[#allocation2 + $0xa] sm:$0xff]
        %v1234 = vsel %vm1222, %v1232, 0.0
        %v1235 = vsel %vm1223, %v1233, 0.0
        %v1236 = vpack.c.bf16 %v1235, %v1234
        %v1237 = vld [vmem:[#allocation2 + $0x4] sm:$0xff]
        %v1238 = vld [vmem:[#allocation2 + $0xc] sm:$0xff]
        %v1239 = vsel %vm1220, %v1237, 0.0
        %v1240 = vsel %vm1221, %v1238, 0.0
        %v1241 = vpack.c.bf16 %v1240, %v1239
        %v1242 = vld [vmem:[#allocation2 + $0x5] sm:$0xff]
        %v1243 = vld [vmem:[#allocation2 + $0xd] sm:$0xff]
        %v1244 = vpack.c.bf16 %v1243, %v1242
        %v1245 = vld [vmem:[#allocation2 + $0x6] sm:$0xff]
        %v1246 = vld [vmem:[#allocation2 + $0xe] sm:$0xff]
        %v1247 = vsel %vm1222, %v1245, 0.0
        %v1248 = vsel %vm1223, %v1246, 0.0
        %v1249 = vpack.c.bf16 %v1248, %v1247
        %v1250 = vld [vmem:[#allocation2 + $0x10] sm:$0xff]
        %v1251 = vsel %vm1220, %v1225, 0.0
        %v1252 = vsel %vm1221, %v1250, 0.0
        %v1253 = vpack.c.bf16 %v1252, %v1251
        %v1254 = vld [vmem:[#allocation2 + $0x11] sm:$0xff]
        %v1255 = vpack.c.bf16 %v1254, %v1230
        %v1256 = vld [vmem:[#allocation2 + $0x12] sm:$0xff]
        %v1257 = vsel %vm1222, %v1233, 0.0
        %v1258 = vsel %vm1223, %v1256, 0.0
        %v1259 = vpack.c.bf16 %v1258, %v1257
        %v1260 = vld [vmem:[%s3] sm:$0xf]
        %v1261 = vld [vmem:[%s3 + $0x4] sm:$0xf]
        %v1262 = vld [vmem:[%s3 + $0x8] sm:$0xf]
        %v1263 = vld [vmem:[%s3 + $0xc] sm:$0xf]
        %v1264 = vld [vmem:[%s3 + $0x10] sm:$0xf]
        %v1265 = vld [vmem:[%s3 + $0x14] sm:$0xf]
        %v1266 = vld [vmem:[%s3 + $0x18] sm:$0xf]
        %v1267 = vld [vmem:[%s3 + $0x1c] sm:$0xf]
        %v1268 = vld [vmem:[%s3 + $0x20] sm:$0xf]
        %v1269 = vld [vmem:[%s3 + $0x24] sm:$0xf]
        %v1270 = vld [vmem:[%s3 + $0x28] sm:$0xf]
        %v1271 = vld [vmem:[%s3 + $0x2c] sm:$0xf]
        %v1272 = vld [vmem:[%s3 + $0x30] sm:$0xf]
        %v1273 = vld [vmem:[%s3 + $0x34] sm:$0xf]
        %v1274 = vld [vmem:[%s3 + $0x38] sm:$0xf]
        %v1275 = vld [vmem:[%s3 + $0x3c] sm:$0xf]
        %v1276 = vld [vmem:[%s3 + $0x40] sm:$0xf]
        %v1277 = vld [vmem:[%s3 + $0x44] sm:$0xf]
        %v1278 = vld [vmem:[%s3 + $0x48] sm:$0xf]
        %v1279 = vld [vmem:[%s3 + $0x4c] sm:$0xf]
        %v1280 = vld [vmem:[%s3 + $0x50] sm:$0xf]
        %v1281 = vld [vmem:[%s3 + $0x54] sm:$0xf]
        %v1282 = vld [vmem:[%s3 + $0x58] sm:$0xf]
        %v1283 = vld [vmem:[%s3 + $0x5c] sm:$0xf]
        %v1284 = vld [vmem:[%s3 + $0x60] sm:$0xf]
        %v1285 = vld [vmem:[%s3 + $0x64] sm:$0xf]
        %v1286 = vld [vmem:[%s3 + $0x68] sm:$0xf]
        %v1287 = vld [vmem:[%s3 + $0x6c] sm:$0xf]
        %v1288 = vld [vmem:[%s3 + $0x70] sm:$0xf]
        %v1289 = vld [vmem:[%s3 + $0x74] sm:$0xf]
        %v1290 = vld [vmem:[%s3 + $0x78] sm:$0xf]
        %v1291 = vld [vmem:[%s3 + $0x7c] sm:$0xf]
        %v1292 = vld [vmem:[%s3 + $0x80] sm:$0xf]
        %v1293 = vld [vmem:[%s3 + $0x84] sm:$0xf]
        %v1294 = vld [vmem:[%s3 + $0x88] sm:$0xf]
        %v1295 = vld [vmem:[%s3 + $0x8c] sm:$0xf]
        %v1296 = vld [vmem:[%s3 + $0x90] sm:$0xf]
        %v1297 = vld [vmem:[%s3 + $0x94] sm:$0xf]
        %v1298 = vld [vmem:[%s3 + $0x98] sm:$0xf]
        %v1299 = vld [vmem:[%s3 + $0x9c] sm:$0xf]
        %v1300 = vld [vmem:[%s3 + $0xa0] sm:$0xf]
        %v1301 = vld [vmem:[%s3 + $0xa4] sm:$0xf]
        %v1302 = vld [vmem:[%s3 + $0xa8] sm:$0xf]
        %v1303 = vld [vmem:[%s3 + $0xac] sm:$0xf]
        %v1304 = vld [vmem:[%s3 + $0xb0] sm:$0xf]
        %v1305 = vld [vmem:[%s3 + $0xb4] sm:$0xf]
        %v1306 = vld [vmem:[%s3 + $0xb8] sm:$0xf]
        %v1307 = vld [vmem:[%s3 + $0xbc] sm:$0xf]
        %v1308 = vld [vmem:[%s3 + $0xc0] sm:$0xf]
        %v1309 = vld [vmem:[%s3 + $0xc4] sm:$0xf]
        %v1310 = vld [vmem:[%s3 + $0xc8] sm:$0xf]
        %v1311 = vld [vmem:[%s3 + $0xcc] sm:$0xf]
        %v1312 = vld [vmem:[%s3 + $0xd0] sm:$0xf]
        %v1313 = vld [vmem:[%s3 + $0xd4] sm:$0xf]
        %v1314 = vld [vmem:[%s3 + $0xd8] sm:$0xf]
        %v1315 = vld [vmem:[%s3 + $0xdc] sm:$0xf]
        %v1316 = vld [vmem:[%s3 + $0xe0] sm:$0xf]
        %v1317 = vld [vmem:[%s3 + $0xe4] sm:$0xf]
        %v1318 = vld [vmem:[%s3 + $0xe8] sm:$0xf]
        %v1319 = vld [vmem:[%s3 + $0xec] sm:$0xf]
        %v1320 = vld [vmem:[%s3 + $0xf0] sm:$0xf]
        %v1321 = vld [vmem:[%s3 + $0xf4] sm:$0xf]
        %v1322 = vld [vmem:[%s3 + $0xf8] sm:$0xf]
        %v1323 = vld [vmem:[%s3 + $0xfc] sm:$0xf]
        %v1324 = vld [vmem:[%s3 + $0x100] sm:$0xf]
        %v1325 = vld [vmem:[%s3 + $0x104] sm:$0xf]
        %v1326 = vld [vmem:[%s3 + $0x108] sm:$0xf]
        %v1327 = vld [vmem:[%s3 + $0x10c] sm:$0xf]
        %v1328 = vld [vmem:[%s3 + $0x110] sm:$0xf]
        %v1329 = vld [vmem:[%s3 + $0x114] sm:$0xf]
        %v1330 = vld [vmem:[%s3 + $0x118] sm:$0xf]
        %v1331 = vld [vmem:[%s3 + $0x11c] sm:$0xf]
        %v1332 = vld [vmem:[%s3 + $0x120] sm:$0xf]
        %v1333 = vld [vmem:[%s3 + $0x124] sm:$0xf]
        %v1334 = vld [vmem:[%s3 + $0x128] sm:$0xf]
        %v1335 = vld [vmem:[%s3 + $0x12c] sm:$0xf]
        %v1336 = vld [vmem:[%s3 + $0x130] sm:$0xf]
        %v1337 = vld [vmem:[%s3 + $0x134] sm:$0xf]
        %v1338 = vld [vmem:[%s3 + $0x138] sm:$0xf]
        %v1339 = vld [vmem:[%s3 + $0x13c] sm:$0xf]
        %v1340 = vld [vmem:[%s3 + $0x140] sm:$0xf]
        %v1341 = vld [vmem:[%s3 + $0x144] sm:$0xf]
        %v1342 = vld [vmem:[%s3 + $0x148] sm:$0xf]
        %v1343 = vld [vmem:[%s3 + $0x14c] sm:$0xf]
        %v1344 = vld [vmem:[%s3 + $0x150] sm:$0xf]
        %v1345 = vld [vmem:[%s3 + $0x154] sm:$0xf]
        %v1346 = vld [vmem:[%s3 + $0x158] sm:$0xf]
        %v1347 = vld [vmem:[%s3 + $0x15c] sm:$0xf]
        %v1348 = vld [vmem:[%s3 + $0x160] sm:$0xf]
        %v1349 = vld [vmem:[%s3 + $0x164] sm:$0xf]
        %v1350 = vld [vmem:[%s3 + $0x168] sm:$0xf]
        %v1351 = vld [vmem:[%s3 + $0x16c] sm:$0xf]
        %v1352 = vld [vmem:[%s3 + $0x170] sm:$0xf]
        %v1353 = vld [vmem:[%s3 + $0x174] sm:$0xf]
        %v1354 = vld [vmem:[%s3 + $0x178] sm:$0xf]
        %v1355 = vld [vmem:[%s3 + $0x17c] sm:$0xf]
        %v1356 = vld [vmem:[%s3 + $0x180] sm:$0xf]
        %v1357 = vld [vmem:[%s3 + $0x184] sm:$0xf]
        %v1358 = vld [vmem:[%s3 + $0x188] sm:$0xf]
        %v1359 = vld [vmem:[%s3 + $0x18c] sm:$0xf]
        %v1360 = vld [vmem:[%s3 + $0x190] sm:$0xf]
        %v1361 = vld [vmem:[%s3 + $0x194] sm:$0xf]
        %v1362 = vld [vmem:[%s3 + $0x198] sm:$0xf]
        %v1363 = vld [vmem:[%s3 + $0x19c] sm:$0xf]
        %v1364 = vld [vmem:[%s3 + $0x1a0] sm:$0xf]
        %v1365 = vld [vmem:[%s3 + $0x1a4] sm:$0xf]
        %v1366 = vld [vmem:[%s3 + $0x1a8] sm:$0xf]
        %v1367 = vld [vmem:[%s3 + $0x1ac] sm:$0xf]
        %v1368 = vld [vmem:[%s3 + $0x1b0] sm:$0xf]
        %v1369 = vld [vmem:[%s3 + $0x1b4] sm:$0xf]
        %v1370 = vld [vmem:[%s3 + $0x1b8] sm:$0xf]
        %v1371 = vld [vmem:[%s3 + $0x1bc] sm:$0xf]
        %v1372 = vld [vmem:[%s3 + $0x1c0] sm:$0xf]
        %v1373 = vld [vmem:[%s3 + $0x1c4] sm:$0xf]
        %v1374 = vld [vmem:[%s3 + $0x1c8] sm:$0xf]
        %v1375 = vld [vmem:[%s3 + $0x1cc] sm:$0xf]
        %v1376 = vld [vmem:[%s3 + $0x1d0] sm:$0xf]
        %v1377 = vld [vmem:[%s3 + $0x1d4] sm:$0xf]
        %v1378 = vld [vmem:[%s3 + $0x1d8] sm:$0xf]
        %v1379 = vld [vmem:[%s3 + $0x1dc] sm:$0xf]
        %v1380 = vld [vmem:[%s3 + $0x1e0] sm:$0xf]
        %v1381 = vld [vmem:[%s3 + $0x1e4] sm:$0xf]
        %v1382 = vld [vmem:[%s3 + $0x1e8] sm:$0xf]
        %v1383 = vld [vmem:[%s3 + $0x1ec] sm:$0xf]
        %v1384 = vld [vmem:[%s3 + $0x1f0] sm:$0xf]
        %v1385 = vld [vmem:[%s3 + $0x1f4] sm:$0xf]
        %v1386 = vld [vmem:[%s3 + $0x1f8] sm:$0xf]
        %v1387 = vld [vmem:[%s3 + $0x1fc] sm:$0xf]
        %v1388 = vld [vmem:[%s3 + $0x200] sm:$0xf]
        %v1389 = vld [vmem:[%s3 + $0x204] sm:$0xf]
        %v1390 = vld [vmem:[%s3 + $0x208] sm:$0xf]
        %v1391 = vld [vmem:[%s3 + $0x20c] sm:$0xf]
        %v1392 = vld [vmem:[%s3 + $0x210] sm:$0xf]
        %v1393 = vld [vmem:[%s3 + $0x214] sm:$0xf]
        %v1394 = vld [vmem:[%s3 + $0x218] sm:$0xf]
        %v1395 = vld [vmem:[%s3 + $0x21c] sm:$0xf]
        %v1396 = vld [vmem:[%s3 + $0x220] sm:$0xf]
        %v1397 = vld [vmem:[%s3 + $0x224] sm:$0xf]
        %v1398 = vld [vmem:[%s3 + $0x228] sm:$0xf]
        %v1399 = vld [vmem:[%s3 + $0x22c] sm:$0xf]
        %v1400 = vld [vmem:[%s3 + $0x230] sm:$0xf]
        %v1401 = vld [vmem:[%s3 + $0x234] sm:$0xf]
        %v1402 = vld [vmem:[%s3 + $0x238] sm:$0xf]
        %v1403 = vld [vmem:[%s3 + $0x23c] sm:$0xf]
        %v1404 = vld [vmem:[%s12] sm:$0x1]
        %v1406 = vlaneseq
        %v1407 = vshrl.u32 %v1406, 7
        %v1408 = vsub.s32 0, %v1407
        %v1409 = vrot.slane %v1404, %v1408
        %v1555 = vunpack.c.l.b16 %v1260
        %v1556 = vunpack.c.l.b16 %v1261
        %v1557 = vunpack.c.l.b16 %v1262
        %v1558 = vunpack.c.l.b16 %v1263
        %v1559 = vunpack.c.l.b16 %v1264
        %v1560 = vunpack.c.l.b16 %v1265
        %v1561 = vunpack.c.l.b16 %v1266
        %v1562 = vunpack.c.l.b16 %v1267
        %v1563 = vunpack.c.l.b16 %v1268
        %v1564 = vunpack.c.l.b16 %v1269
        %v1565 = vunpack.c.l.b16 %v1270
        %v1566 = vunpack.c.l.b16 %v1271
        %v1567 = vunpack.c.l.b16 %v1272
        %v1568 = vunpack.c.l.b16 %v1273
        %v1569 = vunpack.c.l.b16 %v1274
        %v1570 = vunpack.c.l.b16 %v1275
        %v1571 = vunpack.c.l.b16 %v1276
        %v1572 = vunpack.c.l.b16 %v1277
        %v1573 = vunpack.c.l.b16 %v1278
        %v1574 = vunpack.c.l.b16 %v1279
        %v1575 = vunpack.c.l.b16 %v1280
        %v1576 = vunpack.c.l.b16 %v1281
        %v1577 = vunpack.c.l.b16 %v1282
        %v1578 = vunpack.c.l.b16 %v1283
        %v1579 = vunpack.c.l.b16 %v1284
        %v1580 = vunpack.c.l.b16 %v1285
        %v1581 = vunpack.c.l.b16 %v1286
        %v1582 = vunpack.c.l.b16 %v1287
        %v1583 = vunpack.c.l.b16 %v1288
        %v1584 = vunpack.c.l.b16 %v1289
        %v1585 = vunpack.c.l.b16 %v1290
        %v1586 = vunpack.c.l.b16 %v1291
        %v1587 = vunpack.c.l.b16 %v1292
        %v1588 = vunpack.c.l.b16 %v1293
        %v1589 = vunpack.c.l.b16 %v1294
        %v1590 = vunpack.c.l.b16 %v1295
        %v1591 = vunpack.c.l.b16 %v1296
        %v1592 = vunpack.c.l.b16 %v1297
        %v1593 = vunpack.c.l.b16 %v1298
        %v1594 = vunpack.c.l.b16 %v1299
        %v1595 = vunpack.c.l.b16 %v1300
        %v1596 = vunpack.c.l.b16 %v1301
        %v1597 = vunpack.c.l.b16 %v1302
        %v1598 = vunpack.c.l.b16 %v1303
        %v1599 = vunpack.c.l.b16 %v1304
        %v1600 = vunpack.c.l.b16 %v1305
        %v1601 = vunpack.c.l.b16 %v1306
        %v1602 = vunpack.c.l.b16 %v1307
        %v1603 = vunpack.c.l.b16 %v1308
        %v1604 = vunpack.c.l.b16 %v1309
        %v1605 = vunpack.c.l.b16 %v1310
        %v1606 = vunpack.c.l.b16 %v1311
        %v1607 = vunpack.c.l.b16 %v1312
        %v1608 = vunpack.c.l.b16 %v1313
        %v1609 = vunpack.c.l.b16 %v1314
        %v1610 = vunpack.c.l.b16 %v1315
        %v1611 = vunpack.c.l.b16 %v1316
        %v1612 = vunpack.c.l.b16 %v1317
        %v1613 = vunpack.c.l.b16 %v1318
        %v1614 = vunpack.c.l.b16 %v1319
        %v1615 = vunpack.c.l.b16 %v1320
        %v1616 = vunpack.c.l.b16 %v1321
        %v1617 = vunpack.c.l.b16 %v1322
        %v1618 = vunpack.c.l.b16 %v1323
        %v1619 = vunpack.c.l.b16 %v1324
        %v1620 = vunpack.c.l.b16 %v1325
        %v1621 = vunpack.c.l.b16 %v1326
        %v1622 = vunpack.c.l.b16 %v1327
        %v1623 = vunpack.c.l.b16 %v1328
        %v1624 = vunpack.c.l.b16 %v1329
        %v1625 = vunpack.c.l.b16 %v1330
        %v1626 = vunpack.c.l.b16 %v1331
        %v1627 = vunpack.c.l.b16 %v1332
        %v1628 = vunpack.c.l.b16 %v1333
        %v1629 = vunpack.c.l.b16 %v1334
        %v1630 = vunpack.c.l.b16 %v1335
        %v1631 = vunpack.c.l.b16 %v1336
        %v1632 = vunpack.c.l.b16 %v1337
        %v1633 = vunpack.c.l.b16 %v1338
        %v1634 = vunpack.c.l.b16 %v1339
        %v1635 = vunpack.c.l.b16 %v1340
        %v1636 = vunpack.c.l.b16 %v1341
        %v1637 = vunpack.c.l.b16 %v1342
        %v1638 = vunpack.c.l.b16 %v1343
        %v1639 = vunpack.c.l.b16 %v1344
        %v1640 = vunpack.c.l.b16 %v1345
        %v1641 = vunpack.c.l.b16 %v1346
        %v1642 = vunpack.c.l.b16 %v1347
        %v1643 = vunpack.c.l.b16 %v1348
        %v1644 = vunpack.c.l.b16 %v1349
        %v1645 = vunpack.c.l.b16 %v1350
        %v1646 = vunpack.c.l.b16 %v1351
        %v1647 = vunpack.c.l.b16 %v1352
        %v1648 = vunpack.c.l.b16 %v1353
        %v1649 = vunpack.c.l.b16 %v1354
        %v1650 = vunpack.c.l.b16 %v1355
        %v1651 = vunpack.c.l.b16 %v1356
        %v1652 = vunpack.c.l.b16 %v1357
        %v1653 = vunpack.c.l.b16 %v1358
        %v1654 = vunpack.c.l.b16 %v1359
        %v1655 = vunpack.c.l.b16 %v1360
        %v1656 = vunpack.c.l.b16 %v1361
        %v1657 = vunpack.c.l.b16 %v1362
        %v1658 = vunpack.c.l.b16 %v1363
        %v1659 = vunpack.c.l.b16 %v1364
        %v1660 = vunpack.c.l.b16 %v1365
        %v1661 = vunpack.c.l.b16 %v1366
        %v1662 = vunpack.c.l.b16 %v1367
        %v1663 = vunpack.c.l.b16 %v1368
        %v1664 = vunpack.c.l.b16 %v1369
        %v1665 = vunpack.c.l.b16 %v1370
        %v1666 = vunpack.c.l.b16 %v1371
        %v1667 = vunpack.c.l.b16 %v1372
        %v1668 = vunpack.c.l.b16 %v1373
        %v1669 = vunpack.c.l.b16 %v1374
        %v1670 = vunpack.c.l.b16 %v1375
        %v1671 = vunpack.c.l.b16 %v1376
        %v1672 = vunpack.c.l.b16 %v1377
        %v1673 = vunpack.c.l.b16 %v1378
        %v1674 = vunpack.c.l.b16 %v1379
        %v1675 = vunpack.c.l.b16 %v1380
        %v1676 = vunpack.c.l.b16 %v1381
        %v1677 = vunpack.c.l.b16 %v1382
        %v1678 = vunpack.c.l.b16 %v1383
        %v1679 = vunpack.c.l.b16 %v1384
        %v1680 = vunpack.c.l.b16 %v1385
        %v1681 = vunpack.c.l.b16 %v1386
        %v1682 = vunpack.c.l.b16 %v1387
        %v1683 = vunpack.c.l.b16 %v1388
        %v1684 = vunpack.c.l.b16 %v1389
        %v1685 = vunpack.c.l.b16 %v1390
        %v1686 = vunpack.c.l.b16 %v1391
        %v1687 = vunpack.c.l.b16 %v1392
        %v1688 = vunpack.c.l.b16 %v1393
        %v1689 = vunpack.c.l.b16 %v1394
        %v1690 = vunpack.c.l.b16 %v1395
        %v1691 = vunpack.c.l.b16 %v1396
        %v1692 = vunpack.c.l.b16 %v1397
        %v1693 = vunpack.c.l.b16 %v1398
        %v1694 = vunpack.c.l.b16 %v1399
        %v1695 = vunpack.c.l.b16 %v1400
        %v1696 = vunpack.c.l.b16 %v1401
        %v1697 = vunpack.c.l.b16 %v1402
        %v1698 = vunpack.c.l.b16 %v1403
        %v1699 = vpack.c.b16 %v1556, %v1555
        %v1700 = vpack.c.b16 %v1558, %v1557
        %v1701 = vpack.c.b16 %v1560, %v1559
        %v1702 = vpack.c.b16 %v1562, %v1561
        %v1703 = vpack.c.b16 %v1564, %v1563
        %v1704 = vpack.c.b16 %v1566, %v1565
        %v1705 = vpack.c.b16 %v1568, %v1567
        %v1706 = vpack.c.b16 %v1570, %v1569
        %v1707 = vpack.c.b16 %v1572, %v1571
        %v1708 = vpack.c.b16 %v1574, %v1573
        %v1709 = vpack.c.b16 %v1576, %v1575
        %v1710 = vpack.c.b16 %v1578, %v1577
        %v1711 = vpack.c.b16 %v1580, %v1579
        %v1712 = vpack.c.b16 %v1582, %v1581
        %v1713 = vpack.c.b16 %v1584, %v1583
        %v1714 = vpack.c.b16 %v1586, %v1585
        %v1715 = vpack.c.b16 %v1588, %v1587
        %v1716 = vpack.c.b16 %v1590, %v1589
        %v1717 = vpack.c.b16 %v1592, %v1591
        %v1718 = vpack.c.b16 %v1594, %v1593
        %v1719 = vpack.c.b16 %v1596, %v1595
        %v1720 = vpack.c.b16 %v1598, %v1597
        %v1721 = vpack.c.b16 %v1600, %v1599
        %v1722 = vpack.c.b16 %v1602, %v1601
        %v1723 = vpack.c.b16 %v1604, %v1603
        %v1724 = vpack.c.b16 %v1606, %v1605
        %v1725 = vpack.c.b16 %v1608, %v1607
        %v1726 = vpack.c.b16 %v1610, %v1609
        %v1727 = vpack.c.b16 %v1612, %v1611
        %v1728 = vpack.c.b16 %v1614, %v1613
        %v1729 = vpack.c.b16 %v1616, %v1615
        %v1730 = vpack.c.b16 %v1618, %v1617
        %v1731 = vpack.c.b16 %v1620, %v1619
        %v1732 = vpack.c.b16 %v1622, %v1621
        %v1733 = vpack.c.b16 %v1624, %v1623
        %v1734 = vpack.c.b16 %v1626, %v1625
        %v1735 = vpack.c.b16 %v1628, %v1627
        %v1736 = vpack.c.b16 %v1630, %v1629
        %v1737 = vpack.c.b16 %v1632, %v1631
        %v1738 = vpack.c.b16 %v1634, %v1633
        %v1739 = vpack.c.b16 %v1636, %v1635
        %v1740 = vpack.c.b16 %v1638, %v1637
        %v1741 = vpack.c.b16 %v1640, %v1639
        %v1742 = vpack.c.b16 %v1642, %v1641
        %v1743 = vpack.c.b16 %v1644, %v1643
        %v1744 = vpack.c.b16 %v1646, %v1645
        %v1745 = vpack.c.b16 %v1648, %v1647
        %v1746 = vpack.c.b16 %v1650, %v1649
        %v1747 = vpack.c.b16 %v1652, %v1651
        %v1748 = vpack.c.b16 %v1654, %v1653
        %v1749 = vpack.c.b16 %v1656, %v1655
        %v1750 = vpack.c.b16 %v1658, %v1657
        %v1751 = vpack.c.b16 %v1660, %v1659
        %v1752 = vpack.c.b16 %v1662, %v1661
        %v1753 = vpack.c.b16 %v1664, %v1663
        %v1754 = vpack.c.b16 %v1666, %v1665
        %v1755 = vpack.c.b16 %v1668, %v1667
        %v1756 = vpack.c.b16 %v1670, %v1669
        %v1757 = vpack.c.b16 %v1672, %v1671
        %v1758 = vpack.c.b16 %v1674, %v1673
        %v1759 = vpack.c.b16 %v1676, %v1675
        %v1760 = vpack.c.b16 %v1678, %v1677
        %v1761 = vpack.c.b16 %v1680, %v1679
        %v1762 = vpack.c.b16 %v1682, %v1681
        %v1763 = vpack.c.b16 %v1684, %v1683
        %v1764 = vpack.c.b16 %v1686, %v1685
        %v1765 = vpack.c.b16 %v1688, %v1687
        %v1766 = vpack.c.b16 %v1690, %v1689
        %v1767 = vpack.c.b16 %v1692, %v1691
        %v1768 = vpack.c.b16 %v1694, %v1693
        %v1769 = vpack.c.b16 %v1696, %v1695
        %v1770 = vpack.c.b16 %v1698, %v1697
        %1843 = vmatprep.subr.bf16.mxu0 0
        %1844 = vmatpush1.bf16.msra.mxu0 %v1706
        %1845 = vmatprep.subr.bf16.mxu0 0
        %1846 = vmatpush1.bf16.msra.mxu0 %v1705
        %1847 = vmatprep.subr.bf16.mxu0 0
        %1848 = vmatpush1.bf16.msra.mxu0 %v1704
        %1849 = vmatprep.subr.bf16.mxu0 0
        %1850 = vmatpush1.bf16.msra.mxu0 %v1703
        %1851 = vmatprep.subr.bf16.mxu0 0
        %1852 = vmatpush1.bf16.msra.mxu0 %v1702
        %1853 = vmatprep.subr.bf16.mxu0 0
        %1854 = vmatpush1.bf16.msra.mxu0 %v1701
        %1855 = vmatprep.subr.bf16.mxu0 0
        %1856 = vmatpush1.bf16.msra.mxu0 %v1700
        %1857 = vmatprep.subr.bf16.mxu0 0
        %1858 = vmatpush1.bf16.msra.mxu0 %v1699
        %1859 = vmatprep.subr.bf16.mxu0 0
        %1860 = vmatpush2.bf16.msra.mxu0 %v1714
        %1861 = vmatprep.subr.bf16.mxu0 0
        %1862 = vmatpush2.bf16.msra.mxu0 %v1713
        %1863 = vmatprep.subr.bf16.mxu0 0
        %1864 = vmatpush2.bf16.msra.mxu0 %v1712
        %1865 = vmatprep.subr.bf16.mxu0 0
        %1866 = vmatpush2.bf16.msra.mxu0 %v1711
        %1867 = vmatprep.subr.bf16.mxu0 0
        %1868 = vmatpush2.bf16.msra.mxu0 %v1710
        %1869 = vmatprep.subr.bf16.mxu0 0
        %1870 = vmatpush2.bf16.msra.mxu0 %v1709
        %1871 = vmatprep.subr.bf16.mxu0 0
        %1872 = vmatpush2.bf16.msra.mxu0 %v1708
        %1873 = vmatprep.subr.bf16.mxu0 0
        %1874 = vmatpush2.bf16.msra.mxu0 %v1707
        %1875 = vmatprep.mubr.bf16.mxu0 %v1231
        %1876 = vmatmul.mubr.bf16.gmra.mxu0 %v1228
        %v1877 = vpop.f32.mrf.mxu0
        %v1878 = vadd.f32 %v1409, %v1877
        %v1879 = vpop.f32.mrf.mxu0
        %v1880 = vpop.f32.mrf.mxu0
        %v1881 = vadd.f32 %v1409, %v1880
        %v1882 = vpop.f32.mrf.mxu0
        %1883 = vdwg.mxu0
        %1884 = vmatprep.subr.bf16.mxu0 0
        %1885 = vmatpush1.bf16.msra.mxu0 %v1722
        %1886 = vmatprep.subr.bf16.mxu0 0
        %1887 = vmatpush1.bf16.msra.mxu0 %v1721
        %1888 = vmatprep.subr.bf16.mxu0 0
        %1889 = vmatpush1.bf16.msra.mxu0 %v1720
        %1890 = vmatprep.subr.bf16.mxu0 0
        %1891 = vmatpush1.bf16.msra.mxu0 %v1719
        %1892 = vmatprep.subr.bf16.mxu0 0
        %1893 = vmatpush1.bf16.msra.mxu0 %v1718
        %1894 = vmatprep.subr.bf16.mxu0 0
        %1895 = vmatpush1.bf16.msra.mxu0 %v1717
        %1896 = vmatprep.subr.bf16.mxu0 0
        %1897 = vmatpush1.bf16.msra.mxu0 %v1716
        %1898 = vmatprep.subr.bf16.mxu0 0
        %1899 = vmatpush1.bf16.msra.mxu0 %v1715
        %1900 = vmatprep.subr.bf16.mxu0 0
        %1901 = vmatpush2.bf16.msra.mxu0 %v1730
        %1902 = vmatprep.subr.bf16.mxu0 0
        %1903 = vmatpush2.bf16.msra.mxu0 %v1729
        %1904 = vmatprep.subr.bf16.mxu0 0
        %1905 = vmatpush2.bf16.msra.mxu0 %v1728
        %1906 = vmatprep.subr.bf16.mxu0 0
        %1907 = vmatpush2.bf16.msra.mxu0 %v1727
        %1908 = vmatprep.subr.bf16.mxu0 0
        %1909 = vmatpush2.bf16.msra.mxu0 %v1726
        %1910 = vmatprep.subr.bf16.mxu0 0
        %1911 = vmatpush2.bf16.msra.mxu0 %v1725
        %1912 = vmatprep.subr.bf16.mxu0 0
        %1913 = vmatpush2.bf16.msra.mxu0 %v1724
        %1914 = vmatprep.subr.bf16.mxu0 0
        %1915 = vmatpush2.bf16.msra.mxu0 %v1723
        %1916 = vmatprep.mubr.bf16.mxu0 %v1241
        %1917 = vmatmul.mubr.bf16.gmra.mxu0 %v1236
        %v1918 = vpop.f32.mrf.mxu0
        %v1919 = vadd.f32 %v1878, %v1918
        %v1920 = vpop.f32.mrf.mxu0
        %v1921 = vpop.f32.mrf.mxu0
        %v1922 = vadd.f32 %v1881, %v1921
        %v1923 = vpop.f32.mrf.mxu0
        %1924 = vdwg.mxu0
        %1925 = vmatprep.subr.bf16.mxu0 0
        %1926 = vmatpush1.bf16.msra.mxu0 %v1738
        %1927 = vmatprep.subr.bf16.mxu0 0
        %1928 = vmatpush1.bf16.msra.mxu0 %v1737
        %1929 = vmatprep.subr.bf16.mxu0 0
        %1930 = vmatpush1.bf16.msra.mxu0 %v1736
        %1931 = vmatprep.subr.bf16.mxu0 0
        %1932 = vmatpush1.bf16.msra.mxu0 %v1735
        %1933 = vmatprep.subr.bf16.mxu0 0
        %1934 = vmatpush1.bf16.msra.mxu0 %v1734
        %1935 = vmatprep.subr.bf16.mxu0 0
        %1936 = vmatpush1.bf16.msra.mxu0 %v1733
        %1937 = vmatprep.subr.bf16.mxu0 0
        %1938 = vmatpush1.bf16.msra.mxu0 %v1732
        %1939 = vmatprep.subr.bf16.mxu0 0
        %1940 = vmatpush1.bf16.msra.mxu0 %v1731
        %1941 = vmatprep.subr.bf16.mxu0 0
        %1942 = vmatpush2.bf16.msra.mxu0 %v1746
        %1943 = vmatprep.subr.bf16.mxu0 0
        %1944 = vmatpush2.bf16.msra.mxu0 %v1745
        %1945 = vmatprep.subr.bf16.mxu0 0
        %1946 = vmatpush2.bf16.msra.mxu0 %v1744
        %1947 = vmatprep.subr.bf16.mxu0 0
        %1948 = vmatpush2.bf16.msra.mxu0 %v1743
        %1949 = vmatprep.subr.bf16.mxu0 0
        %1950 = vmatpush2.bf16.msra.mxu0 %v1742
        %1951 = vmatprep.subr.bf16.mxu0 0
        %1952 = vmatpush2.bf16.msra.mxu0 %v1741
        %1953 = vmatprep.subr.bf16.mxu0 0
        %1954 = vmatpush2.bf16.msra.mxu0 %v1740
        %1955 = vmatprep.subr.bf16.mxu0 0
        %1956 = vmatpush2.bf16.msra.mxu0 %v1739
        %1957 = vmatprep.mubr.bf16.mxu0 %v1249
        %1958 = vmatmul.mubr.bf16.gmra.mxu0 %v1244
        %v1959 = vpop.f32.mrf.mxu0
        %v1960 = vadd.f32 %v1919, %v1959
        %v1961 = vpop.f32.mrf.mxu0
        %v1962 = vpop.f32.mrf.mxu0
        %v1963 = vadd.f32 %v1922, %v1962
        %v1964 = vpop.f32.mrf.mxu0
        %1965 = vdwg.mxu0
        %1966 = vmatprep.subr.bf16.mxu0 0
        %1967 = vmatpush1.bf16.msra.mxu0 %v1754
        %1968 = vmatprep.subr.bf16.mxu0 0
        %1969 = vmatpush1.bf16.msra.mxu0 %v1753
        %1970 = vmatprep.subr.bf16.mxu0 0
        %1971 = vmatpush1.bf16.msra.mxu0 %v1752
        %1972 = vmatprep.subr.bf16.mxu0 0
        %1973 = vmatpush1.bf16.msra.mxu0 %v1751
        %1974 = vmatprep.subr.bf16.mxu0 0
        %1975 = vmatpush1.bf16.msra.mxu0 %v1750
        %1976 = vmatprep.subr.bf16.mxu0 0
        %1977 = vmatpush1.bf16.msra.mxu0 %v1749
        %1978 = vmatprep.subr.bf16.mxu0 0
        %1979 = vmatpush1.bf16.msra.mxu0 %v1748
        %1980 = vmatprep.subr.bf16.mxu0 0
        %1981 = vmatpush1.bf16.msra.mxu0 %v1747
        %1982 = vmatprep.subr.bf16.mxu0 0
        %1983 = vmatpush2.bf16.msra.mxu0 %v1762
        %1984 = vmatprep.subr.bf16.mxu0 0
        %1985 = vmatpush2.bf16.msra.mxu0 %v1761
        %1986 = vmatprep.subr.bf16.mxu0 0
        %1987 = vmatpush2.bf16.msra.mxu0 %v1760
        %1988 = vmatprep.subr.bf16.mxu0 0
        %1989 = vmatpush2.bf16.msra.mxu0 %v1759
        %1990 = vmatprep.subr.bf16.mxu0 0
        %1991 = vmatpush2.bf16.msra.mxu0 %v1758
        %1992 = vmatprep.subr.bf16.mxu0 0
        %1993 = vmatpush2.bf16.msra.mxu0 %v1757
        %1994 = vmatprep.subr.bf16.mxu0 0
        %1995 = vmatpush2.bf16.msra.mxu0 %v1756
        %1996 = vmatprep.subr.bf16.mxu0 0
        %1997 = vmatpush2.bf16.msra.mxu0 %v1755
        %1998 = vmatprep.mubr.bf16.mxu0 %v1255
        %1999 = vmatmul.mubr.bf16.gmra.mxu0 %v1253
        %v2000 = vpop.f32.mrf.mxu0
        %v2001 = vadd.f32 %v1960, %v2000
        %v2002 = vpop.f32.mrf.mxu0
        %v2003 = vpop.f32.mrf.mxu0
        %v2004 = vadd.f32 %v1963, %v2003
        %v2005 = vpop.f32.mrf.mxu0
        %2006 = vdwg.mxu0
        %2007 = vmatprep.subr.bf16.mxu0 0
        %2008 = vmatpush1.bf16.msra.mxu0 %v1770
        %2009 = vmatprep.subr.bf16.mxu0 0
        %2010 = vmatpush1.bf16.msra.mxu0 %v1769
        %2011 = vmatprep.subr.bf16.mxu0 0
        %2012 = vmatpush1.bf16.msra.mxu0 %v1768
        %2013 = vmatprep.subr.bf16.mxu0 0
        %2014 = vmatpush1.bf16.msra.mxu0 %v1767
        %2015 = vmatprep.subr.bf16.mxu0 0
        %2016 = vmatpush1.bf16.msra.mxu0 %v1766
        %2017 = vmatprep.subr.bf16.mxu0 0
        %2018 = vmatpush1.bf16.msra.mxu0 %v1765
        %2019 = vmatprep.subr.bf16.mxu0 0
        %2020 = vmatpush1.bf16.msra.mxu0 %v1764
        %2021 = vmatprep.subr.bf16.mxu0 0
        %2022 = vmatpush1.bf16.msra.mxu0 %v1763
        %2023 = vmatprep.subr.bf16.mxu0 0
        %2024 = vmatpush2.bf16.msra.mxu0 0
        %2025 = vmatprep.subr.bf16.mxu0 0
        %2026 = vmatpush2.bf16.msra.mxu0 0
        %2027 = vmatprep.subr.bf16.mxu0 0
        %2028 = vmatpush2.bf16.msra.mxu0 0
        %2029 = vmatprep.subr.bf16.mxu0 0
        %2030 = vmatpush2.bf16.msra.mxu0 0
        %2031 = vmatprep.subr.bf16.mxu0 0
        %2032 = vmatpush2.bf16.msra.mxu0 0
        %2033 = vmatprep.subr.bf16.mxu0 0
        %2034 = vmatpush2.bf16.msra.mxu0 0
        %2035 = vmatprep.subr.bf16.mxu0 0
        %2036 = vmatpush2.bf16.msra.mxu0 0
        %2037 = vmatprep.subr.bf16.mxu0 0
        %2038 = vmatpush2.bf16.msra.mxu0 0
        %2039 = vmatprep.mubr.bf16.mxu0 0
        %2040 = vmatmul.mubr.bf16.gmra.mxu0 %v1259
        %v2041 = vpop.f32.mrf.mxu0
        %v2042 = vadd.f32 %v2001, %v2041
        %v2043 = vpop.f32.mrf.mxu0
        %v2044 = vpop.f32.mrf.mxu0
        %v2045 = vadd.f32 %v2004, %v2044
        %v2046 = vpop.f32.mrf.mxu0
        %2047 = vdwg.mxu0
        %v2048 = vmax.f32 %v2042, 0.0
        %v2049 = vmax.f32 %v2045, 0.0
        %2050 = vst [vmem:[#allocation2] sm:$0xff] 0.0
        %2051 = vst [vmem:[#allocation2 + $0x8] sm:$0xff] 0.0
        %2052 = vst [vmem:[#allocation2 + $0x10] sm:$0xff] 0.0
        %2053 = vst [vmem:[#allocation2 + $0x18] sm:$0x3] 0.0
        %2054 = vst [vmem:[#allocation2 + $0x5] sm:$0xff] %v2048
        %2055 = vst [vmem:[#allocation2 + $0xd] sm:$0xff] %v2049
        %v2056 = vld [vmem:[#allocation2] sm:$0xff]
        %v2057 = vld [vmem:[#allocation2 + $0x8] sm:$0xff]
        %v2058 = vsel %vm1220, %v2056, 0.0
        %v2059 = vsel %vm1221, %v2057, 0.0
        %v2060 = vpack.c.bf16 %v2059, %v2058
        %v2061 = vld [vmem:[#allocation2 + $0x1] sm:$0xff]
        %v2062 = vld [vmem:[#allocation2 + $0x9] sm:$0xff]
        %v2063 = vpack.c.bf16 %v2062, %v2061
        %v2064 = vld [vmem:[#allocation2 + $0x2] sm:$0xff]
        %v2065 = vld [vmem:[#allocation2 + $0xa] sm:$0xff]
        %v2066 = vsel %vm1222, %v2064, 0.0
        %v2067 = vsel %vm1223, %v2065, 0.0
        %v2068 = vpack.c.bf16 %v2067, %v2066
        %v2069 = vld [vmem:[#allocation2 + $0x4] sm:$0xff]
        %v2070 = vld [vmem:[#allocation2 + $0xc] sm:$0xff]
        %v2071 = vsel %vm1220, %v2069, 0.0
        %v2072 = vsel %vm1221, %v2070, 0.0
        %v2073 = vpack.c.bf16 %v2072, %v2071
        %v2074 = vld [vmem:[#allocation2 + $0x5] sm:$0xff]
        %v2075 = vld [vmem:[#allocation2 + $0xd] sm:$0xff]
        %v2076 = vpack.c.bf16 %v2075, %v2074
        %v2077 = vld [vmem:[#allocation2 + $0x6] sm:$0xff]
        %v2078 = vld [vmem:[#allocation2 + $0xe] sm:$0xff]
        %v2079 = vsel %vm1222, %v2077, 0.0
        %v2080 = vsel %vm1223, %v2078, 0.0
        %v2081 = vpack.c.bf16 %v2080, %v2079
        %v2082 = vld [vmem:[#allocation2 + $0x10] sm:$0xff]
        %v2083 = vsel %vm1220, %v2057, 0.0
        %v2084 = vsel %vm1221, %v2082, 0.0
        %v2085 = vpack.c.bf16 %v2084, %v2083
        %v2086 = vld [vmem:[#allocation2 + $0x11] sm:$0xff]
        %v2087 = vpack.c.bf16 %v2086, %v2062
        %v2088 = vld [vmem:[#allocation2 + $0x12] sm:$0xff]
        %v2089 = vsel %vm1222, %v2065, 0.0
        %v2090 = vsel %vm1223, %v2088, 0.0
        %v2091 = vpack.c.bf16 %v2090, %v2089
        %v2092 = vld [vmem:[%s4] sm:$0xf]
        %v2093 = vld [vmem:[%s4 + $0x4] sm:$0xf]
        %v2094 = vld [vmem:[%s4 + $0x8] sm:$0xf]
        %v2095 = vld [vmem:[%s4 + $0xc] sm:$0xf]
        %v2096 = vld [vmem:[%s4 + $0x10] sm:$0xf]
        %v2097 = vld [vmem:[%s4 + $0x14] sm:$0xf]
        %v2098 = vld [vmem:[%s4 + $0x18] sm:$0xf]
        %v2099 = vld [vmem:[%s4 + $0x1c] sm:$0xf]
        %v2100 = vld [vmem:[%s4 + $0x20] sm:$0xf]
        %v2101 = vld [vmem:[%s4 + $0x24] sm:$0xf]
        %v2102 = vld [vmem:[%s4 + $0x28] sm:$0xf]
        %v2103 = vld [vmem:[%s4 + $0x2c] sm:$0xf]
        %v2104 = vld [vmem:[%s4 + $0x30] sm:$0xf]
        %v2105 = vld [vmem:[%s4 + $0x34] sm:$0xf]
        %v2106 = vld [vmem:[%s4 + $0x38] sm:$0xf]
        %v2107 = vld [vmem:[%s4 + $0x3c] sm:$0xf]
        %v2108 = vld [vmem:[%s4 + $0x40] sm:$0xf]
        %v2109 = vld [vmem:[%s4 + $0x44] sm:$0xf]
        %v2110 = vld [vmem:[%s4 + $0x48] sm:$0xf]
        %v2111 = vld [vmem:[%s4 + $0x4c] sm:$0xf]
        %v2112 = vld [vmem:[%s4 + $0x50] sm:$0xf]
        %v2113 = vld [vmem:[%s4 + $0x54] sm:$0xf]
        %v2114 = vld [vmem:[%s4 + $0x58] sm:$0xf]
        %v2115 = vld [vmem:[%s4 + $0x5c] sm:$0xf]
        %v2116 = vld [vmem:[%s4 + $0x60] sm:$0xf]
        %v2117 = vld [vmem:[%s4 + $0x64] sm:$0xf]
        %v2118 = vld [vmem:[%s4 + $0x68] sm:$0xf]
        %v2119 = vld [vmem:[%s4 + $0x6c] sm:$0xf]
        %v2120 = vld [vmem:[%s4 + $0x70] sm:$0xf]
        %v2121 = vld [vmem:[%s4 + $0x74] sm:$0xf]
        %v2122 = vld [vmem:[%s4 + $0x78] sm:$0xf]
        %v2123 = vld [vmem:[%s4 + $0x7c] sm:$0xf]
        %v2124 = vld [vmem:[%s4 + $0x80] sm:$0xf]
        %v2125 = vld [vmem:[%s4 + $0x84] sm:$0xf]
        %v2126 = vld [vmem:[%s4 + $0x88] sm:$0xf]
        %v2127 = vld [vmem:[%s4 + $0x8c] sm:$0xf]
        %v2128 = vld [vmem:[%s4 + $0x90] sm:$0xf]
        %v2129 = vld [vmem:[%s4 + $0x94] sm:$0xf]
        %v2130 = vld [vmem:[%s4 + $0x98] sm:$0xf]
        %v2131 = vld [vmem:[%s4 + $0x9c] sm:$0xf]
        %v2132 = vld [vmem:[%s4 + $0xa0] sm:$0xf]
        %v2133 = vld [vmem:[%s4 + $0xa4] sm:$0xf]
        %v2134 = vld [vmem:[%s4 + $0xa8] sm:$0xf]
        %v2135 = vld [vmem:[%s4 + $0xac] sm:$0xf]
        %v2136 = vld [vmem:[%s4 + $0xb0] sm:$0xf]
        %v2137 = vld [vmem:[%s4 + $0xb4] sm:$0xf]
        %v2138 = vld [vmem:[%s4 + $0xb8] sm:$0xf]
        %v2139 = vld [vmem:[%s4 + $0xbc] sm:$0xf]
        %v2140 = vld [vmem:[%s4 + $0xc0] sm:$0xf]
        %v2141 = vld [vmem:[%s4 + $0xc4] sm:$0xf]
        %v2142 = vld [vmem:[%s4 + $0xc8] sm:$0xf]
        %v2143 = vld [vmem:[%s4 + $0xcc] sm:$0xf]
        %v2144 = vld [vmem:[%s4 + $0xd0] sm:$0xf]
        %v2145 = vld [vmem:[%s4 + $0xd4] sm:$0xf]
        %v2146 = vld [vmem:[%s4 + $0xd8] sm:$0xf]
        %v2147 = vld [vmem:[%s4 + $0xdc] sm:$0xf]
        %v2148 = vld [vmem:[%s4 + $0xe0] sm:$0xf]
        %v2149 = vld [vmem:[%s4 + $0xe4] sm:$0xf]
        %v2150 = vld [vmem:[%s4 + $0xe8] sm:$0xf]
        %v2151 = vld [vmem:[%s4 + $0xec] sm:$0xf]
        %v2152 = vld [vmem:[%s4 + $0xf0] sm:$0xf]
        %v2153 = vld [vmem:[%s4 + $0xf4] sm:$0xf]
        %v2154 = vld [vmem:[%s4 + $0xf8] sm:$0xf]
        %v2155 = vld [vmem:[%s4 + $0xfc] sm:$0xf]
        %v2156 = vld [vmem:[%s4 + $0x100] sm:$0xf]
        %v2157 = vld [vmem:[%s4 + $0x104] sm:$0xf]
        %v2158 = vld [vmem:[%s4 + $0x108] sm:$0xf]
        %v2159 = vld [vmem:[%s4 + $0x10c] sm:$0xf]
        %v2160 = vld [vmem:[%s4 + $0x110] sm:$0xf]
        %v2161 = vld [vmem:[%s4 + $0x114] sm:$0xf]
        %v2162 = vld [vmem:[%s4 + $0x118] sm:$0xf]
        %v2163 = vld [vmem:[%s4 + $0x11c] sm:$0xf]
        %v2164 = vld [vmem:[%s4 + $0x120] sm:$0xf]
        %v2165 = vld [vmem:[%s4 + $0x124] sm:$0xf]
        %v2166 = vld [vmem:[%s4 + $0x128] sm:$0xf]
        %v2167 = vld [vmem:[%s4 + $0x12c] sm:$0xf]
        %v2168 = vld [vmem:[%s4 + $0x130] sm:$0xf]
        %v2169 = vld [vmem:[%s4 + $0x134] sm:$0xf]
        %v2170 = vld [vmem:[%s4 + $0x138] sm:$0xf]
        %v2171 = vld [vmem:[%s4 + $0x13c] sm:$0xf]
        %v2172 = vld [vmem:[%s4 + $0x140] sm:$0xf]
        %v2173 = vld [vmem:[%s4 + $0x144] sm:$0xf]
        %v2174 = vld [vmem:[%s4 + $0x148] sm:$0xf]
        %v2175 = vld [vmem:[%s4 + $0x14c] sm:$0xf]
        %v2176 = vld [vmem:[%s4 + $0x150] sm:$0xf]
        %v2177 = vld [vmem:[%s4 + $0x154] sm:$0xf]
        %v2178 = vld [vmem:[%s4 + $0x158] sm:$0xf]
        %v2179 = vld [vmem:[%s4 + $0x15c] sm:$0xf]
        %v2180 = vld [vmem:[%s4 + $0x160] sm:$0xf]
        %v2181 = vld [vmem:[%s4 + $0x164] sm:$0xf]
        %v2182 = vld [vmem:[%s4 + $0x168] sm:$0xf]
        %v2183 = vld [vmem:[%s4 + $0x16c] sm:$0xf]
        %v2184 = vld [vmem:[%s4 + $0x170] sm:$0xf]
        %v2185 = vld [vmem:[%s4 + $0x174] sm:$0xf]
        %v2186 = vld [vmem:[%s4 + $0x178] sm:$0xf]
        %v2187 = vld [vmem:[%s4 + $0x17c] sm:$0xf]
        %v2188 = vld [vmem:[%s4 + $0x180] sm:$0xf]
        %v2189 = vld [vmem:[%s4 + $0x184] sm:$0xf]
        %v2190 = vld [vmem:[%s4 + $0x188] sm:$0xf]
        %v2191 = vld [vmem:[%s4 + $0x18c] sm:$0xf]
        %v2192 = vld [vmem:[%s4 + $0x190] sm:$0xf]
        %v2193 = vld [vmem:[%s4 + $0x194] sm:$0xf]
        %v2194 = vld [vmem:[%s4 + $0x198] sm:$0xf]
        %v2195 = vld [vmem:[%s4 + $0x19c] sm:$0xf]
        %v2196 = vld [vmem:[%s4 + $0x1a0] sm:$0xf]
        %v2197 = vld [vmem:[%s4 + $0x1a4] sm:$0xf]
        %v2198 = vld [vmem:[%s4 + $0x1a8] sm:$0xf]
        %v2199 = vld [vmem:[%s4 + $0x1ac] sm:$0xf]
        %v2200 = vld [vmem:[%s4 + $0x1b0] sm:$0xf]
        %v2201 = vld [vmem:[%s4 + $0x1b4] sm:$0xf]
        %v2202 = vld [vmem:[%s4 + $0x1b8] sm:$0xf]
        %v2203 = vld [vmem:[%s4 + $0x1bc] sm:$0xf]
        %v2204 = vld [vmem:[%s4 + $0x1c0] sm:$0xf]
        %v2205 = vld [vmem:[%s4 + $0x1c4] sm:$0xf]
        %v2206 = vld [vmem:[%s4 + $0x1c8] sm:$0xf]
        %v2207 = vld [vmem:[%s4 + $0x1cc] sm:$0xf]
        %v2208 = vld [vmem:[%s4 + $0x1d0] sm:$0xf]
        %v2209 = vld [vmem:[%s4 + $0x1d4] sm:$0xf]
        %v2210 = vld [vmem:[%s4 + $0x1d8] sm:$0xf]
        %v2211 = vld [vmem:[%s4 + $0x1dc] sm:$0xf]
        %v2212 = vld [vmem:[%s4 + $0x1e0] sm:$0xf]
        %v2213 = vld [vmem:[%s4 + $0x1e4] sm:$0xf]
        %v2214 = vld [vmem:[%s4 + $0x1e8] sm:$0xf]
        %v2215 = vld [vmem:[%s4 + $0x1ec] sm:$0xf]
        %v2216 = vld [vmem:[%s4 + $0x1f0] sm:$0xf]
        %v2217 = vld [vmem:[%s4 + $0x1f4] sm:$0xf]
        %v2218 = vld [vmem:[%s4 + $0x1f8] sm:$0xf]
        %v2219 = vld [vmem:[%s4 + $0x1fc] sm:$0xf]
        %v2220 = vld [vmem:[%s4 + $0x200] sm:$0xf]
        %v2221 = vld [vmem:[%s4 + $0x204] sm:$0xf]
        %v2222 = vld [vmem:[%s4 + $0x208] sm:$0xf]
        %v2223 = vld [vmem:[%s4 + $0x20c] sm:$0xf]
        %v2224 = vld [vmem:[%s4 + $0x210] sm:$0xf]
        %v2225 = vld [vmem:[%s4 + $0x214] sm:$0xf]
        %v2226 = vld [vmem:[%s4 + $0x218] sm:$0xf]
        %v2227 = vld [vmem:[%s4 + $0x21c] sm:$0xf]
        %v2228 = vld [vmem:[%s4 + $0x220] sm:$0xf]
        %v2229 = vld [vmem:[%s4 + $0x224] sm:$0xf]
        %v2230 = vld [vmem:[%s4 + $0x228] sm:$0xf]
        %v2231 = vld [vmem:[%s4 + $0x22c] sm:$0xf]
        %v2232 = vld [vmem:[%s4 + $0x230] sm:$0xf]
        %v2233 = vld [vmem:[%s4 + $0x234] sm:$0xf]
        %v2234 = vld [vmem:[%s4 + $0x238] sm:$0xf]
        %v2235 = vld [vmem:[%s4 + $0x23c] sm:$0xf]
        %v2236 = vld [vmem:[%s13] sm:$0x1]
        %v2238 = vlaneseq
        %v2239 = vshrl.u32 %v2238, 7
        %v2240 = vsub.s32 0, %v2239
        %v2241 = vrot.slane %v2236, %v2240
        %v2387 = vunpack.c.l.b16 %v2092
        %v2388 = vunpack.c.l.b16 %v2093
        %v2389 = vunpack.c.l.b16 %v2094
        %v2390 = vunpack.c.l.b16 %v2095
        %v2391 = vunpack.c.l.b16 %v2096
        %v2392 = vunpack.c.l.b16 %v2097
        %v2393 = vunpack.c.l.b16 %v2098
        %v2394 = vunpack.c.l.b16 %v2099
        %v2395 = vunpack.c.l.b16 %v2100
        %v2396 = vunpack.c.l.b16 %v2101
        %v2397 = vunpack.c.l.b16 %v2102
        %v2398 = vunpack.c.l.b16 %v2103
        %v2399 = vunpack.c.l.b16 %v2104
        %v2400 = vunpack.c.l.b16 %v2105
        %v2401 = vunpack.c.l.b16 %v2106
        %v2402 = vunpack.c.l.b16 %v2107
        %v2403 = vunpack.c.l.b16 %v2108
        %v2404 = vunpack.c.l.b16 %v2109
        %v2405 = vunpack.c.l.b16 %v2110
        %v2406 = vunpack.c.l.b16 %v2111
        %v2407 = vunpack.c.l.b16 %v2112
        %v2408 = vunpack.c.l.b16 %v2113
        %v2409 = vunpack.c.l.b16 %v2114
        %v2410 = vunpack.c.l.b16 %v2115
        %v2411 = vunpack.c.l.b16 %v2116
        %v2412 = vunpack.c.l.b16 %v2117
        %v2413 = vunpack.c.l.b16 %v2118
        %v2414 = vunpack.c.l.b16 %v2119
        %v2415 = vunpack.c.l.b16 %v2120
        %v2416 = vunpack.c.l.b16 %v2121
        %v2417 = vunpack.c.l.b16 %v2122
        %v2418 = vunpack.c.l.b16 %v2123
        %v2419 = vunpack.c.l.b16 %v2124
        %v2420 = vunpack.c.l.b16 %v2125
        %v2421 = vunpack.c.l.b16 %v2126
        %v2422 = vunpack.c.l.b16 %v2127
        %v2423 = vunpack.c.l.b16 %v2128
        %v2424 = vunpack.c.l.b16 %v2129
        %v2425 = vunpack.c.l.b16 %v2130
        %v2426 = vunpack.c.l.b16 %v2131
        %v2427 = vunpack.c.l.b16 %v2132
        %v2428 = vunpack.c.l.b16 %v2133
        %v2429 = vunpack.c.l.b16 %v2134
        %v2430 = vunpack.c.l.b16 %v2135
        %v2431 = vunpack.c.l.b16 %v2136
        %v2432 = vunpack.c.l.b16 %v2137
        %v2433 = vunpack.c.l.b16 %v2138
        %v2434 = vunpack.c.l.b16 %v2139
        %v2435 = vunpack.c.l.b16 %v2140
        %v2436 = vunpack.c.l.b16 %v2141
        %v2437 = vunpack.c.l.b16 %v2142
        %v2438 = vunpack.c.l.b16 %v2143
        %v2439 = vunpack.c.l.b16 %v2144
        %v2440 = vunpack.c.l.b16 %v2145
        %v2441 = vunpack.c.l.b16 %v2146
        %v2442 = vunpack.c.l.b16 %v2147
        %v2443 = vunpack.c.l.b16 %v2148
        %v2444 = vunpack.c.l.b16 %v2149
        %v2445 = vunpack.c.l.b16 %v2150
        %v2446 = vunpack.c.l.b16 %v2151
        %v2447 = vunpack.c.l.b16 %v2152
        %v2448 = vunpack.c.l.b16 %v2153
        %v2449 = vunpack.c.l.b16 %v2154
        %v2450 = vunpack.c.l.b16 %v2155
        %v2451 = vunpack.c.l.b16 %v2156
        %v2452 = vunpack.c.l.b16 %v2157
        %v2453 = vunpack.c.l.b16 %v2158
        %v2454 = vunpack.c.l.b16 %v2159
        %v2455 = vunpack.c.l.b16 %v2160
        %v2456 = vunpack.c.l.b16 %v2161
        %v2457 = vunpack.c.l.b16 %v2162
        %v2458 = vunpack.c.l.b16 %v2163
        %v2459 = vunpack.c.l.b16 %v2164
        %v2460 = vunpack.c.l.b16 %v2165
        %v2461 = vunpack.c.l.b16 %v2166
        %v2462 = vunpack.c.l.b16 %v2167
        %v2463 = vunpack.c.l.b16 %v2168
        %v2464 = vunpack.c.l.b16 %v2169
        %v2465 = vunpack.c.l.b16 %v2170
        %v2466 = vunpack.c.l.b16 %v2171
        %v2467 = vunpack.c.l.b16 %v2172
        %v2468 = vunpack.c.l.b16 %v2173
        %v2469 = vunpack.c.l.b16 %v2174
        %v2470 = vunpack.c.l.b16 %v2175
        %v2471 = vunpack.c.l.b16 %v2176
        %v2472 = vunpack.c.l.b16 %v2177
        %v2473 = vunpack.c.l.b16 %v2178
        %v2474 = vunpack.c.l.b16 %v2179
        %v2475 = vunpack.c.l.b16 %v2180
        %v2476 = vunpack.c.l.b16 %v2181
        %v2477 = vunpack.c.l.b16 %v2182
        %v2478 = vunpack.c.l.b16 %v2183
        %v2479 = vunpack.c.l.b16 %v2184
        %v2480 = vunpack.c.l.b16 %v2185
        %v2481 = vunpack.c.l.b16 %v2186
        %v2482 = vunpack.c.l.b16 %v2187
        %v2483 = vunpack.c.l.b16 %v2188
        %v2484 = vunpack.c.l.b16 %v2189
        %v2485 = vunpack.c.l.b16 %v2190
        %v2486 = vunpack.c.l.b16 %v2191
        %v2487 = vunpack.c.l.b16 %v2192
        %v2488 = vunpack.c.l.b16 %v2193
        %v2489 = vunpack.c.l.b16 %v2194
        %v2490 = vunpack.c.l.b16 %v2195
        %v2491 = vunpack.c.l.b16 %v2196
        %v2492 = vunpack.c.l.b16 %v2197
        %v2493 = vunpack.c.l.b16 %v2198
        %v2494 = vunpack.c.l.b16 %v2199
        %v2495 = vunpack.c.l.b16 %v2200
        %v2496 = vunpack.c.l.b16 %v2201
        %v2497 = vunpack.c.l.b16 %v2202
        %v2498 = vunpack.c.l.b16 %v2203
        %v2499 = vunpack.c.l.b16 %v2204
        %v2500 = vunpack.c.l.b16 %v2205
        %v2501 = vunpack.c.l.b16 %v2206
        %v2502 = vunpack.c.l.b16 %v2207
        %v2503 = vunpack.c.l.b16 %v2208
        %v2504 = vunpack.c.l.b16 %v2209
        %v2505 = vunpack.c.l.b16 %v2210
        %v2506 = vunpack.c.l.b16 %v2211
        %v2507 = vunpack.c.l.b16 %v2212
        %v2508 = vunpack.c.l.b16 %v2213
        %v2509 = vunpack.c.l.b16 %v2214
        %v2510 = vunpack.c.l.b16 %v2215
        %v2511 = vunpack.c.l.b16 %v2216
        %v2512 = vunpack.c.l.b16 %v2217
        %v2513 = vunpack.c.l.b16 %v2218
        %v2514 = vunpack.c.l.b16 %v2219
        %v2515 = vunpack.c.l.b16 %v2220
        %v2516 = vunpack.c.l.b16 %v2221
        %v2517 = vunpack.c.l.b16 %v2222
        %v2518 = vunpack.c.l.b16 %v2223
        %v2519 = vunpack.c.l.b16 %v2224
        %v2520 = vunpack.c.l.b16 %v2225
        %v2521 = vunpack.c.l.b16 %v2226
        %v2522 = vunpack.c.l.b16 %v2227
        %v2523 = vunpack.c.l.b16 %v2228
        %v2524 = vunpack.c.l.b16 %v2229
        %v2525 = vunpack.c.l.b16 %v2230
        %v2526 = vunpack.c.l.b16 %v2231
        %v2527 = vunpack.c.l.b16 %v2232
        %v2528 = vunpack.c.l.b16 %v2233
        %v2529 = vunpack.c.l.b16 %v2234
        %v2530 = vunpack.c.l.b16 %v2235
        %v2531 = vpack.c.b16 %v2388, %v2387
        %v2532 = vpack.c.b16 %v2390, %v2389
        %v2533 = vpack.c.b16 %v2392, %v2391
        %v2534 = vpack.c.b16 %v2394, %v2393
        %v2535 = vpack.c.b16 %v2396, %v2395
        %v2536 = vpack.c.b16 %v2398, %v2397
        %v2537 = vpack.c.b16 %v2400, %v2399
        %v2538 = vpack.c.b16 %v2402, %v2401
        %v2539 = vpack.c.b16 %v2404, %v2403
        %v2540 = vpack.c.b16 %v2406, %v2405
        %v2541 = vpack.c.b16 %v2408, %v2407
        %v2542 = vpack.c.b16 %v2410, %v2409
        %v2543 = vpack.c.b16 %v2412, %v2411
        %v2544 = vpack.c.b16 %v2414, %v2413
        %v2545 = vpack.c.b16 %v2416, %v2415
        %v2546 = vpack.c.b16 %v2418, %v2417
        %v2547 = vpack.c.b16 %v2420, %v2419
        %v2548 = vpack.c.b16 %v2422, %v2421
        %v2549 = vpack.c.b16 %v2424, %v2423
        %v2550 = vpack.c.b16 %v2426, %v2425
        %v2551 = vpack.c.b16 %v2428, %v2427
        %v2552 = vpack.c.b16 %v2430, %v2429
        %v2553 = vpack.c.b16 %v2432, %v2431
        %v2554 = vpack.c.b16 %v2434, %v2433
        %v2555 = vpack.c.b16 %v2436, %v2435
        %v2556 = vpack.c.b16 %v2438, %v2437
        %v2557 = vpack.c.b16 %v2440, %v2439
        %v2558 = vpack.c.b16 %v2442, %v2441
        %v2559 = vpack.c.b16 %v2444, %v2443
        %v2560 = vpack.c.b16 %v2446, %v2445
        %v2561 = vpack.c.b16 %v2448, %v2447
        %v2562 = vpack.c.b16 %v2450, %v2449
        %v2563 = vpack.c.b16 %v2452, %v2451
        %v2564 = vpack.c.b16 %v2454, %v2453
        %v2565 = vpack.c.b16 %v2456, %v2455
        %v2566 = vpack.c.b16 %v2458, %v2457
        %v2567 = vpack.c.b16 %v2460, %v2459
        %v2568 = vpack.c.b16 %v2462, %v2461
        %v2569 = vpack.c.b16 %v2464, %v2463
        %v2570 = vpack.c.b16 %v2466, %v2465
        %v2571 = vpack.c.b16 %v2468, %v2467
        %v2572 = vpack.c.b16 %v2470, %v2469
        %v2573 = vpack.c.b16 %v2472, %v2471
        %v2574 = vpack.c.b16 %v2474, %v2473
        %v2575 = vpack.c.b16 %v2476, %v2475
        %v2576 = vpack.c.b16 %v2478, %v2477
        %v2577 = vpack.c.b16 %v2480, %v2479
        %v2578 = vpack.c.b16 %v2482, %v2481
        %v2579 = vpack.c.b16 %v2484, %v2483
        %v2580 = vpack.c.b16 %v2486, %v2485
        %v2581 = vpack.c.b16 %v2488, %v2487
        %v2582 = vpack.c.b16 %v2490, %v2489
        %v2583 = vpack.c.b16 %v2492, %v2491
        %v2584 = vpack.c.b16 %v2494, %v2493
        %v2585 = vpack.c.b16 %v2496, %v2495
        %v2586 = vpack.c.b16 %v2498, %v2497
        %v2587 = vpack.c.b16 %v2500, %v2499
        %v2588 = vpack.c.b16 %v2502, %v2501
        %v2589 = vpack.c.b16 %v2504, %v2503
        %v2590 = vpack.c.b16 %v2506, %v2505
        %v2591 = vpack.c.b16 %v2508, %v2507
        %v2592 = vpack.c.b16 %v2510, %v2509
        %v2593 = vpack.c.b16 %v2512, %v2511
        %v2594 = vpack.c.b16 %v2514, %v2513
        %v2595 = vpack.c.b16 %v2516, %v2515
        %v2596 = vpack.c.b16 %v2518, %v2517
        %v2597 = vpack.c.b16 %v2520, %v2519
        %v2598 = vpack.c.b16 %v2522, %v2521
        %v2599 = vpack.c.b16 %v2524, %v2523
        %v2600 = vpack.c.b16 %v2526, %v2525
        %v2601 = vpack.c.b16 %v2528, %v2527
        %v2602 = vpack.c.b16 %v2530, %v2529
        %2675 = vmatprep.subr.bf16.mxu0 0
        %2676 = vmatpush1.bf16.msra.mxu0 %v2538
        %2677 = vmatprep.subr.bf16.mxu0 0
        %2678 = vmatpush1.bf16.msra.mxu0 %v2537
        %2679 = vmatprep.subr.bf16.mxu0 0
        %2680 = vmatpush1.bf16.msra.mxu0 %v2536
        %2681 = vmatprep.subr.bf16.mxu0 0
        %2682 = vmatpush1.bf16.msra.mxu0 %v2535
        %2683 = vmatprep.subr.bf16.mxu0 0
        %2684 = vmatpush1.bf16.msra.mxu0 %v2534
        %2685 = vmatprep.subr.bf16.mxu0 0
        %2686 = vmatpush1.bf16.msra.mxu0 %v2533
        %2687 = vmatprep.subr.bf16.mxu0 0
        %2688 = vmatpush1.bf16.msra.mxu0 %v2532
        %2689 = vmatprep.subr.bf16.mxu0 0
        %2690 = vmatpush1.bf16.msra.mxu0 %v2531
        %2691 = vmatprep.subr.bf16.mxu0 0
        %2692 = vmatpush2.bf16.msra.mxu0 %v2546
        %2693 = vmatprep.subr.bf16.mxu0 0
        %2694 = vmatpush2.bf16.msra.mxu0 %v2545
        %2695 = vmatprep.subr.bf16.mxu0 0
        %2696 = vmatpush2.bf16.msra.mxu0 %v2544
        %2697 = vmatprep.subr.bf16.mxu0 0
        %2698 = vmatpush2.bf16.msra.mxu0 %v2543
        %2699 = vmatprep.subr.bf16.mxu0 0
        %2700 = vmatpush2.bf16.msra.mxu0 %v2542
        %2701 = vmatprep.subr.bf16.mxu0 0
        %2702 = vmatpush2.bf16.msra.mxu0 %v2541
        %2703 = vmatprep.subr.bf16.mxu0 0
        %2704 = vmatpush2.bf16.msra.mxu0 %v2540
        %2705 = vmatprep.subr.bf16.mxu0 0
        %2706 = vmatpush2.bf16.msra.mxu0 %v2539
        %2707 = vmatprep.mubr.bf16.mxu0 %v2063
        %2708 = vmatmul.mubr.bf16.gmra.mxu0 %v2060
        %v2709 = vpop.f32.mrf.mxu0
        %v2710 = vadd.f32 %v2241, %v2709
        %v2711 = vpop.f32.mrf.mxu0
        %v2712 = vpop.f32.mrf.mxu0
        %v2713 = vadd.f32 %v2241, %v2712
        %v2714 = vpop.f32.mrf.mxu0
        %2715 = vdwg.mxu0
        %2716 = vmatprep.subr.bf16.mxu0 0
        %2717 = vmatpush1.bf16.msra.mxu0 %v2554
        %2718 = vmatprep.subr.bf16.mxu0 0
        %2719 = vmatpush1.bf16.msra.mxu0 %v2553
        %2720 = vmatprep.subr.bf16.mxu0 0
        %2721 = vmatpush1.bf16.msra.mxu0 %v2552
        %2722 = vmatprep.subr.bf16.mxu0 0
        %2723 = vmatpush1.bf16.msra.mxu0 %v2551
        %2724 = vmatprep.subr.bf16.mxu0 0
        %2725 = vmatpush1.bf16.msra.mxu0 %v2550
        %2726 = vmatprep.subr.bf16.mxu0 0
        %2727 = vmatpush1.bf16.msra.mxu0 %v2549
        %2728 = vmatprep.subr.bf16.mxu0 0
        %2729 = vmatpush1.bf16.msra.mxu0 %v2548
        %2730 = vmatprep.subr.bf16.mxu0 0
        %2731 = vmatpush1.bf16.msra.mxu0 %v2547
        %2732 = vmatprep.subr.bf16.mxu0 0
        %2733 = vmatpush2.bf16.msra.mxu0 %v2562
        %2734 = vmatprep.subr.bf16.mxu0 0
        %2735 = vmatpush2.bf16.msra.mxu0 %v2561
        %2736 = vmatprep.subr.bf16.mxu0 0
        %2737 = vmatpush2.bf16.msra.mxu0 %v2560
        %2738 = vmatprep.subr.bf16.mxu0 0
        %2739 = vmatpush2.bf16.msra.mxu0 %v2559
        %2740 = vmatprep.subr.bf16.mxu0 0
        %2741 = vmatpush2.bf16.msra.mxu0 %v2558
        %2742 = vmatprep.subr.bf16.mxu0 0
        %2743 = vmatpush2.bf16.msra.mxu0 %v2557
        %2744 = vmatprep.subr.bf16.mxu0 0
        %2745 = vmatpush2.bf16.msra.mxu0 %v2556
        %2746 = vmatprep.subr.bf16.mxu0 0
        %2747 = vmatpush2.bf16.msra.mxu0 %v2555
        %2748 = vmatprep.mubr.bf16.mxu0 %v2073
        %2749 = vmatmul.mubr.bf16.gmra.mxu0 %v2068
        %v2750 = vpop.f32.mrf.mxu0
        %v2751 = vadd.f32 %v2710, %v2750
        %v2752 = vpop.f32.mrf.mxu0
        %v2753 = vpop.f32.mrf.mxu0
        %v2754 = vadd.f32 %v2713, %v2753
        %v2755 = vpop.f32.mrf.mxu0
        %2756 = vdwg.mxu0
        %2757 = vmatprep.subr.bf16.mxu0 0
        %2758 = vmatpush1.bf16.msra.mxu0 %v2570
        %2759 = vmatprep.subr.bf16.mxu0 0
        %2760 = vmatpush1.bf16.msra.mxu0 %v2569
        %2761 = vmatprep.subr.bf16.mxu0 0
        %2762 = vmatpush1.bf16.msra.mxu0 %v2568
        %2763 = vmatprep.subr.bf16.mxu0 0
        %2764 = vmatpush1.bf16.msra.mxu0 %v2567
        %2765 = vmatprep.subr.bf16.mxu0 0
        %2766 = vmatpush1.bf16.msra.mxu0 %v2566
        %2767 = vmatprep.subr.bf16.mxu0 0
        %2768 = vmatpush1.bf16.msra.mxu0 %v2565
        %2769 = vmatprep.subr.bf16.mxu0 0
        %2770 = vmatpush1.bf16.msra.mxu0 %v2564
        %2771 = vmatprep.subr.bf16.mxu0 0
        %2772 = vmatpush1.bf16.msra.mxu0 %v2563
        %2773 = vmatprep.subr.bf16.mxu0 0
        %2774 = vmatpush2.bf16.msra.mxu0 %v2578
        %2775 = vmatprep.subr.bf16.mxu0 0
        %2776 = vmatpush2.bf16.msra.mxu0 %v2577
        %2777 = vmatprep.subr.bf16.mxu0 0
        %2778 = vmatpush2.bf16.msra.mxu0 %v2576
        %2779 = vmatprep.subr.bf16.mxu0 0
        %2780 = vmatpush2.bf16.msra.mxu0 %v2575
        %2781 = vmatprep.subr.bf16.mxu0 0
        %2782 = vmatpush2.bf16.msra.mxu0 %v2574
        %2783 = vmatprep.subr.bf16.mxu0 0
        %2784 = vmatpush2.bf16.msra.mxu0 %v2573
        %2785 = vmatprep.subr.bf16.mxu0 0
        %2786 = vmatpush2.bf16.msra.mxu0 %v2572
        %2787 = vmatprep.subr.bf16.mxu0 0
        %2788 = vmatpush2.bf16.msra.mxu0 %v2571
        %2789 = vmatprep.mubr.bf16.mxu0 %v2081
        %2790 = vmatmul.mubr.bf16.gmra.mxu0 %v2076
        %v2791 = vpop.f32.mrf.mxu0
        %v2792 = vadd.f32 %v2751, %v2791
        %v2793 = vpop.f32.mrf.mxu0
        %v2794 = vpop.f32.mrf.mxu0
        %v2795 = vadd.f32 %v2754, %v2794
        %v2796 = vpop.f32.mrf.mxu0
        %2797 = vdwg.mxu0
        %2798 = vmatprep.subr.bf16.mxu0 0
        %2799 = vmatpush1.bf16.msra.mxu0 %v2586
        %2800 = vmatprep.subr.bf16.mxu0 0
        %2801 = vmatpush1.bf16.msra.mxu0 %v2585
        %2802 = vmatprep.subr.bf16.mxu0 0
        %2803 = vmatpush1.bf16.msra.mxu0 %v2584
        %2804 = vmatprep.subr.bf16.mxu0 0
        %2805 = vmatpush1.bf16.msra.mxu0 %v2583
        %2806 = vmatprep.subr.bf16.mxu0 0
        %2807 = vmatpush1.bf16.msra.mxu0 %v2582
        %2808 = vmatprep.subr.bf16.mxu0 0
        %2809 = vmatpush1.bf16.msra.mxu0 %v2581
        %2810 = vmatprep.subr.bf16.mxu0 0
        %2811 = vmatpush1.bf16.msra.mxu0 %v2580
        %2812 = vmatprep.subr.bf16.mxu0 0
        %2813 = vmatpush1.bf16.msra.mxu0 %v2579
        %2814 = vmatprep.subr.bf16.mxu0 0
        %2815 = vmatpush2.bf16.msra.mxu0 %v2594
        %2816 = vmatprep.subr.bf16.mxu0 0
        %2817 = vmatpush2.bf16.msra.mxu0 %v2593
        %2818 = vmatprep.subr.bf16.mxu0 0
        %2819 = vmatpush2.bf16.msra.mxu0 %v2592
        %2820 = vmatprep.subr.bf16.mxu0 0
        %2821 = vmatpush2.bf16.msra.mxu0 %v2591
        %2822 = vmatprep.subr.bf16.mxu0 0
        %2823 = vmatpush2.bf16.msra.mxu0 %v2590
        %2824 = vmatprep.subr.bf16.mxu0 0
        %2825 = vmatpush2.bf16.msra.mxu0 %v2589
        %2826 = vmatprep.subr.bf16.mxu0 0
        %2827 = vmatpush2.bf16.msra.mxu0 %v2588
        %2828 = vmatprep.subr.bf16.mxu0 0
        %2829 = vmatpush2.bf16.msra.mxu0 %v2587
        %2830 = vmatprep.mubr.bf16.mxu0 %v2087
        %2831 = vmatmul.mubr.bf16.gmra.mxu0 %v2085
        %v2832 = vpop.f32.mrf.mxu0
        %v2833 = vadd.f32 %v2792, %v2832
        %v2834 = vpop.f32.mrf.mxu0
        %v2835 = vpop.f32.mrf.mxu0
        %v2836 = vadd.f32 %v2795, %v2835
        %v2837 = vpop.f32.mrf.mxu0
        %2838 = vdwg.mxu0
        %2839 = vmatprep.subr.bf16.mxu0 0
        %2840 = vmatpush1.bf16.msra.mxu0 %v2602
        %2841 = vmatprep.subr.bf16.mxu0 0
        %2842 = vmatpush1.bf16.msra.mxu0 %v2601
        %2843 = vmatprep.subr.bf16.mxu0 0
        %2844 = vmatpush1.bf16.msra.mxu0 %v2600
        %2845 = vmatprep.subr.bf16.mxu0 0
        %2846 = vmatpush1.bf16.msra.mxu0 %v2599
        %2847 = vmatprep.subr.bf16.mxu0 0
        %2848 = vmatpush1.bf16.msra.mxu0 %v2598
        %2849 = vmatprep.subr.bf16.mxu0 0
        %2850 = vmatpush1.bf16.msra.mxu0 %v2597
        %2851 = vmatprep.subr.bf16.mxu0 0
        %2852 = vmatpush1.bf16.msra.mxu0 %v2596
        %2853 = vmatprep.subr.bf16.mxu0 0
        %2854 = vmatpush1.bf16.msra.mxu0 %v2595
        %2855 = vmatprep.subr.bf16.mxu0 0
        %2856 = vmatpush2.bf16.msra.mxu0 0
        %2857 = vmatprep.subr.bf16.mxu0 0
        %2858 = vmatpush2.bf16.msra.mxu0 0
        %2859 = vmatprep.subr.bf16.mxu0 0
        %2860 = vmatpush2.bf16.msra.mxu0 0
        %2861 = vmatprep.subr.bf16.mxu0 0
        %2862 = vmatpush2.bf16.msra.mxu0 0
        %2863 = vmatprep.subr.bf16.mxu0 0
        %2864 = vmatpush2.bf16.msra.mxu0 0
        %2865 = vmatprep.subr.bf16.mxu0 0
        %2866 = vmatpush2.bf16.msra.mxu0 0
        %2867 = vmatprep.subr.bf16.mxu0 0
        %2868 = vmatpush2.bf16.msra.mxu0 0
        %2869 = vmatprep.subr.bf16.mxu0 0
        %2870 = vmatpush2.bf16.msra.mxu0 0
        %2871 = vmatprep.mubr.bf16.mxu0 0
        %2872 = vmatmul.mubr.bf16.gmra.mxu0 %v2091
        %v2873 = vpop.f32.mrf.mxu0
        %v2874 = vadd.f32 %v2833, %v2873
        %v2875 = vpop.f32.mrf.mxu0
        %v2876 = vpop.f32.mrf.mxu0
        %v2877 = vadd.f32 %v2836, %v2876
        %v2878 = vpop.f32.mrf.mxu0
        %2879 = vdwg.mxu0
        %v2880 = vadd.f32 %v2874, %v1188
        %v2881 = vadd.f32 %v2877, %v1189
        %v2882 = vmax.f32 %v2880, 0.0
        %v2883 = vmax.f32 %v2881, 0.0
        %2884 = vst [vmem:[#allocation2] sm:$0xff] 0.0
        %2885 = vst [vmem:[#allocation2 + $0x8] sm:$0xff] 0.0
        %2886 = vst [vmem:[#allocation2 + $0x10] sm:$0xff] 0.0
        %2887 = vst [vmem:[#allocation2 + $0x18] sm:$0x3] 0.0
        %2888 = vst [vmem:[#allocation2 + $0x5] sm:$0xff] %v2882
        %2889 = vst [vmem:[#allocation2 + $0xd] sm:$0xff] %v2883
        %v2890 = vld [vmem:[#allocation2] sm:$0xff]
        %v2891 = vld [vmem:[#allocation2 + $0x8] sm:$0xff]
        %v2892 = vsel %vm1220, %v2890, 0.0
        %v2893 = vsel %vm1221, %v2891, 0.0
        %v2894 = vpack.c.bf16 %v2893, %v2892
        %v2895 = vld [vmem:[#allocation2 + $0x1] sm:$0xff]
        %v2896 = vld [vmem:[#allocation2 + $0x9] sm:$0xff]
        %v2897 = vpack.c.bf16 %v2896, %v2895
        %v2898 = vld [vmem:[#allocation2 + $0x2] sm:$0xff]
        %v2899 = vld [vmem:[#allocation2 + $0xa] sm:$0xff]
        %v2900 = vsel %vm1222, %v2898, 0.0
        %v2901 = vsel %vm1223, %v2899, 0.0
        %v2902 = vpack.c.bf16 %v2901, %v2900
        %v2903 = vld [vmem:[#allocation2 + $0x4] sm:$0xff]
        %v2904 = vld [vmem:[#allocation2 + $0xc] sm:$0xff]
        %v2905 = vsel %vm1220, %v2903, 0.0
        %v2906 = vsel %vm1221, %v2904, 0.0
        %v2907 = vpack.c.bf16 %v2906, %v2905
        %v2908 = vld [vmem:[#allocation2 + $0x5] sm:$0xff]
        %v2909 = vld [vmem:[#allocation2 + $0xd] sm:$0xff]
        %v2910 = vpack.c.bf16 %v2909, %v2908
        %v2911 = vld [vmem:[#allocation2 + $0x6] sm:$0xff]
        %v2912 = vld [vmem:[#allocation2 + $0xe] sm:$0xff]
        %v2913 = vsel %vm1222, %v2911, 0.0
        %v2914 = vsel %vm1223, %v2912, 0.0
        %v2915 = vpack.c.bf16 %v2914, %v2913
        %v2916 = vld [vmem:[#allocation2 + $0x10] sm:$0xff]
        %v2917 = vsel %vm1220, %v2891, 0.0
        %v2918 = vsel %vm1221, %v2916, 0.0
        %v2919 = vpack.c.bf16 %v2918, %v2917
        %v2920 = vld [vmem:[#allocation2 + $0x11] sm:$0xff]
        %v2921 = vpack.c.bf16 %v2920, %v2896
        %v2922 = vld [vmem:[#allocation2 + $0x12] sm:$0xff]
        %v2923 = vsel %vm1222, %v2899, 0.0
        %v2924 = vsel %vm1223, %v2922, 0.0
        %v2925 = vpack.c.bf16 %v2924, %v2923
        %v2926 = vld [vmem:[%s5] sm:$0xf]
        %v2927 = vld [vmem:[%s5 + $0x4] sm:$0xf]
        %v2928 = vld [vmem:[%s5 + $0x8] sm:$0xf]
        %v2929 = vld [vmem:[%s5 + $0xc] sm:$0xf]
        %v2930 = vld [vmem:[%s5 + $0x10] sm:$0xf]
        %v2931 = vld [vmem:[%s5 + $0x14] sm:$0xf]
        %v2932 = vld [vmem:[%s5 + $0x18] sm:$0xf]
        %v2933 = vld [vmem:[%s5 + $0x1c] sm:$0xf]
        %v2934 = vld [vmem:[%s5 + $0x20] sm:$0xf]
        %v2935 = vld [vmem:[%s5 + $0x24] sm:$0xf]
        %v2936 = vld [vmem:[%s5 + $0x28] sm:$0xf]
        %v2937 = vld [vmem:[%s5 + $0x2c] sm:$0xf]
        %v2938 = vld [vmem:[%s5 + $0x30] sm:$0xf]
        %v2939 = vld [vmem:[%s5 + $0x34] sm:$0xf]
        %v2940 = vld [vmem:[%s5 + $0x38] sm:$0xf]
        %v2941 = vld [vmem:[%s5 + $0x3c] sm:$0xf]
        %v2942 = vld [vmem:[%s5 + $0x40] sm:$0xf]
        %v2943 = vld [vmem:[%s5 + $0x44] sm:$0xf]
        %v2944 = vld [vmem:[%s5 + $0x48] sm:$0xf]
        %v2945 = vld [vmem:[%s5 + $0x4c] sm:$0xf]
        %v2946 = vld [vmem:[%s5 + $0x50] sm:$0xf]
        %v2947 = vld [vmem:[%s5 + $0x54] sm:$0xf]
        %v2948 = vld [vmem:[%s5 + $0x58] sm:$0xf]
        %v2949 = vld [vmem:[%s5 + $0x5c] sm:$0xf]
        %v2950 = vld [vmem:[%s5 + $0x60] sm:$0xf]
        %v2951 = vld [vmem:[%s5 + $0x64] sm:$0xf]
        %v2952 = vld [vmem:[%s5 + $0x68] sm:$0xf]
        %v2953 = vld [vmem:[%s5 + $0x6c] sm:$0xf]
        %v2954 = vld [vmem:[%s5 + $0x70] sm:$0xf]
        %v2955 = vld [vmem:[%s5 + $0x74] sm:$0xf]
        %v2956 = vld [vmem:[%s5 + $0x78] sm:$0xf]
        %v2957 = vld [vmem:[%s5 + $0x7c] sm:$0xf]
        %v2958 = vld [vmem:[%s5 + $0x80] sm:$0xf]
        %v2959 = vld [vmem:[%s5 + $0x84] sm:$0xf]
        %v2960 = vld [vmem:[%s5 + $0x88] sm:$0xf]
        %v2961 = vld [vmem:[%s5 + $0x8c] sm:$0xf]
        %v2962 = vld [vmem:[%s5 + $0x90] sm:$0xf]
        %v2963 = vld [vmem:[%s5 + $0x94] sm:$0xf]
        %v2964 = vld [vmem:[%s5 + $0x98] sm:$0xf]
        %v2965 = vld [vmem:[%s5 + $0x9c] sm:$0xf]
        %v2966 = vld [vmem:[%s5 + $0xa0] sm:$0xf]
        %v2967 = vld [vmem:[%s5 + $0xa4] sm:$0xf]
        %v2968 = vld [vmem:[%s5 + $0xa8] sm:$0xf]
        %v2969 = vld [vmem:[%s5 + $0xac] sm:$0xf]
        %v2970 = vld [vmem:[%s5 + $0xb0] sm:$0xf]
        %v2971 = vld [vmem:[%s5 + $0xb4] sm:$0xf]
        %v2972 = vld [vmem:[%s5 + $0xb8] sm:$0xf]
        %v2973 = vld [vmem:[%s5 + $0xbc] sm:$0xf]
        %v2974 = vld [vmem:[%s5 + $0xc0] sm:$0xf]
        %v2975 = vld [vmem:[%s5 + $0xc4] sm:$0xf]
        %v2976 = vld [vmem:[%s5 + $0xc8] sm:$0xf]
        %v2977 = vld [vmem:[%s5 + $0xcc] sm:$0xf]
        %v2978 = vld [vmem:[%s5 + $0xd0] sm:$0xf]
        %v2979 = vld [vmem:[%s5 + $0xd4] sm:$0xf]
        %v2980 = vld [vmem:[%s5 + $0xd8] sm:$0xf]
        %v2981 = vld [vmem:[%s5 + $0xdc] sm:$0xf]
        %v2982 = vld [vmem:[%s5 + $0xe0] sm:$0xf]
        %v2983 = vld [vmem:[%s5 + $0xe4] sm:$0xf]
        %v2984 = vld [vmem:[%s5 + $0xe8] sm:$0xf]
        %v2985 = vld [vmem:[%s5 + $0xec] sm:$0xf]
        %v2986 = vld [vmem:[%s5 + $0xf0] sm:$0xf]
        %v2987 = vld [vmem:[%s5 + $0xf4] sm:$0xf]
        %v2988 = vld [vmem:[%s5 + $0xf8] sm:$0xf]
        %v2989 = vld [vmem:[%s5 + $0xfc] sm:$0xf]
        %v2990 = vld [vmem:[%s5 + $0x100] sm:$0xf]
        %v2991 = vld [vmem:[%s5 + $0x104] sm:$0xf]
        %v2992 = vld [vmem:[%s5 + $0x108] sm:$0xf]
        %v2993 = vld [vmem:[%s5 + $0x10c] sm:$0xf]
        %v2994 = vld [vmem:[%s5 + $0x110] sm:$0xf]
        %v2995 = vld [vmem:[%s5 + $0x114] sm:$0xf]
        %v2996 = vld [vmem:[%s5 + $0x118] sm:$0xf]
        %v2997 = vld [vmem:[%s5 + $0x11c] sm:$0xf]
        %v2998 = vld [vmem:[%s5 + $0x120] sm:$0xf]
        %v2999 = vld [vmem:[%s5 + $0x124] sm:$0xf]
        %v3000 = vld [vmem:[%s5 + $0x128] sm:$0xf]
        %v3001 = vld [vmem:[%s5 + $0x12c] sm:$0xf]
        %v3002 = vld [vmem:[%s5 + $0x130] sm:$0xf]
        %v3003 = vld [vmem:[%s5 + $0x134] sm:$0xf]
        %v3004 = vld [vmem:[%s5 + $0x138] sm:$0xf]
        %v3005 = vld [vmem:[%s5 + $0x13c] sm:$0xf]
        %v3006 = vld [vmem:[%s5 + $0x140] sm:$0xf]
        %v3007 = vld [vmem:[%s5 + $0x144] sm:$0xf]
        %v3008 = vld [vmem:[%s5 + $0x148] sm:$0xf]
        %v3009 = vld [vmem:[%s5 + $0x14c] sm:$0xf]
        %v3010 = vld [vmem:[%s5 + $0x150] sm:$0xf]
        %v3011 = vld [vmem:[%s5 + $0x154] sm:$0xf]
        %v3012 = vld [vmem:[%s5 + $0x158] sm:$0xf]
        %v3013 = vld [vmem:[%s5 + $0x15c] sm:$0xf]
        %v3014 = vld [vmem:[%s5 + $0x160] sm:$0xf]
        %v3015 = vld [vmem:[%s5 + $0x164] sm:$0xf]
        %v3016 = vld [vmem:[%s5 + $0x168] sm:$0xf]
        %v3017 = vld [vmem:[%s5 + $0x16c] sm:$0xf]
        %v3018 = vld [vmem:[%s5 + $0x170] sm:$0xf]
        %v3019 = vld [vmem:[%s5 + $0x174] sm:$0xf]
        %v3020 = vld [vmem:[%s5 + $0x178] sm:$0xf]
        %v3021 = vld [vmem:[%s5 + $0x17c] sm:$0xf]
        %v3022 = vld [vmem:[%s5 + $0x180] sm:$0xf]
        %v3023 = vld [vmem:[%s5 + $0x184] sm:$0xf]
        %v3024 = vld [vmem:[%s5 + $0x188] sm:$0xf]
        %v3025 = vld [vmem:[%s5 + $0x18c] sm:$0xf]
        %v3026 = vld [vmem:[%s5 + $0x190] sm:$0xf]
        %v3027 = vld [vmem:[%s5 + $0x194] sm:$0xf]
        %v3028 = vld [vmem:[%s5 + $0x198] sm:$0xf]
        %v3029 = vld [vmem:[%s5 + $0x19c] sm:$0xf]
        %v3030 = vld [vmem:[%s5 + $0x1a0] sm:$0xf]
        %v3031 = vld [vmem:[%s5 + $0x1a4] sm:$0xf]
        %v3032 = vld [vmem:[%s5 + $0x1a8] sm:$0xf]
        %v3033 = vld [vmem:[%s5 + $0x1ac] sm:$0xf]
        %v3034 = vld [vmem:[%s5 + $0x1b0] sm:$0xf]
        %v3035 = vld [vmem:[%s5 + $0x1b4] sm:$0xf]
        %v3036 = vld [vmem:[%s5 + $0x1b8] sm:$0xf]
        %v3037 = vld [vmem:[%s5 + $0x1bc] sm:$0xf]
        %v3038 = vld [vmem:[%s5 + $0x1c0] sm:$0xf]
        %v3039 = vld [vmem:[%s5 + $0x1c4] sm:$0xf]
        %v3040 = vld [vmem:[%s5 + $0x1c8] sm:$0xf]
        %v3041 = vld [vmem:[%s5 + $0x1cc] sm:$0xf]
        %v3042 = vld [vmem:[%s5 + $0x1d0] sm:$0xf]
        %v3043 = vld [vmem:[%s5 + $0x1d4] sm:$0xf]
        %v3044 = vld [vmem:[%s5 + $0x1d8] sm:$0xf]
        %v3045 = vld [vmem:[%s5 + $0x1dc] sm:$0xf]
        %v3046 = vld [vmem:[%s5 + $0x1e0] sm:$0xf]
        %v3047 = vld [vmem:[%s5 + $0x1e4] sm:$0xf]
        %v3048 = vld [vmem:[%s5 + $0x1e8] sm:$0xf]
        %v3049 = vld [vmem:[%s5 + $0x1ec] sm:$0xf]
        %v3050 = vld [vmem:[%s5 + $0x1f0] sm:$0xf]
        %v3051 = vld [vmem:[%s5 + $0x1f4] sm:$0xf]
        %v3052 = vld [vmem:[%s5 + $0x1f8] sm:$0xf]
        %v3053 = vld [vmem:[%s5 + $0x1fc] sm:$0xf]
        %v3054 = vld [vmem:[%s5 + $0x200] sm:$0xf]
        %v3055 = vld [vmem:[%s5 + $0x204] sm:$0xf]
        %v3056 = vld [vmem:[%s5 + $0x208] sm:$0xf]
        %v3057 = vld [vmem:[%s5 + $0x20c] sm:$0xf]
        %v3058 = vld [vmem:[%s5 + $0x210] sm:$0xf]
        %v3059 = vld [vmem:[%s5 + $0x214] sm:$0xf]
        %v3060 = vld [vmem:[%s5 + $0x218] sm:$0xf]
        %v3061 = vld [vmem:[%s5 + $0x21c] sm:$0xf]
        %v3062 = vld [vmem:[%s5 + $0x220] sm:$0xf]
        %v3063 = vld [vmem:[%s5 + $0x224] sm:$0xf]
        %v3064 = vld [vmem:[%s5 + $0x228] sm:$0xf]
        %v3065 = vld [vmem:[%s5 + $0x22c] sm:$0xf]
        %v3066 = vld [vmem:[%s5 + $0x230] sm:$0xf]
        %v3067 = vld [vmem:[%s5 + $0x234] sm:$0xf]
        %v3068 = vld [vmem:[%s5 + $0x238] sm:$0xf]
        %v3069 = vld [vmem:[%s5 + $0x23c] sm:$0xf]
        %v3070 = vld [vmem:[%s14] sm:$0x1]
        %v3072 = vlaneseq
        %v3073 = vshrl.u32 %v3072, 7
        %v3074 = vsub.s32 0, %v3073
        %v3075 = vrot.slane %v3070, %v3074
        %v3221 = vunpack.c.l.b16 %v2926
        %v3222 = vunpack.c.l.b16 %v2927
        %v3223 = vunpack.c.l.b16 %v2928
        %v3224 = vunpack.c.l.b16 %v2929
        %v3225 = vunpack.c.l.b16 %v2930
        %v3226 = vunpack.c.l.b16 %v2931
        %v3227 = vunpack.c.l.b16 %v2932
        %v3228 = vunpack.c.l.b16 %v2933
        %v3229 = vunpack.c.l.b16 %v2934
        %v3230 = vunpack.c.l.b16 %v2935
        %v3231 = vunpack.c.l.b16 %v2936
        %v3232 = vunpack.c.l.b16 %v2937
        %v3233 = vunpack.c.l.b16 %v2938
        %v3234 = vunpack.c.l.b16 %v2939
        %v3235 = vunpack.c.l.b16 %v2940
        %v3236 = vunpack.c.l.b16 %v2941
        %v3237 = vunpack.c.l.b16 %v2942
        %v3238 = vunpack.c.l.b16 %v2943
        %v3239 = vunpack.c.l.b16 %v2944
        %v3240 = vunpack.c.l.b16 %v2945
        %v3241 = vunpack.c.l.b16 %v2946
        %v3242 = vunpack.c.l.b16 %v2947
        %v3243 = vunpack.c.l.b16 %v2948
        %v3244 = vunpack.c.l.b16 %v2949
        %v3245 = vunpack.c.l.b16 %v2950
        %v3246 = vunpack.c.l.b16 %v2951
        %v3247 = vunpack.c.l.b16 %v2952
        %v3248 = vunpack.c.l.b16 %v2953
        %v3249 = vunpack.c.l.b16 %v2954
        %v3250 = vunpack.c.l.b16 %v2955
        %v3251 = vunpack.c.l.b16 %v2956
        %v3252 = vunpack.c.l.b16 %v2957
        %v3253 = vunpack.c.l.b16 %v2958
        %v3254 = vunpack.c.l.b16 %v2959
        %v3255 = vunpack.c.l.b16 %v2960
        %v3256 = vunpack.c.l.b16 %v2961
        %v3257 = vunpack.c.l.b16 %v2962
        %v3258 = vunpack.c.l.b16 %v2963
        %v3259 = vunpack.c.l.b16 %v2964
        %v3260 = vunpack.c.l.b16 %v2965
        %v3261 = vunpack.c.l.b16 %v2966
        %v3262 = vunpack.c.l.b16 %v2967
        %v3263 = vunpack.c.l.b16 %v2968
        %v3264 = vunpack.c.l.b16 %v2969
        %v3265 = vunpack.c.l.b16 %v2970
        %v3266 = vunpack.c.l.b16 %v2971
        %v3267 = vunpack.c.l.b16 %v2972
        %v3268 = vunpack.c.l.b16 %v2973
        %v3269 = vunpack.c.l.b16 %v2974
        %v3270 = vunpack.c.l.b16 %v2975
        %v3271 = vunpack.c.l.b16 %v2976
        %v3272 = vunpack.c.l.b16 %v2977
        %v3273 = vunpack.c.l.b16 %v2978
        %v3274 = vunpack.c.l.b16 %v2979
        %v3275 = vunpack.c.l.b16 %v2980
        %v3276 = vunpack.c.l.b16 %v2981
        %v3277 = vunpack.c.l.b16 %v2982
        %v3278 = vunpack.c.l.b16 %v2983
        %v3279 = vunpack.c.l.b16 %v2984
        %v3280 = vunpack.c.l.b16 %v2985
        %v3281 = vunpack.c.l.b16 %v2986
        %v3282 = vunpack.c.l.b16 %v2987
        %v3283 = vunpack.c.l.b16 %v2988
        %v3284 = vunpack.c.l.b16 %v2989
        %v3285 = vunpack.c.l.b16 %v2990
        %v3286 = vunpack.c.l.b16 %v2991
        %v3287 = vunpack.c.l.b16 %v2992
        %v3288 = vunpack.c.l.b16 %v2993
        %v3289 = vunpack.c.l.b16 %v2994
        %v3290 = vunpack.c.l.b16 %v2995
        %v3291 = vunpack.c.l.b16 %v2996
        %v3292 = vunpack.c.l.b16 %v2997
        %v3293 = vunpack.c.l.b16 %v2998
        %v3294 = vunpack.c.l.b16 %v2999
        %v3295 = vunpack.c.l.b16 %v3000
        %v3296 = vunpack.c.l.b16 %v3001
        %v3297 = vunpack.c.l.b16 %v3002
        %v3298 = vunpack.c.l.b16 %v3003
        %v3299 = vunpack.c.l.b16 %v3004
        %v3300 = vunpack.c.l.b16 %v3005
        %v3301 = vunpack.c.l.b16 %v3006
        %v3302 = vunpack.c.l.b16 %v3007
        %v3303 = vunpack.c.l.b16 %v3008
        %v3304 = vunpack.c.l.b16 %v3009
        %v3305 = vunpack.c.l.b16 %v3010
        %v3306 = vunpack.c.l.b16 %v3011
        %v3307 = vunpack.c.l.b16 %v3012
        %v3308 = vunpack.c.l.b16 %v3013
        %v3309 = vunpack.c.l.b16 %v3014
        %v3310 = vunpack.c.l.b16 %v3015
        %v3311 = vunpack.c.l.b16 %v3016
        %v3312 = vunpack.c.l.b16 %v3017
        %v3313 = vunpack.c.l.b16 %v3018
        %v3314 = vunpack.c.l.b16 %v3019
        %v3315 = vunpack.c.l.b16 %v3020
        %v3316 = vunpack.c.l.b16 %v3021
        %v3317 = vunpack.c.l.b16 %v3022
        %v3318 = vunpack.c.l.b16 %v3023
        %v3319 = vunpack.c.l.b16 %v3024
        %v3320 = vunpack.c.l.b16 %v3025
        %v3321 = vunpack.c.l.b16 %v3026
        %v3322 = vunpack.c.l.b16 %v3027
        %v3323 = vunpack.c.l.b16 %v3028
        %v3324 = vunpack.c.l.b16 %v3029
        %v3325 = vunpack.c.l.b16 %v3030
        %v3326 = vunpack.c.l.b16 %v3031
        %v3327 = vunpack.c.l.b16 %v3032
        %v3328 = vunpack.c.l.b16 %v3033
        %v3329 = vunpack.c.l.b16 %v3034
        %v3330 = vunpack.c.l.b16 %v3035
        %v3331 = vunpack.c.l.b16 %v3036
        %v3332 = vunpack.c.l.b16 %v3037
        %v3333 = vunpack.c.l.b16 %v3038
        %v3334 = vunpack.c.l.b16 %v3039
        %v3335 = vunpack.c.l.b16 %v3040
        %v3336 = vunpack.c.l.b16 %v3041
        %v3337 = vunpack.c.l.b16 %v3042
        %v3338 = vunpack.c.l.b16 %v3043
        %v3339 = vunpack.c.l.b16 %v3044
        %v3340 = vunpack.c.l.b16 %v3045
        %v3341 = vunpack.c.l.b16 %v3046
        %v3342 = vunpack.c.l.b16 %v3047
        %v3343 = vunpack.c.l.b16 %v3048
        %v3344 = vunpack.c.l.b16 %v3049
        %v3345 = vunpack.c.l.b16 %v3050
        %v3346 = vunpack.c.l.b16 %v3051
        %v3347 = vunpack.c.l.b16 %v3052
        %v3348 = vunpack.c.l.b16 %v3053
        %v3349 = vunpack.c.l.b16 %v3054
        %v3350 = vunpack.c.l.b16 %v3055
        %v3351 = vunpack.c.l.b16 %v3056
        %v3352 = vunpack.c.l.b16 %v3057
        %v3353 = vunpack.c.l.b16 %v3058
        %v3354 = vunpack.c.l.b16 %v3059
        %v3355 = vunpack.c.l.b16 %v3060
        %v3356 = vunpack.c.l.b16 %v3061
        %v3357 = vunpack.c.l.b16 %v3062
        %v3358 = vunpack.c.l.b16 %v3063
        %v3359 = vunpack.c.l.b16 %v3064
        %v3360 = vunpack.c.l.b16 %v3065
        %v3361 = vunpack.c.l.b16 %v3066
        %v3362 = vunpack.c.l.b16 %v3067
        %v3363 = vunpack.c.l.b16 %v3068
        %v3364 = vunpack.c.l.b16 %v3069
        %v3365 = vpack.c.b16 %v3222, %v3221
        %v3366 = vpack.c.b16 %v3224, %v3223
        %v3367 = vpack.c.b16 %v3226, %v3225
        %v3368 = vpack.c.b16 %v3228, %v3227
        %v3369 = vpack.c.b16 %v3230, %v3229
        %v3370 = vpack.c.b16 %v3232, %v3231
        %v3371 = vpack.c.b16 %v3234, %v3233
        %v3372 = vpack.c.b16 %v3236, %v3235
        %v3373 = vpack.c.b16 %v3238, %v3237
        %v3374 = vpack.c.b16 %v3240, %v3239
        %v3375 = vpack.c.b16 %v3242, %v3241
        %v3376 = vpack.c.b16 %v3244, %v3243
        %v3377 = vpack.c.b16 %v3246, %v3245
        %v3378 = vpack.c.b16 %v3248, %v3247
        %v3379 = vpack.c.b16 %v3250, %v3249
        %v3380 = vpack.c.b16 %v3252, %v3251
        %v3381 = vpack.c.b16 %v3254, %v3253
        %v3382 = vpack.c.b16 %v3256, %v3255
        %v3383 = vpack.c.b16 %v3258, %v3257
        %v3384 = vpack.c.b16 %v3260, %v3259
        %v3385 = vpack.c.b16 %v3262, %v3261
        %v3386 = vpack.c.b16 %v3264, %v3263
        %v3387 = vpack.c.b16 %v3266, %v3265
        %v3388 = vpack.c.b16 %v3268, %v3267
        %v3389 = vpack.c.b16 %v3270, %v3269
        %v3390 = vpack.c.b16 %v3272, %v3271
        %v3391 = vpack.c.b16 %v3274, %v3273
        %v3392 = vpack.c.b16 %v3276, %v3275
        %v3393 = vpack.c.b16 %v3278, %v3277
        %v3394 = vpack.c.b16 %v3280, %v3279
        %v3395 = vpack.c.b16 %v3282, %v3281
        %v3396 = vpack.c.b16 %v3284, %v3283
        %v3397 = vpack.c.b16 %v3286, %v3285
        %v3398 = vpack.c.b16 %v3288, %v3287
        %v3399 = vpack.c.b16 %v3290, %v3289
        %v3400 = vpack.c.b16 %v3292, %v3291
        %v3401 = vpack.c.b16 %v3294, %v3293
        %v3402 = vpack.c.b16 %v3296, %v3295
        %v3403 = vpack.c.b16 %v3298, %v3297
        %v3404 = vpack.c.b16 %v3300, %v3299
        %v3405 = vpack.c.b16 %v3302, %v3301
        %v3406 = vpack.c.b16 %v3304, %v3303
        %v3407 = vpack.c.b16 %v3306, %v3305
        %v3408 = vpack.c.b16 %v3308, %v3307
        %v3409 = vpack.c.b16 %v3310, %v3309
        %v3410 = vpack.c.b16 %v3312, %v3311
        %v3411 = vpack.c.b16 %v3314, %v3313
        %v3412 = vpack.c.b16 %v3316, %v3315
        %v3413 = vpack.c.b16 %v3318, %v3317
        %v3414 = vpack.c.b16 %v3320, %v3319
        %v3415 = vpack.c.b16 %v3322, %v3321
        %v3416 = vpack.c.b16 %v3324, %v3323
        %v3417 = vpack.c.b16 %v3326, %v3325
        %v3418 = vpack.c.b16 %v3328, %v3327
        %v3419 = vpack.c.b16 %v3330, %v3329
        %v3420 = vpack.c.b16 %v3332, %v3331
        %v3421 = vpack.c.b16 %v3334, %v3333
        %v3422 = vpack.c.b16 %v3336, %v3335
        %v3423 = vpack.c.b16 %v3338, %v3337
        %v3424 = vpack.c.b16 %v3340, %v3339
        %v3425 = vpack.c.b16 %v3342, %v3341
        %v3426 = vpack.c.b16 %v3344, %v3343
        %v3427 = vpack.c.b16 %v3346, %v3345
        %v3428 = vpack.c.b16 %v3348, %v3347
        %v3429 = vpack.c.b16 %v3350, %v3349
        %v3430 = vpack.c.b16 %v3352, %v3351
        %v3431 = vpack.c.b16 %v3354, %v3353
        %v3432 = vpack.c.b16 %v3356, %v3355
        %v3433 = vpack.c.b16 %v3358, %v3357
        %v3434 = vpack.c.b16 %v3360, %v3359
        %v3435 = vpack.c.b16 %v3362, %v3361
        %v3436 = vpack.c.b16 %v3364, %v3363
        %3509 = vmatprep.subr.bf16.mxu0 0
        %3510 = vmatpush1.bf16.msra.mxu0 %v3372
        %3511 = vmatprep.subr.bf16.mxu0 0
        %3512 = vmatpush1.bf16.msra.mxu0 %v3371
        %3513 = vmatprep.subr.bf16.mxu0 0
        %3514 = vmatpush1.bf16.msra.mxu0 %v3370
        %3515 = vmatprep.subr.bf16.mxu0 0
        %3516 = vmatpush1.bf16.msra.mxu0 %v3369
        %3517 = vmatprep.subr.bf16.mxu0 0
        %3518 = vmatpush1.bf16.msra.mxu0 %v3368
        %3519 = vmatprep.subr.bf16.mxu0 0
        %3520 = vmatpush1.bf16.msra.mxu0 %v3367
        %3521 = vmatprep.subr.bf16.mxu0 0
        %3522 = vmatpush1.bf16.msra.mxu0 %v3366
        %3523 = vmatprep.subr.bf16.mxu0 0
        %3524 = vmatpush1.bf16.msra.mxu0 %v3365
        %3525 = vmatprep.subr.bf16.mxu0 0
        %3526 = vmatpush2.bf16.msra.mxu0 %v3380
        %3527 = vmatprep.subr.bf16.mxu0 0
        %3528 = vmatpush2.bf16.msra.mxu0 %v3379
        %3529 = vmatprep.subr.bf16.mxu0 0
        %3530 = vmatpush2.bf16.msra.mxu0 %v3378
        %3531 = vmatprep.subr.bf16.mxu0 0
        %3532 = vmatpush2.bf16.msra.mxu0 %v3377
        %3533 = vmatprep.subr.bf16.mxu0 0
        %3534 = vmatpush2.bf16.msra.mxu0 %v3376
        %3535 = vmatprep.subr.bf16.mxu0 0
        %3536 = vmatpush2.bf16.msra.mxu0 %v3375
        %3537 = vmatprep.subr.bf16.mxu0 0
        %3538 = vmatpush2.bf16.msra.mxu0 %v3374
        %3539 = vmatprep.subr.bf16.mxu0 0
        %3540 = vmatpush2.bf16.msra.mxu0 %v3373
        %3541 = vmatprep.mubr.bf16.mxu0 %v2897
        %3542 = vmatmul.mubr.bf16.gmra.mxu0 %v2894
        %v3543 = vpop.f32.mrf.mxu0
        %v3544 = vadd.f32 %v3075, %v3543
        %v3545 = vpop.f32.mrf.mxu0
        %v3546 = vpop.f32.mrf.mxu0
        %v3547 = vadd.f32 %v3075, %v3546
        %v3548 = vpop.f32.mrf.mxu0
        %3549 = vdwg.mxu0
        %3550 = vmatprep.subr.bf16.mxu0 0
        %3551 = vmatpush1.bf16.msra.mxu0 %v3388
        %3552 = vmatprep.subr.bf16.mxu0 0
        %3553 = vmatpush1.bf16.msra.mxu0 %v3387
        %3554 = vmatprep.subr.bf16.mxu0 0
        %3555 = vmatpush1.bf16.msra.mxu0 %v3386
        %3556 = vmatprep.subr.bf16.mxu0 0
        %3557 = vmatpush1.bf16.msra.mxu0 %v3385
        %3558 = vmatprep.subr.bf16.mxu0 0
        %3559 = vmatpush1.bf16.msra.mxu0 %v3384
        %3560 = vmatprep.subr.bf16.mxu0 0
        %3561 = vmatpush1.bf16.msra.mxu0 %v3383
        %3562 = vmatprep.subr.bf16.mxu0 0
        %3563 = vmatpush1.bf16.msra.mxu0 %v3382
        %3564 = vmatprep.subr.bf16.mxu0 0
        %3565 = vmatpush1.bf16.msra.mxu0 %v3381
        %3566 = vmatprep.subr.bf16.mxu0 0
        %3567 = vmatpush2.bf16.msra.mxu0 %v3396
        %3568 = vmatprep.subr.bf16.mxu0 0
        %3569 = vmatpush2.bf16.msra.mxu0 %v3395
        %3570 = vmatprep.subr.bf16.mxu0 0
        %3571 = vmatpush2.bf16.msra.mxu0 %v3394
        %3572 = vmatprep.subr.bf16.mxu0 0
        %3573 = vmatpush2.bf16.msra.mxu0 %v3393
        %3574 = vmatprep.subr.bf16.mxu0 0
        %3575 = vmatpush2.bf16.msra.mxu0 %v3392
        %3576 = vmatprep.subr.bf16.mxu0 0
        %3577 = vmatpush2.bf16.msra.mxu0 %v3391
        %3578 = vmatprep.subr.bf16.mxu0 0
        %3579 = vmatpush2.bf16.msra.mxu0 %v3390
        %3580 = vmatprep.subr.bf16.mxu0 0
        %3581 = vmatpush2.bf16.msra.mxu0 %v3389
        %3582 = vmatprep.mubr.bf16.mxu0 %v2907
        %3583 = vmatmul.mubr.bf16.gmra.mxu0 %v2902
        %v3584 = vpop.f32.mrf.mxu0
        %v3585 = vadd.f32 %v3544, %v3584
        %v3586 = vpop.f32.mrf.mxu0
        %v3587 = vpop.f32.mrf.mxu0
        %v3588 = vadd.f32 %v3547, %v3587
        %v3589 = vpop.f32.mrf.mxu0
        %3590 = vdwg.mxu0
        %3591 = vmatprep.subr.bf16.mxu0 0
        %3592 = vmatpush1.bf16.msra.mxu0 %v3404
        %3593 = vmatprep.subr.bf16.mxu0 0
        %3594 = vmatpush1.bf16.msra.mxu0 %v3403
        %3595 = vmatprep.subr.bf16.mxu0 0
        %3596 = vmatpush1.bf16.msra.mxu0 %v3402
        %3597 = vmatprep.subr.bf16.mxu0 0
        %3598 = vmatpush1.bf16.msra.mxu0 %v3401
        %3599 = vmatprep.subr.bf16.mxu0 0
        %3600 = vmatpush1.bf16.msra.mxu0 %v3400
        %3601 = vmatprep.subr.bf16.mxu0 0
        %3602 = vmatpush1.bf16.msra.mxu0 %v3399
        %3603 = vmatprep.subr.bf16.mxu0 0
        %3604 = vmatpush1.bf16.msra.mxu0 %v3398
        %3605 = vmatprep.subr.bf16.mxu0 0
        %3606 = vmatpush1.bf16.msra.mxu0 %v3397
        %3607 = vmatprep.subr.bf16.mxu0 0
        %3608 = vmatpush2.bf16.msra.mxu0 %v3412
        %3609 = vmatprep.subr.bf16.mxu0 0
        %3610 = vmatpush2.bf16.msra.mxu0 %v3411
        %3611 = vmatprep.subr.bf16.mxu0 0
        %3612 = vmatpush2.bf16.msra.mxu0 %v3410
        %3613 = vmatprep.subr.bf16.mxu0 0
        %3614 = vmatpush2.bf16.msra.mxu0 %v3409
        %3615 = vmatprep.subr.bf16.mxu0 0
        %3616 = vmatpush2.bf16.msra.mxu0 %v3408
        %3617 = vmatprep.subr.bf16.mxu0 0
        %3618 = vmatpush2.bf16.msra.mxu0 %v3407
        %3619 = vmatprep.subr.bf16.mxu0 0
        %3620 = vmatpush2.bf16.msra.mxu0 %v3406
        %3621 = vmatprep.subr.bf16.mxu0 0
        %3622 = vmatpush2.bf16.msra.mxu0 %v3405
        %3623 = vmatprep.mubr.bf16.mxu0 %v2915
        %3624 = vmatmul.mubr.bf16.gmra.mxu0 %v2910
        %v3625 = vpop.f32.mrf.mxu0
        %v3626 = vadd.f32 %v3585, %v3625
        %v3627 = vpop.f32.mrf.mxu0
        %v3628 = vpop.f32.mrf.mxu0
        %v3629 = vadd.f32 %v3588, %v3628
        %v3630 = vpop.f32.mrf.mxu0
        %3631 = vdwg.mxu0
        %3632 = vmatprep.subr.bf16.mxu0 0
        %3633 = vmatpush1.bf16.msra.mxu0 %v3420
        %3634 = vmatprep.subr.bf16.mxu0 0
        %3635 = vmatpush1.bf16.msra.mxu0 %v3419
        %3636 = vmatprep.subr.bf16.mxu0 0
        %3637 = vmatpush1.bf16.msra.mxu0 %v3418
        %3638 = vmatprep.subr.bf16.mxu0 0
        %3639 = vmatpush1.bf16.msra.mxu0 %v3417
        %3640 = vmatprep.subr.bf16.mxu0 0
        %3641 = vmatpush1.bf16.msra.mxu0 %v3416
        %3642 = vmatprep.subr.bf16.mxu0 0
        %3643 = vmatpush1.bf16.msra.mxu0 %v3415
        %3644 = vmatprep.subr.bf16.mxu0 0
        %3645 = vmatpush1.bf16.msra.mxu0 %v3414
        %3646 = vmatprep.subr.bf16.mxu0 0
        %3647 = vmatpush1.bf16.msra.mxu0 %v3413
        %3648 = vmatprep.subr.bf16.mxu0 0
        %3649 = vmatpush2.bf16.msra.mxu0 %v3428
        %3650 = vmatprep.subr.bf16.mxu0 0
        %3651 = vmatpush2.bf16.msra.mxu0 %v3427
        %3652 = vmatprep.subr.bf16.mxu0 0
        %3653 = vmatpush2.bf16.msra.mxu0 %v3426
        %3654 = vmatprep.subr.bf16.mxu0 0
        %3655 = vmatpush2.bf16.msra.mxu0 %v3425
        %3656 = vmatprep.subr.bf16.mxu0 0
        %3657 = vmatpush2.bf16.msra.mxu0 %v3424
        %3658 = vmatprep.subr.bf16.mxu0 0
        %3659 = vmatpush2.bf16.msra.mxu0 %v3423
        %3660 = vmatprep.subr.bf16.mxu0 0
        %3661 = vmatpush2.bf16.msra.mxu0 %v3422
        %3662 = vmatprep.subr.bf16.mxu0 0
        %3663 = vmatpush2.bf16.msra.mxu0 %v3421
        %3664 = vmatprep.mubr.bf16.mxu0 %v2921
        %3665 = vmatmul.mubr.bf16.gmra.mxu0 %v2919
        %v3666 = vpop.f32.mrf.mxu0
        %v3667 = vadd.f32 %v3626, %v3666
        %v3668 = vpop.f32.mrf.mxu0
        %v3669 = vpop.f32.mrf.mxu0
        %v3670 = vadd.f32 %v3629, %v3669
        %v3671 = vpop.f32.mrf.mxu0
        %3672 = vdwg.mxu0
        %3673 = vmatprep.subr.bf16.mxu0 0
        %3674 = vmatpush1.bf16.msra.mxu0 %v3436
        %3675 = vmatprep.subr.bf16.mxu0 0
        %3676 = vmatpush1.bf16.msra.mxu0 %v3435
        %3677 = vmatprep.subr.bf16.mxu0 0
        %3678 = vmatpush1.bf16.msra.mxu0 %v3434
        %3679 = vmatprep.subr.bf16.mxu0 0
        %3680 = vmatpush1.bf16.msra.mxu0 %v3433
        %3681 = vmatprep.subr.bf16.mxu0 0
        %3682 = vmatpush1.bf16.msra.mxu0 %v3432
        %3683 = vmatprep.subr.bf16.mxu0 0
        %3684 = vmatpush1.bf16.msra.mxu0 %v3431
        %3685 = vmatprep.subr.bf16.mxu0 0
        %3686 = vmatpush1.bf16.msra.mxu0 %v3430
        %3687 = vmatprep.subr.bf16.mxu0 0
        %3688 = vmatpush1.bf16.msra.mxu0 %v3429
        %3689 = vmatprep.subr.bf16.mxu0 0
        %3690 = vmatpush2.bf16.msra.mxu0 0
        %3691 = vmatprep.subr.bf16.mxu0 0
        %3692 = vmatpush2.bf16.msra.mxu0 0
        %3693 = vmatprep.subr.bf16.mxu0 0
        %3694 = vmatpush2.bf16.msra.mxu0 0
        %3695 = vmatprep.subr.bf16.mxu0 0
        %3696 = vmatpush2.bf16.msra.mxu0 0
        %3697 = vmatprep.subr.bf16.mxu0 0
        %3698 = vmatpush2.bf16.msra.mxu0 0
        %3699 = vmatprep.subr.bf16.mxu0 0
        %3700 = vmatpush2.bf16.msra.mxu0 0
        %3701 = vmatprep.subr.bf16.mxu0 0
        %3702 = vmatpush2.bf16.msra.mxu0 0
        %3703 = vmatprep.subr.bf16.mxu0 0
        %3704 = vmatpush2.bf16.msra.mxu0 0
        %3705 = vmatprep.mubr.bf16.mxu0 0
        %3706 = vmatmul.mubr.bf16.gmra.mxu0 %v2925
        %v3707 = vpop.f32.mrf.mxu0
        %v3708 = vadd.f32 %v3667, %v3707
        %v3709 = vpop.f32.mrf.mxu0
        %v3710 = vpop.f32.mrf.mxu0
        %v3711 = vadd.f32 %v3670, %v3710
        %v3712 = vpop.f32.mrf.mxu0
        %3713 = vdwg.mxu0
        %v3714 = vmax.f32 %v3708, 0.0
        %v3715 = vmax.f32 %v3711, 0.0
        %3716 = vst [vmem:[#allocation2] sm:$0xff] 0.0
        %3717 = vst [vmem:[#allocation2 + $0x8] sm:$0xff] 0.0
        %3718 = vst [vmem:[#allocation2 + $0x10] sm:$0xff] 0.0
        %3719 = vst [vmem:[#allocation2 + $0x18] sm:$0x3] 0.0
        %3720 = vst [vmem:[#allocation2 + $0x5] sm:$0xff] %v3714
        %3721 = vst [vmem:[#allocation2 + $0xd] sm:$0xff] %v3715
        %v3722 = vld [vmem:[#allocation2] sm:$0xff]
        %v3723 = vld [vmem:[#allocation2 + $0x8] sm:$0xff]
        %v3724 = vsel %vm1220, %v3722, 0.0
        %v3725 = vsel %vm1221, %v3723, 0.0
        %v3726 = vpack.c.bf16 %v3725, %v3724
        %v3727 = vld [vmem:[#allocation2 + $0x1] sm:$0xff]
        %v3728 = vld [vmem:[#allocation2 + $0x9] sm:$0xff]
        %v3729 = vpack.c.bf16 %v3728, %v3727
        %v3730 = vld [vmem:[#allocation2 + $0x2] sm:$0xff]
        %v3731 = vld [vmem:[#allocation2 + $0xa] sm:$0xff]
        %v3732 = vsel %vm1222, %v3730, 0.0
        %v3733 = vsel %vm1223, %v3731, 0.0
        %v3734 = vpack.c.bf16 %v3733, %v3732
        %v3735 = vld [vmem:[#allocation2 + $0x4] sm:$0xff]
        %v3736 = vld [vmem:[#allocation2 + $0xc] sm:$0xff]
        %v3737 = vsel %vm1220, %v3735, 0.0
        %v3738 = vsel %vm1221, %v3736, 0.0
        %v3739 = vpack.c.bf16 %v3738, %v3737
        %v3740 = vld [vmem:[#allocation2 + $0x5] sm:$0xff]
        %v3741 = vld [vmem:[#allocation2 + $0xd] sm:$0xff]
        %v3742 = vpack.c.bf16 %v3741, %v3740
        %v3743 = vld [vmem:[#allocation2 + $0x6] sm:$0xff]
        %v3744 = vld [vmem:[#allocation2 + $0xe] sm:$0xff]
        %v3745 = vsel %vm1222, %v3743, 0.0
        %v3746 = vsel %vm1223, %v3744, 0.0
        %v3747 = vpack.c.bf16 %v3746, %v3745
        %v3748 = vld [vmem:[#allocation2 + $0x10] sm:$0xff]
        %v3749 = vsel %vm1220, %v3723, 0.0
        %v3750 = vsel %vm1221, %v3748, 0.0
        %v3751 = vpack.c.bf16 %v3750, %v3749
        %v3752 = vld [vmem:[#allocation2 + $0x11] sm:$0xff]
        %v3753 = vpack.c.bf16 %v3752, %v3728
        %v3754 = vld [vmem:[#allocation2 + $0x12] sm:$0xff]
        %v3755 = vsel %vm1222, %v3731, 0.0
        %v3756 = vsel %vm1223, %v3754, 0.0
        %v3757 = vpack.c.bf16 %v3756, %v3755
        %v3758 = vld [vmem:[%s6] sm:$0xf]
        %v3759 = vld [vmem:[%s6 + $0x4] sm:$0xf]
        %v3760 = vld [vmem:[%s6 + $0x8] sm:$0xf]
        %v3761 = vld [vmem:[%s6 + $0xc] sm:$0xf]
        %v3762 = vld [vmem:[%s6 + $0x10] sm:$0xf]
        %v3763 = vld [vmem:[%s6 + $0x14] sm:$0xf]
        %v3764 = vld [vmem:[%s6 + $0x18] sm:$0xf]
        %v3765 = vld [vmem:[%s6 + $0x1c] sm:$0xf]
        %v3766 = vld [vmem:[%s6 + $0x20] sm:$0xf]
        %v3767 = vld [vmem:[%s6 + $0x24] sm:$0xf]
        %v3768 = vld [vmem:[%s6 + $0x28] sm:$0xf]
        %v3769 = vld [vmem:[%s6 + $0x2c] sm:$0xf]
        %v3770 = vld [vmem:[%s6 + $0x30] sm:$0xf]
        %v3771 = vld [vmem:[%s6 + $0x34] sm:$0xf]
        %v3772 = vld [vmem:[%s6 + $0x38] sm:$0xf]
        %v3773 = vld [vmem:[%s6 + $0x3c] sm:$0xf]
        %v3774 = vld [vmem:[%s6 + $0x40] sm:$0xf]
        %v3775 = vld [vmem:[%s6 + $0x44] sm:$0xf]
        %v3776 = vld [vmem:[%s6 + $0x48] sm:$0xf]
        %v3777 = vld [vmem:[%s6 + $0x4c] sm:$0xf]
        %v3778 = vld [vmem:[%s6 + $0x50] sm:$0xf]
        %v3779 = vld [vmem:[%s6 + $0x54] sm:$0xf]
        %v3780 = vld [vmem:[%s6 + $0x58] sm:$0xf]
        %v3781 = vld [vmem:[%s6 + $0x5c] sm:$0xf]
        %v3782 = vld [vmem:[%s6 + $0x60] sm:$0xf]
        %v3783 = vld [vmem:[%s6 + $0x64] sm:$0xf]
        %v3784 = vld [vmem:[%s6 + $0x68] sm:$0xf]
        %v3785 = vld [vmem:[%s6 + $0x6c] sm:$0xf]
        %v3786 = vld [vmem:[%s6 + $0x70] sm:$0xf]
        %v3787 = vld [vmem:[%s6 + $0x74] sm:$0xf]
        %v3788 = vld [vmem:[%s6 + $0x78] sm:$0xf]
        %v3789 = vld [vmem:[%s6 + $0x7c] sm:$0xf]
        %v3790 = vld [vmem:[%s6 + $0x80] sm:$0xf]
        %v3791 = vld [vmem:[%s6 + $0x84] sm:$0xf]
        %v3792 = vld [vmem:[%s6 + $0x88] sm:$0xf]
        %v3793 = vld [vmem:[%s6 + $0x8c] sm:$0xf]
        %v3794 = vld [vmem:[%s6 + $0x90] sm:$0xf]
        %v3795 = vld [vmem:[%s6 + $0x94] sm:$0xf]
        %v3796 = vld [vmem:[%s6 + $0x98] sm:$0xf]
        %v3797 = vld [vmem:[%s6 + $0x9c] sm:$0xf]
        %v3798 = vld [vmem:[%s6 + $0xa0] sm:$0xf]
        %v3799 = vld [vmem:[%s6 + $0xa4] sm:$0xf]
        %v3800 = vld [vmem:[%s6 + $0xa8] sm:$0xf]
        %v3801 = vld [vmem:[%s6 + $0xac] sm:$0xf]
        %v3802 = vld [vmem:[%s6 + $0xb0] sm:$0xf]
        %v3803 = vld [vmem:[%s6 + $0xb4] sm:$0xf]
        %v3804 = vld [vmem:[%s6 + $0xb8] sm:$0xf]
        %v3805 = vld [vmem:[%s6 + $0xbc] sm:$0xf]
        %v3806 = vld [vmem:[%s6 + $0xc0] sm:$0xf]
        %v3807 = vld [vmem:[%s6 + $0xc4] sm:$0xf]
        %v3808 = vld [vmem:[%s6 + $0xc8] sm:$0xf]
        %v3809 = vld [vmem:[%s6 + $0xcc] sm:$0xf]
        %v3810 = vld [vmem:[%s6 + $0xd0] sm:$0xf]
        %v3811 = vld [vmem:[%s6 + $0xd4] sm:$0xf]
        %v3812 = vld [vmem:[%s6 + $0xd8] sm:$0xf]
        %v3813 = vld [vmem:[%s6 + $0xdc] sm:$0xf]
        %v3814 = vld [vmem:[%s6 + $0xe0] sm:$0xf]
        %v3815 = vld [vmem:[%s6 + $0xe4] sm:$0xf]
        %v3816 = vld [vmem:[%s6 + $0xe8] sm:$0xf]
        %v3817 = vld [vmem:[%s6 + $0xec] sm:$0xf]
        %v3818 = vld [vmem:[%s6 + $0xf0] sm:$0xf]
        %v3819 = vld [vmem:[%s6 + $0xf4] sm:$0xf]
        %v3820 = vld [vmem:[%s6 + $0xf8] sm:$0xf]
        %v3821 = vld [vmem:[%s6 + $0xfc] sm:$0xf]
        %v3822 = vld [vmem:[%s6 + $0x100] sm:$0xf]
        %v3823 = vld [vmem:[%s6 + $0x104] sm:$0xf]
        %v3824 = vld [vmem:[%s6 + $0x108] sm:$0xf]
        %v3825 = vld [vmem:[%s6 + $0x10c] sm:$0xf]
        %v3826 = vld [vmem:[%s6 + $0x110] sm:$0xf]
        %v3827 = vld [vmem:[%s6 + $0x114] sm:$0xf]
        %v3828 = vld [vmem:[%s6 + $0x118] sm:$0xf]
        %v3829 = vld [vmem:[%s6 + $0x11c] sm:$0xf]
        %v3830 = vld [vmem:[%s6 + $0x120] sm:$0xf]
        %v3831 = vld [vmem:[%s6 + $0x124] sm:$0xf]
        %v3832 = vld [vmem:[%s6 + $0x128] sm:$0xf]
        %v3833 = vld [vmem:[%s6 + $0x12c] sm:$0xf]
        %v3834 = vld [vmem:[%s6 + $0x130] sm:$0xf]
        %v3835 = vld [vmem:[%s6 + $0x134] sm:$0xf]
        %v3836 = vld [vmem:[%s6 + $0x138] sm:$0xf]
        %v3837 = vld [vmem:[%s6 + $0x13c] sm:$0xf]
        %v3838 = vld [vmem:[%s6 + $0x140] sm:$0xf]
        %v3839 = vld [vmem:[%s6 + $0x144] sm:$0xf]
        %v3840 = vld [vmem:[%s6 + $0x148] sm:$0xf]
        %v3841 = vld [vmem:[%s6 + $0x14c] sm:$0xf]
        %v3842 = vld [vmem:[%s6 + $0x150] sm:$0xf]
        %v3843 = vld [vmem:[%s6 + $0x154] sm:$0xf]
        %v3844 = vld [vmem:[%s6 + $0x158] sm:$0xf]
        %v3845 = vld [vmem:[%s6 + $0x15c] sm:$0xf]
        %v3846 = vld [vmem:[%s6 + $0x160] sm:$0xf]
        %v3847 = vld [vmem:[%s6 + $0x164] sm:$0xf]
        %v3848 = vld [vmem:[%s6 + $0x168] sm:$0xf]
        %v3849 = vld [vmem:[%s6 + $0x16c] sm:$0xf]
        %v3850 = vld [vmem:[%s6 + $0x170] sm:$0xf]
        %v3851 = vld [vmem:[%s6 + $0x174] sm:$0xf]
        %v3852 = vld [vmem:[%s6 + $0x178] sm:$0xf]
        %v3853 = vld [vmem:[%s6 + $0x17c] sm:$0xf]
        %v3854 = vld [vmem:[%s6 + $0x180] sm:$0xf]
        %v3855 = vld [vmem:[%s6 + $0x184] sm:$0xf]
        %v3856 = vld [vmem:[%s6 + $0x188] sm:$0xf]
        %v3857 = vld [vmem:[%s6 + $0x18c] sm:$0xf]
        %v3858 = vld [vmem:[%s6 + $0x190] sm:$0xf]
        %v3859 = vld [vmem:[%s6 + $0x194] sm:$0xf]
        %v3860 = vld [vmem:[%s6 + $0x198] sm:$0xf]
        %v3861 = vld [vmem:[%s6 + $0x19c] sm:$0xf]
        %v3862 = vld [vmem:[%s6 + $0x1a0] sm:$0xf]
        %v3863 = vld [vmem:[%s6 + $0x1a4] sm:$0xf]
        %v3864 = vld [vmem:[%s6 + $0x1a8] sm:$0xf]
        %v3865 = vld [vmem:[%s6 + $0x1ac] sm:$0xf]
        %v3866 = vld [vmem:[%s6 + $0x1b0] sm:$0xf]
        %v3867 = vld [vmem:[%s6 + $0x1b4] sm:$0xf]
        %v3868 = vld [vmem:[%s6 + $0x1b8] sm:$0xf]
        %v3869 = vld [vmem:[%s6 + $0x1bc] sm:$0xf]
        %v3870 = vld [vmem:[%s6 + $0x1c0] sm:$0xf]
        %v3871 = vld [vmem:[%s6 + $0x1c4] sm:$0xf]
        %v3872 = vld [vmem:[%s6 + $0x1c8] sm:$0xf]
        %v3873 = vld [vmem:[%s6 + $0x1cc] sm:$0xf]
        %v3874 = vld [vmem:[%s6 + $0x1d0] sm:$0xf]
        %v3875 = vld [vmem:[%s6 + $0x1d4] sm:$0xf]
        %v3876 = vld [vmem:[%s6 + $0x1d8] sm:$0xf]
        %v3877 = vld [vmem:[%s6 + $0x1dc] sm:$0xf]
        %v3878 = vld [vmem:[%s6 + $0x1e0] sm:$0xf]
        %v3879 = vld [vmem:[%s6 + $0x1e4] sm:$0xf]
        %v3880 = vld [vmem:[%s6 + $0x1e8] sm:$0xf]
        %v3881 = vld [vmem:[%s6 + $0x1ec] sm:$0xf]
        %v3882 = vld [vmem:[%s6 + $0x1f0] sm:$0xf]
        %v3883 = vld [vmem:[%s6 + $0x1f4] sm:$0xf]
        %v3884 = vld [vmem:[%s6 + $0x1f8] sm:$0xf]
        %v3885 = vld [vmem:[%s6 + $0x1fc] sm:$0xf]
        %v3886 = vld [vmem:[%s6 + $0x200] sm:$0xf]
        %v3887 = vld [vmem:[%s6 + $0x204] sm:$0xf]
        %v3888 = vld [vmem:[%s6 + $0x208] sm:$0xf]
        %v3889 = vld [vmem:[%s6 + $0x20c] sm:$0xf]
        %v3890 = vld [vmem:[%s6 + $0x210] sm:$0xf]
        %v3891 = vld [vmem:[%s6 + $0x214] sm:$0xf]
        %v3892 = vld [vmem:[%s6 + $0x218] sm:$0xf]
        %v3893 = vld [vmem:[%s6 + $0x21c] sm:$0xf]
        %v3894 = vld [vmem:[%s6 + $0x220] sm:$0xf]
        %v3895 = vld [vmem:[%s6 + $0x224] sm:$0xf]
        %v3896 = vld [vmem:[%s6 + $0x228] sm:$0xf]
        %v3897 = vld [vmem:[%s6 + $0x22c] sm:$0xf]
        %v3898 = vld [vmem:[%s6 + $0x230] sm:$0xf]
        %v3899 = vld [vmem:[%s6 + $0x234] sm:$0xf]
        %v3900 = vld [vmem:[%s6 + $0x238] sm:$0xf]
        %v3901 = vld [vmem:[%s6 + $0x23c] sm:$0xf]
        %v3902 = vld [vmem:[%s15] sm:$0x1]
        %v3904 = vlaneseq
        %v3905 = vshrl.u32 %v3904, 7
        %v3906 = vsub.s32 0, %v3905
        %v3907 = vrot.slane %v3902, %v3906
        %v4053 = vunpack.c.l.b16 %v3758
        %v4054 = vunpack.c.l.b16 %v3759
        %v4055 = vunpack.c.l.b16 %v3760
        %v4056 = vunpack.c.l.b16 %v3761
        %v4057 = vunpack.c.l.b16 %v3762
        %v4058 = vunpack.c.l.b16 %v3763
        %v4059 = vunpack.c.l.b16 %v3764
        %v4060 = vunpack.c.l.b16 %v3765
        %v4061 = vunpack.c.l.b16 %v3766
        %v4062 = vunpack.c.l.b16 %v3767
        %v4063 = vunpack.c.l.b16 %v3768
        %v4064 = vunpack.c.l.b16 %v3769
        %v4065 = vunpack.c.l.b16 %v3770
        %v4066 = vunpack.c.l.b16 %v3771
        %v4067 = vunpack.c.l.b16 %v3772
        %v4068 = vunpack.c.l.b16 %v3773
        %v4069 = vunpack.c.l.b16 %v3774
        %v4070 = vunpack.c.l.b16 %v3775
        %v4071 = vunpack.c.l.b16 %v3776
        %v4072 = vunpack.c.l.b16 %v3777
        %v4073 = vunpack.c.l.b16 %v3778
        %v4074 = vunpack.c.l.b16 %v3779
        %v4075 = vunpack.c.l.b16 %v3780
        %v4076 = vunpack.c.l.b16 %v3781
        %v4077 = vunpack.c.l.b16 %v3782
        %v4078 = vunpack.c.l.b16 %v3783
        %v4079 = vunpack.c.l.b16 %v3784
        %v4080 = vunpack.c.l.b16 %v3785
        %v4081 = vunpack.c.l.b16 %v3786
        %v4082 = vunpack.c.l.b16 %v3787
        %v4083 = vunpack.c.l.b16 %v3788
        %v4084 = vunpack.c.l.b16 %v3789
        %v4085 = vunpack.c.l.b16 %v3790
        %v4086 = vunpack.c.l.b16 %v3791
        %v4087 = vunpack.c.l.b16 %v3792
        %v4088 = vunpack.c.l.b16 %v3793
        %v4089 = vunpack.c.l.b16 %v3794
        %v4090 = vunpack.c.l.b16 %v3795
        %v4091 = vunpack.c.l.b16 %v3796
        %v4092 = vunpack.c.l.b16 %v3797
        %v4093 = vunpack.c.l.b16 %v3798
        %v4094 = vunpack.c.l.b16 %v3799
        %v4095 = vunpack.c.l.b16 %v3800
        %v4096 = vunpack.c.l.b16 %v3801
        %v4097 = vunpack.c.l.b16 %v3802
        %v4098 = vunpack.c.l.b16 %v3803
        %v4099 = vunpack.c.l.b16 %v3804
        %v4100 = vunpack.c.l.b16 %v3805
        %v4101 = vunpack.c.l.b16 %v3806
        %v4102 = vunpack.c.l.b16 %v3807
        %v4103 = vunpack.c.l.b16 %v3808
        %v4104 = vunpack.c.l.b16 %v3809
        %v4105 = vunpack.c.l.b16 %v3810
        %v4106 = vunpack.c.l.b16 %v3811
        %v4107 = vunpack.c.l.b16 %v3812
        %v4108 = vunpack.c.l.b16 %v3813
        %v4109 = vunpack.c.l.b16 %v3814
        %v4110 = vunpack.c.l.b16 %v3815
        %v4111 = vunpack.c.l.b16 %v3816
        %v4112 = vunpack.c.l.b16 %v3817
        %v4113 = vunpack.c.l.b16 %v3818
        %v4114 = vunpack.c.l.b16 %v3819
        %v4115 = vunpack.c.l.b16 %v3820
        %v4116 = vunpack.c.l.b16 %v3821
        %v4117 = vunpack.c.l.b16 %v3822
        %v4118 = vunpack.c.l.b16 %v3823
        %v4119 = vunpack.c.l.b16 %v3824
        %v4120 = vunpack.c.l.b16 %v3825
        %v4121 = vunpack.c.l.b16 %v3826
        %v4122 = vunpack.c.l.b16 %v3827
        %v4123 = vunpack.c.l.b16 %v3828
        %v4124 = vunpack.c.l.b16 %v3829
        %v4125 = vunpack.c.l.b16 %v3830
        %v4126 = vunpack.c.l.b16 %v3831
        %v4127 = vunpack.c.l.b16 %v3832
        %v4128 = vunpack.c.l.b16 %v3833
        %v4129 = vunpack.c.l.b16 %v3834
        %v4130 = vunpack.c.l.b16 %v3835
        %v4131 = vunpack.c.l.b16 %v3836
        %v4132 = vunpack.c.l.b16 %v3837
        %v4133 = vunpack.c.l.b16 %v3838
        %v4134 = vunpack.c.l.b16 %v3839
        %v4135 = vunpack.c.l.b16 %v3840
        %v4136 = vunpack.c.l.b16 %v3841
        %v4137 = vunpack.c.l.b16 %v3842
        %v4138 = vunpack.c.l.b16 %v3843
        %v4139 = vunpack.c.l.b16 %v3844
        %v4140 = vunpack.c.l.b16 %v3845
        %v4141 = vunpack.c.l.b16 %v3846
        %v4142 = vunpack.c.l.b16 %v3847
        %v4143 = vunpack.c.l.b16 %v3848
        %v4144 = vunpack.c.l.b16 %v3849
        %v4145 = vunpack.c.l.b16 %v3850
        %v4146 = vunpack.c.l.b16 %v3851
        %v4147 = vunpack.c.l.b16 %v3852
        %v4148 = vunpack.c.l.b16 %v3853
        %v4149 = vunpack.c.l.b16 %v3854
        %v4150 = vunpack.c.l.b16 %v3855
        %v4151 = vunpack.c.l.b16 %v3856
        %v4152 = vunpack.c.l.b16 %v3857
        %v4153 = vunpack.c.l.b16 %v3858
        %v4154 = vunpack.c.l.b16 %v3859
        %v4155 = vunpack.c.l.b16 %v3860
        %v4156 = vunpack.c.l.b16 %v3861
        %v4157 = vunpack.c.l.b16 %v3862
        %v4158 = vunpack.c.l.b16 %v3863
        %v4159 = vunpack.c.l.b16 %v3864
        %v4160 = vunpack.c.l.b16 %v3865
        %v4161 = vunpack.c.l.b16 %v3866
        %v4162 = vunpack.c.l.b16 %v3867
        %v4163 = vunpack.c.l.b16 %v3868
        %v4164 = vunpack.c.l.b16 %v3869
        %v4165 = vunpack.c.l.b16 %v3870
        %v4166 = vunpack.c.l.b16 %v3871
        %v4167 = vunpack.c.l.b16 %v3872
        %v4168 = vunpack.c.l.b16 %v3873
        %v4169 = vunpack.c.l.b16 %v3874
        %v4170 = vunpack.c.l.b16 %v3875
        %v4171 = vunpack.c.l.b16 %v3876
        %v4172 = vunpack.c.l.b16 %v3877
        %v4173 = vunpack.c.l.b16 %v3878
        %v4174 = vunpack.c.l.b16 %v3879
        %v4175 = vunpack.c.l.b16 %v3880
        %v4176 = vunpack.c.l.b16 %v3881
        %v4177 = vunpack.c.l.b16 %v3882
        %v4178 = vunpack.c.l.b16 %v3883
        %v4179 = vunpack.c.l.b16 %v3884
        %v4180 = vunpack.c.l.b16 %v3885
        %v4181 = vunpack.c.l.b16 %v3886
        %v4182 = vunpack.c.l.b16 %v3887
        %v4183 = vunpack.c.l.b16 %v3888
        %v4184 = vunpack.c.l.b16 %v3889
        %v4185 = vunpack.c.l.b16 %v3890
        %v4186 = vunpack.c.l.b16 %v3891
        %v4187 = vunpack.c.l.b16 %v3892
        %v4188 = vunpack.c.l.b16 %v3893
        %v4189 = vunpack.c.l.b16 %v3894
        %v4190 = vunpack.c.l.b16 %v3895
        %v4191 = vunpack.c.l.b16 %v3896
        %v4192 = vunpack.c.l.b16 %v3897
        %v4193 = vunpack.c.l.b16 %v3898
        %v4194 = vunpack.c.l.b16 %v3899
        %v4195 = vunpack.c.l.b16 %v3900
        %v4196 = vunpack.c.l.b16 %v3901
        %v4197 = vpack.c.b16 %v4054, %v4053
        %v4198 = vpack.c.b16 %v4056, %v4055
        %v4199 = vpack.c.b16 %v4058, %v4057
        %v4200 = vpack.c.b16 %v4060, %v4059
        %v4201 = vpack.c.b16 %v4062, %v4061
        %v4202 = vpack.c.b16 %v4064, %v4063
        %v4203 = vpack.c.b16 %v4066, %v4065
        %v4204 = vpack.c.b16 %v4068, %v4067
        %v4205 = vpack.c.b16 %v4070, %v4069
        %v4206 = vpack.c.b16 %v4072, %v4071
        %v4207 = vpack.c.b16 %v4074, %v4073
        %v4208 = vpack.c.b16 %v4076, %v4075
        %v4209 = vpack.c.b16 %v4078, %v4077
        %v4210 = vpack.c.b16 %v4080, %v4079
        %v4211 = vpack.c.b16 %v4082, %v4081
        %v4212 = vpack.c.b16 %v4084, %v4083
        %v4213 = vpack.c.b16 %v4086, %v4085
        %v4214 = vpack.c.b16 %v4088, %v4087
        %v4215 = vpack.c.b16 %v4090, %v4089
        %v4216 = vpack.c.b16 %v4092, %v4091
        %v4217 = vpack.c.b16 %v4094, %v4093
        %v4218 = vpack.c.b16 %v4096, %v4095
        %v4219 = vpack.c.b16 %v4098, %v4097
        %v4220 = vpack.c.b16 %v4100, %v4099
        %v4221 = vpack.c.b16 %v4102, %v4101
        %v4222 = vpack.c.b16 %v4104, %v4103
        %v4223 = vpack.c.b16 %v4106, %v4105
        %v4224 = vpack.c.b16 %v4108, %v4107
        %v4225 = vpack.c.b16 %v4110, %v4109
        %v4226 = vpack.c.b16 %v4112, %v4111
        %v4227 = vpack.c.b16 %v4114, %v4113
        %v4228 = vpack.c.b16 %v4116, %v4115
        %v4229 = vpack.c.b16 %v4118, %v4117
        %v4230 = vpack.c.b16 %v4120, %v4119
        %v4231 = vpack.c.b16 %v4122, %v4121
        %v4232 = vpack.c.b16 %v4124, %v4123
        %v4233 = vpack.c.b16 %v4126, %v4125
        %v4234 = vpack.c.b16 %v4128, %v4127
        %v4235 = vpack.c.b16 %v4130, %v4129
        %v4236 = vpack.c.b16 %v4132, %v4131
        %v4237 = vpack.c.b16 %v4134, %v4133
        %v4238 = vpack.c.b16 %v4136, %v4135
        %v4239 = vpack.c.b16 %v4138, %v4137
        %v4240 = vpack.c.b16 %v4140, %v4139
        %v4241 = vpack.c.b16 %v4142, %v4141
        %v4242 = vpack.c.b16 %v4144, %v4143
        %v4243 = vpack.c.b16 %v4146, %v4145
        %v4244 = vpack.c.b16 %v4148, %v4147
        %v4245 = vpack.c.b16 %v4150, %v4149
        %v4246 = vpack.c.b16 %v4152, %v4151
        %v4247 = vpack.c.b16 %v4154, %v4153
        %v4248 = vpack.c.b16 %v4156, %v4155
        %v4249 = vpack.c.b16 %v4158, %v4157
        %v4250 = vpack.c.b16 %v4160, %v4159
        %v4251 = vpack.c.b16 %v4162, %v4161
        %v4252 = vpack.c.b16 %v4164, %v4163
        %v4253 = vpack.c.b16 %v4166, %v4165
        %v4254 = vpack.c.b16 %v4168, %v4167
        %v4255 = vpack.c.b16 %v4170, %v4169
        %v4256 = vpack.c.b16 %v4172, %v4171
        %v4257 = vpack.c.b16 %v4174, %v4173
        %v4258 = vpack.c.b16 %v4176, %v4175
        %v4259 = vpack.c.b16 %v4178, %v4177
        %v4260 = vpack.c.b16 %v4180, %v4179
        %v4261 = vpack.c.b16 %v4182, %v4181
        %v4262 = vpack.c.b16 %v4184, %v4183
        %v4263 = vpack.c.b16 %v4186, %v4185
        %v4264 = vpack.c.b16 %v4188, %v4187
        %v4265 = vpack.c.b16 %v4190, %v4189
        %v4266 = vpack.c.b16 %v4192, %v4191
        %v4267 = vpack.c.b16 %v4194, %v4193
        %v4268 = vpack.c.b16 %v4196, %v4195
        %4341 = vmatprep.subr.bf16.mxu0 0
        %4342 = vmatpush1.bf16.msra.mxu0 %v4204
        %4343 = vmatprep.subr.bf16.mxu0 0
        %4344 = vmatpush1.bf16.msra.mxu0 %v4203
        %4345 = vmatprep.subr.bf16.mxu0 0
        %4346 = vmatpush1.bf16.msra.mxu0 %v4202
        %4347 = vmatprep.subr.bf16.mxu0 0
        %4348 = vmatpush1.bf16.msra.mxu0 %v4201
        %4349 = vmatprep.subr.bf16.mxu0 0
        %4350 = vmatpush1.bf16.msra.mxu0 %v4200
        %4351 = vmatprep.subr.bf16.mxu0 0
        %4352 = vmatpush1.bf16.msra.mxu0 %v4199
        %4353 = vmatprep.subr.bf16.mxu0 0
        %4354 = vmatpush1.bf16.msra.mxu0 %v4198
        %4355 = vmatprep.subr.bf16.mxu0 0
        %4356 = vmatpush1.bf16.msra.mxu0 %v4197
        %4357 = vmatprep.subr.bf16.mxu0 0
        %4358 = vmatpush2.bf16.msra.mxu0 %v4212
        %4359 = vmatprep.subr.bf16.mxu0 0
        %4360 = vmatpush2.bf16.msra.mxu0 %v4211
        %4361 = vmatprep.subr.bf16.mxu0 0
        %4362 = vmatpush2.bf16.msra.mxu0 %v4210
        %4363 = vmatprep.subr.bf16.mxu0 0
        %4364 = vmatpush2.bf16.msra.mxu0 %v4209
        %4365 = vmatprep.subr.bf16.mxu0 0
        %4366 = vmatpush2.bf16.msra.mxu0 %v4208
        %4367 = vmatprep.subr.bf16.mxu0 0
        %4368 = vmatpush2.bf16.msra.mxu0 %v4207
        %4369 = vmatprep.subr.bf16.mxu0 0
        %4370 = vmatpush2.bf16.msra.mxu0 %v4206
        %4371 = vmatprep.subr.bf16.mxu0 0
        %4372 = vmatpush2.bf16.msra.mxu0 %v4205
        %4373 = vmatprep.mubr.bf16.mxu0 %v3729
        %4374 = vmatmul.mubr.bf16.gmra.mxu0 %v3726
        %v4375 = vpop.f32.mrf.mxu0
        %v4376 = vadd.f32 %v3907, %v4375
        %v4377 = vpop.f32.mrf.mxu0
        %v4378 = vpop.f32.mrf.mxu0
        %v4379 = vadd.f32 %v3907, %v4378
        %v4380 = vpop.f32.mrf.mxu0
        %4381 = vdwg.mxu0
        %4382 = vmatprep.subr.bf16.mxu0 0
        %4383 = vmatpush1.bf16.msra.mxu0 %v4220
        %4384 = vmatprep.subr.bf16.mxu0 0
        %4385 = vmatpush1.bf16.msra.mxu0 %v4219
        %4386 = vmatprep.subr.bf16.mxu0 0
        %4387 = vmatpush1.bf16.msra.mxu0 %v4218
        %4388 = vmatprep.subr.bf16.mxu0 0
        %4389 = vmatpush1.bf16.msra.mxu0 %v4217
        %4390 = vmatprep.subr.bf16.mxu0 0
        %4391 = vmatpush1.bf16.msra.mxu0 %v4216
        %4392 = vmatprep.subr.bf16.mxu0 0
        %4393 = vmatpush1.bf16.msra.mxu0 %v4215
        %4394 = vmatprep.subr.bf16.mxu0 0
        %4395 = vmatpush1.bf16.msra.mxu0 %v4214
        %4396 = vmatprep.subr.bf16.mxu0 0
        %4397 = vmatpush1.bf16.msra.mxu0 %v4213
        %4398 = vmatprep.subr.bf16.mxu0 0
        %4399 = vmatpush2.bf16.msra.mxu0 %v4228
        %4400 = vmatprep.subr.bf16.mxu0 0
        %4401 = vmatpush2.bf16.msra.mxu0 %v4227
        %4402 = vmatprep.subr.bf16.mxu0 0
        %4403 = vmatpush2.bf16.msra.mxu0 %v4226
        %4404 = vmatprep.subr.bf16.mxu0 0
        %4405 = vmatpush2.bf16.msra.mxu0 %v4225
        %4406 = vmatprep.subr.bf16.mxu0 0
        %4407 = vmatpush2.bf16.msra.mxu0 %v4224
        %4408 = vmatprep.subr.bf16.mxu0 0
        %4409 = vmatpush2.bf16.msra.mxu0 %v4223
        %4410 = vmatprep.subr.bf16.mxu0 0
        %4411 = vmatpush2.bf16.msra.mxu0 %v4222
        %4412 = vmatprep.subr.bf16.mxu0 0
        %4413 = vmatpush2.bf16.msra.mxu0 %v4221
        %4414 = vmatprep.mubr.bf16.mxu0 %v3739
        %4415 = vmatmul.mubr.bf16.gmra.mxu0 %v3734
        %v4416 = vpop.f32.mrf.mxu0
        %v4417 = vadd.f32 %v4376, %v4416
        %v4418 = vpop.f32.mrf.mxu0
        %v4419 = vpop.f32.mrf.mxu0
        %v4420 = vadd.f32 %v4379, %v4419
        %v4421 = vpop.f32.mrf.mxu0
        %4422 = vdwg.mxu0
        %4423 = vmatprep.subr.bf16.mxu0 0
        %4424 = vmatpush1.bf16.msra.mxu0 %v4236
        %4425 = vmatprep.subr.bf16.mxu0 0
        %4426 = vmatpush1.bf16.msra.mxu0 %v4235
        %4427 = vmatprep.subr.bf16.mxu0 0
        %4428 = vmatpush1.bf16.msra.mxu0 %v4234
        %4429 = vmatprep.subr.bf16.mxu0 0
        %4430 = vmatpush1.bf16.msra.mxu0 %v4233
        %4431 = vmatprep.subr.bf16.mxu0 0
        %4432 = vmatpush1.bf16.msra.mxu0 %v4232
        %4433 = vmatprep.subr.bf16.mxu0 0
        %4434 = vmatpush1.bf16.msra.mxu0 %v4231
        %4435 = vmatprep.subr.bf16.mxu0 0
        %4436 = vmatpush1.bf16.msra.mxu0 %v4230
        %4437 = vmatprep.subr.bf16.mxu0 0
        %4438 = vmatpush1.bf16.msra.mxu0 %v4229
        %4439 = vmatprep.subr.bf16.mxu0 0
        %4440 = vmatpush2.bf16.msra.mxu0 %v4244
        %4441 = vmatprep.subr.bf16.mxu0 0
        %4442 = vmatpush2.bf16.msra.mxu0 %v4243
        %4443 = vmatprep.subr.bf16.mxu0 0
        %4444 = vmatpush2.bf16.msra.mxu0 %v4242
        %4445 = vmatprep.subr.bf16.mxu0 0
        %4446 = vmatpush2.bf16.msra.mxu0 %v4241
        %4447 = vmatprep.subr.bf16.mxu0 0
        %4448 = vmatpush2.bf16.msra.mxu0 %v4240
        %4449 = vmatprep.subr.bf16.mxu0 0
        %4450 = vmatpush2.bf16.msra.mxu0 %v4239
        %4451 = vmatprep.subr.bf16.mxu0 0
        %4452 = vmatpush2.bf16.msra.mxu0 %v4238
        %4453 = vmatprep.subr.bf16.mxu0 0
        %4454 = vmatpush2.bf16.msra.mxu0 %v4237
        %4455 = vmatprep.mubr.bf16.mxu0 %v3747
        %4456 = vmatmul.mubr.bf16.gmra.mxu0 %v3742
        %v4457 = vpop.f32.mrf.mxu0
        %v4458 = vadd.f32 %v4417, %v4457
        %v4459 = vpop.f32.mrf.mxu0
        %v4460 = vpop.f32.mrf.mxu0
        %v4461 = vadd.f32 %v4420, %v4460
        %v4462 = vpop.f32.mrf.mxu0
        %4463 = vdwg.mxu0
        %4464 = vmatprep.subr.bf16.mxu0 0
        %4465 = vmatpush1.bf16.msra.mxu0 %v4252
        %4466 = vmatprep.subr.bf16.mxu0 0
        %4467 = vmatpush1.bf16.msra.mxu0 %v4251
        %4468 = vmatprep.subr.bf16.mxu0 0
        %4469 = vmatpush1.bf16.msra.mxu0 %v4250
        %4470 = vmatprep.subr.bf16.mxu0 0
        %4471 = vmatpush1.bf16.msra.mxu0 %v4249
        %4472 = vmatprep.subr.bf16.mxu0 0
        %4473 = vmatpush1.bf16.msra.mxu0 %v4248
        %4474 = vmatprep.subr.bf16.mxu0 0
        %4475 = vmatpush1.bf16.msra.mxu0 %v4247
        %4476 = vmatprep.subr.bf16.mxu0 0
        %4477 = vmatpush1.bf16.msra.mxu0 %v4246
        %4478 = vmatprep.subr.bf16.mxu0 0
        %4479 = vmatpush1.bf16.msra.mxu0 %v4245
        %4480 = vmatprep.subr.bf16.mxu0 0
        %4481 = vmatpush2.bf16.msra.mxu0 %v4260
        %4482 = vmatprep.subr.bf16.mxu0 0
        %4483 = vmatpush2.bf16.msra.mxu0 %v4259
        %4484 = vmatprep.subr.bf16.mxu0 0
        %4485 = vmatpush2.bf16.msra.mxu0 %v4258
        %4486 = vmatprep.subr.bf16.mxu0 0
        %4487 = vmatpush2.bf16.msra.mxu0 %v4257
        %4488 = vmatprep.subr.bf16.mxu0 0
        %4489 = vmatpush2.bf16.msra.mxu0 %v4256
        %4490 = vmatprep.subr.bf16.mxu0 0
        %4491 = vmatpush2.bf16.msra.mxu0 %v4255
        %4492 = vmatprep.subr.bf16.mxu0 0
        %4493 = vmatpush2.bf16.msra.mxu0 %v4254
        %4494 = vmatprep.subr.bf16.mxu0 0
        %4495 = vmatpush2.bf16.msra.mxu0 %v4253
        %4496 = vmatprep.mubr.bf16.mxu0 %v3753
        %4497 = vmatmul.mubr.bf16.gmra.mxu0 %v3751
        %v4498 = vpop.f32.mrf.mxu0
        %v4499 = vadd.f32 %v4458, %v4498
        %v4500 = vpop.f32.mrf.mxu0
        %v4501 = vpop.f32.mrf.mxu0
        %v4502 = vadd.f32 %v4461, %v4501
        %v4503 = vpop.f32.mrf.mxu0
        %4504 = vdwg.mxu0
        %4505 = vmatprep.subr.bf16.mxu0 0
        %4506 = vmatpush1.bf16.msra.mxu0 %v4268
        %4507 = vmatprep.subr.bf16.mxu0 0
        %4508 = vmatpush1.bf16.msra.mxu0 %v4267
        %4509 = vmatprep.subr.bf16.mxu0 0
        %4510 = vmatpush1.bf16.msra.mxu0 %v4266
        %4511 = vmatprep.subr.bf16.mxu0 0
        %4512 = vmatpush1.bf16.msra.mxu0 %v4265
        %4513 = vmatprep.subr.bf16.mxu0 0
        %4514 = vmatpush1.bf16.msra.mxu0 %v4264
        %4515 = vmatprep.subr.bf16.mxu0 0
        %4516 = vmatpush1.bf16.msra.mxu0 %v4263
        %4517 = vmatprep.subr.bf16.mxu0 0
        %4518 = vmatpush1.bf16.msra.mxu0 %v4262
        %4519 = vmatprep.subr.bf16.mxu0 0
        %4520 = vmatpush1.bf16.msra.mxu0 %v4261
        %4521 = vmatprep.subr.bf16.mxu0 0
        %4522 = vmatpush2.bf16.msra.mxu0 0
        %4523 = vmatprep.subr.bf16.mxu0 0
        %4524 = vmatpush2.bf16.msra.mxu0 0
        %4525 = vmatprep.subr.bf16.mxu0 0
        %4526 = vmatpush2.bf16.msra.mxu0 0
        %4527 = vmatprep.subr.bf16.mxu0 0
        %4528 = vmatpush2.bf16.msra.mxu0 0
        %4529 = vmatprep.subr.bf16.mxu0 0
        %4530 = vmatpush2.bf16.msra.mxu0 0
        %4531 = vmatprep.subr.bf16.mxu0 0
        %4532 = vmatpush2.bf16.msra.mxu0 0
        %4533 = vmatprep.subr.bf16.mxu0 0
        %4534 = vmatpush2.bf16.msra.mxu0 0
        %4535 = vmatprep.subr.bf16.mxu0 0
        %4536 = vmatpush2.bf16.msra.mxu0 0
        %4537 = vmatprep.mubr.bf16.mxu0 0
        %4538 = vmatmul.mubr.bf16.gmra.mxu0 %v3757
        %v4539 = vpop.f32.mrf.mxu0
        %v4540 = vadd.f32 %v4499, %v4539
        %v4541 = vpop.f32.mrf.mxu0
        %v4542 = vpop.f32.mrf.mxu0
        %v4543 = vadd.f32 %v4502, %v4542
        %v4544 = vpop.f32.mrf.mxu0
        %4545 = vdwg.mxu0
        %v4546 = vadd.f32 %v4540, %v2882
        %v4547 = vadd.f32 %v4543, %v2883
        %v4548 = vmax.f32 %v4546, 0.0
        %v4549 = vmax.f32 %v4547, 0.0
        %4550 = vst [vmem:[#allocation2] sm:$0xff] 0.0
        %4551 = vst [vmem:[#allocation2 + $0x8] sm:$0xff] 0.0
        %4552 = vst [vmem:[#allocation2 + $0x10] sm:$0xff] 0.0
        %4553 = vst [vmem:[#allocation2 + $0x18] sm:$0x3] 0.0
        %4554 = vst [vmem:[#allocation2 + $0x5] sm:$0xff] %v4548
        %4555 = vst [vmem:[#allocation2 + $0xd] sm:$0xff] %v4549
        %v4556 = vld [vmem:[#allocation2] sm:$0xff]
        %v4557 = vld [vmem:[#allocation2 + $0x8] sm:$0xff]
        %v4558 = vsel %vm1220, %v4556, 0.0
        %v4559 = vsel %vm1221, %v4557, 0.0
        %v4560 = vpack.c.bf16 %v4559, %v4558
        %v4561 = vld [vmem:[#allocation2 + $0x1] sm:$0xff]
        %v4562 = vld [vmem:[#allocation2 + $0x9] sm:$0xff]
        %v4563 = vpack.c.bf16 %v4562, %v4561
        %v4564 = vld [vmem:[#allocation2 + $0x2] sm:$0xff]
        %v4565 = vld [vmem:[#allocation2 + $0xa] sm:$0xff]
        %v4566 = vsel %vm1222, %v4564, 0.0
        %v4567 = vsel %vm1223, %v4565, 0.0
        %v4568 = vpack.c.bf16 %v4567, %v4566
        %v4569 = vld [vmem:[#allocation2 + $0x4] sm:$0xff]
        %v4570 = vld [vmem:[#allocation2 + $0xc] sm:$0xff]
        %v4571 = vsel %vm1220, %v4569, 0.0
        %v4572 = vsel %vm1221, %v4570, 0.0
        %v4573 = vpack.c.bf16 %v4572, %v4571
        %v4574 = vld [vmem:[#allocation2 + $0x5] sm:$0xff]
        %v4575 = vld [vmem:[#allocation2 + $0xd] sm:$0xff]
        %v4576 = vpack.c.bf16 %v4575, %v4574
        %v4577 = vld [vmem:[#allocation2 + $0x6] sm:$0xff]
        %v4578 = vld [vmem:[#allocation2 + $0xe] sm:$0xff]
        %v4579 = vsel %vm1222, %v4577, 0.0
        %v4580 = vsel %vm1223, %v4578, 0.0
        %v4581 = vpack.c.bf16 %v4580, %v4579
        %v4582 = vld [vmem:[#allocation2 + $0x10] sm:$0xff]
        %v4583 = vsel %vm1220, %v4557, 0.0
        %v4584 = vsel %vm1221, %v4582, 0.0
        %v4585 = vpack.c.bf16 %v4584, %v4583
        %v4586 = vld [vmem:[#allocation2 + $0x11] sm:$0xff]
        %v4587 = vpack.c.bf16 %v4586, %v4562
        %v4588 = vld [vmem:[#allocation2 + $0x12] sm:$0xff]
        %v4589 = vsel %vm1222, %v4565, 0.0
        %v4590 = vsel %vm1223, %v4588, 0.0
        %v4591 = vpack.c.bf16 %v4590, %v4589
        %v4592 = vld [vmem:[%s7] sm:$0xf]
        %v4593 = vld [vmem:[%s7 + $0x4] sm:$0xf]
        %v4594 = vld [vmem:[%s7 + $0x8] sm:$0xf]
        %v4595 = vld [vmem:[%s7 + $0xc] sm:$0xf]
        %v4596 = vld [vmem:[%s7 + $0x10] sm:$0xf]
        %v4597 = vld [vmem:[%s7 + $0x14] sm:$0xf]
        %v4598 = vld [vmem:[%s7 + $0x18] sm:$0xf]
        %v4599 = vld [vmem:[%s7 + $0x1c] sm:$0xf]
        %v4600 = vld [vmem:[%s7 + $0x20] sm:$0xf]
        %v4601 = vld [vmem:[%s7 + $0x24] sm:$0xf]
        %v4602 = vld [vmem:[%s7 + $0x28] sm:$0xf]
        %v4603 = vld [vmem:[%s7 + $0x2c] sm:$0xf]
        %v4604 = vld [vmem:[%s7 + $0x30] sm:$0xf]
        %v4605 = vld [vmem:[%s7 + $0x34] sm:$0xf]
        %v4606 = vld [vmem:[%s7 + $0x38] sm:$0xf]
        %v4607 = vld [vmem:[%s7 + $0x3c] sm:$0xf]
        %v4608 = vld [vmem:[%s7 + $0x40] sm:$0xf]
        %v4609 = vld [vmem:[%s7 + $0x44] sm:$0xf]
        %v4610 = vld [vmem:[%s7 + $0x48] sm:$0xf]
        %v4611 = vld [vmem:[%s7 + $0x4c] sm:$0xf]
        %v4612 = vld [vmem:[%s7 + $0x50] sm:$0xf]
        %v4613 = vld [vmem:[%s7 + $0x54] sm:$0xf]
        %v4614 = vld [vmem:[%s7 + $0x58] sm:$0xf]
        %v4615 = vld [vmem:[%s7 + $0x5c] sm:$0xf]
        %v4616 = vld [vmem:[%s7 + $0x60] sm:$0xf]
        %v4617 = vld [vmem:[%s7 + $0x64] sm:$0xf]
        %v4618 = vld [vmem:[%s7 + $0x68] sm:$0xf]
        %v4619 = vld [vmem:[%s7 + $0x6c] sm:$0xf]
        %v4620 = vld [vmem:[%s7 + $0x70] sm:$0xf]
        %v4621 = vld [vmem:[%s7 + $0x74] sm:$0xf]
        %v4622 = vld [vmem:[%s7 + $0x78] sm:$0xf]
        %v4623 = vld [vmem:[%s7 + $0x7c] sm:$0xf]
        %v4624 = vld [vmem:[%s7 + $0x80] sm:$0xf]
        %v4625 = vld [vmem:[%s7 + $0x84] sm:$0xf]
        %v4626 = vld [vmem:[%s7 + $0x88] sm:$0xf]
        %v4627 = vld [vmem:[%s7 + $0x8c] sm:$0xf]
        %v4628 = vld [vmem:[%s7 + $0x90] sm:$0xf]
        %v4629 = vld [vmem:[%s7 + $0x94] sm:$0xf]
        %v4630 = vld [vmem:[%s7 + $0x98] sm:$0xf]
        %v4631 = vld [vmem:[%s7 + $0x9c] sm:$0xf]
        %v4632 = vld [vmem:[%s7 + $0xa0] sm:$0xf]
        %v4633 = vld [vmem:[%s7 + $0xa4] sm:$0xf]
        %v4634 = vld [vmem:[%s7 + $0xa8] sm:$0xf]
        %v4635 = vld [vmem:[%s7 + $0xac] sm:$0xf]
        %v4636 = vld [vmem:[%s7 + $0xb0] sm:$0xf]
        %v4637 = vld [vmem:[%s7 + $0xb4] sm:$0xf]
        %v4638 = vld [vmem:[%s7 + $0xb8] sm:$0xf]
        %v4639 = vld [vmem:[%s7 + $0xbc] sm:$0xf]
        %v4640 = vld [vmem:[%s7 + $0xc0] sm:$0xf]
        %v4641 = vld [vmem:[%s7 + $0xc4] sm:$0xf]
        %v4642 = vld [vmem:[%s7 + $0xc8] sm:$0xf]
        %v4643 = vld [vmem:[%s7 + $0xcc] sm:$0xf]
        %v4644 = vld [vmem:[%s7 + $0xd0] sm:$0xf]
        %v4645 = vld [vmem:[%s7 + $0xd4] sm:$0xf]
        %v4646 = vld [vmem:[%s7 + $0xd8] sm:$0xf]
        %v4647 = vld [vmem:[%s7 + $0xdc] sm:$0xf]
        %v4648 = vld [vmem:[%s7 + $0xe0] sm:$0xf]
        %v4649 = vld [vmem:[%s7 + $0xe4] sm:$0xf]
        %v4650 = vld [vmem:[%s7 + $0xe8] sm:$0xf]
        %v4651 = vld [vmem:[%s7 + $0xec] sm:$0xf]
        %v4652 = vld [vmem:[%s7 + $0xf0] sm:$0xf]
        %v4653 = vld [vmem:[%s7 + $0xf4] sm:$0xf]
        %v4654 = vld [vmem:[%s7 + $0xf8] sm:$0xf]
        %v4655 = vld [vmem:[%s7 + $0xfc] sm:$0xf]
        %v4656 = vld [vmem:[%s7 + $0x100] sm:$0xf]
        %v4657 = vld [vmem:[%s7 + $0x104] sm:$0xf]
        %v4658 = vld [vmem:[%s7 + $0x108] sm:$0xf]
        %v4659 = vld [vmem:[%s7 + $0x10c] sm:$0xf]
        %v4660 = vld [vmem:[%s7 + $0x110] sm:$0xf]
        %v4661 = vld [vmem:[%s7 + $0x114] sm:$0xf]
        %v4662 = vld [vmem:[%s7 + $0x118] sm:$0xf]
        %v4663 = vld [vmem:[%s7 + $0x11c] sm:$0xf]
        %v4664 = vld [vmem:[%s7 + $0x120] sm:$0xf]
        %v4665 = vld [vmem:[%s7 + $0x124] sm:$0xf]
        %v4666 = vld [vmem:[%s7 + $0x128] sm:$0xf]
        %v4667 = vld [vmem:[%s7 + $0x12c] sm:$0xf]
        %v4668 = vld [vmem:[%s7 + $0x130] sm:$0xf]
        %v4669 = vld [vmem:[%s7 + $0x134] sm:$0xf]
        %v4670 = vld [vmem:[%s7 + $0x138] sm:$0xf]
        %v4671 = vld [vmem:[%s7 + $0x13c] sm:$0xf]
        %v4672 = vld [vmem:[%s7 + $0x140] sm:$0xf]
        %v4673 = vld [vmem:[%s7 + $0x144] sm:$0xf]
        %v4674 = vld [vmem:[%s7 + $0x148] sm:$0xf]
        %v4675 = vld [vmem:[%s7 + $0x14c] sm:$0xf]
        %v4676 = vld [vmem:[%s7 + $0x150] sm:$0xf]
        %v4677 = vld [vmem:[%s7 + $0x154] sm:$0xf]
        %v4678 = vld [vmem:[%s7 + $0x158] sm:$0xf]
        %v4679 = vld [vmem:[%s7 + $0x15c] sm:$0xf]
        %v4680 = vld [vmem:[%s7 + $0x160] sm:$0xf]
        %v4681 = vld [vmem:[%s7 + $0x164] sm:$0xf]
        %v4682 = vld [vmem:[%s7 + $0x168] sm:$0xf]
        %v4683 = vld [vmem:[%s7 + $0x16c] sm:$0xf]
        %v4684 = vld [vmem:[%s7 + $0x170] sm:$0xf]
        %v4685 = vld [vmem:[%s7 + $0x174] sm:$0xf]
        %v4686 = vld [vmem:[%s7 + $0x178] sm:$0xf]
        %v4687 = vld [vmem:[%s7 + $0x17c] sm:$0xf]
        %v4688 = vld [vmem:[%s7 + $0x180] sm:$0xf]
        %v4689 = vld [vmem:[%s7 + $0x184] sm:$0xf]
        %v4690 = vld [vmem:[%s7 + $0x188] sm:$0xf]
        %v4691 = vld [vmem:[%s7 + $0x18c] sm:$0xf]
        %v4692 = vld [vmem:[%s7 + $0x190] sm:$0xf]
        %v4693 = vld [vmem:[%s7 + $0x194] sm:$0xf]
        %v4694 = vld [vmem:[%s7 + $0x198] sm:$0xf]
        %v4695 = vld [vmem:[%s7 + $0x19c] sm:$0xf]
        %v4696 = vld [vmem:[%s7 + $0x1a0] sm:$0xf]
        %v4697 = vld [vmem:[%s7 + $0x1a4] sm:$0xf]
        %v4698 = vld [vmem:[%s7 + $0x1a8] sm:$0xf]
        %v4699 = vld [vmem:[%s7 + $0x1ac] sm:$0xf]
        %v4700 = vld [vmem:[%s7 + $0x1b0] sm:$0xf]
        %v4701 = vld [vmem:[%s7 + $0x1b4] sm:$0xf]
        %v4702 = vld [vmem:[%s7 + $0x1b8] sm:$0xf]
        %v4703 = vld [vmem:[%s7 + $0x1bc] sm:$0xf]
        %v4704 = vld [vmem:[%s7 + $0x1c0] sm:$0xf]
        %v4705 = vld [vmem:[%s7 + $0x1c4] sm:$0xf]
        %v4706 = vld [vmem:[%s7 + $0x1c8] sm:$0xf]
        %v4707 = vld [vmem:[%s7 + $0x1cc] sm:$0xf]
        %v4708 = vld [vmem:[%s7 + $0x1d0] sm:$0xf]
        %v4709 = vld [vmem:[%s7 + $0x1d4] sm:$0xf]
        %v4710 = vld [vmem:[%s7 + $0x1d8] sm:$0xf]
        %v4711 = vld [vmem:[%s7 + $0x1dc] sm:$0xf]
        %v4712 = vld [vmem:[%s7 + $0x1e0] sm:$0xf]
        %v4713 = vld [vmem:[%s7 + $0x1e4] sm:$0xf]
        %v4714 = vld [vmem:[%s7 + $0x1e8] sm:$0xf]
        %v4715 = vld [vmem:[%s7 + $0x1ec] sm:$0xf]
        %v4716 = vld [vmem:[%s7 + $0x1f0] sm:$0xf]
        %v4717 = vld [vmem:[%s7 + $0x1f4] sm:$0xf]
        %v4718 = vld [vmem:[%s7 + $0x1f8] sm:$0xf]
        %v4719 = vld [vmem:[%s7 + $0x1fc] sm:$0xf]
        %v4720 = vld [vmem:[%s7 + $0x200] sm:$0xf]
        %v4721 = vld [vmem:[%s7 + $0x204] sm:$0xf]
        %v4722 = vld [vmem:[%s7 + $0x208] sm:$0xf]
        %v4723 = vld [vmem:[%s7 + $0x20c] sm:$0xf]
        %v4724 = vld [vmem:[%s7 + $0x210] sm:$0xf]
        %v4725 = vld [vmem:[%s7 + $0x214] sm:$0xf]
        %v4726 = vld [vmem:[%s7 + $0x218] sm:$0xf]
        %v4727 = vld [vmem:[%s7 + $0x21c] sm:$0xf]
        %v4728 = vld [vmem:[%s7 + $0x220] sm:$0xf]
        %v4729 = vld [vmem:[%s7 + $0x224] sm:$0xf]
        %v4730 = vld [vmem:[%s7 + $0x228] sm:$0xf]
        %v4731 = vld [vmem:[%s7 + $0x22c] sm:$0xf]
        %v4732 = vld [vmem:[%s7 + $0x230] sm:$0xf]
        %v4733 = vld [vmem:[%s7 + $0x234] sm:$0xf]
        %v4734 = vld [vmem:[%s7 + $0x238] sm:$0xf]
        %v4735 = vld [vmem:[%s7 + $0x23c] sm:$0xf]
        %v4736 = vld [vmem:[%s16] sm:$0x1]
        %v4738 = vlaneseq
        %v4739 = vshrl.u32 %v4738, 7
        %v4740 = vsub.s32 0, %v4739
        %v4741 = vrot.slane %v4736, %v4740
        %v4887 = vunpack.c.l.b16 %v4592
        %v4888 = vunpack.c.l.b16 %v4593
        %v4889 = vunpack.c.l.b16 %v4594
        %v4890 = vunpack.c.l.b16 %v4595
        %v4891 = vunpack.c.l.b16 %v4596
        %v4892 = vunpack.c.l.b16 %v4597
        %v4893 = vunpack.c.l.b16 %v4598
        %v4894 = vunpack.c.l.b16 %v4599
        %v4895 = vunpack.c.l.b16 %v4600
        %v4896 = vunpack.c.l.b16 %v4601
        %v4897 = vunpack.c.l.b16 %v4602
        %v4898 = vunpack.c.l.b16 %v4603
        %v4899 = vunpack.c.l.b16 %v4604
        %v4900 = vunpack.c.l.b16 %v4605
        %v4901 = vunpack.c.l.b16 %v4606
        %v4902 = vunpack.c.l.b16 %v4607
        %v4903 = vunpack.c.l.b16 %v4608
        %v4904 = vunpack.c.l.b16 %v4609
        %v4905 = vunpack.c.l.b16 %v4610
        %v4906 = vunpack.c.l.b16 %v4611
        %v4907 = vunpack.c.l.b16 %v4612
        %v4908 = vunpack.c.l.b16 %v4613
        %v4909 = vunpack.c.l.b16 %v4614
        %v4910 = vunpack.c.l.b16 %v4615
        %v4911 = vunpack.c.l.b16 %v4616
        %v4912 = vunpack.c.l.b16 %v4617
        %v4913 = vunpack.c.l.b16 %v4618
        %v4914 = vunpack.c.l.b16 %v4619
        %v4915 = vunpack.c.l.b16 %v4620
        %v4916 = vunpack.c.l.b16 %v4621
        %v4917 = vunpack.c.l.b16 %v4622
        %v4918 = vunpack.c.l.b16 %v4623
        %v4919 = vunpack.c.l.b16 %v4624
        %v4920 = vunpack.c.l.b16 %v4625
        %v4921 = vunpack.c.l.b16 %v4626
        %v4922 = vunpack.c.l.b16 %v4627
        %v4923 = vunpack.c.l.b16 %v4628
        %v4924 = vunpack.c.l.b16 %v4629
        %v4925 = vunpack.c.l.b16 %v4630
        %v4926 = vunpack.c.l.b16 %v4631
        %v4927 = vunpack.c.l.b16 %v4632
        %v4928 = vunpack.c.l.b16 %v4633
        %v4929 = vunpack.c.l.b16 %v4634
        %v4930 = vunpack.c.l.b16 %v4635
        %v4931 = vunpack.c.l.b16 %v4636
        %v4932 = vunpack.c.l.b16 %v4637
        %v4933 = vunpack.c.l.b16 %v4638
        %v4934 = vunpack.c.l.b16 %v4639
        %v4935 = vunpack.c.l.b16 %v4640
        %v4936 = vunpack.c.l.b16 %v4641
        %v4937 = vunpack.c.l.b16 %v4642
        %v4938 = vunpack.c.l.b16 %v4643
        %v4939 = vunpack.c.l.b16 %v4644
        %v4940 = vunpack.c.l.b16 %v4645
        %v4941 = vunpack.c.l.b16 %v4646
        %v4942 = vunpack.c.l.b16 %v4647
        %v4943 = vunpack.c.l.b16 %v4648
        %v4944 = vunpack.c.l.b16 %v4649
        %v4945 = vunpack.c.l.b16 %v4650
        %v4946 = vunpack.c.l.b16 %v4651
        %v4947 = vunpack.c.l.b16 %v4652
        %v4948 = vunpack.c.l.b16 %v4653
        %v4949 = vunpack.c.l.b16 %v4654
        %v4950 = vunpack.c.l.b16 %v4655
        %v4951 = vunpack.c.l.b16 %v4656
        %v4952 = vunpack.c.l.b16 %v4657
        %v4953 = vunpack.c.l.b16 %v4658
        %v4954 = vunpack.c.l.b16 %v4659
        %v4955 = vunpack.c.l.b16 %v4660
        %v4956 = vunpack.c.l.b16 %v4661
        %v4957 = vunpack.c.l.b16 %v4662
        %v4958 = vunpack.c.l.b16 %v4663
        %v4959 = vunpack.c.l.b16 %v4664
        %v4960 = vunpack.c.l.b16 %v4665
        %v4961 = vunpack.c.l.b16 %v4666
        %v4962 = vunpack.c.l.b16 %v4667
        %v4963 = vunpack.c.l.b16 %v4668
        %v4964 = vunpack.c.l.b16 %v4669
        %v4965 = vunpack.c.l.b16 %v4670
        %v4966 = vunpack.c.l.b16 %v4671
        %v4967 = vunpack.c.l.b16 %v4672
        %v4968 = vunpack.c.l.b16 %v4673
        %v4969 = vunpack.c.l.b16 %v4674
        %v4970 = vunpack.c.l.b16 %v4675
        %v4971 = vunpack.c.l.b16 %v4676
        %v4972 = vunpack.c.l.b16 %v4677
        %v4973 = vunpack.c.l.b16 %v4678
        %v4974 = vunpack.c.l.b16 %v4679
        %v4975 = vunpack.c.l.b16 %v4680
        %v4976 = vunpack.c.l.b16 %v4681
        %v4977 = vunpack.c.l.b16 %v4682
        %v4978 = vunpack.c.l.b16 %v4683
        %v4979 = vunpack.c.l.b16 %v4684
        %v4980 = vunpack.c.l.b16 %v4685
        %v4981 = vunpack.c.l.b16 %v4686
        %v4982 = vunpack.c.l.b16 %v4687
        %v4983 = vunpack.c.l.b16 %v4688
        %v4984 = vunpack.c.l.b16 %v4689
        %v4985 = vunpack.c.l.b16 %v4690
        %v4986 = vunpack.c.l.b16 %v4691
        %v4987 = vunpack.c.l.b16 %v4692
        %v4988 = vunpack.c.l.b16 %v4693
        %v4989 = vunpack.c.l.b16 %v4694
        %v4990 = vunpack.c.l.b16 %v4695
        %v4991 = vunpack.c.l.b16 %v4696
        %v4992 = vunpack.c.l.b16 %v4697
        %v4993 = vunpack.c.l.b16 %v4698
        %v4994 = vunpack.c.l.b16 %v4699
        %v4995 = vunpack.c.l.b16 %v4700
        %v4996 = vunpack.c.l.b16 %v4701
        %v4997 = vunpack.c.l.b16 %v4702
        %v4998 = vunpack.c.l.b16 %v4703
        %v4999 = vunpack.c.l.b16 %v4704
        %v5000 = vunpack.c.l.b16 %v4705
        %v5001 = vunpack.c.l.b16 %v4706
        %v5002 = vunpack.c.l.b16 %v4707
        %v5003 = vunpack.c.l.b16 %v4708
        %v5004 = vunpack.c.l.b16 %v4709
        %v5005 = vunpack.c.l.b16 %v4710
        %v5006 = vunpack.c.l.b16 %v4711
        %v5007 = vunpack.c.l.b16 %v4712
        %v5008 = vunpack.c.l.b16 %v4713
        %v5009 = vunpack.c.l.b16 %v4714
        %v5010 = vunpack.c.l.b16 %v4715
        %v5011 = vunpack.c.l.b16 %v4716
        %v5012 = vunpack.c.l.b16 %v4717
        %v5013 = vunpack.c.l.b16 %v4718
        %v5014 = vunpack.c.l.b16 %v4719
        %v5015 = vunpack.c.l.b16 %v4720
        %v5016 = vunpack.c.l.b16 %v4721
        %v5017 = vunpack.c.l.b16 %v4722
        %v5018 = vunpack.c.l.b16 %v4723
        %v5019 = vunpack.c.l.b16 %v4724
        %v5020 = vunpack.c.l.b16 %v4725
        %v5021 = vunpack.c.l.b16 %v4726
        %v5022 = vunpack.c.l.b16 %v4727
        %v5023 = vunpack.c.l.b16 %v4728
        %v5024 = vunpack.c.l.b16 %v4729
        %v5025 = vunpack.c.l.b16 %v4730
        %v5026 = vunpack.c.l.b16 %v4731
        %v5027 = vunpack.c.l.b16 %v4732
        %v5028 = vunpack.c.l.b16 %v4733
        %v5029 = vunpack.c.l.b16 %v4734
        %v5030 = vunpack.c.l.b16 %v4735
        %v5031 = vpack.c.b16 %v4888, %v4887
        %v5032 = vpack.c.b16 %v4890, %v4889
        %v5033 = vpack.c.b16 %v4892, %v4891
        %v5034 = vpack.c.b16 %v4894, %v4893
        %v5035 = vpack.c.b16 %v4896, %v4895
        %v5036 = vpack.c.b16 %v4898, %v4897
        %v5037 = vpack.c.b16 %v4900, %v4899
        %v5038 = vpack.c.b16 %v4902, %v4901
        %v5039 = vpack.c.b16 %v4904, %v4903
        %v5040 = vpack.c.b16 %v4906, %v4905
        %v5041 = vpack.c.b16 %v4908, %v4907
        %v5042 = vpack.c.b16 %v4910, %v4909
        %v5043 = vpack.c.b16 %v4912, %v4911
        %v5044 = vpack.c.b16 %v4914, %v4913
        %v5045 = vpack.c.b16 %v4916, %v4915
        %v5046 = vpack.c.b16 %v4918, %v4917
        %v5047 = vpack.c.b16 %v4920, %v4919
        %v5048 = vpack.c.b16 %v4922, %v4921
        %v5049 = vpack.c.b16 %v4924, %v4923
        %v5050 = vpack.c.b16 %v4926, %v4925
        %v5051 = vpack.c.b16 %v4928, %v4927
        %v5052 = vpack.c.b16 %v4930, %v4929
        %v5053 = vpack.c.b16 %v4932, %v4931
        %v5054 = vpack.c.b16 %v4934, %v4933
        %v5055 = vpack.c.b16 %v4936, %v4935
        %v5056 = vpack.c.b16 %v4938, %v4937
        %v5057 = vpack.c.b16 %v4940, %v4939
        %v5058 = vpack.c.b16 %v4942, %v4941
        %v5059 = vpack.c.b16 %v4944, %v4943
        %v5060 = vpack.c.b16 %v4946, %v4945
        %v5061 = vpack.c.b16 %v4948, %v4947
        %v5062 = vpack.c.b16 %v4950, %v4949
        %v5063 = vpack.c.b16 %v4952, %v4951
        %v5064 = vpack.c.b16 %v4954, %v4953
        %v5065 = vpack.c.b16 %v4956, %v4955
        %v5066 = vpack.c.b16 %v4958, %v4957
        %v5067 = vpack.c.b16 %v4960, %v4959
        %v5068 = vpack.c.b16 %v4962, %v4961
        %v5069 = vpack.c.b16 %v4964, %v4963
        %v5070 = vpack.c.b16 %v4966, %v4965
        %v5071 = vpack.c.b16 %v4968, %v4967
        %v5072 = vpack.c.b16 %v4970, %v4969
        %v5073 = vpack.c.b16 %v4972, %v4971
        %v5074 = vpack.c.b16 %v4974, %v4973
        %v5075 = vpack.c.b16 %v4976, %v4975
        %v5076 = vpack.c.b16 %v4978, %v4977
        %v5077 = vpack.c.b16 %v4980, %v4979
        %v5078 = vpack.c.b16 %v4982, %v4981
        %v5079 = vpack.c.b16 %v4984, %v4983
        %v5080 = vpack.c.b16 %v4986, %v4985
        %v5081 = vpack.c.b16 %v4988, %v4987
        %v5082 = vpack.c.b16 %v4990, %v4989
        %v5083 = vpack.c.b16 %v4992, %v4991
        %v5084 = vpack.c.b16 %v4994, %v4993
        %v5085 = vpack.c.b16 %v4996, %v4995
        %v5086 = vpack.c.b16 %v4998, %v4997
        %v5087 = vpack.c.b16 %v5000, %v4999
        %v5088 = vpack.c.b16 %v5002, %v5001
        %v5089 = vpack.c.b16 %v5004, %v5003
        %v5090 = vpack.c.b16 %v5006, %v5005
        %v5091 = vpack.c.b16 %v5008, %v5007
        %v5092 = vpack.c.b16 %v5010, %v5009
        %v5093 = vpack.c.b16 %v5012, %v5011
        %v5094 = vpack.c.b16 %v5014, %v5013
        %v5095 = vpack.c.b16 %v5016, %v5015
        %v5096 = vpack.c.b16 %v5018, %v5017
        %v5097 = vpack.c.b16 %v5020, %v5019
        %v5098 = vpack.c.b16 %v5022, %v5021
        %v5099 = vpack.c.b16 %v5024, %v5023
        %v5100 = vpack.c.b16 %v5026, %v5025
        %v5101 = vpack.c.b16 %v5028, %v5027
        %v5102 = vpack.c.b16 %v5030, %v5029
        %5175 = vmatprep.subr.bf16.mxu0 0
        %5176 = vmatpush1.bf16.msra.mxu0 %v5038
        %5177 = vmatprep.subr.bf16.mxu0 0
        %5178 = vmatpush1.bf16.msra.mxu0 %v5037
        %5179 = vmatprep.subr.bf16.mxu0 0
        %5180 = vmatpush1.bf16.msra.mxu0 %v5036
        %5181 = vmatprep.subr.bf16.mxu0 0
        %5182 = vmatpush1.bf16.msra.mxu0 %v5035
        %5183 = vmatprep.subr.bf16.mxu0 0
        %5184 = vmatpush1.bf16.msra.mxu0 %v5034
        %5185 = vmatprep.subr.bf16.mxu0 0
        %5186 = vmatpush1.bf16.msra.mxu0 %v5033
        %5187 = vmatprep.subr.bf16.mxu0 0
        %5188 = vmatpush1.bf16.msra.mxu0 %v5032
        %5189 = vmatprep.subr.bf16.mxu0 0
        %5190 = vmatpush1.bf16.msra.mxu0 %v5031
        %5191 = vmatprep.subr.bf16.mxu0 0
        %5192 = vmatpush2.bf16.msra.mxu0 %v5046
        %5193 = vmatprep.subr.bf16.mxu0 0
        %5194 = vmatpush2.bf16.msra.mxu0 %v5045
        %5195 = vmatprep.subr.bf16.mxu0 0
        %5196 = vmatpush2.bf16.msra.mxu0 %v5044
        %5197 = vmatprep.subr.bf16.mxu0 0
        %5198 = vmatpush2.bf16.msra.mxu0 %v5043
        %5199 = vmatprep.subr.bf16.mxu0 0
        %5200 = vmatpush2.bf16.msra.mxu0 %v5042
        %5201 = vmatprep.subr.bf16.mxu0 0
        %5202 = vmatpush2.bf16.msra.mxu0 %v5041
        %5203 = vmatprep.subr.bf16.mxu0 0
        %5204 = vmatpush2.bf16.msra.mxu0 %v5040
        %5205 = vmatprep.subr.bf16.mxu0 0
        %5206 = vmatpush2.bf16.msra.mxu0 %v5039
        %5207 = vmatprep.mubr.bf16.mxu0 %v4563
        %5208 = vmatmul.mubr.bf16.gmra.mxu0 %v4560
        %v5209 = vpop.f32.mrf.mxu0
        %v5210 = vadd.f32 %v4741, %v5209
        %v5211 = vpop.f32.mrf.mxu0
        %v5212 = vpop.f32.mrf.mxu0
        %v5213 = vadd.f32 %v4741, %v5212
        %v5214 = vpop.f32.mrf.mxu0
        %5215 = vdwg.mxu0
        %5216 = vmatprep.subr.bf16.mxu0 0
        %5217 = vmatpush1.bf16.msra.mxu0 %v5054
        %5218 = vmatprep.subr.bf16.mxu0 0
        %5219 = vmatpush1.bf16.msra.mxu0 %v5053
        %5220 = vmatprep.subr.bf16.mxu0 0
        %5221 = vmatpush1.bf16.msra.mxu0 %v5052
        %5222 = vmatprep.subr.bf16.mxu0 0
        %5223 = vmatpush1.bf16.msra.mxu0 %v5051
        %5224 = vmatprep.subr.bf16.mxu0 0
        %5225 = vmatpush1.bf16.msra.mxu0 %v5050
        %5226 = vmatprep.subr.bf16.mxu0 0
        %5227 = vmatpush1.bf16.msra.mxu0 %v5049
        %5228 = vmatprep.subr.bf16.mxu0 0
        %5229 = vmatpush1.bf16.msra.mxu0 %v5048
        %5230 = vmatprep.subr.bf16.mxu0 0
        %5231 = vmatpush1.bf16.msra.mxu0 %v5047
        %5232 = vmatprep.subr.bf16.mxu0 0
        %5233 = vmatpush2.bf16.msra.mxu0 %v5062
        %5234 = vmatprep.subr.bf16.mxu0 0
        %5235 = vmatpush2.bf16.msra.mxu0 %v5061
        %5236 = vmatprep.subr.bf16.mxu0 0
        %5237 = vmatpush2.bf16.msra.mxu0 %v5060
        %5238 = vmatprep.subr.bf16.mxu0 0
        %5239 = vmatpush2.bf16.msra.mxu0 %v5059
        %5240 = vmatprep.subr.bf16.mxu0 0
        %5241 = vmatpush2.bf16.msra.mxu0 %v5058
        %5242 = vmatprep.subr.bf16.mxu0 0
        %5243 = vmatpush2.bf16.msra.mxu0 %v5057
        %5244 = vmatprep.subr.bf16.mxu0 0
        %5245 = vmatpush2.bf16.msra.mxu0 %v5056
        %5246 = vmatprep.subr.bf16.mxu0 0
        %5247 = vmatpush2.bf16.msra.mxu0 %v5055
        %5248 = vmatprep.mubr.bf16.mxu0 %v4573
        %5249 = vmatmul.mubr.bf16.gmra.mxu0 %v4568
        %v5250 = vpop.f32.mrf.mxu0
        %v5251 = vadd.f32 %v5210, %v5250
        %v5252 = vpop.f32.mrf.mxu0
        %v5253 = vpop.f32.mrf.mxu0
        %v5254 = vadd.f32 %v5213, %v5253
        %v5255 = vpop.f32.mrf.mxu0
        %5256 = vdwg.mxu0
        %5257 = vmatprep.subr.bf16.mxu0 0
        %5258 = vmatpush1.bf16.msra.mxu0 %v5070
        %5259 = vmatprep.subr.bf16.mxu0 0
        %5260 = vmatpush1.bf16.msra.mxu0 %v5069
        %5261 = vmatprep.subr.bf16.mxu0 0
        %5262 = vmatpush1.bf16.msra.mxu0 %v5068
        %5263 = vmatprep.subr.bf16.mxu0 0
        %5264 = vmatpush1.bf16.msra.mxu0 %v5067
        %5265 = vmatprep.subr.bf16.mxu0 0
        %5266 = vmatpush1.bf16.msra.mxu0 %v5066
        %5267 = vmatprep.subr.bf16.mxu0 0
        %5268 = vmatpush1.bf16.msra.mxu0 %v5065
        %5269 = vmatprep.subr.bf16.mxu0 0
        %5270 = vmatpush1.bf16.msra.mxu0 %v5064
        %5271 = vmatprep.subr.bf16.mxu0 0
        %5272 = vmatpush1.bf16.msra.mxu0 %v5063
        %5273 = vmatprep.subr.bf16.mxu0 0
        %5274 = vmatpush2.bf16.msra.mxu0 %v5078
        %5275 = vmatprep.subr.bf16.mxu0 0
        %5276 = vmatpush2.bf16.msra.mxu0 %v5077
        %5277 = vmatprep.subr.bf16.mxu0 0
        %5278 = vmatpush2.bf16.msra.mxu0 %v5076
        %5279 = vmatprep.subr.bf16.mxu0 0
        %5280 = vmatpush2.bf16.msra.mxu0 %v5075
        %5281 = vmatprep.subr.bf16.mxu0 0
        %5282 = vmatpush2.bf16.msra.mxu0 %v5074
        %5283 = vmatprep.subr.bf16.mxu0 0
        %5284 = vmatpush2.bf16.msra.mxu0 %v5073
        %5285 = vmatprep.subr.bf16.mxu0 0
        %5286 = vmatpush2.bf16.msra.mxu0 %v5072
        %5287 = vmatprep.subr.bf16.mxu0 0
        %5288 = vmatpush2.bf16.msra.mxu0 %v5071
        %5289 = vmatprep.mubr.bf16.mxu0 %v4581
        %5290 = vmatmul.mubr.bf16.gmra.mxu0 %v4576
        %v5291 = vpop.f32.mrf.mxu0
        %v5292 = vadd.f32 %v5251, %v5291
        %v5293 = vpop.f32.mrf.mxu0
        %v5294 = vpop.f32.mrf.mxu0
        %v5295 = vadd.f32 %v5254, %v5294
        %v5296 = vpop.f32.mrf.mxu0
        %5297 = vdwg.mxu0
        %5298 = vmatprep.subr.bf16.mxu0 0
        %5299 = vmatpush1.bf16.msra.mxu0 %v5086
        %5300 = vmatprep.subr.bf16.mxu0 0
        %5301 = vmatpush1.bf16.msra.mxu0 %v5085
        %5302 = vmatprep.subr.bf16.mxu0 0
        %5303 = vmatpush1.bf16.msra.mxu0 %v5084
        %5304 = vmatprep.subr.bf16.mxu0 0
        %5305 = vmatpush1.bf16.msra.mxu0 %v5083
        %5306 = vmatprep.subr.bf16.mxu0 0
        %5307 = vmatpush1.bf16.msra.mxu0 %v5082
        %5308 = vmatprep.subr.bf16.mxu0 0
        %5309 = vmatpush1.bf16.msra.mxu0 %v5081
        %5310 = vmatprep.subr.bf16.mxu0 0
        %5311 = vmatpush1.bf16.msra.mxu0 %v5080
        %5312 = vmatprep.subr.bf16.mxu0 0
        %5313 = vmatpush1.bf16.msra.mxu0 %v5079
        %5314 = vmatprep.subr.bf16.mxu0 0
        %5315 = vmatpush2.bf16.msra.mxu0 %v5094
        %5316 = vmatprep.subr.bf16.mxu0 0
        %5317 = vmatpush2.bf16.msra.mxu0 %v5093
        %5318 = vmatprep.subr.bf16.mxu0 0
        %5319 = vmatpush2.bf16.msra.mxu0 %v5092
        %5320 = vmatprep.subr.bf16.mxu0 0
        %5321 = vmatpush2.bf16.msra.mxu0 %v5091
        %5322 = vmatprep.subr.bf16.mxu0 0
        %5323 = vmatpush2.bf16.msra.mxu0 %v5090
        %5324 = vmatprep.subr.bf16.mxu0 0
        %5325 = vmatpush2.bf16.msra.mxu0 %v5089
        %5326 = vmatprep.subr.bf16.mxu0 0
        %5327 = vmatpush2.bf16.msra.mxu0 %v5088
        %5328 = vmatprep.subr.bf16.mxu0 0
        %5329 = vmatpush2.bf16.msra.mxu0 %v5087
        %5330 = vmatprep.mubr.bf16.mxu0 %v4587
        %5331 = vmatmul.mubr.bf16.gmra.mxu0 %v4585
        %v5332 = vpop.f32.mrf.mxu0
        %v5333 = vadd.f32 %v5292, %v5332
        %v5334 = vpop.f32.mrf.mxu0
        %v5335 = vpop.f32.mrf.mxu0
        %v5336 = vadd.f32 %v5295, %v5335
        %v5337 = vpop.f32.mrf.mxu0
        %5338 = vdwg.mxu0
        %5339 = vmatprep.subr.bf16.mxu0 0
        %5340 = vmatpush1.bf16.msra.mxu0 %v5102
        %5341 = vmatprep.subr.bf16.mxu0 0
        %5342 = vmatpush1.bf16.msra.mxu0 %v5101
        %5343 = vmatprep.subr.bf16.mxu0 0
        %5344 = vmatpush1.bf16.msra.mxu0 %v5100
        %5345 = vmatprep.subr.bf16.mxu0 0
        %5346 = vmatpush1.bf16.msra.mxu0 %v5099
        %5347 = vmatprep.subr.bf16.mxu0 0
        %5348 = vmatpush1.bf16.msra.mxu0 %v5098
        %5349 = vmatprep.subr.bf16.mxu0 0
        %5350 = vmatpush1.bf16.msra.mxu0 %v5097
        %5351 = vmatprep.subr.bf16.mxu0 0
        %5352 = vmatpush1.bf16.msra.mxu0 %v5096
        %5353 = vmatprep.subr.bf16.mxu0 0
        %5354 = vmatpush1.bf16.msra.mxu0 %v5095
        %5355 = vmatprep.subr.bf16.mxu0 0
        %5356 = vmatpush2.bf16.msra.mxu0 0
        %5357 = vmatprep.subr.bf16.mxu0 0
        %5358 = vmatpush2.bf16.msra.mxu0 0
        %5359 = vmatprep.subr.bf16.mxu0 0
        %5360 = vmatpush2.bf16.msra.mxu0 0
        %5361 = vmatprep.subr.bf16.mxu0 0
        %5362 = vmatpush2.bf16.msra.mxu0 0
        %5363 = vmatprep.subr.bf16.mxu0 0
        %5364 = vmatpush2.bf16.msra.mxu0 0
        %5365 = vmatprep.subr.bf16.mxu0 0
        %5366 = vmatpush2.bf16.msra.mxu0 0
        %5367 = vmatprep.subr.bf16.mxu0 0
        %5368 = vmatpush2.bf16.msra.mxu0 0
        %5369 = vmatprep.subr.bf16.mxu0 0
        %5370 = vmatpush2.bf16.msra.mxu0 0
        %5371 = vmatprep.mubr.bf16.mxu0 0
        %5372 = vmatmul.mubr.bf16.gmra.mxu0 %v4591
        %v5373 = vpop.f32.mrf.mxu0
        %v5374 = vadd.f32 %v5333, %v5373
        %v5375 = vpop.f32.mrf.mxu0
        %v5376 = vpop.f32.mrf.mxu0
        %v5377 = vadd.f32 %v5336, %v5376
        %v5378 = vpop.f32.mrf.mxu0
        %5379 = vdwg.mxu0
        %v5380 = vmax.f32 %v5374, 0.0
        %v5381 = vmax.f32 %v5377, 0.0
        %5382 = vst [vmem:[#allocation2] sm:$0xff] %v5380
        %5383 = vst [vmem:[#allocation2 + $0x8] sm:$0xff] %v5381
        %v5384 = vld [vmem:[#allocation2] ss:$2 sm:$0x3]
        %5385 = vst [vmem:[#allocation3] sm:$0x3] %v5384
        %s5386 = scalar_lea.vmem [#allocation2], 8
        %v5387 = vld [vmem:[%s5386] ss:$2 sm:$0x3]
        %5388 = vst [vmem:[#allocation3 + $0x2] sm:$0x3] %v5387
        %v5389 = vld [vmem:[#allocation3] sm:$0xf]
        %5390 = vst [vmem:[#allocation2] sm:$0xff] 0.0
        %5391 = vst [vmem:[#allocation2 + $0x8] sm:$0x3] 0.0
        %5392 = vst [vmem:[#allocation2 + $0x3] sm:$0xf] %v5389
        %vm5393 = vcmp.lt.s32.totalorder %v907, 0
        %v5394 = vsub.s32 0, %v907
        %v5395 = vsel %vm5393, %v5394, %v907
        %v5396 = vshrl.u32 %v5395, 1
        %v5397 = vand.u32 %v5395, 1
        %v5398 = vsub.s32 0, %v5397
        %v5399 = vsel %vm5393, %v5398, %v5397
        %vm5400 = vcmp.ne.s32.totalorder %v5399, 0
        %vm5401 = vcmp.lt.s32.totalorder %v5399, 0
        %vm5402 = vmand %vm5401, %vm5400
        %v5403 = vadd.s32 %v5399, 2
        %v5404 = vsel %vm5402, %v5403, %v5399
        %vm5405 = vcmp.ge.s32.totalorder %v5404, 1
        %vm5406 = vcmp.le.s32.totalorder %v5404, 0
        %v5407 = vld [vmem:[#allocation2] sm:$0xf]
        %v5408 = vsel %vm5405, %v5407, 0.0
        %v5409 = vpack.c.bf16 %v5408, %v5408
        %v5410 = vld [vmem:[#allocation2 + $0x1] sm:$0xf]
        %v5411 = vpack.c.bf16 %v5410, %v5410
        %v5412 = vld [vmem:[#allocation2 + $0x2] sm:$0xf]
        %v5413 = vsel %vm5406, %v5412, 0.0
        %v5414 = vpack.c.bf16 %v5413, %v5413
        %v5415 = vsel %vm5405, %v5412, 0.0
        %v5416 = vpack.c.bf16 %v5415, %v5415
        %v5417 = vld [vmem:[#allocation2 + $0x3] sm:$0xf]
        %v5418 = vpack.c.bf16 %v5417, %v5417
        %v5419 = vld [vmem:[#allocation2 + $0x4] sm:$0xf]
        %v5420 = vsel %vm5406, %v5419, 0.0
        %v5421 = vpack.c.bf16 %v5420, %v5420
        %v5422 = vsel %vm5405, %v5419, 0.0
        %v5423 = vpack.c.bf16 %v5422, %v5422
        %v5424 = vld [vmem:[#allocation2 + $0x5] sm:$0xf]
        %v5425 = vpack.c.bf16 %v5424, %v5424
        %v5426 = vld [vmem:[#allocation2 + $0x6] sm:$0xf]
        %v5427 = vsel %vm5406, %v5426, 0.0
        %v5428 = vpack.c.bf16 %v5427, %v5427
        %v5429 = vld [vmem:[%s8] sm:$0xf]
        %v5430 = vld [vmem:[%s8 + $0x4] sm:$0xf]
        %v5431 = vld [vmem:[%s8 + $0x8] sm:$0xf]
        %v5432 = vld [vmem:[%s8 + $0xc] sm:$0xf]
        %v5433 = vld [vmem:[%s8 + $0x10] sm:$0xf]
        %v5434 = vld [vmem:[%s8 + $0x14] sm:$0xf]
        %v5435 = vld [vmem:[%s8 + $0x18] sm:$0xf]
        %v5436 = vld [vmem:[%s8 + $0x1c] sm:$0xf]
        %v5437 = vld [vmem:[%s8 + $0x20] sm:$0xf]
        %v5438 = vld [vmem:[%s8 + $0x24] sm:$0xf]
        %v5439 = vld [vmem:[%s8 + $0x28] sm:$0xf]
        %v5440 = vld [vmem:[%s8 + $0x2c] sm:$0xf]
        %v5441 = vld [vmem:[%s8 + $0x30] sm:$0xf]
        %v5442 = vld [vmem:[%s8 + $0x34] sm:$0xf]
        %v5443 = vld [vmem:[%s8 + $0x38] sm:$0xf]
        %v5444 = vld [vmem:[%s8 + $0x3c] sm:$0xf]
        %v5445 = vld [vmem:[%s8 + $0x40] sm:$0xf]
        %v5446 = vld [vmem:[%s8 + $0x44] sm:$0xf]
        %v5447 = vld [vmem:[%s8 + $0x48] sm:$0xf]
        %v5448 = vld [vmem:[%s8 + $0x4c] sm:$0xf]
        %v5449 = vld [vmem:[%s8 + $0x50] sm:$0xf]
        %v5450 = vld [vmem:[%s8 + $0x54] sm:$0xf]
        %v5451 = vld [vmem:[%s8 + $0x58] sm:$0xf]
        %v5452 = vld [vmem:[%s8 + $0x5c] sm:$0xf]
        %v5453 = vld [vmem:[%s8 + $0x60] sm:$0xf]
        %v5454 = vld [vmem:[%s8 + $0x64] sm:$0xf]
        %v5455 = vld [vmem:[%s8 + $0x68] sm:$0xf]
        %v5456 = vld [vmem:[%s8 + $0x6c] sm:$0xf]
        %v5457 = vld [vmem:[%s8 + $0x70] sm:$0xf]
        %v5458 = vld [vmem:[%s8 + $0x74] sm:$0xf]
        %v5459 = vld [vmem:[%s8 + $0x78] sm:$0xf]
        %v5460 = vld [vmem:[%s8 + $0x7c] sm:$0xf]
        %v5461 = vld [vmem:[%s8 + $0x80] sm:$0xf]
        %v5462 = vld [vmem:[%s8 + $0x84] sm:$0xf]
        %v5463 = vld [vmem:[%s8 + $0x88] sm:$0xf]
        %v5464 = vld [vmem:[%s8 + $0x8c] sm:$0xf]
        %v5465 = vld [vmem:[%s8 + $0x90] sm:$0xf]
        %v5466 = vld [vmem:[%s8 + $0x94] sm:$0xf]
        %v5467 = vld [vmem:[%s8 + $0x98] sm:$0xf]
        %v5468 = vld [vmem:[%s8 + $0x9c] sm:$0xf]
        %v5469 = vld [vmem:[%s8 + $0xa0] sm:$0xf]
        %v5470 = vld [vmem:[%s8 + $0xa4] sm:$0xf]
        %v5471 = vld [vmem:[%s8 + $0xa8] sm:$0xf]
        %v5472 = vld [vmem:[%s8 + $0xac] sm:$0xf]
        %v5473 = vld [vmem:[%s8 + $0xb0] sm:$0xf]
        %v5474 = vld [vmem:[%s8 + $0xb4] sm:$0xf]
        %v5475 = vld [vmem:[%s8 + $0xb8] sm:$0xf]
        %v5476 = vld [vmem:[%s8 + $0xbc] sm:$0xf]
        %v5477 = vld [vmem:[%s8 + $0xc0] sm:$0xf]
        %v5478 = vld [vmem:[%s8 + $0xc4] sm:$0xf]
        %v5479 = vld [vmem:[%s8 + $0xc8] sm:$0xf]
        %v5480 = vld [vmem:[%s8 + $0xcc] sm:$0xf]
        %v5481 = vld [vmem:[%s8 + $0xd0] sm:$0xf]
        %v5482 = vld [vmem:[%s8 + $0xd4] sm:$0xf]
        %v5483 = vld [vmem:[%s8 + $0xd8] sm:$0xf]
        %v5484 = vld [vmem:[%s8 + $0xdc] sm:$0xf]
        %v5485 = vld [vmem:[%s8 + $0xe0] sm:$0xf]
        %v5486 = vld [vmem:[%s8 + $0xe4] sm:$0xf]
        %v5487 = vld [vmem:[%s8 + $0xe8] sm:$0xf]
        %v5488 = vld [vmem:[%s8 + $0xec] sm:$0xf]
        %v5489 = vld [vmem:[%s8 + $0xf0] sm:$0xf]
        %v5490 = vld [vmem:[%s8 + $0xf4] sm:$0xf]
        %v5491 = vld [vmem:[%s8 + $0xf8] sm:$0xf]
        %v5492 = vld [vmem:[%s8 + $0xfc] sm:$0xf]
        %v5493 = vld [vmem:[%s8 + $0x100] sm:$0xf]
        %v5494 = vld [vmem:[%s8 + $0x104] sm:$0xf]
        %v5495 = vld [vmem:[%s8 + $0x108] sm:$0xf]
        %v5496 = vld [vmem:[%s8 + $0x10c] sm:$0xf]
        %v5497 = vld [vmem:[%s8 + $0x110] sm:$0xf]
        %v5498 = vld [vmem:[%s8 + $0x114] sm:$0xf]
        %v5499 = vld [vmem:[%s8 + $0x118] sm:$0xf]
        %v5500 = vld [vmem:[%s8 + $0x11c] sm:$0xf]
        %v5501 = vld [vmem:[%s8 + $0x120] sm:$0xf]
        %v5502 = vld [vmem:[%s8 + $0x124] sm:$0xf]
        %v5503 = vld [vmem:[%s8 + $0x128] sm:$0xf]
        %v5504 = vld [vmem:[%s8 + $0x12c] sm:$0xf]
        %v5505 = vld [vmem:[%s8 + $0x130] sm:$0xf]
        %v5506 = vld [vmem:[%s8 + $0x134] sm:$0xf]
        %v5507 = vld [vmem:[%s8 + $0x138] sm:$0xf]
        %v5508 = vld [vmem:[%s8 + $0x13c] sm:$0xf]
        %v5509 = vld [vmem:[%s8 + $0x140] sm:$0xf]
        %v5510 = vld [vmem:[%s8 + $0x144] sm:$0xf]
        %v5511 = vld [vmem:[%s8 + $0x148] sm:$0xf]
        %v5512 = vld [vmem:[%s8 + $0x14c] sm:$0xf]
        %v5513 = vld [vmem:[%s8 + $0x150] sm:$0xf]
        %v5514 = vld [vmem:[%s8 + $0x154] sm:$0xf]
        %v5515 = vld [vmem:[%s8 + $0x158] sm:$0xf]
        %v5516 = vld [vmem:[%s8 + $0x15c] sm:$0xf]
        %v5517 = vld [vmem:[%s8 + $0x160] sm:$0xf]
        %v5518 = vld [vmem:[%s8 + $0x164] sm:$0xf]
        %v5519 = vld [vmem:[%s8 + $0x168] sm:$0xf]
        %v5520 = vld [vmem:[%s8 + $0x16c] sm:$0xf]
        %v5521 = vld [vmem:[%s8 + $0x170] sm:$0xf]
        %v5522 = vld [vmem:[%s8 + $0x174] sm:$0xf]
        %v5523 = vld [vmem:[%s8 + $0x178] sm:$0xf]
        %v5524 = vld [vmem:[%s8 + $0x17c] sm:$0xf]
        %v5525 = vld [vmem:[%s8 + $0x180] sm:$0xf]
        %v5526 = vld [vmem:[%s8 + $0x184] sm:$0xf]
        %v5527 = vld [vmem:[%s8 + $0x188] sm:$0xf]
        %v5528 = vld [vmem:[%s8 + $0x18c] sm:$0xf]
        %v5529 = vld [vmem:[%s8 + $0x190] sm:$0xf]
        %v5530 = vld [vmem:[%s8 + $0x194] sm:$0xf]
        %v5531 = vld [vmem:[%s8 + $0x198] sm:$0xf]
        %v5532 = vld [vmem:[%s8 + $0x19c] sm:$0xf]
        %v5533 = vld [vmem:[%s8 + $0x1a0] sm:$0xf]
        %v5534 = vld [vmem:[%s8 + $0x1a4] sm:$0xf]
        %v5535 = vld [vmem:[%s8 + $0x1a8] sm:$0xf]
        %v5536 = vld [vmem:[%s8 + $0x1ac] sm:$0xf]
        %v5537 = vld [vmem:[%s8 + $0x1b0] sm:$0xf]
        %v5538 = vld [vmem:[%s8 + $0x1b4] sm:$0xf]
        %v5539 = vld [vmem:[%s8 + $0x1b8] sm:$0xf]
        %v5540 = vld [vmem:[%s8 + $0x1bc] sm:$0xf]
        %v5541 = vld [vmem:[%s8 + $0x1c0] sm:$0xf]
        %v5542 = vld [vmem:[%s8 + $0x1c4] sm:$0xf]
        %v5543 = vld [vmem:[%s8 + $0x1c8] sm:$0xf]
        %v5544 = vld [vmem:[%s8 + $0x1cc] sm:$0xf]
        %v5545 = vld [vmem:[%s8 + $0x1d0] sm:$0xf]
        %v5546 = vld [vmem:[%s8 + $0x1d4] sm:$0xf]
        %v5547 = vld [vmem:[%s8 + $0x1d8] sm:$0xf]
        %v5548 = vld [vmem:[%s8 + $0x1dc] sm:$0xf]
        %v5549 = vld [vmem:[%s8 + $0x1e0] sm:$0xf]
        %v5550 = vld [vmem:[%s8 + $0x1e4] sm:$0xf]
        %v5551 = vld [vmem:[%s8 + $0x1e8] sm:$0xf]
        %v5552 = vld [vmem:[%s8 + $0x1ec] sm:$0xf]
        %v5553 = vld [vmem:[%s8 + $0x1f0] sm:$0xf]
        %v5554 = vld [vmem:[%s8 + $0x1f4] sm:$0xf]
        %v5555 = vld [vmem:[%s8 + $0x1f8] sm:$0xf]
        %v5556 = vld [vmem:[%s8 + $0x1fc] sm:$0xf]
        %v5557 = vld [vmem:[%s8 + $0x200] sm:$0xf]
        %v5558 = vld [vmem:[%s8 + $0x204] sm:$0xf]
        %v5559 = vld [vmem:[%s8 + $0x208] sm:$0xf]
        %v5560 = vld [vmem:[%s8 + $0x20c] sm:$0xf]
        %v5561 = vld [vmem:[%s8 + $0x210] sm:$0xf]
        %v5562 = vld [vmem:[%s8 + $0x214] sm:$0xf]
        %v5563 = vld [vmem:[%s8 + $0x218] sm:$0xf]
        %v5564 = vld [vmem:[%s8 + $0x21c] sm:$0xf]
        %v5565 = vld [vmem:[%s8 + $0x220] sm:$0xf]
        %v5566 = vld [vmem:[%s8 + $0x224] sm:$0xf]
        %v5567 = vld [vmem:[%s8 + $0x228] sm:$0xf]
        %v5568 = vld [vmem:[%s8 + $0x22c] sm:$0xf]
        %v5569 = vld [vmem:[%s8 + $0x230] sm:$0xf]
        %v5570 = vld [vmem:[%s8 + $0x234] sm:$0xf]
        %v5571 = vld [vmem:[%s8 + $0x238] sm:$0xf]
        %v5572 = vld [vmem:[%s8 + $0x23c] sm:$0xf]
        %v5573 = vld [vmem:[%s17] sm:$0x1]
        %v5575 = vlaneseq
        %v5576 = vshrl.u32 %v5575, 7
        %v5577 = vsub.s32 0, %v5576
        %v5578 = vrot.slane %v5573, %v5577
        %v5724 = vunpack.c.l.b16 %v5429
        %v5725 = vunpack.c.l.b16 %v5430
        %v5726 = vunpack.c.l.b16 %v5431
        %v5727 = vunpack.c.l.b16 %v5432
        %v5728 = vunpack.c.l.b16 %v5433
        %v5729 = vunpack.c.l.b16 %v5434
        %v5730 = vunpack.c.l.b16 %v5435
        %v5731 = vunpack.c.l.b16 %v5436
        %v5732 = vunpack.c.l.b16 %v5437
        %v5733 = vunpack.c.l.b16 %v5438
        %v5734 = vunpack.c.l.b16 %v5439
        %v5735 = vunpack.c.l.b16 %v5440
        %v5736 = vunpack.c.l.b16 %v5441
        %v5737 = vunpack.c.l.b16 %v5442
        %v5738 = vunpack.c.l.b16 %v5443
        %v5739 = vunpack.c.l.b16 %v5444
        %v5740 = vunpack.c.l.b16 %v5445
        %v5741 = vunpack.c.l.b16 %v5446
        %v5742 = vunpack.c.l.b16 %v5447
        %v5743 = vunpack.c.l.b16 %v5448
        %v5744 = vunpack.c.l.b16 %v5449
        %v5745 = vunpack.c.l.b16 %v5450
        %v5746 = vunpack.c.l.b16 %v5451
        %v5747 = vunpack.c.l.b16 %v5452
        %v5748 = vunpack.c.l.b16 %v5453
        %v5749 = vunpack.c.l.b16 %v5454
        %v5750 = vunpack.c.l.b16 %v5455
        %v5751 = vunpack.c.l.b16 %v5456
        %v5752 = vunpack.c.l.b16 %v5457
        %v5753 = vunpack.c.l.b16 %v5458
        %v5754 = vunpack.c.l.b16 %v5459
        %v5755 = vunpack.c.l.b16 %v5460
        %v5756 = vunpack.c.l.b16 %v5461
        %v5757 = vunpack.c.l.b16 %v5462
        %v5758 = vunpack.c.l.b16 %v5463
        %v5759 = vunpack.c.l.b16 %v5464
        %v5760 = vunpack.c.l.b16 %v5465
        %v5761 = vunpack.c.l.b16 %v5466
        %v5762 = vunpack.c.l.b16 %v5467
        %v5763 = vunpack.c.l.b16 %v5468
        %v5764 = vunpack.c.l.b16 %v5469
        %v5765 = vunpack.c.l.b16 %v5470
        %v5766 = vunpack.c.l.b16 %v5471
        %v5767 = vunpack.c.l.b16 %v5472
        %v5768 = vunpack.c.l.b16 %v5473
        %v5769 = vunpack.c.l.b16 %v5474
        %v5770 = vunpack.c.l.b16 %v5475
        %v5771 = vunpack.c.l.b16 %v5476
        %v5772 = vunpack.c.l.b16 %v5477
        %v5773 = vunpack.c.l.b16 %v5478
        %v5774 = vunpack.c.l.b16 %v5479
        %v5775 = vunpack.c.l.b16 %v5480
        %v5776 = vunpack.c.l.b16 %v5481
        %v5777 = vunpack.c.l.b16 %v5482
        %v5778 = vunpack.c.l.b16 %v5483
        %v5779 = vunpack.c.l.b16 %v5484
        %v5780 = vunpack.c.l.b16 %v5485
        %v5781 = vunpack.c.l.b16 %v5486
        %v5782 = vunpack.c.l.b16 %v5487
        %v5783 = vunpack.c.l.b16 %v5488
        %v5784 = vunpack.c.l.b16 %v5489
        %v5785 = vunpack.c.l.b16 %v5490
        %v5786 = vunpack.c.l.b16 %v5491
        %v5787 = vunpack.c.l.b16 %v5492
        %v5788 = vunpack.c.l.b16 %v5493
        %v5789 = vunpack.c.l.b16 %v5494
        %v5790 = vunpack.c.l.b16 %v5495
        %v5791 = vunpack.c.l.b16 %v5496
        %v5792 = vunpack.c.l.b16 %v5497
        %v5793 = vunpack.c.l.b16 %v5498
        %v5794 = vunpack.c.l.b16 %v5499
        %v5795 = vunpack.c.l.b16 %v5500
        %v5796 = vunpack.c.l.b16 %v5501
        %v5797 = vunpack.c.l.b16 %v5502
        %v5798 = vunpack.c.l.b16 %v5503
        %v5799 = vunpack.c.l.b16 %v5504
        %v5800 = vunpack.c.l.b16 %v5505
        %v5801 = vunpack.c.l.b16 %v5506
        %v5802 = vunpack.c.l.b16 %v5507
        %v5803 = vunpack.c.l.b16 %v5508
        %v5804 = vunpack.c.l.b16 %v5509
        %v5805 = vunpack.c.l.b16 %v5510
        %v5806 = vunpack.c.l.b16 %v5511
        %v5807 = vunpack.c.l.b16 %v5512
        %v5808 = vunpack.c.l.b16 %v5513
        %v5809 = vunpack.c.l.b16 %v5514
        %v5810 = vunpack.c.l.b16 %v5515
        %v5811 = vunpack.c.l.b16 %v5516
        %v5812 = vunpack.c.l.b16 %v5517
        %v5813 = vunpack.c.l.b16 %v5518
        %v5814 = vunpack.c.l.b16 %v5519
        %v5815 = vunpack.c.l.b16 %v5520
        %v5816 = vunpack.c.l.b16 %v5521
        %v5817 = vunpack.c.l.b16 %v5522
        %v5818 = vunpack.c.l.b16 %v5523
        %v5819 = vunpack.c.l.b16 %v5524
        %v5820 = vunpack.c.l.b16 %v5525
        %v5821 = vunpack.c.l.b16 %v5526
        %v5822 = vunpack.c.l.b16 %v5527
        %v5823 = vunpack.c.l.b16 %v5528
        %v5824 = vunpack.c.l.b16 %v5529
        %v5825 = vunpack.c.l.b16 %v5530
        %v5826 = vunpack.c.l.b16 %v5531
        %v5827 = vunpack.c.l.b16 %v5532
        %v5828 = vunpack.c.l.b16 %v5533
        %v5829 = vunpack.c.l.b16 %v5534
        %v5830 = vunpack.c.l.b16 %v5535
        %v5831 = vunpack.c.l.b16 %v5536
        %v5832 = vunpack.c.l.b16 %v5537
        %v5833 = vunpack.c.l.b16 %v5538
        %v5834 = vunpack.c.l.b16 %v5539
        %v5835 = vunpack.c.l.b16 %v5540
        %v5836 = vunpack.c.l.b16 %v5541
        %v5837 = vunpack.c.l.b16 %v5542
        %v5838 = vunpack.c.l.b16 %v5543
        %v5839 = vunpack.c.l.b16 %v5544
        %v5840 = vunpack.c.l.b16 %v5545
        %v5841 = vunpack.c.l.b16 %v5546
        %v5842 = vunpack.c.l.b16 %v5547
        %v5843 = vunpack.c.l.b16 %v5548
        %v5844 = vunpack.c.l.b16 %v5549
        %v5845 = vunpack.c.l.b16 %v5550
        %v5846 = vunpack.c.l.b16 %v5551
        %v5847 = vunpack.c.l.b16 %v5552
        %v5848 = vunpack.c.l.b16 %v5553
        %v5849 = vunpack.c.l.b16 %v5554
        %v5850 = vunpack.c.l.b16 %v5555
        %v5851 = vunpack.c.l.b16 %v5556
        %v5852 = vunpack.c.l.b16 %v5557
        %v5853 = vunpack.c.l.b16 %v5558
        %v5854 = vunpack.c.l.b16 %v5559
        %v5855 = vunpack.c.l.b16 %v5560
        %v5856 = vunpack.c.l.b16 %v5561
        %v5857 = vunpack.c.l.b16 %v5562
        %v5858 = vunpack.c.l.b16 %v5563
        %v5859 = vunpack.c.l.b16 %v5564
        %v5860 = vunpack.c.l.b16 %v5565
        %v5861 = vunpack.c.l.b16 %v5566
        %v5862 = vunpack.c.l.b16 %v5567
        %v5863 = vunpack.c.l.b16 %v5568
        %v5864 = vunpack.c.l.b16 %v5569
        %v5865 = vunpack.c.l.b16 %v5570
        %v5866 = vunpack.c.l.b16 %v5571
        %v5867 = vunpack.c.l.b16 %v5572
        %v5868 = vpack.c.b16 %v5725, %v5724
        %v5869 = vpack.c.b16 %v5727, %v5726
        %v5870 = vpack.c.b16 %v5729, %v5728
        %v5871 = vpack.c.b16 %v5731, %v5730
        %v5872 = vpack.c.b16 %v5733, %v5732
        %v5873 = vpack.c.b16 %v5735, %v5734
        %v5874 = vpack.c.b16 %v5737, %v5736
        %v5875 = vpack.c.b16 %v5739, %v5738
        %v5876 = vpack.c.b16 %v5741, %v5740
        %v5877 = vpack.c.b16 %v5743, %v5742
        %v5878 = vpack.c.b16 %v5745, %v5744
        %v5879 = vpack.c.b16 %v5747, %v5746
        %v5880 = vpack.c.b16 %v5749, %v5748
        %v5881 = vpack.c.b16 %v5751, %v5750
        %v5882 = vpack.c.b16 %v5753, %v5752
        %v5883 = vpack.c.b16 %v5755, %v5754
        %v5884 = vpack.c.b16 %v5757, %v5756
        %v5885 = vpack.c.b16 %v5759, %v5758
        %v5886 = vpack.c.b16 %v5761, %v5760
        %v5887 = vpack.c.b16 %v5763, %v5762
        %v5888 = vpack.c.b16 %v5765, %v5764
        %v5889 = vpack.c.b16 %v5767, %v5766
        %v5890 = vpack.c.b16 %v5769, %v5768
        %v5891 = vpack.c.b16 %v5771, %v5770
        %v5892 = vpack.c.b16 %v5773, %v5772
        %v5893 = vpack.c.b16 %v5775, %v5774
        %v5894 = vpack.c.b16 %v5777, %v5776
        %v5895 = vpack.c.b16 %v5779, %v5778
        %v5896 = vpack.c.b16 %v5781, %v5780
        %v5897 = vpack.c.b16 %v5783, %v5782
        %v5898 = vpack.c.b16 %v5785, %v5784
        %v5899 = vpack.c.b16 %v5787, %v5786
        %v5900 = vpack.c.b16 %v5789, %v5788
        %v5901 = vpack.c.b16 %v5791, %v5790
        %v5902 = vpack.c.b16 %v5793, %v5792
        %v5903 = vpack.c.b16 %v5795, %v5794
        %v5904 = vpack.c.b16 %v5797, %v5796
        %v5905 = vpack.c.b16 %v5799, %v5798
        %v5906 = vpack.c.b16 %v5801, %v5800
        %v5907 = vpack.c.b16 %v5803, %v5802
        %v5908 = vpack.c.b16 %v5805, %v5804
        %v5909 = vpack.c.b16 %v5807, %v5806
        %v5910 = vpack.c.b16 %v5809, %v5808
        %v5911 = vpack.c.b16 %v5811, %v5810
        %v5912 = vpack.c.b16 %v5813, %v5812
        %v5913 = vpack.c.b16 %v5815, %v5814
        %v5914 = vpack.c.b16 %v5817, %v5816
        %v5915 = vpack.c.b16 %v5819, %v5818
        %v5916 = vpack.c.b16 %v5821, %v5820
        %v5917 = vpack.c.b16 %v5823, %v5822
        %v5918 = vpack.c.b16 %v5825, %v5824
        %v5919 = vpack.c.b16 %v5827, %v5826
        %v5920 = vpack.c.b16 %v5829, %v5828
        %v5921 = vpack.c.b16 %v5831, %v5830
        %v5922 = vpack.c.b16 %v5833, %v5832
        %v5923 = vpack.c.b16 %v5835, %v5834
        %v5924 = vpack.c.b16 %v5837, %v5836
        %v5925 = vpack.c.b16 %v5839, %v5838
        %v5926 = vpack.c.b16 %v5841, %v5840
        %v5927 = vpack.c.b16 %v5843, %v5842
        %v5928 = vpack.c.b16 %v5845, %v5844
        %v5929 = vpack.c.b16 %v5847, %v5846
        %v5930 = vpack.c.b16 %v5849, %v5848
        %v5931 = vpack.c.b16 %v5851, %v5850
        %v5932 = vpack.c.b16 %v5853, %v5852
        %v5933 = vpack.c.b16 %v5855, %v5854
        %v5934 = vpack.c.b16 %v5857, %v5856
        %v5935 = vpack.c.b16 %v5859, %v5858
        %v5936 = vpack.c.b16 %v5861, %v5860
        %v5937 = vpack.c.b16 %v5863, %v5862
        %v5938 = vpack.c.b16 %v5865, %v5864
        %v5939 = vpack.c.b16 %v5867, %v5866
        %6012 = vmatprep.subr.bf16.mxu0 0
        %6013 = vmatpush1.bf16.msra.mxu0 %v5875
        %6014 = vmatprep.subr.bf16.mxu0 0
        %6015 = vmatpush1.bf16.msra.mxu0 %v5874
        %6016 = vmatprep.subr.bf16.mxu0 0
        %6017 = vmatpush1.bf16.msra.mxu0 %v5873
        %6018 = vmatprep.subr.bf16.mxu0 0
        %6019 = vmatpush1.bf16.msra.mxu0 %v5872
        %6020 = vmatprep.subr.bf16.mxu0 0
        %6021 = vmatpush1.bf16.msra.mxu0 %v5871
        %6022 = vmatprep.subr.bf16.mxu0 0
        %6023 = vmatpush1.bf16.msra.mxu0 %v5870
        %6024 = vmatprep.subr.bf16.mxu0 0
        %6025 = vmatpush1.bf16.msra.mxu0 %v5869
        %6026 = vmatprep.subr.bf16.mxu0 0
        %6027 = vmatpush1.bf16.msra.mxu0 %v5868
        %6028 = vmatprep.subr.bf16.mxu0 0
        %6029 = vmatpush2.bf16.msra.mxu0 %v5883
        %6030 = vmatprep.subr.bf16.mxu0 0
        %6031 = vmatpush2.bf16.msra.mxu0 %v5882
        %6032 = vmatprep.subr.bf16.mxu0 0
        %6033 = vmatpush2.bf16.msra.mxu0 %v5881
        %6034 = vmatprep.subr.bf16.mxu0 0
        %6035 = vmatpush2.bf16.msra.mxu0 %v5880
        %6036 = vmatprep.subr.bf16.mxu0 0
        %6037 = vmatpush2.bf16.msra.mxu0 %v5879
        %6038 = vmatprep.subr.bf16.mxu0 0
        %6039 = vmatpush2.bf16.msra.mxu0 %v5878
        %6040 = vmatprep.subr.bf16.mxu0 0
        %6041 = vmatpush2.bf16.msra.mxu0 %v5877
        %6042 = vmatprep.subr.bf16.mxu0 0
        %6043 = vmatpush2.bf16.msra.mxu0 %v5876
        %6044 = vmatprep.mubr.bf16.mxu0 %v5411
        %6045 = vmatmul.mubr.bf16.gmra.mxu0 %v5409
        %v6046 = vpop.f32.mrf.mxu0
        %v6047 = vadd.f32 %v5578, %v6046
        %v6048 = vpop.f32.mrf.mxu0
        %v6049 = vpop.f32.mrf.mxu0
        %v6050 = vpop.f32.mrf.mxu0
        %6051 = vdwg.mxu0
        %6052 = vmatprep.subr.bf16.mxu0 0
        %6053 = vmatpush1.bf16.msra.mxu0 %v5891
        %6054 = vmatprep.subr.bf16.mxu0 0
        %6055 = vmatpush1.bf16.msra.mxu0 %v5890
        %6056 = vmatprep.subr.bf16.mxu0 0
        %6057 = vmatpush1.bf16.msra.mxu0 %v5889
        %6058 = vmatprep.subr.bf16.mxu0 0
        %6059 = vmatpush1.bf16.msra.mxu0 %v5888
        %6060 = vmatprep.subr.bf16.mxu0 0
        %6061 = vmatpush1.bf16.msra.mxu0 %v5887
        %6062 = vmatprep.subr.bf16.mxu0 0
        %6063 = vmatpush1.bf16.msra.mxu0 %v5886
        %6064 = vmatprep.subr.bf16.mxu0 0
        %6065 = vmatpush1.bf16.msra.mxu0 %v5885
        %6066 = vmatprep.subr.bf16.mxu0 0
        %6067 = vmatpush1.bf16.msra.mxu0 %v5884
        %6068 = vmatprep.subr.bf16.mxu0 0
        %6069 = vmatpush2.bf16.msra.mxu0 %v5899
        %6070 = vmatprep.subr.bf16.mxu0 0
        %6071 = vmatpush2.bf16.msra.mxu0 %v5898
        %6072 = vmatprep.subr.bf16.mxu0 0
        %6073 = vmatpush2.bf16.msra.mxu0 %v5897
        %6074 = vmatprep.subr.bf16.mxu0 0
        %6075 = vmatpush2.bf16.msra.mxu0 %v5896
        %6076 = vmatprep.subr.bf16.mxu0 0
        %6077 = vmatpush2.bf16.msra.mxu0 %v5895
        %6078 = vmatprep.subr.bf16.mxu0 0
        %6079 = vmatpush2.bf16.msra.mxu0 %v5894
        %6080 = vmatprep.subr.bf16.mxu0 0
        %6081 = vmatpush2.bf16.msra.mxu0 %v5893
        %6082 = vmatprep.subr.bf16.mxu0 0
        %6083 = vmatpush2.bf16.msra.mxu0 %v5892
        %6084 = vmatprep.mubr.bf16.mxu0 %v5416
        %6085 = vmatmul.mubr.bf16.gmra.mxu0 %v5414
        %v6086 = vpop.f32.mrf.mxu0
        %v6087 = vadd.f32 %v6047, %v6086
        %v6088 = vpop.f32.mrf.mxu0
        %v6089 = vpop.f32.mrf.mxu0
        %v6090 = vpop.f32.mrf.mxu0
        %6091 = vdwg.mxu0
        %6092 = vmatprep.subr.bf16.mxu0 0
        %6093 = vmatpush1.bf16.msra.mxu0 %v5907
        %6094 = vmatprep.subr.bf16.mxu0 0
        %6095 = vmatpush1.bf16.msra.mxu0 %v5906
        %6096 = vmatprep.subr.bf16.mxu0 0
        %6097 = vmatpush1.bf16.msra.mxu0 %v5905
        %6098 = vmatprep.subr.bf16.mxu0 0
        %6099 = vmatpush1.bf16.msra.mxu0 %v5904
        %6100 = vmatprep.subr.bf16.mxu0 0
        %6101 = vmatpush1.bf16.msra.mxu0 %v5903
        %6102 = vmatprep.subr.bf16.mxu0 0
        %6103 = vmatpush1.bf16.msra.mxu0 %v5902
        %6104 = vmatprep.subr.bf16.mxu0 0
        %6105 = vmatpush1.bf16.msra.mxu0 %v5901
        %6106 = vmatprep.subr.bf16.mxu0 0
        %6107 = vmatpush1.bf16.msra.mxu0 %v5900
        %6108 = vmatprep.subr.bf16.mxu0 0
        %6109 = vmatpush2.bf16.msra.mxu0 %v5915
        %6110 = vmatprep.subr.bf16.mxu0 0
        %6111 = vmatpush2.bf16.msra.mxu0 %v5914
        %6112 = vmatprep.subr.bf16.mxu0 0
        %6113 = vmatpush2.bf16.msra.mxu0 %v5913
        %6114 = vmatprep.subr.bf16.mxu0 0
        %6115 = vmatpush2.bf16.msra.mxu0 %v5912
        %6116 = vmatprep.subr.bf16.mxu0 0
        %6117 = vmatpush2.bf16.msra.mxu0 %v5911
        %6118 = vmatprep.subr.bf16.mxu0 0
        %6119 = vmatpush2.bf16.msra.mxu0 %v5910
        %6120 = vmatprep.subr.bf16.mxu0 0
        %6121 = vmatpush2.bf16.msra.mxu0 %v5909
        %6122 = vmatprep.subr.bf16.mxu0 0
        %6123 = vmatpush2.bf16.msra.mxu0 %v5908
        %6124 = vmatprep.mubr.bf16.mxu0 %v5421
        %6125 = vmatmul.mubr.bf16.gmra.mxu0 %v5418
        %v6126 = vpop.f32.mrf.mxu0
        %v6127 = vadd.f32 %v6087, %v6126
        %v6128 = vpop.f32.mrf.mxu0
        %v6129 = vpop.f32.mrf.mxu0
        %v6130 = vpop.f32.mrf.mxu0
        %6131 = vdwg.mxu0
        %6132 = vmatprep.subr.bf16.mxu0 0
        %6133 = vmatpush1.bf16.msra.mxu0 %v5923
        %6134 = vmatprep.subr.bf16.mxu0 0
        %6135 = vmatpush1.bf16.msra.mxu0 %v5922
        %6136 = vmatprep.subr.bf16.mxu0 0
        %6137 = vmatpush1.bf16.msra.mxu0 %v5921
        %6138 = vmatprep.subr.bf16.mxu0 0
        %6139 = vmatpush1.bf16.msra.mxu0 %v5920
        %6140 = vmatprep.subr.bf16.mxu0 0
        %6141 = vmatpush1.bf16.msra.mxu0 %v5919
        %6142 = vmatprep.subr.bf16.mxu0 0
        %6143 = vmatpush1.bf16.msra.mxu0 %v5918
        %6144 = vmatprep.subr.bf16.mxu0 0
        %6145 = vmatpush1.bf16.msra.mxu0 %v5917
        %6146 = vmatprep.subr.bf16.mxu0 0
        %6147 = vmatpush1.bf16.msra.mxu0 %v5916
        %6148 = vmatprep.subr.bf16.mxu0 0
        %6149 = vmatpush2.bf16.msra.mxu0 %v5931
        %6150 = vmatprep.subr.bf16.mxu0 0
        %6151 = vmatpush2.bf16.msra.mxu0 %v5930
        %6152 = vmatprep.subr.bf16.mxu0 0
        %6153 = vmatpush2.bf16.msra.mxu0 %v5929
        %6154 = vmatprep.subr.bf16.mxu0 0
        %6155 = vmatpush2.bf16.msra.mxu0 %v5928
        %6156 = vmatprep.subr.bf16.mxu0 0
        %6157 = vmatpush2.bf16.msra.mxu0 %v5927
        %6158 = vmatprep.subr.bf16.mxu0 0
        %6159 = vmatpush2.bf16.msra.mxu0 %v5926
        %6160 = vmatprep.subr.bf16.mxu0 0
        %6161 = vmatpush2.bf16.msra.mxu0 %v5925
        %6162 = vmatprep.subr.bf16.mxu0 0
        %6163 = vmatpush2.bf16.msra.mxu0 %v5924
        %6164 = vmatprep.mubr.bf16.mxu0 %v5425
        %6165 = vmatmul.mubr.bf16.gmra.mxu0 %v5423
        %v6166 = vpop.f32.mrf.mxu0
        %v6167 = vadd.f32 %v6127, %v6166
        %v6168 = vpop.f32.mrf.mxu0
        %v6169 = vpop.f32.mrf.mxu0
        %v6170 = vpop.f32.mrf.mxu0
        %6171 = vdwg.mxu0
        %6172 = vmatprep.subr.bf16.mxu0 0
        %6173 = vmatpush1.bf16.msra.mxu0 %v5939
        %6174 = vmatprep.subr.bf16.mxu0 0
        %6175 = vmatpush1.bf16.msra.mxu0 %v5938
        %6176 = vmatprep.subr.bf16.mxu0 0
        %6177 = vmatpush1.bf16.msra.mxu0 %v5937
        %6178 = vmatprep.subr.bf16.mxu0 0
        %6179 = vmatpush1.bf16.msra.mxu0 %v5936
        %6180 = vmatprep.subr.bf16.mxu0 0
        %6181 = vmatpush1.bf16.msra.mxu0 %v5935
        %6182 = vmatprep.subr.bf16.mxu0 0
        %6183 = vmatpush1.bf16.msra.mxu0 %v5934
        %6184 = vmatprep.subr.bf16.mxu0 0
        %6185 = vmatpush1.bf16.msra.mxu0 %v5933
        %6186 = vmatprep.subr.bf16.mxu0 0
        %6187 = vmatpush1.bf16.msra.mxu0 %v5932
        %6188 = vmatprep.subr.bf16.mxu0 0
        %6189 = vmatpush2.bf16.msra.mxu0 0
        %6190 = vmatprep.subr.bf16.mxu0 0
        %6191 = vmatpush2.bf16.msra.mxu0 0
        %6192 = vmatprep.subr.bf16.mxu0 0
        %6193 = vmatpush2.bf16.msra.mxu0 0
        %6194 = vmatprep.subr.bf16.mxu0 0
        %6195 = vmatpush2.bf16.msra.mxu0 0
        %6196 = vmatprep.subr.bf16.mxu0 0
        %6197 = vmatpush2.bf16.msra.mxu0 0
        %6198 = vmatprep.subr.bf16.mxu0 0
        %6199 = vmatpush2.bf16.msra.mxu0 0
        %6200 = vmatprep.subr.bf16.mxu0 0
        %6201 = vmatpush2.bf16.msra.mxu0 0
        %6202 = vmatprep.subr.bf16.mxu0 0
        %6203 = vmatpush2.bf16.msra.mxu0 0
        %6204 = vmatprep.mubr.bf16.mxu0 0
        %6205 = vmatmul.mubr.bf16.gmra.mxu0 %v5428
        %v6206 = vpop.f32.mrf.mxu0
        %v6207 = vadd.f32 %v6167, %v6206
        %v6208 = vpop.f32.mrf.mxu0
        %v6209 = vpop.f32.mrf.mxu0
        %v6210 = vpop.f32.mrf.mxu0
        %6211 = vdwg.mxu0
        %6212 = vst [vmem:[#allocation2] sm:$0xff] %v4548
        %6213 = vst [vmem:[#allocation2 + $0x8] sm:$0xff] %v4549
        %v6214 = vld [vmem:[#allocation2] ss:$2 sm:$0x3]
        %6215 = vst [vmem:[#allocation3] sm:$0x3] %v6214
        %v6216 = vld [vmem:[%s5386] ss:$2 sm:$0x3]
        %6217 = vst [vmem:[#allocation3 + $0x2] sm:$0x3] %v6216
        %v6218 = vld [vmem:[#allocation3] sm:$0xf]
        %v6219 = vpack.c.bf16 %v6218, %v6218
        %v6220 = vld [vmem:[%s9] sm:$0xf]
        %v6221 = vld [vmem:[%s9 + $0x4] sm:$0xf]
        %v6222 = vld [vmem:[%s9 + $0x8] sm:$0xf]
        %v6223 = vld [vmem:[%s9 + $0xc] sm:$0xf]
        %v6224 = vld [vmem:[%s9 + $0x10] sm:$0xf]
        %v6225 = vld [vmem:[%s9 + $0x14] sm:$0xf]
        %v6226 = vld [vmem:[%s9 + $0x18] sm:$0xf]
        %v6227 = vld [vmem:[%s9 + $0x1c] sm:$0xf]
        %v6228 = vld [vmem:[%s9 + $0x20] sm:$0xf]
        %v6229 = vld [vmem:[%s9 + $0x24] sm:$0xf]
        %v6230 = vld [vmem:[%s9 + $0x28] sm:$0xf]
        %v6231 = vld [vmem:[%s9 + $0x2c] sm:$0xf]
        %v6232 = vld [vmem:[%s9 + $0x30] sm:$0xf]
        %v6233 = vld [vmem:[%s9 + $0x34] sm:$0xf]
        %v6234 = vld [vmem:[%s9 + $0x38] sm:$0xf]
        %v6235 = vld [vmem:[%s9 + $0x3c] sm:$0xf]
        %v6236 = vld [vmem:[%s18] sm:$0x1]
        %v6238 = vlaneseq
        %v6239 = vshrl.u32 %v6238, 7
        %v6240 = vsub.s32 0, %v6239
        %v6241 = vrot.slane %v6236, %v6240
        %v6259 = vunpack.c.l.b16 %v6220
        %v6260 = vunpack.c.l.b16 %v6221
        %v6261 = vunpack.c.l.b16 %v6222
        %v6262 = vunpack.c.l.b16 %v6223
        %v6263 = vunpack.c.l.b16 %v6224
        %v6264 = vunpack.c.l.b16 %v6225
        %v6265 = vunpack.c.l.b16 %v6226
        %v6266 = vunpack.c.l.b16 %v6227
        %v6267 = vunpack.c.l.b16 %v6228
        %v6268 = vunpack.c.l.b16 %v6229
        %v6269 = vunpack.c.l.b16 %v6230
        %v6270 = vunpack.c.l.b16 %v6231
        %v6271 = vunpack.c.l.b16 %v6232
        %v6272 = vunpack.c.l.b16 %v6233
        %v6273 = vunpack.c.l.b16 %v6234
        %v6274 = vunpack.c.l.b16 %v6235
        %v6275 = vpack.c.b16 %v6260, %v6259
        %v6276 = vpack.c.b16 %v6262, %v6261
        %v6277 = vpack.c.b16 %v6264, %v6263
        %v6278 = vpack.c.b16 %v6266, %v6265
        %v6279 = vpack.c.b16 %v6268, %v6267
        %v6280 = vpack.c.b16 %v6270, %v6269
        %v6281 = vpack.c.b16 %v6272, %v6271
        %v6282 = vpack.c.b16 %v6274, %v6273
        %6291 = vmatprep.subr.bf16.mxu0 0
        %6292 = vmatpush1.bf16.msra.mxu0 %v6282
        %6293 = vmatprep.subr.bf16.mxu0 0
        %6294 = vmatpush1.bf16.msra.mxu0 %v6281
        %6295 = vmatprep.subr.bf16.mxu0 0
        %6296 = vmatpush1.bf16.msra.mxu0 %v6280
        %6297 = vmatprep.subr.bf16.mxu0 0
        %6298 = vmatpush1.bf16.msra.mxu0 %v6279
        %6299 = vmatprep.subr.bf16.mxu0 0
        %6300 = vmatpush1.bf16.msra.mxu0 %v6278
        %6301 = vmatprep.subr.bf16.mxu0 0
        %6302 = vmatpush1.bf16.msra.mxu0 %v6277
        %6303 = vmatprep.subr.bf16.mxu0 0
        %6304 = vmatpush1.bf16.msra.mxu0 %v6276
        %6305 = vmatprep.subr.bf16.mxu0 0
        %6306 = vmatpush1.bf16.msra.mxu0 %v6275
        %6307 = vmatprep.subr.bf16.mxu0 0
        %6308 = vmatpush2.bf16.msra.mxu0 0
        %6309 = vmatprep.subr.bf16.mxu0 0
        %6310 = vmatpush2.bf16.msra.mxu0 0
        %6311 = vmatprep.subr.bf16.mxu0 0
        %6312 = vmatpush2.bf16.msra.mxu0 0
        %6313 = vmatprep.subr.bf16.mxu0 0
        %6314 = vmatpush2.bf16.msra.mxu0 0
        %6315 = vmatprep.subr.bf16.mxu0 0
        %6316 = vmatpush2.bf16.msra.mxu0 0
        %6317 = vmatprep.subr.bf16.mxu0 0
        %6318 = vmatpush2.bf16.msra.mxu0 0
        %6319 = vmatprep.subr.bf16.mxu0 0
        %6320 = vmatpush2.bf16.msra.mxu0 0
        %6321 = vmatprep.subr.bf16.mxu0 0
        %6322 = vmatpush2.bf16.msra.mxu0 0
        %6323 = vmatprep.mubr.bf16.mxu0 0
        %6324 = vmatmul.mubr.bf16.gmra.mxu0 %v6219
        %v6325 = vpop.f32.mrf.mxu0
        %v6326 = vadd.f32 %v6241, %v6325
        %v6327 = vpop.f32.mrf.mxu0
        %v6328 = vpop.f32.mrf.mxu0
        %v6329 = vpop.f32.mrf.mxu0
        %6330 = vdwg.mxu0
        %v6331 = vadd.f32 %v6207, %v6326
        %v6332 = vmax.f32 %v6331, 0.0
        %6333 = vst [vmem:[#allocation2] sm:$0xff] 0.0
        %6334 = vst [vmem:[#allocation2 + $0x8] sm:$0x3] 0.0
        %6335 = vst [vmem:[#allocation2 + $0x3] sm:$0xf] %v6332
        %v6336 = vld [vmem:[#allocation2] sm:$0xf]
        %v6337 = vsel %vm5405, %v6336, 0.0
        %v6338 = vpack.c.bf16 %v6337, %v6337
        %v6339 = vld [vmem:[#allocation2 + $0x1] sm:$0xf]
        %v6340 = vpack.c.bf16 %v6339, %v6339
        %v6341 = vld [vmem:[#allocation2 + $0x2] sm:$0xf]
        %v6342 = vsel %vm5406, %v6341, 0.0
        %v6343 = vpack.c.bf16 %v6342, %v6342
        %v6344 = vsel %vm5405, %v6341, 0.0
        %v6345 = vpack.c.bf16 %v6344, %v6344
        %v6346 = vld [vmem:[#allocation2 + $0x3] sm:$0xf]
        %v6347 = vpack.c.bf16 %v6346, %v6346
        %v6348 = vld [vmem:[#allocation2 + $0x4] sm:$0xf]
        %v6349 = vsel %vm5406, %v6348, 0.0
        %v6350 = vpack.c.bf16 %v6349, %v6349
        %v6351 = vsel %vm5405, %v6348, 0.0
        %v6352 = vpack.c.bf16 %v6351, %v6351
        %v6353 = vld [vmem:[#allocation2 + $0x5] sm:$0xf]
        %v6354 = vpack.c.bf16 %v6353, %v6353
        %v6355 = vld [vmem:[#allocation2 + $0x6] sm:$0xf]
        %v6356 = vsel %vm5406, %v6355, 0.0
        %v6357 = vpack.c.bf16 %v6356, %v6356
        %v6358 = vld [vmem:[%s10] sm:$0xf]
        %v6359 = vld [vmem:[%s10 + $0x4] sm:$0xf]
        %v6360 = vld [vmem:[%s10 + $0x8] sm:$0xf]
        %v6361 = vld [vmem:[%s10 + $0xc] sm:$0xf]
        %v6362 = vld [vmem:[%s10 + $0x10] sm:$0xf]
        %v6363 = vld [vmem:[%s10 + $0x14] sm:$0xf]
        %v6364 = vld [vmem:[%s10 + $0x18] sm:$0xf]
        %v6365 = vld [vmem:[%s10 + $0x1c] sm:$0xf]
        %v6366 = vld [vmem:[%s10 + $0x20] sm:$0xf]
        %v6367 = vld [vmem:[%s10 + $0x24] sm:$0xf]
        %v6368 = vld [vmem:[%s10 + $0x28] sm:$0xf]
        %v6369 = vld [vmem:[%s10 + $0x2c] sm:$0xf]
        %v6370 = vld [vmem:[%s10 + $0x30] sm:$0xf]
        %v6371 = vld [vmem:[%s10 + $0x34] sm:$0xf]
        %v6372 = vld [vmem:[%s10 + $0x38] sm:$0xf]
        %v6373 = vld [vmem:[%s10 + $0x3c] sm:$0xf]
        %v6374 = vld [vmem:[%s10 + $0x40] sm:$0xf]
        %v6375 = vld [vmem:[%s10 + $0x44] sm:$0xf]
        %v6376 = vld [vmem:[%s10 + $0x48] sm:$0xf]
        %v6377 = vld [vmem:[%s10 + $0x4c] sm:$0xf]
        %v6378 = vld [vmem:[%s10 + $0x50] sm:$0xf]
        %v6379 = vld [vmem:[%s10 + $0x54] sm:$0xf]
        %v6380 = vld [vmem:[%s10 + $0x58] sm:$0xf]
        %v6381 = vld [vmem:[%s10 + $0x5c] sm:$0xf]
        %v6382 = vld [vmem:[%s10 + $0x60] sm:$0xf]
        %v6383 = vld [vmem:[%s10 + $0x64] sm:$0xf]
        %v6384 = vld [vmem:[%s10 + $0x68] sm:$0xf]
        %v6385 = vld [vmem:[%s10 + $0x6c] sm:$0xf]
        %v6386 = vld [vmem:[%s10 + $0x70] sm:$0xf]
        %v6387 = vld [vmem:[%s10 + $0x74] sm:$0xf]
        %v6388 = vld [vmem:[%s10 + $0x78] sm:$0xf]
        %v6389 = vld [vmem:[%s10 + $0x7c] sm:$0xf]
        %v6390 = vld [vmem:[%s10 + $0x80] sm:$0xf]
        %v6391 = vld [vmem:[%s10 + $0x84] sm:$0xf]
        %v6392 = vld [vmem:[%s10 + $0x88] sm:$0xf]
        %v6393 = vld [vmem:[%s10 + $0x8c] sm:$0xf]
        %v6394 = vld [vmem:[%s10 + $0x90] sm:$0xf]
        %v6395 = vld [vmem:[%s10 + $0x94] sm:$0xf]
        %v6396 = vld [vmem:[%s10 + $0x98] sm:$0xf]
        %v6397 = vld [vmem:[%s10 + $0x9c] sm:$0xf]
        %v6398 = vld [vmem:[%s10 + $0xa0] sm:$0xf]
        %v6399 = vld [vmem:[%s10 + $0xa4] sm:$0xf]
        %v6400 = vld [vmem:[%s10 + $0xa8] sm:$0xf]
        %v6401 = vld [vmem:[%s10 + $0xac] sm:$0xf]
        %v6402 = vld [vmem:[%s10 + $0xb0] sm:$0xf]
        %v6403 = vld [vmem:[%s10 + $0xb4] sm:$0xf]
        %v6404 = vld [vmem:[%s10 + $0xb8] sm:$0xf]
        %v6405 = vld [vmem:[%s10 + $0xbc] sm:$0xf]
        %v6406 = vld [vmem:[%s10 + $0xc0] sm:$0xf]
        %v6407 = vld [vmem:[%s10 + $0xc4] sm:$0xf]
        %v6408 = vld [vmem:[%s10 + $0xc8] sm:$0xf]
        %v6409 = vld [vmem:[%s10 + $0xcc] sm:$0xf]
        %v6410 = vld [vmem:[%s10 + $0xd0] sm:$0xf]
        %v6411 = vld [vmem:[%s10 + $0xd4] sm:$0xf]
        %v6412 = vld [vmem:[%s10 + $0xd8] sm:$0xf]
        %v6413 = vld [vmem:[%s10 + $0xdc] sm:$0xf]
        %v6414 = vld [vmem:[%s10 + $0xe0] sm:$0xf]
        %v6415 = vld [vmem:[%s10 + $0xe4] sm:$0xf]
        %v6416 = vld [vmem:[%s10 + $0xe8] sm:$0xf]
        %v6417 = vld [vmem:[%s10 + $0xec] sm:$0xf]
        %v6418 = vld [vmem:[%s10 + $0xf0] sm:$0xf]
        %v6419 = vld [vmem:[%s10 + $0xf4] sm:$0xf]
        %v6420 = vld [vmem:[%s10 + $0xf8] sm:$0xf]
        %v6421 = vld [vmem:[%s10 + $0xfc] sm:$0xf]
        %v6422 = vld [vmem:[%s10 + $0x100] sm:$0xf]
        %v6423 = vld [vmem:[%s10 + $0x104] sm:$0xf]
        %v6424 = vld [vmem:[%s10 + $0x108] sm:$0xf]
        %v6425 = vld [vmem:[%s10 + $0x10c] sm:$0xf]
        %v6426 = vld [vmem:[%s10 + $0x110] sm:$0xf]
        %v6427 = vld [vmem:[%s10 + $0x114] sm:$0xf]
        %v6428 = vld [vmem:[%s10 + $0x118] sm:$0xf]
        %v6429 = vld [vmem:[%s10 + $0x11c] sm:$0xf]
        %v6430 = vld [vmem:[%s10 + $0x120] sm:$0xf]
        %v6431 = vld [vmem:[%s10 + $0x124] sm:$0xf]
        %v6432 = vld [vmem:[%s10 + $0x128] sm:$0xf]
        %v6433 = vld [vmem:[%s10 + $0x12c] sm:$0xf]
        %v6434 = vld [vmem:[%s10 + $0x130] sm:$0xf]
        %v6435 = vld [vmem:[%s10 + $0x134] sm:$0xf]
        %v6436 = vld [vmem:[%s10 + $0x138] sm:$0xf]
        %v6437 = vld [vmem:[%s10 + $0x13c] sm:$0xf]
        %v6438 = vld [vmem:[%s10 + $0x140] sm:$0xf]
        %v6439 = vld [vmem:[%s10 + $0x144] sm:$0xf]
        %v6440 = vld [vmem:[%s10 + $0x148] sm:$0xf]
        %v6441 = vld [vmem:[%s10 + $0x14c] sm:$0xf]
        %v6442 = vld [vmem:[%s10 + $0x150] sm:$0xf]
        %v6443 = vld [vmem:[%s10 + $0x154] sm:$0xf]
        %v6444 = vld [vmem:[%s10 + $0x158] sm:$0xf]
        %v6445 = vld [vmem:[%s10 + $0x15c] sm:$0xf]
        %v6446 = vld [vmem:[%s10 + $0x160] sm:$0xf]
        %v6447 = vld [vmem:[%s10 + $0x164] sm:$0xf]
        %v6448 = vld [vmem:[%s10 + $0x168] sm:$0xf]
        %v6449 = vld [vmem:[%s10 + $0x16c] sm:$0xf]
        %v6450 = vld [vmem:[%s10 + $0x170] sm:$0xf]
        %v6451 = vld [vmem:[%s10 + $0x174] sm:$0xf]
        %v6452 = vld [vmem:[%s10 + $0x178] sm:$0xf]
        %v6453 = vld [vmem:[%s10 + $0x17c] sm:$0xf]
        %v6454 = vld [vmem:[%s10 + $0x180] sm:$0xf]
        %v6455 = vld [vmem:[%s10 + $0x184] sm:$0xf]
        %v6456 = vld [vmem:[%s10 + $0x188] sm:$0xf]
        %v6457 = vld [vmem:[%s10 + $0x18c] sm:$0xf]
        %v6458 = vld [vmem:[%s10 + $0x190] sm:$0xf]
        %v6459 = vld [vmem:[%s10 + $0x194] sm:$0xf]
        %v6460 = vld [vmem:[%s10 + $0x198] sm:$0xf]
        %v6461 = vld [vmem:[%s10 + $0x19c] sm:$0xf]
        %v6462 = vld [vmem:[%s10 + $0x1a0] sm:$0xf]
        %v6463 = vld [vmem:[%s10 + $0x1a4] sm:$0xf]
        %v6464 = vld [vmem:[%s10 + $0x1a8] sm:$0xf]
        %v6465 = vld [vmem:[%s10 + $0x1ac] sm:$0xf]
        %v6466 = vld [vmem:[%s10 + $0x1b0] sm:$0xf]
        %v6467 = vld [vmem:[%s10 + $0x1b4] sm:$0xf]
        %v6468 = vld [vmem:[%s10 + $0x1b8] sm:$0xf]
        %v6469 = vld [vmem:[%s10 + $0x1bc] sm:$0xf]
        %v6470 = vld [vmem:[%s10 + $0x1c0] sm:$0xf]
        %v6471 = vld [vmem:[%s10 + $0x1c4] sm:$0xf]
        %v6472 = vld [vmem:[%s10 + $0x1c8] sm:$0xf]
        %v6473 = vld [vmem:[%s10 + $0x1cc] sm:$0xf]
        %v6474 = vld [vmem:[%s10 + $0x1d0] sm:$0xf]
        %v6475 = vld [vmem:[%s10 + $0x1d4] sm:$0xf]
        %v6476 = vld [vmem:[%s10 + $0x1d8] sm:$0xf]
        %v6477 = vld [vmem:[%s10 + $0x1dc] sm:$0xf]
        %v6478 = vld [vmem:[%s10 + $0x1e0] sm:$0xf]
        %v6479 = vld [vmem:[%s10 + $0x1e4] sm:$0xf]
        %v6480 = vld [vmem:[%s10 + $0x1e8] sm:$0xf]
        %v6481 = vld [vmem:[%s10 + $0x1ec] sm:$0xf]
        %v6482 = vld [vmem:[%s10 + $0x1f0] sm:$0xf]
        %v6483 = vld [vmem:[%s10 + $0x1f4] sm:$0xf]
        %v6484 = vld [vmem:[%s10 + $0x1f8] sm:$0xf]
        %v6485 = vld [vmem:[%s10 + $0x1fc] sm:$0xf]
        %v6486 = vld [vmem:[%s10 + $0x200] sm:$0xf]
        %v6487 = vld [vmem:[%s10 + $0x204] sm:$0xf]
        %v6488 = vld [vmem:[%s10 + $0x208] sm:$0xf]
        %v6489 = vld [vmem:[%s10 + $0x20c] sm:$0xf]
        %v6490 = vld [vmem:[%s10 + $0x210] sm:$0xf]
        %v6491 = vld [vmem:[%s10 + $0x214] sm:$0xf]
        %v6492 = vld [vmem:[%s10 + $0x218] sm:$0xf]
        %v6493 = vld [vmem:[%s10 + $0x21c] sm:$0xf]
        %v6494 = vld [vmem:[%s10 + $0x220] sm:$0xf]
        %v6495 = vld [vmem:[%s10 + $0x224] sm:$0xf]
        %v6496 = vld [vmem:[%s10 + $0x228] sm:$0xf]
        %v6497 = vld [vmem:[%s10 + $0x22c] sm:$0xf]
        %v6498 = vld [vmem:[%s10 + $0x230] sm:$0xf]
        %v6499 = vld [vmem:[%s10 + $0x234] sm:$0xf]
        %v6500 = vld [vmem:[%s10 + $0x238] sm:$0xf]
        %v6501 = vld [vmem:[%s10 + $0x23c] sm:$0xf]
        %v6502 = vld [vmem:[%s19] sm:$0x1]
        %v6504 = vlaneseq
        %v6505 = vshrl.u32 %v6504, 7
        %v6506 = vsub.s32 0, %v6505
        %v6507 = vrot.slane %v6502, %v6506
        %v6653 = vunpack.c.l.b16 %v6358
        %v6654 = vunpack.c.l.b16 %v6359
        %v6655 = vunpack.c.l.b16 %v6360
        %v6656 = vunpack.c.l.b16 %v6361
        %v6657 = vunpack.c.l.b16 %v6362
        %v6658 = vunpack.c.l.b16 %v6363
        %v6659 = vunpack.c.l.b16 %v6364
        %v6660 = vunpack.c.l.b16 %v6365
        %v6661 = vunpack.c.l.b16 %v6366
        %v6662 = vunpack.c.l.b16 %v6367
        %v6663 = vunpack.c.l.b16 %v6368
        %v6664 = vunpack.c.l.b16 %v6369
        %v6665 = vunpack.c.l.b16 %v6370
        %v6666 = vunpack.c.l.b16 %v6371
        %v6667 = vunpack.c.l.b16 %v6372
        %v6668 = vunpack.c.l.b16 %v6373
        %v6669 = vunpack.c.l.b16 %v6374
        %v6670 = vunpack.c.l.b16 %v6375
        %v6671 = vunpack.c.l.b16 %v6376
        %v6672 = vunpack.c.l.b16 %v6377
        %v6673 = vunpack.c.l.b16 %v6378
        %v6674 = vunpack.c.l.b16 %v6379
        %v6675 = vunpack.c.l.b16 %v6380
        %v6676 = vunpack.c.l.b16 %v6381
        %v6677 = vunpack.c.l.b16 %v6382
        %v6678 = vunpack.c.l.b16 %v6383
        %v6679 = vunpack.c.l.b16 %v6384
        %v6680 = vunpack.c.l.b16 %v6385
        %v6681 = vunpack.c.l.b16 %v6386
        %v6682 = vunpack.c.l.b16 %v6387
        %v6683 = vunpack.c.l.b16 %v6388
        %v6684 = vunpack.c.l.b16 %v6389
        %v6685 = vunpack.c.l.b16 %v6390
        %v6686 = vunpack.c.l.b16 %v6391
        %v6687 = vunpack.c.l.b16 %v6392
        %v6688 = vunpack.c.l.b16 %v6393
        %v6689 = vunpack.c.l.b16 %v6394
        %v6690 = vunpack.c.l.b16 %v6395
        %v6691 = vunpack.c.l.b16 %v6396
        %v6692 = vunpack.c.l.b16 %v6397
        %v6693 = vunpack.c.l.b16 %v6398
        %v6694 = vunpack.c.l.b16 %v6399
        %v6695 = vunpack.c.l.b16 %v6400
        %v6696 = vunpack.c.l.b16 %v6401
        %v6697 = vunpack.c.l.b16 %v6402
        %v6698 = vunpack.c.l.b16 %v6403
        %v6699 = vunpack.c.l.b16 %v6404
        %v6700 = vunpack.c.l.b16 %v6405
        %v6701 = vunpack.c.l.b16 %v6406
        %v6702 = vunpack.c.l.b16 %v6407
        %v6703 = vunpack.c.l.b16 %v6408
        %v6704 = vunpack.c.l.b16 %v6409
        %v6705 = vunpack.c.l.b16 %v6410
        %v6706 = vunpack.c.l.b16 %v6411
        %v6707 = vunpack.c.l.b16 %v6412
        %v6708 = vunpack.c.l.b16 %v6413
        %v6709 = vunpack.c.l.b16 %v6414
        %v6710 = vunpack.c.l.b16 %v6415
        %v6711 = vunpack.c.l.b16 %v6416
        %v6712 = vunpack.c.l.b16 %v6417
        %v6713 = vunpack.c.l.b16 %v6418
        %v6714 = vunpack.c.l.b16 %v6419
        %v6715 = vunpack.c.l.b16 %v6420
        %v6716 = vunpack.c.l.b16 %v6421
        %v6717 = vunpack.c.l.b16 %v6422
        %v6718 = vunpack.c.l.b16 %v6423
        %v6719 = vunpack.c.l.b16 %v6424
        %v6720 = vunpack.c.l.b16 %v6425
        %v6721 = vunpack.c.l.b16 %v6426
        %v6722 = vunpack.c.l.b16 %v6427
        %v6723 = vunpack.c.l.b16 %v6428
        %v6724 = vunpack.c.l.b16 %v6429
        %v6725 = vunpack.c.l.b16 %v6430
        %v6726 = vunpack.c.l.b16 %v6431
        %v6727 = vunpack.c.l.b16 %v6432
        %v6728 = vunpack.c.l.b16 %v6433
        %v6729 = vunpack.c.l.b16 %v6434
        %v6730 = vunpack.c.l.b16 %v6435
        %v6731 = vunpack.c.l.b16 %v6436
        %v6732 = vunpack.c.l.b16 %v6437
        %v6733 = vunpack.c.l.b16 %v6438
        %v6734 = vunpack.c.l.b16 %v6439
        %v6735 = vunpack.c.l.b16 %v6440
        %v6736 = vunpack.c.l.b16 %v6441
        %v6737 = vunpack.c.l.b16 %v6442
        %v6738 = vunpack.c.l.b16 %v6443
        %v6739 = vunpack.c.l.b16 %v6444
        %v6740 = vunpack.c.l.b16 %v6445
        %v6741 = vunpack.c.l.b16 %v6446
        %v6742 = vunpack.c.l.b16 %v6447
        %v6743 = vunpack.c.l.b16 %v6448
        %v6744 = vunpack.c.l.b16 %v6449
        %v6745 = vunpack.c.l.b16 %v6450
        %v6746 = vunpack.c.l.b16 %v6451
        %v6747 = vunpack.c.l.b16 %v6452
        %v6748 = vunpack.c.l.b16 %v6453
        %v6749 = vunpack.c.l.b16 %v6454
        %v6750 = vunpack.c.l.b16 %v6455
        %v6751 = vunpack.c.l.b16 %v6456
        %v6752 = vunpack.c.l.b16 %v6457
        %v6753 = vunpack.c.l.b16 %v6458
        %v6754 = vunpack.c.l.b16 %v6459
        %v6755 = vunpack.c.l.b16 %v6460
        %v6756 = vunpack.c.l.b16 %v6461
        %v6757 = vunpack.c.l.b16 %v6462
        %v6758 = vunpack.c.l.b16 %v6463
        %v6759 = vunpack.c.l.b16 %v6464
        %v6760 = vunpack.c.l.b16 %v6465
        %v6761 = vunpack.c.l.b16 %v6466
        %v6762 = vunpack.c.l.b16 %v6467
        %v6763 = vunpack.c.l.b16 %v6468
        %v6764 = vunpack.c.l.b16 %v6469
        %v6765 = vunpack.c.l.b16 %v6470
        %v6766 = vunpack.c.l.b16 %v6471
        %v6767 = vunpack.c.l.b16 %v6472
        %v6768 = vunpack.c.l.b16 %v6473
        %v6769 = vunpack.c.l.b16 %v6474
        %v6770 = vunpack.c.l.b16 %v6475
        %v6771 = vunpack.c.l.b16 %v6476
        %v6772 = vunpack.c.l.b16 %v6477
        %v6773 = vunpack.c.l.b16 %v6478
        %v6774 = vunpack.c.l.b16 %v6479
        %v6775 = vunpack.c.l.b16 %v6480
        %v6776 = vunpack.c.l.b16 %v6481
        %v6777 = vunpack.c.l.b16 %v6482
        %v6778 = vunpack.c.l.b16 %v6483
        %v6779 = vunpack.c.l.b16 %v6484
        %v6780 = vunpack.c.l.b16 %v6485
        %v6781 = vunpack.c.l.b16 %v6486
        %v6782 = vunpack.c.l.b16 %v6487
        %v6783 = vunpack.c.l.b16 %v6488
        %v6784 = vunpack.c.l.b16 %v6489
        %v6785 = vunpack.c.l.b16 %v6490
        %v6786 = vunpack.c.l.b16 %v6491
        %v6787 = vunpack.c.l.b16 %v6492
        %v6788 = vunpack.c.l.b16 %v6493
        %v6789 = vunpack.c.l.b16 %v6494
        %v6790 = vunpack.c.l.b16 %v6495
        %v6791 = vunpack.c.l.b16 %v6496
        %v6792 = vunpack.c.l.b16 %v6497
        %v6793 = vunpack.c.l.b16 %v6498
        %v6794 = vunpack.c.l.b16 %v6499
        %v6795 = vunpack.c.l.b16 %v6500
        %v6796 = vunpack.c.l.b16 %v6501
        %v6797 = vpack.c.b16 %v6654, %v6653
        %v6798 = vpack.c.b16 %v6656, %v6655
        %v6799 = vpack.c.b16 %v6658, %v6657
        %v6800 = vpack.c.b16 %v6660, %v6659
        %v6801 = vpack.c.b16 %v6662, %v6661
        %v6802 = vpack.c.b16 %v6664, %v6663
        %v6803 = vpack.c.b16 %v6666, %v6665
        %v6804 = vpack.c.b16 %v6668, %v6667
        %v6805 = vpack.c.b16 %v6670, %v6669
        %v6806 = vpack.c.b16 %v6672, %v6671
        %v6807 = vpack.c.b16 %v6674, %v6673
        %v6808 = vpack.c.b16 %v6676, %v6675
        %v6809 = vpack.c.b16 %v6678, %v6677
        %v6810 = vpack.c.b16 %v6680, %v6679
        %v6811 = vpack.c.b16 %v6682, %v6681
        %v6812 = vpack.c.b16 %v6684, %v6683
        %v6813 = vpack.c.b16 %v6686, %v6685
        %v6814 = vpack.c.b16 %v6688, %v6687
        %v6815 = vpack.c.b16 %v6690, %v6689
        %v6816 = vpack.c.b16 %v6692, %v6691
        %v6817 = vpack.c.b16 %v6694, %v6693
        %v6818 = vpack.c.b16 %v6696, %v6695
        %v6819 = vpack.c.b16 %v6698, %v6697
        %v6820 = vpack.c.b16 %v6700, %v6699
        %v6821 = vpack.c.b16 %v6702, %v6701
        %v6822 = vpack.c.b16 %v6704, %v6703
        %v6823 = vpack.c.b16 %v6706, %v6705
        %v6824 = vpack.c.b16 %v6708, %v6707
        %v6825 = vpack.c.b16 %v6710, %v6709
        %v6826 = vpack.c.b16 %v6712, %v6711
        %v6827 = vpack.c.b16 %v6714, %v6713
        %v6828 = vpack.c.b16 %v6716, %v6715
        %v6829 = vpack.c.b16 %v6718, %v6717
        %v6830 = vpack.c.b16 %v6720, %v6719
        %v6831 = vpack.c.b16 %v6722, %v6721
        %v6832 = vpack.c.b16 %v6724, %v6723
        %v6833 = vpack.c.b16 %v6726, %v6725
        %v6834 = vpack.c.b16 %v6728, %v6727
        %v6835 = vpack.c.b16 %v6730, %v6729
        %v6836 = vpack.c.b16 %v6732, %v6731
        %v6837 = vpack.c.b16 %v6734, %v6733
        %v6838 = vpack.c.b16 %v6736, %v6735
        %v6839 = vpack.c.b16 %v6738, %v6737
        %v6840 = vpack.c.b16 %v6740, %v6739
        %v6841 = vpack.c.b16 %v6742, %v6741
        %v6842 = vpack.c.b16 %v6744, %v6743
        %v6843 = vpack.c.b16 %v6746, %v6745
        %v6844 = vpack.c.b16 %v6748, %v6747
        %v6845 = vpack.c.b16 %v6750, %v6749
        %v6846 = vpack.c.b16 %v6752, %v6751
        %v6847 = vpack.c.b16 %v6754, %v6753
        %v6848 = vpack.c.b16 %v6756, %v6755
        %v6849 = vpack.c.b16 %v6758, %v6757
        %v6850 = vpack.c.b16 %v6760, %v6759
        %v6851 = vpack.c.b16 %v6762, %v6761
        %v6852 = vpack.c.b16 %v6764, %v6763
        %v6853 = vpack.c.b16 %v6766, %v6765
        %v6854 = vpack.c.b16 %v6768, %v6767
        %v6855 = vpack.c.b16 %v6770, %v6769
        %v6856 = vpack.c.b16 %v6772, %v6771
        %v6857 = vpack.c.b16 %v6774, %v6773
        %v6858 = vpack.c.b16 %v6776, %v6775
        %v6859 = vpack.c.b16 %v6778, %v6777
        %v6860 = vpack.c.b16 %v6780, %v6779
        %v6861 = vpack.c.b16 %v6782, %v6781
        %v6862 = vpack.c.b16 %v6784, %v6783
        %v6863 = vpack.c.b16 %v6786, %v6785
        %v6864 = vpack.c.b16 %v6788, %v6787
        %v6865 = vpack.c.b16 %v6790, %v6789
        %v6866 = vpack.c.b16 %v6792, %v6791
        %v6867 = vpack.c.b16 %v6794, %v6793
        %v6868 = vpack.c.b16 %v6796, %v6795
        %6941 = vmatprep.subr.bf16.mxu0 0
        %6942 = vmatpush1.bf16.msra.mxu0 %v6804
        %6943 = vmatprep.subr.bf16.mxu0 0
        %6944 = vmatpush1.bf16.msra.mxu0 %v6803
        %6945 = vmatprep.subr.bf16.mxu0 0
        %6946 = vmatpush1.bf16.msra.mxu0 %v6802
        %6947 = vmatprep.subr.bf16.mxu0 0
        %6948 = vmatpush1.bf16.msra.mxu0 %v6801
        %6949 = vmatprep.subr.bf16.mxu0 0
        %6950 = vmatpush1.bf16.msra.mxu0 %v6800
        %6951 = vmatprep.subr.bf16.mxu0 0
        %6952 = vmatpush1.bf16.msra.mxu0 %v6799
        %6953 = vmatprep.subr.bf16.mxu0 0
        %6954 = vmatpush1.bf16.msra.mxu0 %v6798
        %6955 = vmatprep.subr.bf16.mxu0 0
        %6956 = vmatpush1.bf16.msra.mxu0 %v6797
        %6957 = vmatprep.subr.bf16.mxu0 0
        %6958 = vmatpush2.bf16.msra.mxu0 %v6812
        %6959 = vmatprep.subr.bf16.mxu0 0
        %6960 = vmatpush2.bf16.msra.mxu0 %v6811
        %6961 = vmatprep.subr.bf16.mxu0 0
        %6962 = vmatpush2.bf16.msra.mxu0 %v6810
        %6963 = vmatprep.subr.bf16.mxu0 0
        %6964 = vmatpush2.bf16.msra.mxu0 %v6809
        %6965 = vmatprep.subr.bf16.mxu0 0
        %6966 = vmatpush2.bf16.msra.mxu0 %v6808
        %6967 = vmatprep.subr.bf16.mxu0 0
        %6968 = vmatpush2.bf16.msra.mxu0 %v6807
        %6969 = vmatprep.subr.bf16.mxu0 0
        %6970 = vmatpush2.bf16.msra.mxu0 %v6806
        %6971 = vmatprep.subr.bf16.mxu0 0
        %6972 = vmatpush2.bf16.msra.mxu0 %v6805
        %6973 = vmatprep.mubr.bf16.mxu0 %v6340
        %6974 = vmatmul.mubr.bf16.gmra.mxu0 %v6338
        %v6975 = vpop.f32.mrf.mxu0
        %v6976 = vadd.f32 %v6507, %v6975
        %v6977 = vpop.f32.mrf.mxu0
        %v6978 = vpop.f32.mrf.mxu0
        %v6979 = vpop.f32.mrf.mxu0
        %6980 = vdwg.mxu0
        %6981 = vmatprep.subr.bf16.mxu0 0
        %6982 = vmatpush1.bf16.msra.mxu0 %v6820
        %6983 = vmatprep.subr.bf16.mxu0 0
        %6984 = vmatpush1.bf16.msra.mxu0 %v6819
        %6985 = vmatprep.subr.bf16.mxu0 0
        %6986 = vmatpush1.bf16.msra.mxu0 %v6818
        %6987 = vmatprep.subr.bf16.mxu0 0
        %6988 = vmatpush1.bf16.msra.mxu0 %v6817
        %6989 = vmatprep.subr.bf16.mxu0 0
        %6990 = vmatpush1.bf16.msra.mxu0 %v6816
        %6991 = vmatprep.subr.bf16.mxu0 0
        %6992 = vmatpush1.bf16.msra.mxu0 %v6815
        %6993 = vmatprep.subr.bf16.mxu0 0
        %6994 = vmatpush1.bf16.msra.mxu0 %v6814
        %6995 = vmatprep.subr.bf16.mxu0 0
        %6996 = vmatpush1.bf16.msra.mxu0 %v6813
        %6997 = vmatprep.subr.bf16.mxu0 0
        %6998 = vmatpush2.bf16.msra.mxu0 %v6828
        %6999 = vmatprep.subr.bf16.mxu0 0
        %7000 = vmatpush2.bf16.msra.mxu0 %v6827
        %7001 = vmatprep.subr.bf16.mxu0 0
        %7002 = vmatpush2.bf16.msra.mxu0 %v6826
        %7003 = vmatprep.subr.bf16.mxu0 0
        %7004 = vmatpush2.bf16.msra.mxu0 %v6825
        %7005 = vmatprep.subr.bf16.mxu0 0
        %7006 = vmatpush2.bf16.msra.mxu0 %v6824
        %7007 = vmatprep.subr.bf16.mxu0 0
        %7008 = vmatpush2.bf16.msra.mxu0 %v6823
        %7009 = vmatprep.subr.bf16.mxu0 0
        %7010 = vmatpush2.bf16.msra.mxu0 %v6822
        %7011 = vmatprep.subr.bf16.mxu0 0
        %7012 = vmatpush2.bf16.msra.mxu0 %v6821
        %7013 = vmatprep.mubr.bf16.mxu0 %v6345
        %7014 = vmatmul.mubr.bf16.gmra.mxu0 %v6343
        %v7015 = vpop.f32.mrf.mxu0
        %v7016 = vadd.f32 %v6976, %v7015
        %v7017 = vpop.f32.mrf.mxu0
        %v7018 = vpop.f32.mrf.mxu0
        %v7019 = vpop.f32.mrf.mxu0
        %7020 = vdwg.mxu0
        %7021 = vmatprep.subr.bf16.mxu0 0
        %7022 = vmatpush1.bf16.msra.mxu0 %v6836
        %7023 = vmatprep.subr.bf16.mxu0 0
        %7024 = vmatpush1.bf16.msra.mxu0 %v6835
        %7025 = vmatprep.subr.bf16.mxu0 0
        %7026 = vmatpush1.bf16.msra.mxu0 %v6834
        %7027 = vmatprep.subr.bf16.mxu0 0
        %7028 = vmatpush1.bf16.msra.mxu0 %v6833
        %7029 = vmatprep.subr.bf16.mxu0 0
        %7030 = vmatpush1.bf16.msra.mxu0 %v6832
        %7031 = vmatprep.subr.bf16.mxu0 0
        %7032 = vmatpush1.bf16.msra.mxu0 %v6831
        %7033 = vmatprep.subr.bf16.mxu0 0
        %7034 = vmatpush1.bf16.msra.mxu0 %v6830
        %7035 = vmatprep.subr.bf16.mxu0 0
        %7036 = vmatpush1.bf16.msra.mxu0 %v6829
        %7037 = vmatprep.subr.bf16.mxu0 0
        %7038 = vmatpush2.bf16.msra.mxu0 %v6844
        %7039 = vmatprep.subr.bf16.mxu0 0
        %7040 = vmatpush2.bf16.msra.mxu0 %v6843
        %7041 = vmatprep.subr.bf16.mxu0 0
        %7042 = vmatpush2.bf16.msra.mxu0 %v6842
        %7043 = vmatprep.subr.bf16.mxu0 0
        %7044 = vmatpush2.bf16.msra.mxu0 %v6841
        %7045 = vmatprep.subr.bf16.mxu0 0
        %7046 = vmatpush2.bf16.msra.mxu0 %v6840
        %7047 = vmatprep.subr.bf16.mxu0 0
        %7048 = vmatpush2.bf16.msra.mxu0 %v6839
        %7049 = vmatprep.subr.bf16.mxu0 0
        %7050 = vmatpush2.bf16.msra.mxu0 %v6838
        %7051 = vmatprep.subr.bf16.mxu0 0
        %7052 = vmatpush2.bf16.msra.mxu0 %v6837
        %7053 = vmatprep.mubr.bf16.mxu0 %v6350
        %7054 = vmatmul.mubr.bf16.gmra.mxu0 %v6347
        %v7055 = vpop.f32.mrf.mxu0
        %v7056 = vadd.f32 %v7016, %v7055
        %v7057 = vpop.f32.mrf.mxu0
        %v7058 = vpop.f32.mrf.mxu0
        %v7059 = vpop.f32.mrf.mxu0
        %7060 = vdwg.mxu0
        %7061 = vmatprep.subr.bf16.mxu0 0
        %7062 = vmatpush1.bf16.msra.mxu0 %v6852
        %7063 = vmatprep.subr.bf16.mxu0 0
        %7064 = vmatpush1.bf16.msra.mxu0 %v6851
        %7065 = vmatprep.subr.bf16.mxu0 0
        %7066 = vmatpush1.bf16.msra.mxu0 %v6850
        %7067 = vmatprep.subr.bf16.mxu0 0
        %7068 = vmatpush1.bf16.msra.mxu0 %v6849
        %7069 = vmatprep.subr.bf16.mxu0 0
        %7070 = vmatpush1.bf16.msra.mxu0 %v6848
        %7071 = vmatprep.subr.bf16.mxu0 0
        %7072 = vmatpush1.bf16.msra.mxu0 %v6847
        %7073 = vmatprep.subr.bf16.mxu0 0
        %7074 = vmatpush1.bf16.msra.mxu0 %v6846
        %7075 = vmatprep.subr.bf16.mxu0 0
        %7076 = vmatpush1.bf16.msra.mxu0 %v6845
        %7077 = vmatprep.subr.bf16.mxu0 0
        %7078 = vmatpush2.bf16.msra.mxu0 %v6860
        %7079 = vmatprep.subr.bf16.mxu0 0
        %7080 = vmatpush2.bf16.msra.mxu0 %v6859
        %7081 = vmatprep.subr.bf16.mxu0 0
        %7082 = vmatpush2.bf16.msra.mxu0 %v6858
        %7083 = vmatprep.subr.bf16.mxu0 0
        %7084 = vmatpush2.bf16.msra.mxu0 %v6857
        %7085 = vmatprep.subr.bf16.mxu0 0
        %7086 = vmatpush2.bf16.msra.mxu0 %v6856
        %7087 = vmatprep.subr.bf16.mxu0 0
        %7088 = vmatpush2.bf16.msra.mxu0 %v6855
        %7089 = vmatprep.subr.bf16.mxu0 0
        %7090 = vmatpush2.bf16.msra.mxu0 %v6854
        %7091 = vmatprep.subr.bf16.mxu0 0
        %7092 = vmatpush2.bf16.msra.mxu0 %v6853
        %7093 = vmatprep.mubr.bf16.mxu0 %v6354
        %7094 = vmatmul.mubr.bf16.gmra.mxu0 %v6352
        %v7095 = vpop.f32.mrf.mxu0
        %v7096 = vadd.f32 %v7056, %v7095
        %v7097 = vpop.f32.mrf.mxu0
        %v7098 = vpop.f32.mrf.mxu0
        %v7099 = vpop.f32.mrf.mxu0
        %7100 = vdwg.mxu0
        %7101 = vmatprep.subr.bf16.mxu0 0
        %7102 = vmatpush1.bf16.msra.mxu0 %v6868
        %7103 = vmatprep.subr.bf16.mxu0 0
        %7104 = vmatpush1.bf16.msra.mxu0 %v6867
        %7105 = vmatprep.subr.bf16.mxu0 0
        %7106 = vmatpush1.bf16.msra.mxu0 %v6866
        %7107 = vmatprep.subr.bf16.mxu0 0
        %7108 = vmatpush1.bf16.msra.mxu0 %v6865
        %7109 = vmatprep.subr.bf16.mxu0 0
        %7110 = vmatpush1.bf16.msra.mxu0 %v6864
        %7111 = vmatprep.subr.bf16.mxu0 0
        %7112 = vmatpush1.bf16.msra.mxu0 %v6863
        %7113 = vmatprep.subr.bf16.mxu0 0
        %7114 = vmatpush1.bf16.msra.mxu0 %v6862
        %7115 = vmatprep.subr.bf16.mxu0 0
        %7116 = vmatpush1.bf16.msra.mxu0 %v6861
        %7117 = vmatprep.subr.bf16.mxu0 0
        %7118 = vmatpush2.bf16.msra.mxu0 0
        %7119 = vmatprep.subr.bf16.mxu0 0
        %7120 = vmatpush2.bf16.msra.mxu0 0
        %7121 = vmatprep.subr.bf16.mxu0 0
        %7122 = vmatpush2.bf16.msra.mxu0 0
        %7123 = vmatprep.subr.bf16.mxu0 0
        %7124 = vmatpush2.bf16.msra.mxu0 0
        %7125 = vmatprep.subr.bf16.mxu0 0
        %7126 = vmatpush2.bf16.msra.mxu0 0
        %7127 = vmatprep.subr.bf16.mxu0 0
        %7128 = vmatpush2.bf16.msra.mxu0 0
        %7129 = vmatprep.subr.bf16.mxu0 0
        %7130 = vmatpush2.bf16.msra.mxu0 0
        %7131 = vmatprep.subr.bf16.mxu0 0
        %7132 = vmatpush2.bf16.msra.mxu0 0
        %7133 = vmatprep.mubr.bf16.mxu0 0
        %7134 = vmatmul.mubr.bf16.gmra.mxu0 %v6357
        %v7135 = vpop.f32.mrf.mxu0
        %v7136 = vadd.f32 %v7096, %v7135
        %v7137 = vpop.f32.mrf.mxu0
        %v7138 = vpop.f32.mrf.mxu0
        %v7139 = vpop.f32.mrf.mxu0
        %7140 = vdwg.mxu0
        %v7141 = vmax.f32 %v7136, 0.0
        %7142 = vst [vmem:[#allocation2] sm:$0xff] 0.0
        %7143 = vst [vmem:[#allocation2 + $0x8] sm:$0x3] 0.0
        %7144 = vst [vmem:[#allocation2 + $0x3] sm:$0xf] %v7141
        %v7145 = vld [vmem:[#allocation2] sm:$0xf]
        %v7146 = vsel %vm5405, %v7145, 0.0
        %v7147 = vpack.c.bf16 %v7146, %v7146
        %v7148 = vld [vmem:[#allocation2 + $0x1] sm:$0xf]
        %v7149 = vpack.c.bf16 %v7148, %v7148
        %v7150 = vld [vmem:[#allocation2 + $0x2] sm:$0xf]
        %v7151 = vsel %vm5406, %v7150, 0.0
        %v7152 = vpack.c.bf16 %v7151, %v7151
        %v7153 = vsel %vm5405, %v7150, 0.0
        %v7154 = vpack.c.bf16 %v7153, %v7153
        %v7155 = vld [vmem:[#allocation2 + $0x3] sm:$0xf]
        %v7156 = vpack.c.bf16 %v7155, %v7155
        %v7157 = vld [vmem:[#allocation2 + $0x4] sm:$0xf]
        %v7158 = vsel %vm5406, %v7157, 0.0
        %v7159 = vpack.c.bf16 %v7158, %v7158
        %v7160 = vsel %vm5405, %v7157, 0.0
        %v7161 = vpack.c.bf16 %v7160, %v7160
        %v7162 = vld [vmem:[#allocation2 + $0x5] sm:$0xf]
        %v7163 = vpack.c.bf16 %v7162, %v7162
        %v7164 = vld [vmem:[#allocation2 + $0x6] sm:$0xf]
        %v7165 = vsel %vm5406, %v7164, 0.0
        %v7166 = vpack.c.bf16 %v7165, %v7165
        %v7167 = vld [vmem:[%s11] sm:$0xf]
        %v7168 = vld [vmem:[%s11 + $0x4] sm:$0xf]
        %v7169 = vld [vmem:[%s11 + $0x8] sm:$0xf]
        %v7170 = vld [vmem:[%s11 + $0xc] sm:$0xf]
        %v7171 = vld [vmem:[%s11 + $0x10] sm:$0xf]
        %v7172 = vld [vmem:[%s11 + $0x14] sm:$0xf]
        %v7173 = vld [vmem:[%s11 + $0x18] sm:$0xf]
        %v7174 = vld [vmem:[%s11 + $0x1c] sm:$0xf]
        %v7175 = vld [vmem:[%s11 + $0x20] sm:$0xf]
        %v7176 = vld [vmem:[%s11 + $0x24] sm:$0xf]
        %v7177 = vld [vmem:[%s11 + $0x28] sm:$0xf]
        %v7178 = vld [vmem:[%s11 + $0x2c] sm:$0xf]
        %v7179 = vld [vmem:[%s11 + $0x30] sm:$0xf]
        %v7180 = vld [vmem:[%s11 + $0x34] sm:$0xf]
        %v7181 = vld [vmem:[%s11 + $0x38] sm:$0xf]
        %v7182 = vld [vmem:[%s11 + $0x3c] sm:$0xf]
        %v7183 = vld [vmem:[%s11 + $0x40] sm:$0xf]
        %v7184 = vld [vmem:[%s11 + $0x44] sm:$0xf]
        %v7185 = vld [vmem:[%s11 + $0x48] sm:$0xf]
        %v7186 = vld [vmem:[%s11 + $0x4c] sm:$0xf]
        %v7187 = vld [vmem:[%s11 + $0x50] sm:$0xf]
        %v7188 = vld [vmem:[%s11 + $0x54] sm:$0xf]
        %v7189 = vld [vmem:[%s11 + $0x58] sm:$0xf]
        %v7190 = vld [vmem:[%s11 + $0x5c] sm:$0xf]
        %v7191 = vld [vmem:[%s11 + $0x60] sm:$0xf]
        %v7192 = vld [vmem:[%s11 + $0x64] sm:$0xf]
        %v7193 = vld [vmem:[%s11 + $0x68] sm:$0xf]
        %v7194 = vld [vmem:[%s11 + $0x6c] sm:$0xf]
        %v7195 = vld [vmem:[%s11 + $0x70] sm:$0xf]
        %v7196 = vld [vmem:[%s11 + $0x74] sm:$0xf]
        %v7197 = vld [vmem:[%s11 + $0x78] sm:$0xf]
        %v7198 = vld [vmem:[%s11 + $0x7c] sm:$0xf]
        %v7199 = vld [vmem:[%s11 + $0x80] sm:$0xf]
        %v7200 = vld [vmem:[%s11 + $0x84] sm:$0xf]
        %v7201 = vld [vmem:[%s11 + $0x88] sm:$0xf]
        %v7202 = vld [vmem:[%s11 + $0x8c] sm:$0xf]
        %v7203 = vld [vmem:[%s11 + $0x90] sm:$0xf]
        %v7204 = vld [vmem:[%s11 + $0x94] sm:$0xf]
        %v7205 = vld [vmem:[%s11 + $0x98] sm:$0xf]
        %v7206 = vld [vmem:[%s11 + $0x9c] sm:$0xf]
        %v7207 = vld [vmem:[%s11 + $0xa0] sm:$0xf]
        %v7208 = vld [vmem:[%s11 + $0xa4] sm:$0xf]
        %v7209 = vld [vmem:[%s11 + $0xa8] sm:$0xf]
        %v7210 = vld [vmem:[%s11 + $0xac] sm:$0xf]
        %v7211 = vld [vmem:[%s11 + $0xb0] sm:$0xf]
        %v7212 = vld [vmem:[%s11 + $0xb4] sm:$0xf]
        %v7213 = vld [vmem:[%s11 + $0xb8] sm:$0xf]
        %v7214 = vld [vmem:[%s11 + $0xbc] sm:$0xf]
        %v7215 = vld [vmem:[%s11 + $0xc0] sm:$0xf]
        %v7216 = vld [vmem:[%s11 + $0xc4] sm:$0xf]
        %v7217 = vld [vmem:[%s11 + $0xc8] sm:$0xf]
        %v7218 = vld [vmem:[%s11 + $0xcc] sm:$0xf]
        %v7219 = vld [vmem:[%s11 + $0xd0] sm:$0xf]
        %v7220 = vld [vmem:[%s11 + $0xd4] sm:$0xf]
        %v7221 = vld [vmem:[%s11 + $0xd8] sm:$0xf]
        %v7222 = vld [vmem:[%s11 + $0xdc] sm:$0xf]
        %v7223 = vld [vmem:[%s11 + $0xe0] sm:$0xf]
        %v7224 = vld [vmem:[%s11 + $0xe4] sm:$0xf]
        %v7225 = vld [vmem:[%s11 + $0xe8] sm:$0xf]
        %v7226 = vld [vmem:[%s11 + $0xec] sm:$0xf]
        %v7227 = vld [vmem:[%s11 + $0xf0] sm:$0xf]
        %v7228 = vld [vmem:[%s11 + $0xf4] sm:$0xf]
        %v7229 = vld [vmem:[%s11 + $0xf8] sm:$0xf]
        %v7230 = vld [vmem:[%s11 + $0xfc] sm:$0xf]
        %v7231 = vld [vmem:[%s11 + $0x100] sm:$0xf]
        %v7232 = vld [vmem:[%s11 + $0x104] sm:$0xf]
        %v7233 = vld [vmem:[%s11 + $0x108] sm:$0xf]
        %v7234 = vld [vmem:[%s11 + $0x10c] sm:$0xf]
        %v7235 = vld [vmem:[%s11 + $0x110] sm:$0xf]
        %v7236 = vld [vmem:[%s11 + $0x114] sm:$0xf]
        %v7237 = vld [vmem:[%s11 + $0x118] sm:$0xf]
        %v7238 = vld [vmem:[%s11 + $0x11c] sm:$0xf]
        %v7239 = vld [vmem:[%s11 + $0x120] sm:$0xf]
        %v7240 = vld [vmem:[%s11 + $0x124] sm:$0xf]
        %v7241 = vld [vmem:[%s11 + $0x128] sm:$0xf]
        %v7242 = vld [vmem:[%s11 + $0x12c] sm:$0xf]
        %v7243 = vld [vmem:[%s11 + $0x130] sm:$0xf]
        %v7244 = vld [vmem:[%s11 + $0x134] sm:$0xf]
        %v7245 = vld [vmem:[%s11 + $0x138] sm:$0xf]
        %v7246 = vld [vmem:[%s11 + $0x13c] sm:$0xf]
        %v7247 = vld [vmem:[%s11 + $0x140] sm:$0xf]
        %v7248 = vld [vmem:[%s11 + $0x144] sm:$0xf]
        %v7249 = vld [vmem:[%s11 + $0x148] sm:$0xf]
        %v7250 = vld [vmem:[%s11 + $0x14c] sm:$0xf]
        %v7251 = vld [vmem:[%s11 + $0x150] sm:$0xf]
        %v7252 = vld [vmem:[%s11 + $0x154] sm:$0xf]
        %v7253 = vld [vmem:[%s11 + $0x158] sm:$0xf]
        %v7254 = vld [vmem:[%s11 + $0x15c] sm:$0xf]
        %v7255 = vld [vmem:[%s11 + $0x160] sm:$0xf]
        %v7256 = vld [vmem:[%s11 + $0x164] sm:$0xf]
        %v7257 = vld [vmem:[%s11 + $0x168] sm:$0xf]
        %v7258 = vld [vmem:[%s11 + $0x16c] sm:$0xf]
        %v7259 = vld [vmem:[%s11 + $0x170] sm:$0xf]
        %v7260 = vld [vmem:[%s11 + $0x174] sm:$0xf]
        %v7261 = vld [vmem:[%s11 + $0x178] sm:$0xf]
        %v7262 = vld [vmem:[%s11 + $0x17c] sm:$0xf]
        %v7263 = vld [vmem:[%s11 + $0x180] sm:$0xf]
        %v7264 = vld [vmem:[%s11 + $0x184] sm:$0xf]
        %v7265 = vld [vmem:[%s11 + $0x188] sm:$0xf]
        %v7266 = vld [vmem:[%s11 + $0x18c] sm:$0xf]
        %v7267 = vld [vmem:[%s11 + $0x190] sm:$0xf]
        %v7268 = vld [vmem:[%s11 + $0x194] sm:$0xf]
        %v7269 = vld [vmem:[%s11 + $0x198] sm:$0xf]
        %v7270 = vld [vmem:[%s11 + $0x19c] sm:$0xf]
        %v7271 = vld [vmem:[%s11 + $0x1a0] sm:$0xf]
        %v7272 = vld [vmem:[%s11 + $0x1a4] sm:$0xf]
        %v7273 = vld [vmem:[%s11 + $0x1a8] sm:$0xf]
        %v7274 = vld [vmem:[%s11 + $0x1ac] sm:$0xf]
        %v7275 = vld [vmem:[%s11 + $0x1b0] sm:$0xf]
        %v7276 = vld [vmem:[%s11 + $0x1b4] sm:$0xf]
        %v7277 = vld [vmem:[%s11 + $0x1b8] sm:$0xf]
        %v7278 = vld [vmem:[%s11 + $0x1bc] sm:$0xf]
        %v7279 = vld [vmem:[%s11 + $0x1c0] sm:$0xf]
        %v7280 = vld [vmem:[%s11 + $0x1c4] sm:$0xf]
        %v7281 = vld [vmem:[%s11 + $0x1c8] sm:$0xf]
        %v7282 = vld [vmem:[%s11 + $0x1cc] sm:$0xf]
        %v7283 = vld [vmem:[%s11 + $0x1d0] sm:$0xf]
        %v7284 = vld [vmem:[%s11 + $0x1d4] sm:$0xf]
        %v7285 = vld [vmem:[%s11 + $0x1d8] sm:$0xf]
        %v7286 = vld [vmem:[%s11 + $0x1dc] sm:$0xf]
        %v7287 = vld [vmem:[%s11 + $0x1e0] sm:$0xf]
        %v7288 = vld [vmem:[%s11 + $0x1e4] sm:$0xf]
        %v7289 = vld [vmem:[%s11 + $0x1e8] sm:$0xf]
        %v7290 = vld [vmem:[%s11 + $0x1ec] sm:$0xf]
        %v7291 = vld [vmem:[%s11 + $0x1f0] sm:$0xf]
        %v7292 = vld [vmem:[%s11 + $0x1f4] sm:$0xf]
        %v7293 = vld [vmem:[%s11 + $0x1f8] sm:$0xf]
        %v7294 = vld [vmem:[%s11 + $0x1fc] sm:$0xf]
        %v7295 = vld [vmem:[%s11 + $0x200] sm:$0xf]
        %v7296 = vld [vmem:[%s11 + $0x204] sm:$0xf]
        %v7297 = vld [vmem:[%s11 + $0x208] sm:$0xf]
        %v7298 = vld [vmem:[%s11 + $0x20c] sm:$0xf]
        %v7299 = vld [vmem:[%s11 + $0x210] sm:$0xf]
        %v7300 = vld [vmem:[%s11 + $0x214] sm:$0xf]
        %v7301 = vld [vmem:[%s11 + $0x218] sm:$0xf]
        %v7302 = vld [vmem:[%s11 + $0x21c] sm:$0xf]
        %v7303 = vld [vmem:[%s11 + $0x220] sm:$0xf]
        %v7304 = vld [vmem:[%s11 + $0x224] sm:$0xf]
        %v7305 = vld [vmem:[%s11 + $0x228] sm:$0xf]
        %v7306 = vld [vmem:[%s11 + $0x22c] sm:$0xf]
        %v7307 = vld [vmem:[%s11 + $0x230] sm:$0xf]
        %v7308 = vld [vmem:[%s11 + $0x234] sm:$0xf]
        %v7309 = vld [vmem:[%s11 + $0x238] sm:$0xf]
        %v7310 = vld [vmem:[%s11 + $0x23c] sm:$0xf]
        %v7311 = vld [vmem:[%s20] sm:$0x1]
        %v7313 = vlaneseq
        %v7314 = vshrl.u32 %v7313, 7
        %v7315 = vsub.s32 0, %v7314
        %v7316 = vrot.slane %v7311, %v7315
        %v7462 = vunpack.c.l.b16 %v7167
        %v7463 = vunpack.c.l.b16 %v7168
        %v7464 = vunpack.c.l.b16 %v7169
        %v7465 = vunpack.c.l.b16 %v7170
        %v7466 = vunpack.c.l.b16 %v7171
        %v7467 = vunpack.c.l.b16 %v7172
        %v7468 = vunpack.c.l.b16 %v7173
        %v7469 = vunpack.c.l.b16 %v7174
        %v7470 = vunpack.c.l.b16 %v7175
        %v7471 = vunpack.c.l.b16 %v7176
        %v7472 = vunpack.c.l.b16 %v7177
        %v7473 = vunpack.c.l.b16 %v7178
        %v7474 = vunpack.c.l.b16 %v7179
        %v7475 = vunpack.c.l.b16 %v7180
        %v7476 = vunpack.c.l.b16 %v7181
        %v7477 = vunpack.c.l.b16 %v7182
        %v7478 = vunpack.c.l.b16 %v7183
        %v7479 = vunpack.c.l.b16 %v7184
        %v7480 = vunpack.c.l.b16 %v7185
        %v7481 = vunpack.c.l.b16 %v7186
        %v7482 = vunpack.c.l.b16 %v7187
        %v7483 = vunpack.c.l.b16 %v7188
        %v7484 = vunpack.c.l.b16 %v7189
        %v7485 = vunpack.c.l.b16 %v7190
        %v7486 = vunpack.c.l.b16 %v7191
        %v7487 = vunpack.c.l.b16 %v7192
        %v7488 = vunpack.c.l.b16 %v7193
        %v7489 = vunpack.c.l.b16 %v7194
        %v7490 = vunpack.c.l.b16 %v7195
        %v7491 = vunpack.c.l.b16 %v7196
        %v7492 = vunpack.c.l.b16 %v7197
        %v7493 = vunpack.c.l.b16 %v7198
        %v7494 = vunpack.c.l.b16 %v7199
        %v7495 = vunpack.c.l.b16 %v7200
        %v7496 = vunpack.c.l.b16 %v7201
        %v7497 = vunpack.c.l.b16 %v7202
        %v7498 = vunpack.c.l.b16 %v7203
        %v7499 = vunpack.c.l.b16 %v7204
        %v7500 = vunpack.c.l.b16 %v7205
        %v7501 = vunpack.c.l.b16 %v7206
        %v7502 = vunpack.c.l.b16 %v7207
        %v7503 = vunpack.c.l.b16 %v7208
        %v7504 = vunpack.c.l.b16 %v7209
        %v7505 = vunpack.c.l.b16 %v7210
        %v7506 = vunpack.c.l.b16 %v7211
        %v7507 = vunpack.c.l.b16 %v7212
        %v7508 = vunpack.c.l.b16 %v7213
        %v7509 = vunpack.c.l.b16 %v7214
        %v7510 = vunpack.c.l.b16 %v7215
        %v7511 = vunpack.c.l.b16 %v7216
        %v7512 = vunpack.c.l.b16 %v7217
        %v7513 = vunpack.c.l.b16 %v7218
        %v7514 = vunpack.c.l.b16 %v7219
        %v7515 = vunpack.c.l.b16 %v7220
        %v7516 = vunpack.c.l.b16 %v7221
        %v7517 = vunpack.c.l.b16 %v7222
        %v7518 = vunpack.c.l.b16 %v7223
        %v7519 = vunpack.c.l.b16 %v7224
        %v7520 = vunpack.c.l.b16 %v7225
        %v7521 = vunpack.c.l.b16 %v7226
        %v7522 = vunpack.c.l.b16 %v7227
        %v7523 = vunpack.c.l.b16 %v7228
        %v7524 = vunpack.c.l.b16 %v7229
        %v7525 = vunpack.c.l.b16 %v7230
        %v7526 = vunpack.c.l.b16 %v7231
        %v7527 = vunpack.c.l.b16 %v7232
        %v7528 = vunpack.c.l.b16 %v7233
        %v7529 = vunpack.c.l.b16 %v7234
        %v7530 = vunpack.c.l.b16 %v7235
        %v7531 = vunpack.c.l.b16 %v7236
        %v7532 = vunpack.c.l.b16 %v7237
        %v7533 = vunpack.c.l.b16 %v7238
        %v7534 = vunpack.c.l.b16 %v7239
        %v7535 = vunpack.c.l.b16 %v7240
        %v7536 = vunpack.c.l.b16 %v7241
        %v7537 = vunpack.c.l.b16 %v7242
        %v7538 = vunpack.c.l.b16 %v7243
        %v7539 = vunpack.c.l.b16 %v7244
        %v7540 = vunpack.c.l.b16 %v7245
        %v7541 = vunpack.c.l.b16 %v7246
        %v7542 = vunpack.c.l.b16 %v7247
        %v7543 = vunpack.c.l.b16 %v7248
        %v7544 = vunpack.c.l.b16 %v7249
        %v7545 = vunpack.c.l.b16 %v7250
        %v7546 = vunpack.c.l.b16 %v7251
        %v7547 = vunpack.c.l.b16 %v7252
        %v7548 = vunpack.c.l.b16 %v7253
        %v7549 = vunpack.c.l.b16 %v7254
        %v7550 = vunpack.c.l.b16 %v7255
        %v7551 = vunpack.c.l.b16 %v7256
        %v7552 = vunpack.c.l.b16 %v7257
        %v7553 = vunpack.c.l.b16 %v7258
        %v7554 = vunpack.c.l.b16 %v7259
        %v7555 = vunpack.c.l.b16 %v7260
        %v7556 = vunpack.c.l.b16 %v7261
        %v7557 = vunpack.c.l.b16 %v7262
        %v7558 = vunpack.c.l.b16 %v7263
        %v7559 = vunpack.c.l.b16 %v7264
        %v7560 = vunpack.c.l.b16 %v7265
        %v7561 = vunpack.c.l.b16 %v7266
        %v7562 = vunpack.c.l.b16 %v7267
        %v7563 = vunpack.c.l.b16 %v7268
        %v7564 = vunpack.c.l.b16 %v7269
        %v7565 = vunpack.c.l.b16 %v7270
        %v7566 = vunpack.c.l.b16 %v7271
        %v7567 = vunpack.c.l.b16 %v7272
        %v7568 = vunpack.c.l.b16 %v7273
        %v7569 = vunpack.c.l.b16 %v7274
        %v7570 = vunpack.c.l.b16 %v7275
        %v7571 = vunpack.c.l.b16 %v7276
        %v7572 = vunpack.c.l.b16 %v7277
        %v7573 = vunpack.c.l.b16 %v7278
        %v7574 = vunpack.c.l.b16 %v7279
        %v7575 = vunpack.c.l.b16 %v7280
        %v7576 = vunpack.c.l.b16 %v7281
        %v7577 = vunpack.c.l.b16 %v7282
        %v7578 = vunpack.c.l.b16 %v7283
        %v7579 = vunpack.c.l.b16 %v7284
        %v7580 = vunpack.c.l.b16 %v7285
        %v7581 = vunpack.c.l.b16 %v7286
        %v7582 = vunpack.c.l.b16 %v7287
        %v7583 = vunpack.c.l.b16 %v7288
        %v7584 = vunpack.c.l.b16 %v7289
        %v7585 = vunpack.c.l.b16 %v7290
        %v7586 = vunpack.c.l.b16 %v7291
        %v7587 = vunpack.c.l.b16 %v7292
        %v7588 = vunpack.c.l.b16 %v7293
        %v7589 = vunpack.c.l.b16 %v7294
        %v7590 = vunpack.c.l.b16 %v7295
        %v7591 = vunpack.c.l.b16 %v7296
        %v7592 = vunpack.c.l.b16 %v7297
        %v7593 = vunpack.c.l.b16 %v7298
        %v7594 = vunpack.c.l.b16 %v7299
        %v7595 = vunpack.c.l.b16 %v7300
        %v7596 = vunpack.c.l.b16 %v7301
        %v7597 = vunpack.c.l.b16 %v7302
        %v7598 = vunpack.c.l.b16 %v7303
        %v7599 = vunpack.c.l.b16 %v7304
        %v7600 = vunpack.c.l.b16 %v7305
        %v7601 = vunpack.c.l.b16 %v7306
        %v7602 = vunpack.c.l.b16 %v7307
        %v7603 = vunpack.c.l.b16 %v7308
        %v7604 = vunpack.c.l.b16 %v7309
        %v7605 = vunpack.c.l.b16 %v7310
        %v7606 = vpack.c.b16 %v7463, %v7462
        %v7607 = vpack.c.b16 %v7465, %v7464
        %v7608 = vpack.c.b16 %v7467, %v7466
        %v7609 = vpack.c.b16 %v7469, %v7468
        %v7610 = vpack.c.b16 %v7471, %v7470
        %v7611 = vpack.c.b16 %v7473, %v7472
        %v7612 = vpack.c.b16 %v7475, %v7474
        %v7613 = vpack.c.b16 %v7477, %v7476
        %v7614 = vpack.c.b16 %v7479, %v7478
        %v7615 = vpack.c.b16 %v7481, %v7480
        %v7616 = vpack.c.b16 %v7483, %v7482
        %v7617 = vpack.c.b16 %v7485, %v7484
        %v7618 = vpack.c.b16 %v7487, %v7486
        %v7619 = vpack.c.b16 %v7489, %v7488
        %v7620 = vpack.c.b16 %v7491, %v7490
        %v7621 = vpack.c.b16 %v7493, %v7492
        %v7622 = vpack.c.b16 %v7495, %v7494
        %v7623 = vpack.c.b16 %v7497, %v7496
        %v7624 = vpack.c.b16 %v7499, %v7498
        %v7625 = vpack.c.b16 %v7501, %v7500
        %v7626 = vpack.c.b16 %v7503, %v7502
        %v7627 = vpack.c.b16 %v7505, %v7504
        %v7628 = vpack.c.b16 %v7507, %v7506
        %v7629 = vpack.c.b16 %v7509, %v7508
        %v7630 = vpack.c.b16 %v7511, %v7510
        %v7631 = vpack.c.b16 %v7513, %v7512
        %v7632 = vpack.c.b16 %v7515, %v7514
        %v7633 = vpack.c.b16 %v7517, %v7516
        %v7634 = vpack.c.b16 %v7519, %v7518
        %v7635 = vpack.c.b16 %v7521, %v7520
        %v7636 = vpack.c.b16 %v7523, %v7522
        %v7637 = vpack.c.b16 %v7525, %v7524
        %v7638 = vpack.c.b16 %v7527, %v7526
        %v7639 = vpack.c.b16 %v7529, %v7528
        %v7640 = vpack.c.b16 %v7531, %v7530
        %v7641 = vpack.c.b16 %v7533, %v7532
        %v7642 = vpack.c.b16 %v7535, %v7534
        %v7643 = vpack.c.b16 %v7537, %v7536
        %v7644 = vpack.c.b16 %v7539, %v7538
        %v7645 = vpack.c.b16 %v7541, %v7540
        %v7646 = vpack.c.b16 %v7543, %v7542
        %v7647 = vpack.c.b16 %v7545, %v7544
        %v7648 = vpack.c.b16 %v7547, %v7546
        %v7649 = vpack.c.b16 %v7549, %v7548
        %v7650 = vpack.c.b16 %v7551, %v7550
        %v7651 = vpack.c.b16 %v7553, %v7552
        %v7652 = vpack.c.b16 %v7555, %v7554
        %v7653 = vpack.c.b16 %v7557, %v7556
        %v7654 = vpack.c.b16 %v7559, %v7558
        %v7655 = vpack.c.b16 %v7561, %v7560
        %v7656 = vpack.c.b16 %v7563, %v7562
        %v7657 = vpack.c.b16 %v7565, %v7564
        %v7658 = vpack.c.b16 %v7567, %v7566
        %v7659 = vpack.c.b16 %v7569, %v7568
        %v7660 = vpack.c.b16 %v7571, %v7570
        %v7661 = vpack.c.b16 %v7573, %v7572
        %v7662 = vpack.c.b16 %v7575, %v7574
        %v7663 = vpack.c.b16 %v7577, %v7576
        %v7664 = vpack.c.b16 %v7579, %v7578
        %v7665 = vpack.c.b16 %v7581, %v7580
        %v7666 = vpack.c.b16 %v7583, %v7582
        %v7667 = vpack.c.b16 %v7585, %v7584
        %v7668 = vpack.c.b16 %v7587, %v7586
        %v7669 = vpack.c.b16 %v7589, %v7588
        %v7670 = vpack.c.b16 %v7591, %v7590
        %v7671 = vpack.c.b16 %v7593, %v7592
        %v7672 = vpack.c.b16 %v7595, %v7594
        %v7673 = vpack.c.b16 %v7597, %v7596
        %v7674 = vpack.c.b16 %v7599, %v7598
        %v7675 = vpack.c.b16 %v7601, %v7600
        %v7676 = vpack.c.b16 %v7603, %v7602
        %v7677 = vpack.c.b16 %v7605, %v7604
        %7750 = vmatprep.subr.bf16.mxu0 0
        %7751 = vmatpush1.bf16.msra.mxu0 %v7613
        %7752 = vmatprep.subr.bf16.mxu0 0
        %7753 = vmatpush1.bf16.msra.mxu0 %v7612
        %7754 = vmatprep.subr.bf16.mxu0 0
        %7755 = vmatpush1.bf16.msra.mxu0 %v7611
        %7756 = vmatprep.subr.bf16.mxu0 0
        %7757 = vmatpush1.bf16.msra.mxu0 %v7610
        %7758 = vmatprep.subr.bf16.mxu0 0
        %7759 = vmatpush1.bf16.msra.mxu0 %v7609
        %7760 = vmatprep.subr.bf16.mxu0 0
        %7761 = vmatpush1.bf16.msra.mxu0 %v7608
        %7762 = vmatprep.subr.bf16.mxu0 0
        %7763 = vmatpush1.bf16.msra.mxu0 %v7607
        %7764 = vmatprep.subr.bf16.mxu0 0
        %7765 = vmatpush1.bf16.msra.mxu0 %v7606
        %7766 = vmatprep.subr.bf16.mxu0 0
        %7767 = vmatpush2.bf16.msra.mxu0 %v7621
        %7768 = vmatprep.subr.bf16.mxu0 0
        %7769 = vmatpush2.bf16.msra.mxu0 %v7620
        %7770 = vmatprep.subr.bf16.mxu0 0
        %7771 = vmatpush2.bf16.msra.mxu0 %v7619
        %7772 = vmatprep.subr.bf16.mxu0 0
        %7773 = vmatpush2.bf16.msra.mxu0 %v7618
        %7774 = vmatprep.subr.bf16.mxu0 0
        %7775 = vmatpush2.bf16.msra.mxu0 %v7617
        %7776 = vmatprep.subr.bf16.mxu0 0
        %7777 = vmatpush2.bf16.msra.mxu0 %v7616
        %7778 = vmatprep.subr.bf16.mxu0 0
        %7779 = vmatpush2.bf16.msra.mxu0 %v7615
        %7780 = vmatprep.subr.bf16.mxu0 0
        %7781 = vmatpush2.bf16.msra.mxu0 %v7614
        %7782 = vmatprep.mubr.bf16.mxu0 %v7149
        %7783 = vmatmul.mubr.bf16.gmra.mxu0 %v7147
        %v7784 = vpop.f32.mrf.mxu0
        %v7785 = vadd.f32 %v7316, %v7784
        %v7786 = vpop.f32.mrf.mxu0
        %v7787 = vpop.f32.mrf.mxu0
        %v7788 = vpop.f32.mrf.mxu0
        %7789 = vdwg.mxu0
        %7790 = vmatprep.subr.bf16.mxu0 0
        %7791 = vmatpush1.bf16.msra.mxu0 %v7629
        %7792 = vmatprep.subr.bf16.mxu0 0
        %7793 = vmatpush1.bf16.msra.mxu0 %v7628
        %7794 = vmatprep.subr.bf16.mxu0 0
        %7795 = vmatpush1.bf16.msra.mxu0 %v7627
        %7796 = vmatprep.subr.bf16.mxu0 0
        %7797 = vmatpush1.bf16.msra.mxu0 %v7626
        %7798 = vmatprep.subr.bf16.mxu0 0
        %7799 = vmatpush1.bf16.msra.mxu0 %v7625
        %7800 = vmatprep.subr.bf16.mxu0 0
        %7801 = vmatpush1.bf16.msra.mxu0 %v7624
        %7802 = vmatprep.subr.bf16.mxu0 0
        %7803 = vmatpush1.bf16.msra.mxu0 %v7623
        %7804 = vmatprep.subr.bf16.mxu0 0
        %7805 = vmatpush1.bf16.msra.mxu0 %v7622
        %7806 = vmatprep.subr.bf16.mxu0 0
        %7807 = vmatpush2.bf16.msra.mxu0 %v7637
        %7808 = vmatprep.subr.bf16.mxu0 0
        %7809 = vmatpush2.bf16.msra.mxu0 %v7636
        %7810 = vmatprep.subr.bf16.mxu0 0
        %7811 = vmatpush2.bf16.msra.mxu0 %v7635
        %7812 = vmatprep.subr.bf16.mxu0 0
        %7813 = vmatpush2.bf16.msra.mxu0 %v7634
        %7814 = vmatprep.subr.bf16.mxu0 0
        %7815 = vmatpush2.bf16.msra.mxu0 %v7633
        %7816 = vmatprep.subr.bf16.mxu0 0
        %7817 = vmatpush2.bf16.msra.mxu0 %v7632
        %7818 = vmatprep.subr.bf16.mxu0 0
        %7819 = vmatpush2.bf16.msra.mxu0 %v7631
        %7820 = vmatprep.subr.bf16.mxu0 0
        %7821 = vmatpush2.bf16.msra.mxu0 %v7630
        %7822 = vmatprep.mubr.bf16.mxu0 %v7154
        %7823 = vmatmul.mubr.bf16.gmra.mxu0 %v7152
        %v7824 = vpop.f32.mrf.mxu0
        %v7825 = vadd.f32 %v7785, %v7824
        %v7826 = vpop.f32.mrf.mxu0
        %v7827 = vpop.f32.mrf.mxu0
        %v7828 = vpop.f32.mrf.mxu0
        %7829 = vdwg.mxu0
        %7830 = vmatprep.subr.bf16.mxu0 0
        %7831 = vmatpush1.bf16.msra.mxu0 %v7645
        %7832 = vmatprep.subr.bf16.mxu0 0
        %7833 = vmatpush1.bf16.msra.mxu0 %v7644
        %7834 = vmatprep.subr.bf16.mxu0 0
        %7835 = vmatpush1.bf16.msra.mxu0 %v7643
        %7836 = vmatprep.subr.bf16.mxu0 0
        %7837 = vmatpush1.bf16.msra.mxu0 %v7642
        %7838 = vmatprep.subr.bf16.mxu0 0
        %7839 = vmatpush1.bf16.msra.mxu0 %v7641
        %7840 = vmatprep.subr.bf16.mxu0 0
        %7841 = vmatpush1.bf16.msra.mxu0 %v7640
        %7842 = vmatprep.subr.bf16.mxu0 0
        %7843 = vmatpush1.bf16.msra.mxu0 %v7639
        %7844 = vmatprep.subr.bf16.mxu0 0
        %7845 = vmatpush1.bf16.msra.mxu0 %v7638
        %7846 = vmatprep.subr.bf16.mxu0 0
        %7847 = vmatpush2.bf16.msra.mxu0 %v7653
        %7848 = vmatprep.subr.bf16.mxu0 0
        %7849 = vmatpush2.bf16.msra.mxu0 %v7652
        %7850 = vmatprep.subr.bf16.mxu0 0
        %7851 = vmatpush2.bf16.msra.mxu0 %v7651
        %7852 = vmatprep.subr.bf16.mxu0 0
        %7853 = vmatpush2.bf16.msra.mxu0 %v7650
        %7854 = vmatprep.subr.bf16.mxu0 0
        %7855 = vmatpush2.bf16.msra.mxu0 %v7649
        %7856 = vmatprep.subr.bf16.mxu0 0
        %7857 = vmatpush2.bf16.msra.mxu0 %v7648
        %7858 = vmatprep.subr.bf16.mxu0 0
        %7859 = vmatpush2.bf16.msra.mxu0 %v7647
        %7860 = vmatprep.subr.bf16.mxu0 0
        %7861 = vmatpush2.bf16.msra.mxu0 %v7646
        %7862 = vmatprep.mubr.bf16.mxu0 %v7159
        %7863 = vmatmul.mubr.bf16.gmra.mxu0 %v7156
        %v7864 = vpop.f32.mrf.mxu0
        %v7865 = vadd.f32 %v7825, %v7864
        %v7866 = vpop.f32.mrf.mxu0
        %v7867 = vpop.f32.mrf.mxu0
        %v7868 = vpop.f32.mrf.mxu0
        %7869 = vdwg.mxu0
        %7870 = vmatprep.subr.bf16.mxu0 0
        %7871 = vmatpush1.bf16.msra.mxu0 %v7661
        %7872 = vmatprep.subr.bf16.mxu0 0
        %7873 = vmatpush1.bf16.msra.mxu0 %v7660
        %7874 = vmatprep.subr.bf16.mxu0 0
        %7875 = vmatpush1.bf16.msra.mxu0 %v7659
        %7876 = vmatprep.subr.bf16.mxu0 0
        %7877 = vmatpush1.bf16.msra.mxu0 %v7658
        %7878 = vmatprep.subr.bf16.mxu0 0
        %7879 = vmatpush1.bf16.msra.mxu0 %v7657
        %7880 = vmatprep.subr.bf16.mxu0 0
        %7881 = vmatpush1.bf16.msra.mxu0 %v7656
        %7882 = vmatprep.subr.bf16.mxu0 0
        %7883 = vmatpush1.bf16.msra.mxu0 %v7655
        %7884 = vmatprep.subr.bf16.mxu0 0
        %7885 = vmatpush1.bf16.msra.mxu0 %v7654
        %7886 = vmatprep.subr.bf16.mxu0 0
        %7887 = vmatpush2.bf16.msra.mxu0 %v7669
        %7888 = vmatprep.subr.bf16.mxu0 0
        %7889 = vmatpush2.bf16.msra.mxu0 %v7668
        %7890 = vmatprep.subr.bf16.mxu0 0
        %7891 = vmatpush2.bf16.msra.mxu0 %v7667
        %7892 = vmatprep.subr.bf16.mxu0 0
        %7893 = vmatpush2.bf16.msra.mxu0 %v7666
        %7894 = vmatprep.subr.bf16.mxu0 0
        %7895 = vmatpush2.bf16.msra.mxu0 %v7665
        %7896 = vmatprep.subr.bf16.mxu0 0
        %7897 = vmatpush2.bf16.msra.mxu0 %v7664
        %7898 = vmatprep.subr.bf16.mxu0 0
        %7899 = vmatpush2.bf16.msra.mxu0 %v7663
        %7900 = vmatprep.subr.bf16.mxu0 0
        %7901 = vmatpush2.bf16.msra.mxu0 %v7662
        %7902 = vmatprep.mubr.bf16.mxu0 %v7163
        %7903 = vmatmul.mubr.bf16.gmra.mxu0 %v7161
        %v7904 = vpop.f32.mrf.mxu0
        %v7905 = vadd.f32 %v7865, %v7904
        %v7906 = vpop.f32.mrf.mxu0
        %v7907 = vpop.f32.mrf.mxu0
        %v7908 = vpop.f32.mrf.mxu0
        %7909 = vdwg.mxu0
        %7910 = vmatprep.subr.bf16.mxu0 0
        %7911 = vmatpush1.bf16.msra.mxu0 %v7677
        %7912 = vmatprep.subr.bf16.mxu0 0
        %7913 = vmatpush1.bf16.msra.mxu0 %v7676
        %7914 = vmatprep.subr.bf16.mxu0 0
        %7915 = vmatpush1.bf16.msra.mxu0 %v7675
        %7916 = vmatprep.subr.bf16.mxu0 0
        %7917 = vmatpush1.bf16.msra.mxu0 %v7674
        %7918 = vmatprep.subr.bf16.mxu0 0
        %7919 = vmatpush1.bf16.msra.mxu0 %v7673
        %7920 = vmatprep.subr.bf16.mxu0 0
        %7921 = vmatpush1.bf16.msra.mxu0 %v7672
        %7922 = vmatprep.subr.bf16.mxu0 0
        %7923 = vmatpush1.bf16.msra.mxu0 %v7671
        %7924 = vmatprep.subr.bf16.mxu0 0
        %7925 = vmatpush1.bf16.msra.mxu0 %v7670
        %7926 = vmatprep.subr.bf16.mxu0 0
        %7927 = vmatpush2.bf16.msra.mxu0 0
        %7928 = vmatprep.subr.bf16.mxu0 0
        %7929 = vmatpush2.bf16.msra.mxu0 0
        %7930 = vmatprep.subr.bf16.mxu0 0
        %7931 = vmatpush2.bf16.msra.mxu0 0
        %7932 = vmatprep.subr.bf16.mxu0 0
        %7933 = vmatpush2.bf16.msra.mxu0 0
        %7934 = vmatprep.subr.bf16.mxu0 0
        %7935 = vmatpush2.bf16.msra.mxu0 0
        %7936 = vmatprep.subr.bf16.mxu0 0
        %7937 = vmatpush2.bf16.msra.mxu0 0
        %7938 = vmatprep.subr.bf16.mxu0 0
        %7939 = vmatpush2.bf16.msra.mxu0 0
        %7940 = vmatprep.subr.bf16.mxu0 0
        %7941 = vmatpush2.bf16.msra.mxu0 0
        %7942 = vmatprep.mubr.bf16.mxu0 0
        %7943 = vmatmul.mubr.bf16.gmra.mxu0 %v7166
        %v7944 = vpop.f32.mrf.mxu0
        %v7945 = vadd.f32 %v7905, %v7944
        %v7946 = vpop.f32.mrf.mxu0
        %v7947 = vpop.f32.mrf.mxu0
        %v7948 = vpop.f32.mrf.mxu0
        %7949 = vdwg.mxu0
        %v7950 = vadd.f32 %v7945, %v6332
        %v7951 = vmax.f32 %v7950, 0.0
        %vm7952 = vcmask 1043456
        %v7953 = vsel %vm7952, %v7951, 0.0
        %v7954 = vrot.slane %v7953, 4
        %v7955 = vadd.f32 %v7953, %v7954
        %v7956 = vrot.slane %v7955, 2
        %v7957 = vadd.f32 %v7955, %v7956
        %v7958 = vrot.slane %v7957, 1
        %v7959 = vadd.f32 %v7957, %v7958
        %v7960 = vrcp.pop 4.0
        %v7961 = vmul.f32 %v7959, %v7960
        %7962 = vst [vmem:[%s648] sm:$0x1] %v7961
        %s7963 = sand.u32 %s489, 1
        %s7964 = scalar_lea.sflag [#allocation5], %s7963
        %s7965 = sand.u32 %s489, 1
        %s7966 = scalar_lea.vmem [#allocation4], %s7965
        // Predicated region
        $region105: #{_lambda_.1} parent=103 // pred_check
          %p7967 = pneg %p499
        $region106: #{_lambda_.1} parent=103 // pred_check_branch
          %7969 = sbr.rel (%p7967) target = $region108
        $region107: #{_lambda_.1} parent=103 // pred_region
          %s7971 = ssub.s32 16, 16
          %7972 = vsyncadd %s7964, %s7971
          %s7973 = smul.addr %s35, 16
          %s7974 = scalar_lea.hbm %s21, %s7973
          %s7976 = sshll.u32 %s7966, 4
          %s7977 = int_to_ptr.vmem [resolvable:$true] %s7976
          %7979 = dma.vmem_to_hbm [thread:$0]  %s7977, 16, %s7974, %s7964
        $region108: #{_lambda_.1} parent=103 // pred_fallthru
          _
      $region104: #{_lambda_.1} parent=5 // pred_fallthru
        _
      %p7980 = scmp.le.s32.totalorder 2, %s30
      // Predicated region
      $region109: #{_lambda_.1} parent=5 // pred_check
        %p7981 = pneg %p7980
      $region110: #{_lambda_.1} parent=5 // pred_check_branch
        %7983 = sbr.rel (%p7981) target = $region112
      $region111: #{_lambda_.1} parent=5 // pred_region
        %s7984 = ssub.s32 %s30, 2
        // Predicated region
        $region113: #{_lambda_.1} parent=111 // pred_check
          %p7985 = pneg %p505
        $region114: #{_lambda_.1} parent=111 // pred_check_branch
          %7987 = sbr.rel (%p7985) target = $region116
        $region115: #{_lambda_.1} parent=111 // pred_region
          %s7988 = sand.u32 %s490, 1
          %s7989 = scalar_lea.sflag [#allocation5], %s7988
          %s7990 = sand.u32 %s490, 1
          %s7991 = scalar_lea.vmem [#allocation4], %s7990
          %7992 = dma.done %s7989, 16
        $region116: #{_lambda_.1} parent=111 // pred_fallthru
          _
      $region112: #{_lambda_.1} parent=5 // pred_fallthru
        _
    $region6: #{_lambda_.1} parent=1 // loop_footer
      %s34 = sadd.s32 1, %s30
    $region7: #{_lambda_.1} parent=1 // loop_footer_branch
      %29 = sbr.rel target = $region3
    $region8: #{_lambda_.1} parent=1 // loop_exit
      _
    %7993 = vsyncpa [#allocation5], 1
    %s7994 = scalar_lea.sflag [#allocation5], 1
    %7995 = vsyncpa %s7994, 1

</llo_original>
